<compile_context>
chip_gen: v5e
topology: v5e:2x2
jax: 0.10.0
libtpu: 0.0.40
codegen_flags: <defaults>
</compile_context>

<pallas_src>
import functools

import jax
import jax.numpy as jnp
from jax.experimental import pallas as pl
from jax.experimental.pallas import tpu as pltpu

EPS = 1e-5
EXPANSION = 4


# ------------------------------ small helpers ------------------------------ #

def _round_up(x, m):
    return ((x + m - 1) // m) * m


def _pad_rows(a, rows):
    if a.shape[0] == rows:
        return a
    pad = [(0, rows - a.shape[0])] + [(0, 0)] * (a.ndim - 1)
    return jnp.pad(a, pad)


def _row_spec(tile_m, c):          # M-tiled activation / output
    return pl.BlockSpec((tile_m, c), lambda i: (i, 0))


def _chan_spec(c):                 # per-channel scale/shift, resident across grid
    return pl.BlockSpec((1, c), lambda i: (0, 0))


def _mat_spec(k, c):               # full weight matrix, resident across grid
    return pl.BlockSpec((k, c), lambda i: (0, 0))


def _stats_spec(c):                # (sum, sum_sq) partials, one row per tile
    return pl.BlockSpec((1, 2, c), lambda i: (i, 0, 0))


def _tpu_budget():
    """(vmem_limit_bytes, row_tile) per TPU generation.
    v5e/v6e have 128 MiB VMEM -> larger scoped limit + 1024-row tiles;
    v7x has 64 MiB -> stay at <=48 MiB and 512-row tiles."""
    try:
        vmem_cap = int(pltpu.get_tpu_info().vmem_capacity_bytes)
    except Exception:
        vmem_cap = 64 * 1024 * 1024
    if vmem_cap > 96 * 1024 * 1024:
        return 96 * 1024 * 1024, 1024
    return 48 * 1024 * 1024, 512


def _bn_scale_shift(stats, gamma, beta, m_real):
    """Reduce per-tile (sum, sum_sq) partials into per-channel scale/shift.
    Training-mode BN: biased variance over the real M rows, eps=1e-5."""
    s1 = jnp.sum(stats[:, 0, :], axis=0)
    s2 = jnp.sum(stats[:, 1, :], axis=0)
    mean = s1 / m_real
    var = jnp.maximum(s2 / m_real - mean * mean, 0.0)
    scale = gamma * jax.lax.rsqrt(var + EPS)
    shift = beta - mean * scale
    return (scale.reshape(1, -1).astype(jnp.float32),
            shift.reshape(1, -1).astype(jnp.float32))


# ----------------------------- Pallas kernels ------------------------------ #

def _matmul_stats_kernel(x_ref, w_ref, y_ref, st_ref):
    """conv1 pass 1: y = x @ w (bf16 in, f32 acc); y stored bf16, stats from f32.
    Padded input rows are zero -> they contribute zero to the partial sums."""
    y = jnp.dot(x_ref[...], w_ref[...], preferred_element_type=jnp.float32)
    y_ref[...] = y.astype(y_ref.dtype)
    st_ref[:, 0, :] = jnp.sum(y, axis=0, keepdims=True)
    st_ref[:, 1, :] = jnp.sum(y * y, axis=0, keepdims=True)


def _bn1_relu_conv3x3_stats_kernel(y1_ref, sc1_ref, sh1_ref, w2_ref,
                                   y2_ref, st_ref, xp_ref, im_ref,
                                   *, h, w, ho, wo, stride):
    """Fused: bn1 scale/shift + relu -> zero-halo in VMEM -> in-VMEM im2col ->
    single big-K (9*Cin) matmul -> bn2 partial stats.  One batch element per
    grid step; nothing but the bf16 conv2 output touches HBM."""
    cin = y1_ref.shape[-1]
    cout = w2_ref.shape[-1]

    # bn1 epilogue (scale/shift precomputed outside), ReLU, cast to bf16.
    x = jnp.maximum(y1_ref[...].astype(jnp.float32) * sc1_ref[...] + sh1_ref[...],
                    0.0)

    # Build the 1-px zero halo in a VMEM scratch (no HBM pad round trip).
    # Zero every step so the kernel stays correct under megacore splitting.
    xp_ref[...] = jnp.zeros_like(xp_ref)
    xp_ref[1:h + 1, 1:w + 1, :] = x[0].astype(xp_ref.dtype)
    xp = xp_ref[...]

    # In-VMEM im2col: rows are dense in the W direction; H rows are already
    # subsampled by `stride` (major-dim slicing only -> no sublane relayouts).
    hs = (ho - 1) * stride + 1
    for kh in range(3):
        for kw in range(3):
            tap = xp[kh:kh + hs:stride, kw:kw + w, :].reshape(ho * w, cin)
            c0 = (kh * 3 + kw) * cin
            im_ref[:, c0:c0 + cin] = tap

    acc = jnp.dot(im_ref[...], w2_ref[...], preferred_element_type=jnp.float32)

    yd = acc.reshape(ho, w, cout)
    # stride>1: subsample dense columns once at store time (not per tap).
    y = yd if stride == 1 else yd[:, ::stride, :]
    y2_ref[...] = y.reshape(1, ho, wo, cout).astype(y2_ref.dtype)

    yf = y.reshape(ho * wo, cout)                  # f32 accumulator values
    st_ref[:, 0, :] = jnp.sum(yf, axis=0, keepdims=True)
    st_ref[:, 1, :] = jnp.sum(yf * yf, axis=0, keepdims=True)


def _bn2_relu_conv1x1_kernel(y2_ref, sc2_ref, sh2_ref, w3_ref, y3_ref, st3_ref,
                             *, m_real, tile_m):
    """bn2 + relu fused into conv3 pass 1 (out2 never materialized in HBM).
    Padded-row masking only exists in the last tile (pl.when) and only when
    padding is actually present (static check)."""
    def body(mask_rows):
        x2 = jnp.maximum(
            y2_ref[...].astype(jnp.float32) * sc2_ref[...] + sh2_ref[...], 0.0)
        if mask_rows:   # relu(shift) on zero-padded rows would pollute bn3 stats
            row = jax.lax.broadcasted_iota(jnp.int32, x2.shape, 0)
            limit = m_real - pl.program_id(0) * tile_m
            x2 = jnp.where(row < limit, x2, 0.0)
        y3 = jnp.dot(x2.astype(jnp.bfloat16), w3_ref[...],
                     preferred_element_type=jnp.float32)
        y3_ref[...] = y3.astype(y3_ref.dtype)
        st3_ref[:, 0, :] = jnp.sum(y3, axis=0, keepdims=True)
        st3_ref[:, 1, :] = jnp.sum(y3 * y3, axis=0, keepdims=True)

    if m_real % tile_m == 0:
        body(False)
    else:
        last = pl.num_programs(0) - 1

        @pl.when(pl.program_id(0) == last)
        def _masked():
            body(True)

        @pl.when(pl.program_id(0) != last)
        def _unmasked():
            body(False)


def _bn2_relu_conv1x1_proj_kernel(y2_ref, sc2_ref, sh2_ref, w3_ref, xs_ref, ws_ref,
                                  y3_ref, ys_ref, st3_ref, sts_ref,
                                  *, m_real, tile_m):
    """Same as above, plus the shortcut 1x1 projection computed ONCE: its bf16
    result is stored (ys) and re-used by the final kernel, never recomputed."""
    def body(mask_rows):
        x2 = jnp.maximum(
            y2_ref[...].astype(jnp.float32) * sc2_ref[...] + sh2_ref[...], 0.0)
        if mask_rows:
            row = jax.lax.broadcasted_iota(jnp.int32, x2.shape, 0)
            limit = m_real - pl.program_id(0) * tile_m
            x2 = jnp.where(row < limit, x2, 0.0)
        y3 = jnp.dot(x2.astype(jnp.bfloat16), w3_ref[...],
                     preferred_element_type=jnp.float32)
        y3_ref[...] = y3.astype(y3_ref.dtype)
        st3_ref[:, 0, :] = jnp.sum(y3, axis=0, keepdims=True)
        st3_ref[:, 1, :] = jnp.sum(y3 * y3, axis=0, keepdims=True)

    if m_real % tile_m == 0:
        body(False)
    else:
        last = pl.num_programs(0) - 1

        @pl.when(pl.program_id(0) == last)
        def _masked():
            body(True)

        @pl.when(pl.program_id(0) != last)
        def _unmasked():
            body(False)

    # Shortcut projection: padded xs rows are zero -> zero stats contribution.
    ys = jnp.dot(xs_ref[...], ws_ref[...], preferred_element_type=jnp.float32)
    ys_ref[...] = ys.astype(ys_ref.dtype)
    sts_ref[:, 0, :] = jnp.sum(ys, axis=0, keepdims=True)
    sts_ref[:, 1, :] = jnp.sum(ys * ys, axis=0, keepdims=True)


def _bn3_add_relu_kernel(y3_ref, sc3_ref, sh3_ref, res_ref, o_ref):
    """bn3 + identity residual add + relu."""
    out = (y3_ref[...].astype(jnp.float32) * sc3_ref[...] + sh3_ref[...]
           + res_ref[...].astype(jnp.float32))
    o_ref[...] = jnp.maximum(out, 0.0).astype(o_ref.dtype)


def _bn3_projbn_add_relu_kernel(y3_ref, sc3_ref, sh3_ref, ys_ref, scs_ref, shs_ref,
                                o_ref):
    """bn3 + (stored shortcut projection) * BN_s + add + relu."""
    res = ys_ref[...].astype(jnp.float32) * scs_ref[...] + shs_ref[...]
    out = y3_ref[...].astype(jnp.float32) * sc3_ref[...] + sh3_ref[...] + res
    o_ref[...] = jnp.maximum(out, 0.0).astype(o_ref.dtype)


# ------------------------------ parameters --------------------------------- #

def init_bottleneck_params(key, in_planes, planes):
    """Deterministic synthetic parameters (PyTorch weight layout: OIHW)."""
    ks = jax.random.split(key, 8)
    out_planes = EXPANSION * planes
    return {
        "w1": jax.random.normal(ks[0], (planes, in_planes, 1, 1), jnp.float32) * 0.2,
        "g1": 1.0 + 0.1 * jax.random.normal(ks[1], (planes,), jnp.float32),
        "b1": 0.1 * jax.random.normal(ks[2], (planes,), jnp.float32),
        "w2": jax.random.normal(ks[3], (planes, planes, 3, 3), jnp.float32) * 0.2,
        "g2": 1.0 + 0.1 * jax.random.normal(ks[4], (planes,), jnp.float32),
        "b2": 0.1 * jax.random.normal(ks[5], (planes,), jnp.float32),
        "w3": jax.random.normal(ks[6], (out_planes, planes, 1, 1), jnp.float32) * 0.2,
        "g3": jnp.ones((out_planes,), jnp.float32),
        "b3": jnp.zeros((out_planes,), jnp.float32),
    }


def init_shortcut_params(key, in_planes, planes):
    ks = jax.random.split(key, 3)
    out_planes = EXPANSION * planes
    return {
        "ws": jax.random.normal(ks[0], (out_planes, in_planes, 1, 1), jnp.float32) * 0.2,
        "gs": 1.0 + 0.1 * jax.random.normal(ks[1], (out_planes,), jnp.float32),
        "bs": 0.1 * jax.random.normal(ks[2], (out_planes,), jnp.float32),
    }


# -------------------------------- forward ---------------------------------- #

def bottleneck_forward(x_nchw, params, shortcut_params, stride):
    x = jnp.transpose(x_nchw, (0, 2, 3, 1)).astype(jnp.float32)   # NCHW -> NHWC
    N, H, W, Cin = x.shape
    planes = params["w1"].shape[0]
    out_planes = EXPANSION * planes
    Ho = (H + 2 - 3) // stride + 1
    Wo = (W + 2 - 3) // stride + 1
    M1, M2 = N * H * W, N * Ho * Wo

    vmem_limit, tile_m = _tpu_budget()
    cparams = pltpu.CompilerParams(
        dimension_semantics=("parallel",),      # independent tiles -> 2 TCs on v7x
        vmem_limit_bytes=vmem_limit)

    # ---------------- conv1 (1x1) pass 1: matmul + bn1 partial stats --------
    t1 = min(tile_m, _round_up(M1, 8))
    M1p = _round_up(M1, t1)
    nt1 = M1p // t1
    x2d = _pad_rows(x.reshape(M1, Cin), M1p).astype(jnp.bfloat16)
    w1 = params["w1"].reshape(planes, Cin).T.astype(jnp.bfloat16)

    y1, st1 = pl.pallas_call(
        _matmul_stats_kernel,
        grid=(nt1,),
        in_specs=[_row_spec(t1, Cin), _mat_spec(Cin, planes)],
        out_specs=(_row_spec(t1, planes), _stats_spec(planes)),
        out_shape=(jax.ShapeDtypeStruct((M1p, planes), jnp.bfloat16),
                   jax.ShapeDtypeStruct((nt1, 2, planes), jnp.float32)),
        compiler_params=cparams,
    )(x2d, w1)
    sc1, sh1 = _bn_scale_shift(st1, params["g1"], params["b1"], M1)

    # ---------------- bn1+relu -> conv2 (3x3, stride, pad=1) + bn2 stats ----
    # bn1 epilogue, zero-halo padding and the im2col all happen inside the
    # kernel in VMEM; only the bf16 y1 block is read and the bf16 y2 written.
    y1_nhwc = y1[:M1].reshape(N, H, W, planes)
    Hp, Wp = H + 2, W + 2
    # OIHW -> (kh, kw, cin, cout) -> (9*cin, cout): matches im2col column order.
    w2 = jnp.transpose(params["w2"], (2, 3, 1, 0)).reshape(9 * planes, planes)
    w2 = w2.astype(jnp.bfloat16)

    y2, st2 = pl.pallas_call(
        functools.partial(_bn1_relu_conv3x3_stats_kernel,
                          h=H, w=W, ho=Ho, wo=Wo, stride=stride),
        grid=(N,),
        in_specs=[pl.BlockSpec((1, H, W, planes), lambda n: (n, 0, 0, 0)),
                  _chan_spec(planes), _chan_spec(planes),
                  _mat_spec(9 * planes, planes)],
        out_specs=(pl.BlockSpec((1, Ho, Wo, planes), lambda n: (n, 0, 0, 0)),
                   pl.BlockSpec((1, 2, planes), lambda n: (n, 0, 0))),
        out_shape=(jax.ShapeDtypeStruct((N, Ho, Wo, planes), jnp.bfloat16),
                   jax.ShapeDtypeStruct((N, 2, planes), jnp.float32)),
        scratch_shapes=[pltpu.VMEM((Hp, Wp, planes), jnp.bfloat16),      # halo
                        pltpu.VMEM((Ho * W, 9 * planes), jnp.bfloat16)],  # im2col
        compiler_params=cparams,
    )(y1_nhwc, sc1, sh1, w2)
    sc2, sh2 = _bn_scale_shift(st2, params["g2"], params["b2"], M2)

    # ---------------- bn2+relu -> conv3 (1x1) [+ shortcut projection] -------
    t2 = min(tile_m, _round_up(M2, 8))
    M2p = _round_up(M2, t2)
    nt2 = M2p // t2
    y2f = _pad_rows(y2.reshape(M2, planes), M2p)
    w3 = params["w3"].reshape(out_planes, planes).T.astype(jnp.bfloat16)

    if shortcut_params is not None:
        xs = _pad_rows(x[:, ::stride, ::stride, :].reshape(M2, Cin), M2p)
        xs = xs.astype(jnp.bfloat16)
        ws = shortcut_params["ws"].reshape(out_planes, Cin).T.astype(jnp.bfloat16)

        y3, ys, st3, sts = pl.pallas_call(
            functools.partial(_bn2_relu_conv1x1_proj_kernel, m_real=M2, tile_m=t2),
            grid=(nt2,),
            in_specs=[_row_spec(t2, planes), _chan_spec(planes), _chan_spec(planes),
                      _mat_spec(planes, out_planes),
                      _row_spec(t2, Cin), _mat_spec(Cin, out_planes)],
            out_specs=(_row_spec(t2, out_planes), _row_spec(t2, out_planes),
                       _stats_spec(out_planes), _stats_spec(out_planes)),
            out_shape=(jax.ShapeDtypeStruct((M2p, out_planes), jnp.bfloat16),
                       jax.ShapeDtypeStruct((M2p, out_planes), jnp.bfloat16),
                       jax.ShapeDtypeStruct((nt2, 2, out_planes), jnp.float32),
                       jax.ShapeDtypeStruct((nt2, 2, out_planes), jnp.float32)),
            compiler_params=cparams,
        )(y2f, sc2, sh2, w3, xs, ws)
        sc3, sh3 = _bn_scale_shift(st3, params["g3"], params["b3"], M2)
        scs, shs = _bn_scale_shift(sts, shortcut_params["gs"],
                                   shortcut_params["bs"], M2)

        out3 = pl.pallas_call(
            _bn3_projbn_add_relu_kernel,
            grid=(nt2,),
            in_specs=[_row_spec(t2, out_planes), _chan_spec(out_planes),
                      _chan_spec(out_planes),
                      _row_spec(t2, out_planes), _chan_spec(out_planes),
                      _chan_spec(out_planes)],
            out_specs=_row_spec(t2, out_planes),
            out_shape=jax.ShapeDtypeStruct((M2p, out_planes), jnp.bfloat16),
            compiler_params=cparams,
        )(y3, sc3, sh3, ys, scs, shs)
    else:
        y3, st3 = pl.pallas_call(
            functools.partial(_bn2_relu_conv1x1_kernel, m_real=M2, tile_m=t2),
            grid=(nt2,),
            in_specs=[_row_spec(t2, planes), _chan_spec(planes), _chan_spec(planes),
                      _mat_spec(planes, out_planes)],
            out_specs=(_row_spec(t2, out_planes), _stats_spec(out_planes)),
            out_shape=(jax.ShapeDtypeStruct((M2p, out_planes), jnp.bfloat16),
                       jax.ShapeDtypeStruct((nt2, 2, out_planes), jnp.float32)),
            compiler_params=cparams,
        )(y2f, sc2, sh2, w3)
        sc3, sh3 = _bn_scale_shift(st3, params["g3"], params["b3"], M2)
        res = _pad_rows(x[:, ::stride, ::stride, :].reshape(M2, out_planes), M2p)

        out3 = pl.pallas_call(
            _bn3_add_relu_kernel,
            grid=(nt2,),
            in_specs=[_row_spec(t2, out_planes), _chan_spec(out_planes),
                      _chan_spec(out_planes), _row_spec(t2, out_planes)],
            out_specs=_row_spec(t2, out_planes),
            out_shape=jax.ShapeDtypeStruct((M2p, out_planes), jnp.bfloat16),
            compiler_params=cparams,
        )(y3, sc3, sh3, res)

    out = out3[:M2].reshape(N, Ho, Wo, out_planes).astype(jnp.float32)
    return jnp.transpose(out, (0, 3, 1, 2))                       # NHWC -> NCHW


# --------------------------- pure-JAX reference ----------------------------- #

def _reference_bottleneck(x_nchw, params, shortcut_params, stride):
    dn = ("NCHW", "OIHW", "NCHW")

    def conv(x, w, s, pad):
        return jax.lax.conv_general_dilated(x, w, (s, s), pad, dimension_numbers=dn)

    def bn(y, g, b):
        mean = jnp.mean(y, axis=(0, 2, 3), keepdims=True)
        var = jnp.var(y, axis=(0, 2, 3), keepdims=True)           # biased, training mode
        yn = (y - mean) * jax.lax.rsqrt(var + EPS)
        return yn * g.reshape(1, -1, 1, 1) + b.reshape(1, -1, 1, 1)

    out = jax.nn.relu(bn(conv(x_nchw, params["w1"], 1, "VALID"),
                         params["g1"], params["b1"]))
    out = jax.nn.relu(bn(conv(out, params["w2"], stride, ((1, 1), (1, 1))),
                         params["g2"], params["b2"]))
    out = bn(conv(out, params["w3"], 1, "VALID"), params["g3"], params["b3"])
    if shortcut_params is not None:
        res = bn(conv(x_nchw, shortcut_params["ws"], stride, "VALID"),
                 shortcut_params["gs"], shortcut_params["bs"])
    else:
        res = x_nchw
    return jax.nn.relu(out + res)


# --------------------------------- main ------------------------------------ #

if __name__ == "__main__":
    key = jax.random.PRNGKey(0)
    k_x, k_p, k_s = jax.random.split(key, 3)

    N, in_planes, H, W = 2, 4, 16, 16
    planes, stride = 4, 1                     # in_planes != 4*planes -> projection shortcut

    x = jax.random.normal(k_x, (N, in_planes, H, W), jnp.float32)
    params = init_bottleneck_params(k_p, in_planes, planes)
    needs_proj = (stride != 1) or (in_planes != EXPANSION * planes)
    shortcut_params = init_shortcut_params(k_s, in_planes, planes) if needs_proj else None

    fwd = jax.jit(lambda xx, p, sp: bottleneck_forward(xx, p, sp, stride))
    out = jax.block_until_ready(fwd(x, params, shortcut_params))

    expected_shape = (N, EXPANSION * planes, H // stride, W // stride)
    assert out.shape == expected_shape, (out.shape, expected_shape)
    assert bool(jnp.all(jnp.isfinite(out)))
    assert bool(jnp.all(out >= 0.0))          # final ReLU

    ref = _reference_bottleneck(x, params, shortcut_params, stride)
    max_err = float(jnp.max(jnp.abs(out - ref)))
    assert max_err < 0.5, max_err             # bf16 MXU feed / intermediates vs f32 ref

    print("KERNEL_OK")
</pallas_src>

<mosaic_0001>
module attributes {stable_mosaic.version = 11 : i64} {
  func.func @_matmul_stats_kernel(%arg0: i32, %arg1: memref<512x4xbf16, #tpu.memory_space<vmem>>, %arg2: memref<4x4xbf16, #tpu.memory_space<vmem>>, %arg3: memref<512x4xbf16, #tpu.memory_space<vmem>>, %arg4: memref<1x2x4xf32, #tpu.memory_space<vmem>>) attributes {dimension_semantics = [#tpu.dimension_semantics<parallel>], iteration_bounds = array<i64: 1>, scalar_prefetch = 0 : i64, scratch_operands = 0 : i64, tpu.core_type = #tpu.core_type<tc>, window_params = [{transform_indices = @transform_0, window_bounds = array<i64: 512, 4>}, {pipeline_mode = #tpu.pipeline_mode<synchronous>, transform_indices = @transform_1, window_bounds = array<i64: 4, 4>}, {transform_indices = @transform_2, window_bounds = array<i64: 512, 4>}, {transform_indices = @transform_3, window_bounds = array<i64: 1, 2, 4>}]} {
    %c0 = arith.constant 0 : index
    %c0_0 = arith.constant 0 : index
    %0 = vector.load %arg1[%c0, %c0_0] : memref<512x4xbf16, #tpu.memory_space<vmem>>, vector<512x4xbf16>
    %c0_1 = arith.constant 0 : index
    %c0_2 = arith.constant 0 : index
    %1 = vector.load %arg2[%c0_1, %c0_2] : memref<4x4xbf16, #tpu.memory_space<vmem>>, vector<4x4xbf16>
    %cst = arith.constant dense<0.000000e+00> : vector<512x4xf32>
    %2 = tpu.matmul %0, %1, %cst {dimension_numbers = #tpu.dot_dimension_numbers<[1], [0], [0], [1], [0, 0, 1, 1], [], []>} : vector<512x4xbf16>, vector<4x4xbf16>, vector<512x4xf32> -> vector<512x4xf32>
    %3 = arith.truncf %2 : vector<512x4xf32> to vector<512x4xbf16>
    %c0_3 = arith.constant 0 : index
    %c0_4 = arith.constant 0 : index
    %4 = vector.load %arg3[%c0_3, %c0_4] : memref<512x4xbf16, #tpu.memory_space<vmem>>, vector<512x4xbf16>
    tpu.vector_store %arg3[%c0_3, %c0_4], %3 {strides = array<i32>} : memref<512x4xbf16, #tpu.memory_space<vmem>>, vector<512x4xbf16>,
    %cst_5 = arith.constant dense<0.000000e+00> : vector<4xf32>
    %5 = vector.multi_reduction <add>, %2, %cst_5 [0] : vector<512x4xf32> to vector<4xf32>
    %6 = vector.shape_cast %5 : vector<4xf32> to vector<1x4xf32>
    %c0_6 = arith.constant 0 : index
    %c0_7 = arith.constant 0 : index
    %c0_8 = arith.constant 0 : index
    %7 = vector.load %arg4[%c0_6, %c0_7, %c0_8] : memref<1x2x4xf32, #tpu.memory_space<vmem>>, vector<1x1x4xf32>
    %8 = vector.shape_cast %7 : vector<1x1x4xf32> to vector<1x4xf32>
    %9 = vector.shape_cast %6 : vector<1x4xf32> to vector<1x1x4xf32>
    tpu.vector_store %arg4[%c0_6, %c0_7, %c0_8], %9 {strides = array<i32>} : memref<1x2x4xf32, #tpu.memory_space<vmem>>, vector<1x1x4xf32>,
    %10 = arith.mulf %2, %2 : vector<512x4xf32>
    %cst_9 = arith.constant dense<0.000000e+00> : vector<4xf32>
    %11 = vector.multi_reduction <add>, %10, %cst_9 [0] : vector<512x4xf32> to vector<4xf32>
    %12 = vector.shape_cast %11 : vector<4xf32> to vector<1x4xf32>
    %c0_10 = arith.constant 0 : index
    %c1 = arith.constant 1 : index
    %c0_11 = arith.constant 0 : index
    %13 = vector.load %arg4[%c0_10, %c1, %c0_11] : memref<1x2x4xf32, #tpu.memory_space<vmem>>, vector<1x1x4xf32>
    %14 = vector.shape_cast %13 : vector<1x1x4xf32> to vector<1x4xf32>
    %15 = vector.shape_cast %12 : vector<1x4xf32> to vector<1x1x4xf32>
    tpu.vector_store %arg4[%c0_10, %c1, %c0_11], %15 {strides = array<i32>} : memref<1x2x4xf32, #tpu.memory_space<vmem>>, vector<1x1x4xf32>,
    return
  }
  func.func @transform_0(%arg0: i32) -> (i32, i32) {
    %c0_i32 = arith.constant 0 : i32
    %c0_i32_0 = arith.constant 0 : i32
    return %arg0, %c0_i32 : i32, i32
  }
  func.func @transform_1(%arg0: i32) -> (i32, i32) {
    %c0_i32 = arith.constant 0 : i32
    %c0_i32_0 = arith.constant 0 : i32
    %c0_i32_1 = arith.constant 0 : i32
    return %c0_i32, %c0_i32_0 : i32, i32
  }
  func.func @transform_2(%arg0: i32) -> (i32, i32) {
    %c0_i32 = arith.constant 0 : i32
    %c0_i32_0 = arith.constant 0 : i32
    return %arg0, %c0_i32 : i32, i32
  }
  func.func @transform_3(%arg0: i32) -> (i32, i32, i32) {
    %c0_i32 = arith.constant 0 : i32
    %c0_i32_0 = arith.constant 0 : i32
    %c0_i32_1 = arith.constant 0 : i32
    return %arg0, %c0_i32, %c0_i32_0 : i32, i32, i32
  }
}

module attributes {stable_mosaic.version = 11 : i64} {
  func.func @_bn1_relu_conv3x3_stats_kernel(%arg0: i32, %arg1: memref<1x16x16x4xbf16, #tpu.memory_space<vmem>>, %arg2: memref<1x4xf32, #tpu.memory_space<vmem>>, %arg3: memref<1x4xf32, #tpu.memory_space<vmem>>, %arg4: memref<36x4xbf16, #tpu.memory_space<vmem>>, %arg5: memref<1x16x16x4xbf16, #tpu.memory_space<vmem>>, %arg6: memref<1x2x4xf32, #tpu.memory_space<vmem>>, %arg7: memref<18x18x4xbf16, #tpu.memory_space<vmem>>, %arg8: memref<256x36xbf16, #tpu.memory_space<vmem>>) attributes {dimension_semantics = [#tpu.dimension_semantics<parallel>], iteration_bounds = array<i64: 2>, scalar_prefetch = 0 : i64, scratch_operands = 2 : i64, tpu.core_type = #tpu.core_type<tc>, window_params = [{transform_indices = @transform_0, window_bounds = array<i64: 1, 16, 16, 4>}, {pipeline_mode = #tpu.pipeline_mode<synchronous>, transform_indices = @transform_1, window_bounds = array<i64: 1, 4>}, {pipeline_mode = #tpu.pipeline_mode<synchronous>, transform_indices = @transform_2, window_bounds = array<i64: 1, 4>}, {pipeline_mode = #tpu.pipeline_mode<synchronous>, transform_indices = @transform_3, window_bounds = array<i64: 36, 4>}, {transform_indices = @transform_4, window_bounds = array<i64: 1, 16, 16, 4>}, {transform_indices = @transform_5, window_bounds = array<i64: 1, 2, 4>}]} {
    %c0 = arith.constant 0 : index
    %c0_0 = arith.constant 0 : index
    %c0_1 = arith.constant 0 : index
    %c0_2 = arith.constant 0 : index
    %0 = vector.load %arg1[%c0, %c0_0, %c0_1, %c0_2] : memref<1x16x16x4xbf16, #tpu.memory_space<vmem>>, vector<1x16x16x4xbf16>
    %1 = arith.extf %0 : vector<1x16x16x4xbf16> to vector<1x16x16x4xf32>
    %c0_3 = arith.constant 0 : index
    %c0_4 = arith.constant 0 : index
    %2 = vector.load %arg2[%c0_3, %c0_4] : memref<1x4xf32, #tpu.memory_space<vmem>>, vector<1x4xf32>
    %3 = vector.shape_cast %2 : vector<1x4xf32> to vector<1x1x1x4xf32>
    %4 = vector.broadcast %3 : vector<1x1x1x4xf32> to vector<1x16x16x4xf32>
    %5 = arith.mulf %1, %4 : vector<1x16x16x4xf32>
    %c0_5 = arith.constant 0 : index
    %c0_6 = arith.constant 0 : index
    %6 = vector.load %arg3[%c0_5, %c0_6] : memref<1x4xf32, #tpu.memory_space<vmem>>, vector<1x4xf32>
    %7 = vector.shape_cast %6 : vector<1x4xf32> to vector<1x1x1x4xf32>
    %8 = vector.broadcast %7 : vector<1x1x1x4xf32> to vector<1x16x16x4xf32>
    %9 = arith.addf %5, %8 : vector<1x16x16x4xf32>
    %cst = arith.constant 0.000000e+00 : f32
    %10 = vector.broadcast %cst : f32 to vector<1x16x16x4xf32>
    %11 = arith.maximumf %9, %10 : vector<1x16x16x4xf32>
    %cst_7 = arith.constant 0.000000e+00 : bf16
    %12 = vector.broadcast %cst_7 : bf16 to vector<18x18x4xbf16>
    %c0_8 = arith.constant 0 : index
    %c0_9 = arith.constant 0 : index
    %c0_10 = arith.constant 0 : index
    %13 = vector.load %arg7[%c0_8, %c0_9, %c0_10] : memref<18x18x4xbf16, #tpu.memory_space<vmem>>, vector<18x18x4xbf16>
    tpu.vector_store %arg7[%c0_8, %c0_9, %c0_10], %12 {strides = array<i32>} : memref<18x18x4xbf16, #tpu.memory_space<vmem>>, vector<18x18x4xbf16>,
    %14 = vector.shape_cast %11 : vector<1x16x16x4xf32> to vector<16x16x4xf32>
    %15 = arith.truncf %14 : vector<16x16x4xf32> to vector<16x16x4xbf16>
    %c1 = arith.constant 1 : index
    %c1_11 = arith.constant 1 : index
    %c0_12 = arith.constant 0 : index
    %16 = vector.load %arg7[%c1, %c1_11, %c0_12] : memref<18x18x4xbf16, #tpu.memory_space<vmem>>, vector<16x16x4xbf16>
    tpu.vector_store %arg7[%c1, %c1_11, %c0_12], %15 {strides = array<i32>} : memref<18x18x4xbf16, #tpu.memory_space<vmem>>, vector<16x16x4xbf16>,
    %c0_13 = arith.constant 0 : index
    %c0_14 = arith.constant 0 : index
    %c0_15 = arith.constant 0 : index
    %17 = vector.load %arg7[%c0_13, %c0_14, %c0_15] : memref<18x18x4xbf16, #tpu.memory_space<vmem>>, vector<18x18x4xbf16>
    %18 = vector.extract_strided_slice %17 {offsets = [0, 0, 0], sizes = [16, 16, 4], strides = [1, 1, 1]} : vector<18x18x4xbf16> to vector<16x16x4xbf16>
    %19 = vector.shape_cast %18 : vector<16x16x4xbf16> to vector<256x4xbf16>
    %c0_16 = arith.constant 0 : index
    %c0_17 = arith.constant 0 : index
    %20 = vector.load %arg8[%c0_16, %c0_17] : memref<256x36xbf16, #tpu.memory_space<vmem>>, vector<256x4xbf16>
    tpu.vector_store %arg8[%c0_16, %c0_17], %19 {strides = array<i32>} : memref<256x36xbf16, #tpu.memory_space<vmem>>, vector<256x4xbf16>,
    %21 = vector.extract_strided_slice %17 {offsets = [0, 1, 0], sizes = [16, 16, 4], strides = [1, 1, 1]} : vector<18x18x4xbf16> to vector<16x16x4xbf16>
    %22 = vector.shape_cast %21 : vector<16x16x4xbf16> to vector<256x4xbf16>
    %c0_18 = arith.constant 0 : index
    %c4 = arith.constant 4 : index
    %23 = vector.load %arg8[%c0_18, %c4] : memref<256x36xbf16, #tpu.memory_space<vmem>>, vector<256x4xbf16>
    tpu.vector_store %arg8[%c0_18, %c4], %22 {strides = array<i32>} : memref<256x36xbf16, #tpu.memory_space<vmem>>, vector<256x4xbf16>,
    %24 = vector.extract_strided_slice %17 {offsets = [0, 2, 0], sizes = [16, 16, 4], strides = [1, 1, 1]} : vector<18x18x4xbf16> to vector<16x16x4xbf16>
    %25 = vector.shape_cast %24 : vector<16x16x4xbf16> to vector<256x4xbf16>
    %c0_19 = arith.constant 0 : index
    %c8 = arith.constant 8 : index
    %26 = vector.load %arg8[%c0_19, %c8] : memref<256x36xbf16, #tpu.memory_space<vmem>>, vector<256x4xbf16>
    tpu.vector_store %arg8[%c0_19, %c8], %25 {strides = array<i32>} : memref<256x36xbf16, #tpu.memory_space<vmem>>, vector<256x4xbf16>,
    %27 = vector.extract_strided_slice %17 {offsets = [1, 0, 0], sizes = [16, 16, 4], strides = [1, 1, 1]} : vector<18x18x4xbf16> to vector<16x16x4xbf16>
    %28 = vector.shape_cast %27 : vector<16x16x4xbf16> to vector<256x4xbf16>
    %c0_20 = arith.constant 0 : index
    %c12 = arith.constant 12 : index
    %29 = vector.load %arg8[%c0_20, %c12] : memref<256x36xbf16, #tpu.memory_space<vmem>>, vector<256x4xbf16>
    tpu.vector_store %arg8[%c0_20, %c12], %28 {strides = array<i32>} : memref<256x36xbf16, #tpu.memory_space<vmem>>, vector<256x4xbf16>,
    %30 = vector.extract_strided_slice %17 {offsets = [1, 1, 0], sizes = [16, 16, 4], strides = [1, 1, 1]} : vector<18x18x4xbf16> to vector<16x16x4xbf16>
    %31 = vector.shape_cast %30 : vector<16x16x4xbf16> to vector<256x4xbf16>
    %c0_21 = arith.constant 0 : index
    %c16 = arith.constant 16 : index
    %32 = vector.load %arg8[%c0_21, %c16] : memref<256x36xbf16, #tpu.memory_space<vmem>>, vector<256x4xbf16>
    tpu.vector_store %arg8[%c0_21, %c16], %31 {strides = array<i32>} : memref<256x36xbf16, #tpu.memory_space<vmem>>, vector<256x4xbf16>,
    %33 = vector.extract_strided_slice %17 {offsets = [1, 2, 0], sizes = [16, 16, 4], strides = [1, 1, 1]} : vector<18x18x4xbf16> to vector<16x16x4xbf16>
    %34 = vector.shape_cast %33 : vector<16x16x4xbf16> to vector<256x4xbf16>
    %c0_22 = arith.constant 0 : index
    %c20 = arith.constant 20 : index
    %35 = vector.load %arg8[%c0_22, %c20] : memref<256x36xbf16, #tpu.memory_space<vmem>>, vector<256x4xbf16>
    tpu.vector_store %arg8[%c0_22, %c20], %34 {strides = array<i32>} : memref<256x36xbf16, #tpu.memory_space<vmem>>, vector<256x4xbf16>,
    %36 = vector.extract_strided_slice %17 {offsets = [2, 0, 0], sizes = [16, 16, 4], strides = [1, 1, 1]} : vector<18x18x4xbf16> to vector<16x16x4xbf16>
    %37 = vector.shape_cast %36 : vector<16x16x4xbf16> to vector<256x4xbf16>
    %c0_23 = arith.constant 0 : index
    %c24 = arith.constant 24 : index
    %38 = vector.load %arg8[%c0_23, %c24] : memref<256x36xbf16, #tpu.memory_space<vmem>>, vector<256x4xbf16>
    tpu.vector_store %arg8[%c0_23, %c24], %37 {strides = array<i32>} : memref<256x36xbf16, #tpu.memory_space<vmem>>, vector<256x4xbf16>,
    %39 = vector.extract_strided_slice %17 {offsets = [2, 1, 0], sizes = [16, 16, 4], strides = [1, 1, 1]} : vector<18x18x4xbf16> to vector<16x16x4xbf16>
    %40 = vector.shape_cast %39 : vector<16x16x4xbf16> to vector<256x4xbf16>
    %c0_24 = arith.constant 0 : index
    %c28 = arith.constant 28 : index
    %41 = vector.load %arg8[%c0_24, %c28] : memref<256x36xbf16, #tpu.memory_space<vmem>>, vector<256x4xbf16>
    tpu.vector_store %arg8[%c0_24, %c28], %40 {strides = array<i32>} : memref<256x36xbf16, #tpu.memory_space<vmem>>, vector<256x4xbf16>,
    %42 = vector.extract_strided_slice %17 {offsets = [2, 2, 0], sizes = [16, 16, 4], strides = [1, 1, 1]} : vector<18x18x4xbf16> to vector<16x16x4xbf16>
    %43 = vector.shape_cast %42 : vector<16x16x4xbf16> to vector<256x4xbf16>
    %c0_25 = arith.constant 0 : index
    %c32 = arith.constant 32 : index
    %44 = vector.load %arg8[%c0_25, %c32] : memref<256x36xbf16, #tpu.memory_space<vmem>>, vector<256x4xbf16>
    tpu.vector_store %arg8[%c0_25, %c32], %43 {strides = array<i32>} : memref<256x36xbf16, #tpu.memory_space<vmem>>, vector<256x4xbf16>,
    %c0_26 = arith.constant 0 : index
    %c0_27 = arith.constant 0 : index
    %45 = vector.load %arg8[%c0_26, %c0_27] : memref<256x36xbf16, #tpu.memory_space<vmem>>, vector<256x36xbf16>
    %c0_28 = arith.constant 0 : index
    %c0_29 = arith.constant 0 : index
    %46 = vector.load %arg4[%c0_28, %c0_29] : memref<36x4xbf16, #tpu.memory_space<vmem>>, vector<36x4xbf16>
    %cst_30 = arith.constant dense<0.000000e+00> : vector<256x4xf32>
    %47 = tpu.matmul %45, %46, %cst_30 {dimension_numbers = #tpu.dot_dimension_numbers<[1], [0], [0], [1], [0, 0, 1, 1], [], []>} : vector<256x36xbf16>, vector<36x4xbf16>, vector<256x4xf32> -> vector<256x4xf32>
    %48 = vector.shape_cast %47 : vector<256x4xf32> to vector<16x16x4xf32>
    %49 = vector.shape_cast %48 : vector<16x16x4xf32> to vector<1x16x16x4xf32>
    %50 = arith.truncf %49 : vector<1x16x16x4xf32> to vector<1x16x16x4xbf16>
    %c0_31 = arith.constant 0 : index
    %c0_32 = arith.constant 0 : index
    %c0_33 = arith.constant 0 : index
    %c0_34 = arith.constant 0 : index
    %51 = vector.load %arg5[%c0_31, %c0_32, %c0_33, %c0_34] : memref<1x16x16x4xbf16, #tpu.memory_space<vmem>>, vector<1x16x16x4xbf16>
    tpu.vector_store %arg5[%c0_31, %c0_32, %c0_33, %c0_34], %50 {strides = array<i32>} : memref<1x16x16x4xbf16, #tpu.memory_space<vmem>>, vector<1x16x16x4xbf16>,
    %52 = vector.shape_cast %48 : vector<16x16x4xf32> to vector<256x4xf32>
    %cst_35 = arith.constant dense<0.000000e+00> : vector<4xf32>
    %53 = vector.multi_reduction <add>, %52, %cst_35 [0] : vector<256x4xf32> to vector<4xf32>
    %54 = vector.shape_cast %53 : vector<4xf32> to vector<1x4xf32>
    %c0_36 = arith.constant 0 : index
    %c0_37 = arith.constant 0 : index
    %c0_38 = arith.constant 0 : index
    %55 = vector.load %arg6[%c0_36, %c0_37, %c0_38] : memref<1x2x4xf32, #tpu.memory_space<vmem>>, vector<1x1x4xf32>
    %56 = vector.shape_cast %55 : vector<1x1x4xf32> to vector<1x4xf32>
    %57 = vector.shape_cast %54 : vector<1x4xf32> to vector<1x1x4xf32>
    tpu.vector_store %arg6[%c0_36, %c0_37, %c0_38], %57 {strides = array<i32>} : memref<1x2x4xf32, #tpu.memory_space<vmem>>, vector<1x1x4xf32>,
    %58 = arith.mulf %52, %52 : vector<256x4xf32>
    %cst_39 = arith.constant dense<0.000000e+00> : vector<4xf32>
    %59 = vector.multi_reduction <add>, %58, %cst_39 [0] : vector<256x4xf32> to vector<4xf32>
    %60 = vector.shape_cast %59 : vector<4xf32> to vector<1x4xf32>
    %c0_40 = arith.constant 0 : index
    %c1_41 = arith.constant 1 : index
    %c0_42 = arith.constant 0 : index
    %61 = vector.load %arg6[%c0_40, %c1_41, %c0_42] : memref<1x2x4xf32, #tpu.memory_space<vmem>>, vector<1x1x4xf32>
    %62 = vector.shape_cast %61 : vector<1x1x4xf32> to vector<1x4xf32>
    %63 = vector.shape_cast %60 : vector<1x4xf32> to vector<1x1x4xf32>
    tpu.vector_store %arg6[%c0_40, %c1_41, %c0_42], %63 {strides = array<i32>} : memref<1x2x4xf32, #tpu.memory_space<vmem>>, vector<1x1x4xf32>,
    return
  }
  func.func @transform_0(%arg0: i32) -> (i32, i32, i32, i32) {
    %c0_i32 = arith.constant 0 : i32
    %c0_i32_0 = arith.constant 0 : i32
    %c0_i32_1 = arith.constant 0 : i32
    %c0_i32_2 = arith.constant 0 : i32
    return %arg0, %c0_i32, %c0_i32_0, %c0_i32_1 : i32, i32, i32, i32
  }
  func.func @transform_1(%arg0: i32) -> (i32, i32) {
    %c0_i32 = arith.constant 0 : i32
    %c0_i32_0 = arith.constant 0 : i32
    %c0_i32_1 = arith.constant 0 : i32
    return %c0_i32, %c0_i32_0 : i32, i32
  }
  func.func @transform_2(%arg0: i32) -> (i32, i32) {
    %c0_i32 = arith.constant 0 : i32
    %c0_i32_0 = arith.constant 0 : i32
    %c0_i32_1 = arith.constant 0 : i32
    return %c0_i32, %c0_i32_0 : i32, i32
  }
  func.func @transform_3(%arg0: i32) -> (i32, i32) {
    %c0_i32 = arith.constant 0 : i32
    %c0_i32_0 = arith.constant 0 : i32
    %c0_i32_1 = arith.constant 0 : i32
    return %c0_i32, %c0_i32_0 : i32, i32
  }
  func.func @transform_4(%arg0: i32) -> (i32, i32, i32, i32) {
    %c0_i32 = arith.constant 0 : i32
    %c0_i32_0 = arith.constant 0 : i32
    %c0_i32_1 = arith.constant 0 : i32
    %c0_i32_2 = arith.constant 0 : i32
    return %arg0, %c0_i32, %c0_i32_0, %c0_i32_1 : i32, i32, i32, i32
  }
  func.func @transform_5(%arg0: i32) -> (i32, i32, i32) {
    %c0_i32 = arith.constant 0 : i32
    %c0_i32_0 = arith.constant 0 : i32
    %c0_i32_1 = arith.constant 0 : i32
    return %arg0, %c0_i32, %c0_i32_0 : i32, i32, i32
  }
}

module attributes {stable_mosaic.version = 11 : i64} {
  func.func @_bn2_relu_conv1x1_proj_kernel(%arg0: i32, %arg1: memref<512x4xbf16, #tpu.memory_space<vmem>>, %arg2: memref<1x4xf32, #tpu.memory_space<vmem>>, %arg3: memref<1x4xf32, #tpu.memory_space<vmem>>, %arg4: memref<4x16xbf16, #tpu.memory_space<vmem>>, %arg5: memref<512x4xbf16, #tpu.memory_space<vmem>>, %arg6: memref<4x16xbf16, #tpu.memory_space<vmem>>, %arg7: memref<512x16xbf16, #tpu.memory_space<vmem>>, %arg8: memref<512x16xbf16, #tpu.memory_space<vmem>>, %arg9: memref<1x2x16xf32, #tpu.memory_space<vmem>>, %arg10: memref<1x2x16xf32, #tpu.memory_space<vmem>>) attributes {dimension_semantics = [#tpu.dimension_semantics<parallel>], iteration_bounds = array<i64: 1>, scalar_prefetch = 0 : i64, scratch_operands = 0 : i64, tpu.core_type = #tpu.core_type<tc>, window_params = [{transform_indices = @transform_0, window_bounds = array<i64: 512, 4>}, {pipeline_mode = #tpu.pipeline_mode<synchronous>, transform_indices = @transform_1, window_bounds = array<i64: 1, 4>}, {pipeline_mode = #tpu.pipeline_mode<synchronous>, transform_indices = @transform_2, window_bounds = array<i64: 1, 4>}, {pipeline_mode = #tpu.pipeline_mode<synchronous>, transform_indices = @transform_3, window_bounds = array<i64: 4, 16>}, {transform_indices = @transform_4, window_bounds = array<i64: 512, 4>}, {pipeline_mode = #tpu.pipeline_mode<synchronous>, transform_indices = @transform_5, window_bounds = array<i64: 4, 16>}, {transform_indices = @transform_6, window_bounds = array<i64: 512, 16>}, {transform_indices = @transform_7, window_bounds = array<i64: 512, 16>}, {transform_indices = @transform_8, window_bounds = array<i64: 1, 2, 16>}, {transform_indices = @transform_9, window_bounds = array<i64: 1, 2, 16>}]} {
    %c0 = arith.constant 0 : index
    %c0_0 = arith.constant 0 : index
    %0 = vector.load %arg1[%c0, %c0_0] : memref<512x4xbf16, #tpu.memory_space<vmem>>, vector<512x4xbf16>
    %1 = arith.extf %0 : vector<512x4xbf16> to vector<512x4xf32>
    %c0_1 = arith.constant 0 : index
    %c0_2 = arith.constant 0 : index
    %2 = vector.load %arg2[%c0_1, %c0_2] : memref<1x4xf32, #tpu.memory_space<vmem>>, vector<1x4xf32>
    %3 = vector.broadcast %2 : vector<1x4xf32> to vector<512x4xf32>
    %4 = arith.mulf %1, %3 : vector<512x4xf32>
    %c0_3 = arith.constant 0 : index
    %c0_4 = arith.constant 0 : index
    %5 = vector.load %arg3[%c0_3, %c0_4] : memref<1x4xf32, #tpu.memory_space<vmem>>, vector<1x4xf32>
    %6 = vector.broadcast %5 : vector<1x4xf32> to vector<512x4xf32>
    %7 = arith.addf %4, %6 : vector<512x4xf32>
    %cst = arith.constant 0.000000e+00 : f32
    %8 = vector.broadcast %cst : f32 to vector<512x4xf32>
    %9 = arith.maximumf %7, %8 : vector<512x4xf32>
    %10 = arith.truncf %9 : vector<512x4xf32> to vector<512x4xbf16>
    %c0_5 = arith.constant 0 : index
    %c0_6 = arith.constant 0 : index
    %11 = vector.load %arg4[%c0_5, %c0_6] : memref<4x16xbf16, #tpu.memory_space<vmem>>, vector<4x16xbf16>
    %cst_7 = arith.constant dense<0.000000e+00> : vector<512x16xf32>
    %12 = tpu.matmul %10, %11, %cst_7 {dimension_numbers = #tpu.dot_dimension_numbers<[1], [0], [0], [1], [0, 0, 1, 1], [], []>} : vector<512x4xbf16>, vector<4x16xbf16>, vector<512x16xf32> -> vector<512x16xf32>
    %13 = arith.truncf %12 : vector<512x16xf32> to vector<512x16xbf16>
    %c0_8 = arith.constant 0 : index
    %c0_9 = arith.constant 0 : index
    %14 = vector.load %arg7[%c0_8, %c0_9] : memref<512x16xbf16, #tpu.memory_space<vmem>>, vector<512x16xbf16>
    tpu.vector_store %arg7[%c0_8, %c0_9], %13 {strides = array<i32>} : memref<512x16xbf16, #tpu.memory_space<vmem>>, vector<512x16xbf16>,
    %cst_10 = arith.constant dense<0.000000e+00> : vector<16xf32>
    %15 = vector.multi_reduction <add>, %12, %cst_10 [0] : vector<512x16xf32> to vector<16xf32>
    %16 = vector.shape_cast %15 : vector<16xf32> to vector<1x16xf32>
    %c0_11 = arith.constant 0 : index
    %c0_12 = arith.constant 0 : index
    %c0_13 = arith.constant 0 : index
    %17 = vector.load %arg9[%c0_11, %c0_12, %c0_13] : memref<1x2x16xf32, #tpu.memory_space<vmem>>, vector<1x1x16xf32>
    %18 = vector.shape_cast %17 : vector<1x1x16xf32> to vector<1x16xf32>
    %19 = vector.shape_cast %16 : vector<1x16xf32> to vector<1x1x16xf32>
    tpu.vector_store %arg9[%c0_11, %c0_12, %c0_13], %19 {strides = array<i32>} : memref<1x2x16xf32, #tpu.memory_space<vmem>>, vector<1x1x16xf32>,
    %20 = arith.mulf %12, %12 : vector<512x16xf32>
    %cst_14 = arith.constant dense<0.000000e+00> : vector<16xf32>
    %21 = vector.multi_reduction <add>, %20, %cst_14 [0] : vector<512x16xf32> to vector<16xf32>
    %22 = vector.shape_cast %21 : vector<16xf32> to vector<1x16xf32>
    %c0_15 = arith.constant 0 : index
    %c1 = arith.constant 1 : index
    %c0_16 = arith.constant 0 : index
    %23 = vector.load %arg9[%c0_15, %c1, %c0_16] : memref<1x2x16xf32, #tpu.memory_space<vmem>>, vector<1x1x16xf32>
    %24 = vector.shape_cast %23 : vector<1x1x16xf32> to vector<1x16xf32>
    %25 = vector.shape_cast %22 : vector<1x16xf32> to vector<1x1x16xf32>
    tpu.vector_store %arg9[%c0_15, %c1, %c0_16], %25 {strides = array<i32>} : memref<1x2x16xf32, #tpu.memory_space<vmem>>, vector<1x1x16xf32>,
    %c0_17 = arith.constant 0 : index
    %c0_18 = arith.constant 0 : index
    %26 = vector.load %arg5[%c0_17, %c0_18] : memref<512x4xbf16, #tpu.memory_space<vmem>>, vector<512x4xbf16>
    %c0_19 = arith.constant 0 : index
    %c0_20 = arith.constant 0 : index
    %27 = vector.load %arg6[%c0_19, %c0_20] : memref<4x16xbf16, #tpu.memory_space<vmem>>, vector<4x16xbf16>
    %cst_21 = arith.constant dense<0.000000e+00> : vector<512x16xf32>
    %28 = tpu.matmul %26, %27, %cst_21 {dimension_numbers = #tpu.dot_dimension_numbers<[1], [0], [0], [1], [0, 0, 1, 1], [], []>} : vector<512x4xbf16>, vector<4x16xbf16>, vector<512x16xf32> -> vector<512x16xf32>
    %29 = arith.truncf %28 : vector<512x16xf32> to vector<512x16xbf16>
    %c0_22 = arith.constant 0 : index
    %c0_23 = arith.constant 0 : index
    %30 = vector.load %arg8[%c0_22, %c0_23] : memref<512x16xbf16, #tpu.memory_space<vmem>>, vector<512x16xbf16>
    tpu.vector_store %arg8[%c0_22, %c0_23], %29 {strides = array<i32>} : memref<512x16xbf16, #tpu.memory_space<vmem>>, vector<512x16xbf16>,
    %cst_24 = arith.constant dense<0.000000e+00> : vector<16xf32>
    %31 = vector.multi_reduction <add>, %28, %cst_24 [0] : vector<512x16xf32> to vector<16xf32>
    %32 = vector.shape_cast %31 : vector<16xf32> to vector<1x16xf32>
    %c0_25 = arith.constant 0 : index
    %c0_26 = arith.constant 0 : index
    %c0_27 = arith.constant 0 : index
    %33 = vector.load %arg10[%c0_25, %c0_26, %c0_27] : memref<1x2x16xf32, #tpu.memory_space<vmem>>, vector<1x1x16xf32>
    %34 = vector.shape_cast %33 : vector<1x1x16xf32> to vector<1x16xf32>
    %35 = vector.shape_cast %32 : vector<1x16xf32> to vector<1x1x16xf32>
    tpu.vector_store %arg10[%c0_25, %c0_26, %c0_27], %35 {strides = array<i32>} : memref<1x2x16xf32, #tpu.memory_space<vmem>>, vector<1x1x16xf32>,
    %36 = arith.mulf %28, %28 : vector<512x16xf32>
    %cst_28 = arith.constant dense<0.000000e+00> : vector<16xf32>
    %37 = vector.multi_reduction <add>, %36, %cst_28 [0] : vector<512x16xf32> to vector<16xf32>
    %38 = vector.shape_cast %37 : vector<16xf32> to vector<1x16xf32>
    %c0_29 = arith.constant 0 : index
    %c1_30 = arith.constant 1 : index
    %c0_31 = arith.constant 0 : index
    %39 = vector.load %arg10[%c0_29, %c1_30, %c0_31] : memref<1x2x16xf32, #tpu.memory_space<vmem>>, vector<1x1x16xf32>
    %40 = vector.shape_cast %39 : vector<1x1x16xf32> to vector<1x16xf32>
    %41 = vector.shape_cast %38 : vector<1x16xf32> to vector<1x1x16xf32>
    tpu.vector_store %arg10[%c0_29, %c1_30, %c0_31], %41 {strides = array<i32>} : memref<1x2x16xf32, #tpu.memory_space<vmem>>, vector<1x1x16xf32>,
    return
  }
  func.func @transform_0(%arg0: i32) -> (i32, i32) {
    %c0_i32 = arith.constant 0 : i32
    %c0_i32_0 = arith.constant 0 : i32
    return %arg0, %c0_i32 : i32, i32
  }
  func.func @transform_1(%arg0: i32) -> (i32, i32) {
    %c0_i32 = arith.constant 0 : i32
    %c0_i32_0 = arith.constant 0 : i32
    %c0_i32_1 = arith.constant 0 : i32
    return %c0_i32, %c0_i32_0 : i32, i32
  }
  func.func @transform_2(%arg0: i32) -> (i32, i32) {
    %c0_i32 = arith.constant 0 : i32
    %c0_i32_0 = arith.constant 0 : i32
    %c0_i32_1 = arith.constant 0 : i32
    return %c0_i32, %c0_i32_0 : i32, i32
  }
  func.func @transform_3(%arg0: i32) -> (i32, i32) {
    %c0_i32 = arith.constant 0 : i32
    %c0_i32_0 = arith.constant 0 : i32
    %c0_i32_1 = arith.constant 0 : i32
    return %c0_i32, %c0_i32_0 : i32, i32
  }
  func.func @transform_4(%arg0: i32) -> (i32, i32) {
    %c0_i32 = arith.constant 0 : i32
    %c0_i32_0 = arith.constant 0 : i32
    return %arg0, %c0_i32 : i32, i32
  }
  func.func @transform_5(%arg0: i32) -> (i32, i32) {
    %c0_i32 = arith.constant 0 : i32
    %c0_i32_0 = arith.constant 0 : i32
    %c0_i32_1 = arith.constant 0 : i32
    return %c0_i32, %c0_i32_0 : i32, i32
  }
  func.func @transform_6(%arg0: i32) -> (i32, i32) {
    %c0_i32 = arith.constant 0 : i32
    %c0_i32_0 = arith.constant 0 : i32
    return %arg0, %c0_i32 : i32, i32
  }
  func.func @transform_7(%arg0: i32) -> (i32, i32) {
    %c0_i32 = arith.constant 0 : i32
    %c0_i32_0 = arith.constant 0 : i32
    return %arg0, %c0_i32 : i32, i32
  }
  func.func @transform_8(%arg0: i32) -> (i32, i32, i32) {
    %c0_i32 = arith.constant 0 : i32
    %c0_i32_0 = arith.constant 0 : i32
    %c0_i32_1 = arith.constant 0 : i32
    return %arg0, %c0_i32, %c0_i32_0 : i32, i32, i32
  }
  func.func @transform_9(%arg0: i32) -> (i32, i32, i32) {
    %c0_i32 = arith.constant 0 : i32
    %c0_i32_0 = arith.constant 0 : i32
    %c0_i32_1 = arith.constant 0 : i32
    return %arg0, %c0_i32, %c0_i32_0 : i32, i32, i32
  }
}

module attributes {stable_mosaic.version = 11 : i64} {
  func.func @_bn3_projbn_add_relu_kernel(%arg0: i32, %arg1: memref<512x16xbf16, #tpu.memory_space<vmem>>, %arg2: memref<1x16xf32, #tpu.memory_space<vmem>>, %arg3: memref<1x16xf32, #tpu.memory_space<vmem>>, %arg4: memref<512x16xbf16, #tpu.memory_space<vmem>>, %arg5: memref<1x16xf32, #tpu.memory_space<vmem>>, %arg6: memref<1x16xf32, #tpu.memory_space<vmem>>, %arg7: memref<512x16xbf16, #tpu.memory_space<vmem>>) attributes {dimension_semantics = [#tpu.dimension_semantics<parallel>], iteration_bounds = array<i64: 1>, scalar_prefetch = 0 : i64, scratch_operands = 0 : i64, tpu.core_type = #tpu.core_type<tc>, window_params = [{transform_indices = @transform_0, window_bounds = array<i64: 512, 16>}, {pipeline_mode = #tpu.pipeline_mode<synchronous>, transform_indices = @transform_1, window_bounds = array<i64: 1, 16>}, {pipeline_mode = #tpu.pipeline_mode<synchronous>, transform_indices = @transform_2, window_bounds = array<i64: 1, 16>}, {transform_indices = @transform_3, window_bounds = array<i64: 512, 16>}, {pipeline_mode = #tpu.pipeline_mode<synchronous>, transform_indices = @transform_4, window_bounds = array<i64: 1, 16>}, {pipeline_mode = #tpu.pipeline_mode<synchronous>, transform_indices = @transform_5, window_bounds = array<i64: 1, 16>}, {transform_indices = @transform_6, window_bounds = array<i64: 512, 16>}]} {
    %c0 = arith.constant 0 : index
    %c0_0 = arith.constant 0 : index
    %0 = vector.load %arg4[%c0, %c0_0] : memref<512x16xbf16, #tpu.memory_space<vmem>>, vector<512x16xbf16>
    %1 = arith.extf %0 : vector<512x16xbf16> to vector<512x16xf32>
    %c0_1 = arith.constant 0 : index
    %c0_2 = arith.constant 0 : index
    %2 = vector.load %arg5[%c0_1, %c0_2] : memref<1x16xf32, #tpu.memory_space<vmem>>, vector<1x16xf32>
    %3 = vector.broadcast %2 : vector<1x16xf32> to vector<512x16xf32>
    %4 = arith.mulf %1, %3 : vector<512x16xf32>
    %c0_3 = arith.constant 0 : index
    %c0_4 = arith.constant 0 : index
    %5 = vector.load %arg6[%c0_3, %c0_4] : memref<1x16xf32, #tpu.memory_space<vmem>>, vector<1x16xf32>
    %6 = vector.broadcast %5 : vector<1x16xf32> to vector<512x16xf32>
    %7 = arith.addf %4, %6 : vector<512x16xf32>
    %c0_5 = arith.constant 0 : index
    %c0_6 = arith.constant 0 : index
    %8 = vector.load %arg1[%c0_5, %c0_6] : memref<512x16xbf16, #tpu.memory_space<vmem>>, vector<512x16xbf16>
    %9 = arith.extf %8 : vector<512x16xbf16> to vector<512x16xf32>
    %c0_7 = arith.constant 0 : index
    %c0_8 = arith.constant 0 : index
    %10 = vector.load %arg2[%c0_7, %c0_8] : memref<1x16xf32, #tpu.memory_space<vmem>>, vector<1x16xf32>
    %11 = vector.broadcast %10 : vector<1x16xf32> to vector<512x16xf32>
    %12 = arith.mulf %9, %11 : vector<512x16xf32>
    %c0_9 = arith.constant 0 : index
    %c0_10 = arith.constant 0 : index
    %13 = vector.load %arg3[%c0_9, %c0_10] : memref<1x16xf32, #tpu.memory_space<vmem>>, vector<1x16xf32>
    %14 = vector.broadcast %13 : vector<1x16xf32> to vector<512x16xf32>
    %15 = arith.addf %12, %14 : vector<512x16xf32>
    %16 = arith.addf %15, %7 : vector<512x16xf32>
    %cst = arith.constant 0.000000e+00 : f32
    %17 = vector.broadcast %cst : f32 to vector<512x16xf32>
    %18 = arith.maximumf %16, %17 : vector<512x16xf32>
    %19 = arith.truncf %18 : vector<512x16xf32> to vector<512x16xbf16>
    %c0_11 = arith.constant 0 : index
    %c0_12 = arith.constant 0 : index
    %20 = vector.load %arg7[%c0_11, %c0_12] : memref<512x16xbf16, #tpu.memory_space<vmem>>, vector<512x16xbf16>
    tpu.vector_store %arg7[%c0_11, %c0_12], %19 {strides = array<i32>} : memref<512x16xbf16, #tpu.memory_space<vmem>>, vector<512x16xbf16>,
    return
  }
  func.func @transform_0(%arg0: i32) -> (i32, i32) {
    %c0_i32 = arith.constant 0 : i32
    %c0_i32_0 = arith.constant 0 : i32
    return %arg0, %c0_i32 : i32, i32
  }
  func.func @transform_1(%arg0: i32) -> (i32, i32) {
    %c0_i32 = arith.constant 0 : i32
    %c0_i32_0 = arith.constant 0 : i32
    %c0_i32_1 = arith.constant 0 : i32
    return %c0_i32, %c0_i32_0 : i32, i32
  }
  func.func @transform_2(%arg0: i32) -> (i32, i32) {
    %c0_i32 = arith.constant 0 : i32
    %c0_i32_0 = arith.constant 0 : i32
    %c0_i32_1 = arith.constant 0 : i32
    return %c0_i32, %c0_i32_0 : i32, i32
  }
  func.func @transform_3(%arg0: i32) -> (i32, i32) {
    %c0_i32 = arith.constant 0 : i32
    %c0_i32_0 = arith.constant 0 : i32
    return %arg0, %c0_i32 : i32, i32
  }
  func.func @transform_4(%arg0: i32) -> (i32, i32) {
    %c0_i32 = arith.constant 0 : i32
    %c0_i32_0 = arith.constant 0 : i32
    %c0_i32_1 = arith.constant 0 : i32
    return %c0_i32, %c0_i32_0 : i32, i32
  }
  func.func @transform_5(%arg0: i32) -> (i32, i32) {
    %c0_i32 = arith.constant 0 : i32
    %c0_i32_0 = arith.constant 0 : i32
    %c0_i32_1 = arith.constant 0 : i32
    return %c0_i32, %c0_i32_0 : i32, i32
  }
  func.func @transform_6(%arg0: i32) -> (i32, i32) {
    %c0_i32 = arith.constant 0 : i32
    %c0_i32_0 = arith.constant 0 : i32
    return %arg0, %c0_i32 : i32, i32
  }
}

</mosaic_0001>

<llo_original>
// kernel: _lambda_.4
$region0: #{_lambda_.4}
  #allocation0 [shape = 'u32[]', space=smem, size = 0x4, offset = 0x4, fixed_abs, tag = 'smem constant byte address 0x4 - core index']
  #allocation1 [shape = 'u32[72,128]{1,0:T(1,128)}', space=vmem, size = 0x9000, scoped, tag = 'internal scratch']
  %s0 = inlined_call_operand.vmem [shape: bf16[512,4], index: 0, kind: input, shape index: {}]
  %s1 = inlined_call_operand.vmem [shape: bf16[4,4], index: 1, kind: input, shape index: {}]
  %s2 = inlined_call_operand.vmem [shape: bf16[512,4], index: 2, kind: output, shape index: {0}]
  %s3 = inlined_call_operand.vmem [shape: f32[1,2,4], index: 3, kind: output, shape index: {1}]
  %4 = xla_tuple %s2, %s3
  %s5 = sld [smem:[#allocation0]]
  $region26: #{_lambda_.4} parent=0
    _
  %s7 = ssub.s32 1, %s5
  %s8 = scalar_select 0, %s7, %s5
  // Predicated region
  $region2: #{_lambda_.4} parent=0 // pred_check
    _
  $region3: #{_lambda_.4} parent=0 // pred_check_branch
    %10 = sbr.rel (0) target = $region5
  $region4: #{_lambda_.4} parent=0 // pred_region
    _
  $region5: #{_lambda_.4} parent=0 // pred_fallthru
    _
  // Predicated region
  $region6: #{_lambda_.4} parent=0 // pred_check
    _
  $region7: #{_lambda_.4} parent=0 // pred_check_branch
    %12 = sbr.rel (0) target = $region9
  $region8: #{_lambda_.4} parent=0 // pred_region
    _
  $region9: #{_lambda_.4} parent=0 // pred_fallthru
    _
  %v14 = vld [vmem:[%s0] sm:$0xf]
  %v15 = vld [vmem:[%s0 + $0x4] sm:$0xf]
  %v16 = vld [vmem:[%s0 + $0x8] sm:$0xf]
  %v17 = vld [vmem:[%s0 + $0xc] sm:$0xf]
  %v18 = vld [vmem:[%s0 + $0x10] sm:$0xf]
  %v19 = vld [vmem:[%s0 + $0x14] sm:$0xf]
  %v20 = vld [vmem:[%s0 + $0x18] sm:$0xf]
  %v21 = vld [vmem:[%s0 + $0x1c] sm:$0xf]
  %v22 = vld [vmem:[%s0 + $0x20] sm:$0xf]
  %v23 = vld [vmem:[%s0 + $0x24] sm:$0xf]
  %v24 = vld [vmem:[%s0 + $0x28] sm:$0xf]
  %v25 = vld [vmem:[%s0 + $0x2c] sm:$0xf]
  %v26 = vld [vmem:[%s0 + $0x30] sm:$0xf]
  %v27 = vld [vmem:[%s0 + $0x34] sm:$0xf]
  %v28 = vld [vmem:[%s0 + $0x38] sm:$0xf]
  %v29 = vld [vmem:[%s0 + $0x3c] sm:$0xf]
  %v30 = vld [vmem:[%s0 + $0x40] sm:$0xf]
  %v31 = vld [vmem:[%s0 + $0x44] sm:$0xf]
  %v32 = vld [vmem:[%s0 + $0x48] sm:$0xf]
  %v33 = vld [vmem:[%s0 + $0x4c] sm:$0xf]
  %v34 = vld [vmem:[%s0 + $0x50] sm:$0xf]
  %v35 = vld [vmem:[%s0 + $0x54] sm:$0xf]
  %v36 = vld [vmem:[%s0 + $0x58] sm:$0xf]
  %v37 = vld [vmem:[%s0 + $0x5c] sm:$0xf]
  %v38 = vld [vmem:[%s0 + $0x60] sm:$0xf]
  %v39 = vld [vmem:[%s0 + $0x64] sm:$0xf]
  %v40 = vld [vmem:[%s0 + $0x68] sm:$0xf]
  %v41 = vld [vmem:[%s0 + $0x6c] sm:$0xf]
  %v42 = vld [vmem:[%s0 + $0x70] sm:$0xf]
  %v43 = vld [vmem:[%s0 + $0x74] sm:$0xf]
  %v44 = vld [vmem:[%s0 + $0x78] sm:$0xf]
  %v45 = vld [vmem:[%s0 + $0x7c] sm:$0xf]
  %v46 = vld [vmem:[%s0 + $0x80] sm:$0xf]
  %v47 = vld [vmem:[%s0 + $0x84] sm:$0xf]
  %v48 = vld [vmem:[%s0 + $0x88] sm:$0xf]
  %v49 = vld [vmem:[%s0 + $0x8c] sm:$0xf]
  %v50 = vld [vmem:[%s0 + $0x90] sm:$0xf]
  %v51 = vld [vmem:[%s0 + $0x94] sm:$0xf]
  %v52 = vld [vmem:[%s0 + $0x98] sm:$0xf]
  %v53 = vld [vmem:[%s0 + $0x9c] sm:$0xf]
  %v54 = vld [vmem:[%s0 + $0xa0] sm:$0xf]
  %v55 = vld [vmem:[%s0 + $0xa4] sm:$0xf]
  %v56 = vld [vmem:[%s0 + $0xa8] sm:$0xf]
  %v57 = vld [vmem:[%s0 + $0xac] sm:$0xf]
  %v58 = vld [vmem:[%s0 + $0xb0] sm:$0xf]
  %v59 = vld [vmem:[%s0 + $0xb4] sm:$0xf]
  %v60 = vld [vmem:[%s0 + $0xb8] sm:$0xf]
  %v61 = vld [vmem:[%s0 + $0xbc] sm:$0xf]
  %v62 = vld [vmem:[%s0 + $0xc0] sm:$0xf]
  %v63 = vld [vmem:[%s0 + $0xc4] sm:$0xf]
  %v64 = vld [vmem:[%s0 + $0xc8] sm:$0xf]
  %v65 = vld [vmem:[%s0 + $0xcc] sm:$0xf]
  %v66 = vld [vmem:[%s0 + $0xd0] sm:$0xf]
  %v67 = vld [vmem:[%s0 + $0xd4] sm:$0xf]
  %v68 = vld [vmem:[%s0 + $0xd8] sm:$0xf]
  %v69 = vld [vmem:[%s0 + $0xdc] sm:$0xf]
  %v70 = vld [vmem:[%s0 + $0xe0] sm:$0xf]
  %v71 = vld [vmem:[%s0 + $0xe4] sm:$0xf]
  %v72 = vld [vmem:[%s0 + $0xe8] sm:$0xf]
  %v73 = vld [vmem:[%s0 + $0xec] sm:$0xf]
  %v74 = vld [vmem:[%s0 + $0xf0] sm:$0xf]
  %v75 = vld [vmem:[%s0 + $0xf4] sm:$0xf]
  %v76 = vld [vmem:[%s0 + $0xf8] sm:$0xf]
  %v77 = vld [vmem:[%s0 + $0xfc] sm:$0xf]
  %v78 = vld [vmem:[%s1] sm:$0x3]
  %v143 = vunpack.c.l.b16 %v14
  %v144 = vunpack.c.l.b16 %v15
  %v145 = vunpack.c.l.b16 %v16
  %v146 = vunpack.c.l.b16 %v17
  %v147 = vunpack.c.l.b16 %v18
  %v148 = vunpack.c.l.b16 %v19
  %v149 = vunpack.c.l.b16 %v20
  %v150 = vunpack.c.l.b16 %v21
  %v151 = vunpack.c.l.b16 %v22
  %v152 = vunpack.c.l.b16 %v23
  %v153 = vunpack.c.l.b16 %v24
  %v154 = vunpack.c.l.b16 %v25
  %v155 = vunpack.c.l.b16 %v26
  %v156 = vunpack.c.l.b16 %v27
  %v157 = vunpack.c.l.b16 %v28
  %v158 = vunpack.c.l.b16 %v29
  %v159 = vunpack.c.l.b16 %v30
  %v160 = vunpack.c.l.b16 %v31
  %v161 = vunpack.c.l.b16 %v32
  %v162 = vunpack.c.l.b16 %v33
  %v163 = vunpack.c.l.b16 %v34
  %v164 = vunpack.c.l.b16 %v35
  %v165 = vunpack.c.l.b16 %v36
  %v166 = vunpack.c.l.b16 %v37
  %v167 = vunpack.c.l.b16 %v38
  %v168 = vunpack.c.l.b16 %v39
  %v169 = vunpack.c.l.b16 %v40
  %v170 = vunpack.c.l.b16 %v41
  %v171 = vunpack.c.l.b16 %v42
  %v172 = vunpack.c.l.b16 %v43
  %v173 = vunpack.c.l.b16 %v44
  %v174 = vunpack.c.l.b16 %v45
  %v175 = vunpack.c.l.b16 %v46
  %v176 = vunpack.c.l.b16 %v47
  %v177 = vunpack.c.l.b16 %v48
  %v178 = vunpack.c.l.b16 %v49
  %v179 = vunpack.c.l.b16 %v50
  %v180 = vunpack.c.l.b16 %v51
  %v181 = vunpack.c.l.b16 %v52
  %v182 = vunpack.c.l.b16 %v53
  %v183 = vunpack.c.l.b16 %v54
  %v184 = vunpack.c.l.b16 %v55
  %v185 = vunpack.c.l.b16 %v56
  %v186 = vunpack.c.l.b16 %v57
  %v187 = vunpack.c.l.b16 %v58
  %v188 = vunpack.c.l.b16 %v59
  %v189 = vunpack.c.l.b16 %v60
  %v190 = vunpack.c.l.b16 %v61
  %v191 = vunpack.c.l.b16 %v62
  %v192 = vunpack.c.l.b16 %v63
  %v193 = vunpack.c.l.b16 %v64
  %v194 = vunpack.c.l.b16 %v65
  %v195 = vunpack.c.l.b16 %v66
  %v196 = vunpack.c.l.b16 %v67
  %v197 = vunpack.c.l.b16 %v68
  %v198 = vunpack.c.l.b16 %v69
  %v199 = vunpack.c.l.b16 %v70
  %v200 = vunpack.c.l.b16 %v71
  %v201 = vunpack.c.l.b16 %v72
  %v202 = vunpack.c.l.b16 %v73
  %v203 = vunpack.c.l.b16 %v74
  %v204 = vunpack.c.l.b16 %v75
  %v205 = vunpack.c.l.b16 %v76
  %v206 = vunpack.c.l.b16 %v77
  %v207 = vpack.c.b16 %v144, %v143
  %v208 = vpack.c.b16 %v146, %v145
  %v209 = vpack.c.b16 %v148, %v147
  %v210 = vpack.c.b16 %v150, %v149
  %v211 = vpack.c.b16 %v152, %v151
  %v212 = vpack.c.b16 %v154, %v153
  %v213 = vpack.c.b16 %v156, %v155
  %v214 = vpack.c.b16 %v158, %v157
  %v215 = vpack.c.b16 %v160, %v159
  %v216 = vpack.c.b16 %v162, %v161
  %v217 = vpack.c.b16 %v164, %v163
  %v218 = vpack.c.b16 %v166, %v165
  %v219 = vpack.c.b16 %v168, %v167
  %v220 = vpack.c.b16 %v170, %v169
  %v221 = vpack.c.b16 %v172, %v171
  %v222 = vpack.c.b16 %v174, %v173
  %v223 = vpack.c.b16 %v176, %v175
  %v224 = vpack.c.b16 %v178, %v177
  %v225 = vpack.c.b16 %v180, %v179
  %v226 = vpack.c.b16 %v182, %v181
  %v227 = vpack.c.b16 %v184, %v183
  %v228 = vpack.c.b16 %v186, %v185
  %v229 = vpack.c.b16 %v188, %v187
  %v230 = vpack.c.b16 %v190, %v189
  %v231 = vpack.c.b16 %v192, %v191
  %v232 = vpack.c.b16 %v194, %v193
  %v233 = vpack.c.b16 %v196, %v195
  %v234 = vpack.c.b16 %v198, %v197
  %v235 = vpack.c.b16 %v200, %v199
  %v236 = vpack.c.b16 %v202, %v201
  %v237 = vpack.c.b16 %v204, %v203
  %v238 = vpack.c.b16 %v206, %v205
  %vm239 = vcmask 31744
  %v241 = vsel %vm239, %v207, 0
  %v244 = vsel %vm239, %v208, 0
  %v247 = vsel %vm239, %v209, 0
  %v250 = vsel %vm239, %v210, 0
  %v253 = vsel %vm239, %v211, 0
  %v256 = vsel %vm239, %v212, 0
  %v259 = vsel %vm239, %v213, 0
  %v262 = vsel %vm239, %v214, 0
  %v265 = vsel %vm239, %v215, 0
  %v268 = vsel %vm239, %v216, 0
  %v271 = vsel %vm239, %v217, 0
  %v274 = vsel %vm239, %v218, 0
  %v277 = vsel %vm239, %v219, 0
  %v280 = vsel %vm239, %v220, 0
  %v283 = vsel %vm239, %v221, 0
  %v286 = vsel %vm239, %v222, 0
  %v289 = vsel %vm239, %v223, 0
  %v292 = vsel %vm239, %v224, 0
  %v295 = vsel %vm239, %v225, 0
  %v298 = vsel %vm239, %v226, 0
  %v301 = vsel %vm239, %v227, 0
  %v304 = vsel %vm239, %v228, 0
  %v307 = vsel %vm239, %v229, 0
  %v310 = vsel %vm239, %v230, 0
  %v313 = vsel %vm239, %v231, 0
  %v316 = vsel %vm239, %v232, 0
  %v319 = vsel %vm239, %v233, 0
  %v322 = vsel %vm239, %v234, 0
  %v325 = vsel %vm239, %v235, 0
  %v328 = vsel %vm239, %v236, 0
  %v331 = vsel %vm239, %v237, 0
  %v334 = vsel %vm239, %v238, 0
  %vm336 = vcmask 1041408
  %v338 = vsel %vm336, %v78, 0
  %340 = vmatpush.bf16.msra.mxu0 0
  %341 = vmatpush.bf16.msra.mxu0 0
  %342 = vmatpush.bf16.msra.mxu0 0
  %343 = vmatpush.bf16.msra.mxu0 0
  %344 = vmatpush.bf16.msra.mxu0 0
  %345 = vmatpush.bf16.msra.mxu0 0
  %346 = vmatpush.bf16.msra.mxu0 0
  %347 = vmatpush.bf16.msra.mxu0 %v338
  %348 = vmatmul.bf16.gmra.mxu0 %v241
  %v349 = vpop.f32.mrf.mxu0
  %v350 = vadd.f32 0.0, %v349
  %v351 = vpop.f32.mrf.mxu0
  %v352 = vadd.f32 0.0, %v351
  %353 = vmatmul.bf16.gmra.mxu0 %v244
  %v354 = vpop.f32.mrf.mxu0
  %v355 = vadd.f32 0.0, %v354
  %v356 = vpop.f32.mrf.mxu0
  %v357 = vadd.f32 0.0, %v356
  %358 = vmatmul.bf16.gmra.mxu0 %v247
  %v359 = vpop.f32.mrf.mxu0
  %v360 = vadd.f32 0.0, %v359
  %v361 = vpop.f32.mrf.mxu0
  %v362 = vadd.f32 0.0, %v361
  %363 = vmatmul.bf16.gmra.mxu0 %v250
  %v364 = vpop.f32.mrf.mxu0
  %v365 = vadd.f32 0.0, %v364
  %v366 = vpop.f32.mrf.mxu0
  %v367 = vadd.f32 0.0, %v366
  %368 = vmatmul.bf16.gmra.mxu0 %v253
  %v369 = vpop.f32.mrf.mxu0
  %v370 = vadd.f32 0.0, %v369
  %v371 = vpop.f32.mrf.mxu0
  %v372 = vadd.f32 0.0, %v371
  %373 = vmatmul.bf16.gmra.mxu0 %v256
  %v374 = vpop.f32.mrf.mxu0
  %v375 = vadd.f32 0.0, %v374
  %v376 = vpop.f32.mrf.mxu0
  %v377 = vadd.f32 0.0, %v376
  %378 = vmatmul.bf16.gmra.mxu0 %v259
  %v379 = vpop.f32.mrf.mxu0
  %v380 = vadd.f32 0.0, %v379
  %v381 = vpop.f32.mrf.mxu0
  %v382 = vadd.f32 0.0, %v381
  %383 = vmatmul.bf16.gmra.mxu0 %v262
  %v384 = vpop.f32.mrf.mxu0
  %v385 = vadd.f32 0.0, %v384
  %v386 = vpop.f32.mrf.mxu0
  %v387 = vadd.f32 0.0, %v386
  %388 = vmatmul.bf16.gmra.mxu0 %v265
  %v389 = vpop.f32.mrf.mxu0
  %v390 = vadd.f32 0.0, %v389
  %v391 = vpop.f32.mrf.mxu0
  %v392 = vadd.f32 0.0, %v391
  %393 = vmatmul.bf16.gmra.mxu0 %v268
  %v394 = vpop.f32.mrf.mxu0
  %v395 = vadd.f32 0.0, %v394
  %v396 = vpop.f32.mrf.mxu0
  %v397 = vadd.f32 0.0, %v396
  %398 = vmatmul.bf16.gmra.mxu0 %v271
  %v399 = vpop.f32.mrf.mxu0
  %v400 = vadd.f32 0.0, %v399
  %v401 = vpop.f32.mrf.mxu0
  %v402 = vadd.f32 0.0, %v401
  %403 = vmatmul.bf16.gmra.mxu0 %v274
  %v404 = vpop.f32.mrf.mxu0
  %v405 = vadd.f32 0.0, %v404
  %v406 = vpop.f32.mrf.mxu0
  %v407 = vadd.f32 0.0, %v406
  %408 = vmatmul.bf16.gmra.mxu0 %v277
  %v409 = vpop.f32.mrf.mxu0
  %v410 = vadd.f32 0.0, %v409
  %v411 = vpop.f32.mrf.mxu0
  %v412 = vadd.f32 0.0, %v411
  %413 = vmatmul.bf16.gmra.mxu0 %v280
  %v414 = vpop.f32.mrf.mxu0
  %v415 = vadd.f32 0.0, %v414
  %v416 = vpop.f32.mrf.mxu0
  %v417 = vadd.f32 0.0, %v416
  %418 = vmatmul.bf16.gmra.mxu0 %v283
  %v419 = vpop.f32.mrf.mxu0
  %v420 = vadd.f32 0.0, %v419
  %v421 = vpop.f32.mrf.mxu0
  %v422 = vadd.f32 0.0, %v421
  %423 = vmatmul.bf16.gmra.mxu0 %v286
  %v424 = vpop.f32.mrf.mxu0
  %v425 = vadd.f32 0.0, %v424
  %v426 = vpop.f32.mrf.mxu0
  %v427 = vadd.f32 0.0, %v426
  %428 = vmatmul.bf16.gmra.mxu0 %v289
  %v429 = vpop.f32.mrf.mxu0
  %v430 = vadd.f32 0.0, %v429
  %v431 = vpop.f32.mrf.mxu0
  %v432 = vadd.f32 0.0, %v431
  %433 = vmatmul.bf16.gmra.mxu0 %v292
  %v434 = vpop.f32.mrf.mxu0
  %v435 = vadd.f32 0.0, %v434
  %v436 = vpop.f32.mrf.mxu0
  %v437 = vadd.f32 0.0, %v436
  %438 = vmatmul.bf16.gmra.mxu0 %v295
  %v439 = vpop.f32.mrf.mxu0
  %v440 = vadd.f32 0.0, %v439
  %v441 = vpop.f32.mrf.mxu0
  %v442 = vadd.f32 0.0, %v441
  %443 = vmatmul.bf16.gmra.mxu0 %v298
  %v444 = vpop.f32.mrf.mxu0
  %v445 = vadd.f32 0.0, %v444
  %v446 = vpop.f32.mrf.mxu0
  %v447 = vadd.f32 0.0, %v446
  %448 = vmatmul.bf16.gmra.mxu0 %v301
  %v449 = vpop.f32.mrf.mxu0
  %v450 = vadd.f32 0.0, %v449
  %v451 = vpop.f32.mrf.mxu0
  %v452 = vadd.f32 0.0, %v451
  %453 = vmatmul.bf16.gmra.mxu0 %v304
  %v454 = vpop.f32.mrf.mxu0
  %v455 = vadd.f32 0.0, %v454
  %v456 = vpop.f32.mrf.mxu0
  %v457 = vadd.f32 0.0, %v456
  %458 = vmatmul.bf16.gmra.mxu0 %v307
  %v459 = vpop.f32.mrf.mxu0
  %v460 = vadd.f32 0.0, %v459
  %v461 = vpop.f32.mrf.mxu0
  %v462 = vadd.f32 0.0, %v461
  %463 = vmatmul.bf16.gmra.mxu0 %v310
  %v464 = vpop.f32.mrf.mxu0
  %v465 = vadd.f32 0.0, %v464
  %v466 = vpop.f32.mrf.mxu0
  %v467 = vadd.f32 0.0, %v466
  %468 = vmatmul.bf16.gmra.mxu0 %v313
  %v469 = vpop.f32.mrf.mxu0
  %v470 = vadd.f32 0.0, %v469
  %v471 = vpop.f32.mrf.mxu0
  %v472 = vadd.f32 0.0, %v471
  %473 = vmatmul.bf16.gmra.mxu0 %v316
  %v474 = vpop.f32.mrf.mxu0
  %v475 = vadd.f32 0.0, %v474
  %v476 = vpop.f32.mrf.mxu0
  %v477 = vadd.f32 0.0, %v476
  %478 = vmatmul.bf16.gmra.mxu0 %v319
  %v479 = vpop.f32.mrf.mxu0
  %v480 = vadd.f32 0.0, %v479
  %v481 = vpop.f32.mrf.mxu0
  %v482 = vadd.f32 0.0, %v481
  %483 = vmatmul.bf16.gmra.mxu0 %v322
  %v484 = vpop.f32.mrf.mxu0
  %v485 = vadd.f32 0.0, %v484
  %v486 = vpop.f32.mrf.mxu0
  %v487 = vadd.f32 0.0, %v486
  %488 = vmatmul.bf16.gmra.mxu0 %v325
  %v489 = vpop.f32.mrf.mxu0
  %v490 = vadd.f32 0.0, %v489
  %v491 = vpop.f32.mrf.mxu0
  %v492 = vadd.f32 0.0, %v491
  %493 = vmatmul.bf16.gmra.mxu0 %v328
  %v494 = vpop.f32.mrf.mxu0
  %v495 = vadd.f32 0.0, %v494
  %v496 = vpop.f32.mrf.mxu0
  %v497 = vadd.f32 0.0, %v496
  %498 = vmatmul.bf16.gmra.mxu0 %v331
  %v499 = vpop.f32.mrf.mxu0
  %v500 = vadd.f32 0.0, %v499
  %v501 = vpop.f32.mrf.mxu0
  %v502 = vadd.f32 0.0, %v501
  %503 = vmatmul.bf16.gmra.mxu0 %v334
  %v504 = vpop.f32.mrf.mxu0
  %v505 = vadd.f32 0.0, %v504
  %v506 = vpop.f32.mrf.mxu0
  %v507 = vadd.f32 0.0, %v506
  %508 = vdwg.mxu0
  %v509 = vpack.c.bf16 %v350, %v350
  %v510 = vpack.c.bf16 %v352, %v352
  %v511 = vpack.c.bf16 %v355, %v355
  %v512 = vpack.c.bf16 %v357, %v357
  %v513 = vpack.c.bf16 %v360, %v360
  %v514 = vpack.c.bf16 %v362, %v362
  %v515 = vpack.c.bf16 %v365, %v365
  %v516 = vpack.c.bf16 %v367, %v367
  %v517 = vpack.c.bf16 %v370, %v370
  %v518 = vpack.c.bf16 %v372, %v372
  %v519 = vpack.c.bf16 %v375, %v375
  %v520 = vpack.c.bf16 %v377, %v377
  %v521 = vpack.c.bf16 %v380, %v380
  %v522 = vpack.c.bf16 %v382, %v382
  %v523 = vpack.c.bf16 %v385, %v385
  %v524 = vpack.c.bf16 %v387, %v387
  %v525 = vpack.c.bf16 %v390, %v390
  %v526 = vpack.c.bf16 %v392, %v392
  %v527 = vpack.c.bf16 %v395, %v395
  %v528 = vpack.c.bf16 %v397, %v397
  %v529 = vpack.c.bf16 %v400, %v400
  %v530 = vpack.c.bf16 %v402, %v402
  %v531 = vpack.c.bf16 %v405, %v405
  %v532 = vpack.c.bf16 %v407, %v407
  %v533 = vpack.c.bf16 %v410, %v410
  %v534 = vpack.c.bf16 %v412, %v412
  %v535 = vpack.c.bf16 %v415, %v415
  %v536 = vpack.c.bf16 %v417, %v417
  %v537 = vpack.c.bf16 %v420, %v420
  %v538 = vpack.c.bf16 %v422, %v422
  %v539 = vpack.c.bf16 %v425, %v425
  %v540 = vpack.c.bf16 %v427, %v427
  %v541 = vpack.c.bf16 %v430, %v430
  %v542 = vpack.c.bf16 %v432, %v432
  %v543 = vpack.c.bf16 %v435, %v435
  %v544 = vpack.c.bf16 %v437, %v437
  %v545 = vpack.c.bf16 %v440, %v440
  %v546 = vpack.c.bf16 %v442, %v442
  %v547 = vpack.c.bf16 %v445, %v445
  %v548 = vpack.c.bf16 %v447, %v447
  %v549 = vpack.c.bf16 %v450, %v450
  %v550 = vpack.c.bf16 %v452, %v452
  %v551 = vpack.c.bf16 %v455, %v455
  %v552 = vpack.c.bf16 %v457, %v457
  %v553 = vpack.c.bf16 %v460, %v460
  %v554 = vpack.c.bf16 %v462, %v462
  %v555 = vpack.c.bf16 %v465, %v465
  %v556 = vpack.c.bf16 %v467, %v467
  %v557 = vpack.c.bf16 %v470, %v470
  %v558 = vpack.c.bf16 %v472, %v472
  %v559 = vpack.c.bf16 %v475, %v475
  %v560 = vpack.c.bf16 %v477, %v477
  %v561 = vpack.c.bf16 %v480, %v480
  %v562 = vpack.c.bf16 %v482, %v482
  %v563 = vpack.c.bf16 %v485, %v485
  %v564 = vpack.c.bf16 %v487, %v487
  %v565 = vpack.c.bf16 %v490, %v490
  %v566 = vpack.c.bf16 %v492, %v492
  %v567 = vpack.c.bf16 %v495, %v495
  %v568 = vpack.c.bf16 %v497, %v497
  %v569 = vpack.c.bf16 %v500, %v500
  %v570 = vpack.c.bf16 %v502, %v502
  %v571 = vpack.c.bf16 %v505, %v505
  %v572 = vpack.c.bf16 %v507, %v507
  %vm573 = vcmask 27648
  %574 = vst.msk [vmem:[%s2] sm:$0xf] %vm573, %v509
  %575 = vst.msk [vmem:[%s2 + $0x4] sm:$0xf] %vm573, %v510
  %576 = vst.msk [vmem:[%s2 + $0x8] sm:$0xf] %vm573, %v511
  %577 = vst.msk [vmem:[%s2 + $0xc] sm:$0xf] %vm573, %v512
  %578 = vst.msk [vmem:[%s2 + $0x10] sm:$0xf] %vm573, %v513
  %579 = vst.msk [vmem:[%s2 + $0x14] sm:$0xf] %vm573, %v514
  %580 = vst.msk [vmem:[%s2 + $0x18] sm:$0xf] %vm573, %v515
  %581 = vst.msk [vmem:[%s2 + $0x1c] sm:$0xf] %vm573, %v516
  %582 = vst.msk [vmem:[%s2 + $0x20] sm:$0xf] %vm573, %v517
  %583 = vst.msk [vmem:[%s2 + $0x24] sm:$0xf] %vm573, %v518
  %584 = vst.msk [vmem:[%s2 + $0x28] sm:$0xf] %vm573, %v519
  %585 = vst.msk [vmem:[%s2 + $0x2c] sm:$0xf] %vm573, %v520
  %586 = vst.msk [vmem:[%s2 + $0x30] sm:$0xf] %vm573, %v521
  %587 = vst.msk [vmem:[%s2 + $0x34] sm:$0xf] %vm573, %v522
  %588 = vst.msk [vmem:[%s2 + $0x38] sm:$0xf] %vm573, %v523
  %589 = vst.msk [vmem:[%s2 + $0x3c] sm:$0xf] %vm573, %v524
  %590 = vst.msk [vmem:[%s2 + $0x40] sm:$0xf] %vm573, %v525
  %591 = vst.msk [vmem:[%s2 + $0x44] sm:$0xf] %vm573, %v526
  %592 = vst.msk [vmem:[%s2 + $0x48] sm:$0xf] %vm573, %v527
  %593 = vst.msk [vmem:[%s2 + $0x4c] sm:$0xf] %vm573, %v528
  %594 = vst.msk [vmem:[%s2 + $0x50] sm:$0xf] %vm573, %v529
  %595 = vst.msk [vmem:[%s2 + $0x54] sm:$0xf] %vm573, %v530
  %596 = vst.msk [vmem:[%s2 + $0x58] sm:$0xf] %vm573, %v531
  %597 = vst.msk [vmem:[%s2 + $0x5c] sm:$0xf] %vm573, %v532
  %598 = vst.msk [vmem:[%s2 + $0x60] sm:$0xf] %vm573, %v533
  %599 = vst.msk [vmem:[%s2 + $0x64] sm:$0xf] %vm573, %v534
  %600 = vst.msk [vmem:[%s2 + $0x68] sm:$0xf] %vm573, %v535
  %601 = vst.msk [vmem:[%s2 + $0x6c] sm:$0xf] %vm573, %v536
  %602 = vst.msk [vmem:[%s2 + $0x70] sm:$0xf] %vm573, %v537
  %603 = vst.msk [vmem:[%s2 + $0x74] sm:$0xf] %vm573, %v538
  %604 = vst.msk [vmem:[%s2 + $0x78] sm:$0xf] %vm573, %v539
  %605 = vst.msk [vmem:[%s2 + $0x7c] sm:$0xf] %vm573, %v540
  %606 = vst.msk [vmem:[%s2 + $0x80] sm:$0xf] %vm573, %v541
  %607 = vst.msk [vmem:[%s2 + $0x84] sm:$0xf] %vm573, %v542
  %608 = vst.msk [vmem:[%s2 + $0x88] sm:$0xf] %vm573, %v543
  %609 = vst.msk [vmem:[%s2 + $0x8c] sm:$0xf] %vm573, %v544
  %610 = vst.msk [vmem:[%s2 + $0x90] sm:$0xf] %vm573, %v545
  %611 = vst.msk [vmem:[%s2 + $0x94] sm:$0xf] %vm573, %v546
  %612 = vst.msk [vmem:[%s2 + $0x98] sm:$0xf] %vm573, %v547
  %613 = vst.msk [vmem:[%s2 + $0x9c] sm:$0xf] %vm573, %v548
  %614 = vst.msk [vmem:[%s2 + $0xa0] sm:$0xf] %vm573, %v549
  %615 = vst.msk [vmem:[%s2 + $0xa4] sm:$0xf] %vm573, %v550
  %616 = vst.msk [vmem:[%s2 + $0xa8] sm:$0xf] %vm573, %v551
  %617 = vst.msk [vmem:[%s2 + $0xac] sm:$0xf] %vm573, %v552
  %618 = vst.msk [vmem:[%s2 + $0xb0] sm:$0xf] %vm573, %v553
  %619 = vst.msk [vmem:[%s2 + $0xb4] sm:$0xf] %vm573, %v554
  %620 = vst.msk [vmem:[%s2 + $0xb8] sm:$0xf] %vm573, %v555
  %621 = vst.msk [vmem:[%s2 + $0xbc] sm:$0xf] %vm573, %v556
  %622 = vst.msk [vmem:[%s2 + $0xc0] sm:$0xf] %vm573, %v557
  %623 = vst.msk [vmem:[%s2 + $0xc4] sm:$0xf] %vm573, %v558
  %624 = vst.msk [vmem:[%s2 + $0xc8] sm:$0xf] %vm573, %v559
  %625 = vst.msk [vmem:[%s2 + $0xcc] sm:$0xf] %vm573, %v560
  %626 = vst.msk [vmem:[%s2 + $0xd0] sm:$0xf] %vm573, %v561
  %627 = vst.msk [vmem:[%s2 + $0xd4] sm:$0xf] %vm573, %v562
  %628 = vst.msk [vmem:[%s2 + $0xd8] sm:$0xf] %vm573, %v563
  %629 = vst.msk [vmem:[%s2 + $0xdc] sm:$0xf] %vm573, %v564
  %630 = vst.msk [vmem:[%s2 + $0xe0] sm:$0xf] %vm573, %v565
  %631 = vst.msk [vmem:[%s2 + $0xe4] sm:$0xf] %vm573, %v566
  %632 = vst.msk [vmem:[%s2 + $0xe8] sm:$0xf] %vm573, %v567
  %633 = vst.msk [vmem:[%s2 + $0xec] sm:$0xf] %vm573, %v568
  %634 = vst.msk [vmem:[%s2 + $0xf0] sm:$0xf] %vm573, %v569
  %635 = vst.msk [vmem:[%s2 + $0xf4] sm:$0xf] %vm573, %v570
  %636 = vst.msk [vmem:[%s2 + $0xf8] sm:$0xf] %vm573, %v571
  %637 = vst.msk [vmem:[%s2 + $0xfc] sm:$0xf] %vm573, %v572
  %v638 = vsel %vm239, %v350, 0.0
  %v639 = vsel %vm239, %v352, 0.0
  %v640 = vadd.f32 %v638, %v639
  %v641 = vsel %vm239, %v355, 0.0
  %v642 = vadd.f32 %v640, %v641
  %v643 = vsel %vm239, %v357, 0.0
  %v644 = vadd.f32 %v642, %v643
  %v645 = vsel %vm239, %v360, 0.0
  %v646 = vadd.f32 %v644, %v645
  %v647 = vsel %vm239, %v362, 0.0
  %v648 = vadd.f32 %v646, %v647
  %v649 = vsel %vm239, %v365, 0.0
  %v650 = vadd.f32 %v648, %v649
  %v651 = vsel %vm239, %v367, 0.0
  %v652 = vadd.f32 %v650, %v651
  %v653 = vsel %vm239, %v370, 0.0
  %v654 = vadd.f32 %v652, %v653
  %v655 = vsel %vm239, %v372, 0.0
  %v656 = vadd.f32 %v654, %v655
  %v657 = vsel %vm239, %v375, 0.0
  %v658 = vadd.f32 %v656, %v657
  %v659 = vsel %vm239, %v377, 0.0
  %v660 = vadd.f32 %v658, %v659
  %v661 = vsel %vm239, %v380, 0.0
  %v662 = vadd.f32 %v660, %v661
  %v663 = vsel %vm239, %v382, 0.0
  %v664 = vadd.f32 %v662, %v663
  %v665 = vsel %vm239, %v385, 0.0
  %v666 = vadd.f32 %v664, %v665
  %v667 = vsel %vm239, %v387, 0.0
  %v668 = vadd.f32 %v666, %v667
  %v669 = vsel %vm239, %v390, 0.0
  %v670 = vadd.f32 %v668, %v669
  %v671 = vsel %vm239, %v392, 0.0
  %v672 = vadd.f32 %v670, %v671
  %v673 = vsel %vm239, %v395, 0.0
  %v674 = vadd.f32 %v672, %v673
  %v675 = vsel %vm239, %v397, 0.0
  %v676 = vadd.f32 %v674, %v675
  %v677 = vsel %vm239, %v400, 0.0
  %v678 = vadd.f32 %v676, %v677
  %v679 = vsel %vm239, %v402, 0.0
  %v680 = vadd.f32 %v678, %v679
  %v681 = vsel %vm239, %v405, 0.0
  %v682 = vadd.f32 %v680, %v681
  %v683 = vsel %vm239, %v407, 0.0
  %v684 = vadd.f32 %v682, %v683
  %v685 = vsel %vm239, %v410, 0.0
  %v686 = vadd.f32 %v684, %v685
  %v687 = vsel %vm239, %v412, 0.0
  %v688 = vadd.f32 %v686, %v687
  %v689 = vsel %vm239, %v415, 0.0
  %v690 = vadd.f32 %v688, %v689
  %v691 = vsel %vm239, %v417, 0.0
  %v692 = vadd.f32 %v690, %v691
  %v693 = vsel %vm239, %v420, 0.0
  %v694 = vadd.f32 %v692, %v693
  %v695 = vsel %vm239, %v422, 0.0
  %v696 = vadd.f32 %v694, %v695
  %v697 = vsel %vm239, %v425, 0.0
  %v698 = vadd.f32 %v696, %v697
  %v699 = vsel %vm239, %v427, 0.0
  %v700 = vadd.f32 %v698, %v699
  %v701 = vsel %vm239, %v430, 0.0
  %v702 = vadd.f32 %v700, %v701
  %v703 = vsel %vm239, %v432, 0.0
  %v704 = vadd.f32 %v702, %v703
  %v705 = vsel %vm239, %v435, 0.0
  %v706 = vadd.f32 %v704, %v705
  %v707 = vsel %vm239, %v437, 0.0
  %v708 = vadd.f32 %v706, %v707
  %v709 = vsel %vm239, %v440, 0.0
  %v710 = vadd.f32 %v708, %v709
  %v711 = vsel %vm239, %v442, 0.0
  %v712 = vadd.f32 %v710, %v711
  %v713 = vsel %vm239, %v445, 0.0
  %v714 = vadd.f32 %v712, %v713
  %v715 = vsel %vm239, %v447, 0.0
  %v716 = vadd.f32 %v714, %v715
  %v717 = vsel %vm239, %v450, 0.0
  %v718 = vadd.f32 %v716, %v717
  %v719 = vsel %vm239, %v452, 0.0
  %v720 = vadd.f32 %v718, %v719
  %v721 = vsel %vm239, %v455, 0.0
  %v722 = vadd.f32 %v720, %v721
  %v723 = vsel %vm239, %v457, 0.0
  %v724 = vadd.f32 %v722, %v723
  %v725 = vsel %vm239, %v460, 0.0
  %v726 = vadd.f32 %v724, %v725
  %v727 = vsel %vm239, %v462, 0.0
  %v728 = vadd.f32 %v726, %v727
  %v729 = vsel %vm239, %v465, 0.0
  %v730 = vadd.f32 %v728, %v729
  %v731 = vsel %vm239, %v467, 0.0
  %v732 = vadd.f32 %v730, %v731
  %v733 = vsel %vm239, %v470, 0.0
  %v734 = vadd.f32 %v732, %v733
  %v735 = vsel %vm239, %v472, 0.0
  %v736 = vadd.f32 %v734, %v735
  %v737 = vsel %vm239, %v475, 0.0
  %v738 = vadd.f32 %v736, %v737
  %v739 = vsel %vm239, %v477, 0.0
  %v740 = vadd.f32 %v738, %v739
  %v741 = vsel %vm239, %v480, 0.0
  %v742 = vadd.f32 %v740, %v741
  %v743 = vsel %vm239, %v482, 0.0
  %v744 = vadd.f32 %v742, %v743
  %v745 = vsel %vm239, %v485, 0.0
  %v746 = vadd.f32 %v744, %v745
  %v747 = vsel %vm239, %v487, 0.0
  %v748 = vadd.f32 %v746, %v747
  %v749 = vsel %vm239, %v490, 0.0
  %v750 = vadd.f32 %v748, %v749
  %v751 = vsel %vm239, %v492, 0.0
  %v752 = vadd.f32 %v750, %v751
  %v753 = vsel %vm239, %v495, 0.0
  %v754 = vadd.f32 %v752, %v753
  %v755 = vsel %vm239, %v497, 0.0
  %v756 = vadd.f32 %v754, %v755
  %v757 = vsel %vm239, %v500, 0.0
  %v758 = vadd.f32 %v756, %v757
  %v759 = vsel %vm239, %v502, 0.0
  %v760 = vadd.f32 %v758, %v759
  %v761 = vsel %vm239, %v505, 0.0
  %v762 = vadd.f32 %v760, %v761
  %v763 = vsel %vm239, %v507, 0.0
  %v764 = vadd.f32 %v762, %v763
  %v765 = vrot.slane %v764, 4
  %v766 = vadd.f32 %v764, %v765
  %v767 = vrot.slane %v766, 2
  %v768 = vadd.f32 %v766, %v767
  %v769 = vrot.slane %v768, 1
  %v770 = vadd.f32 %v768, %v769
  %vm771 = vcmask 24576
  %772 = vst.msk [vmem:[%s3] sm:$0x1] %vm771, %v770
  %v773 = vmul.f32 %v350, %v350
  %v774 = vmul.f32 %v352, %v352
  %v775 = vmul.f32 %v355, %v355
  %v776 = vmul.f32 %v357, %v357
  %v777 = vmul.f32 %v360, %v360
  %v778 = vmul.f32 %v362, %v362
  %v779 = vmul.f32 %v365, %v365
  %v780 = vmul.f32 %v367, %v367
  %v781 = vmul.f32 %v370, %v370
  %v782 = vmul.f32 %v372, %v372
  %v783 = vmul.f32 %v375, %v375
  %v784 = vmul.f32 %v377, %v377
  %v785 = vmul.f32 %v380, %v380
  %v786 = vmul.f32 %v382, %v382
  %v787 = vmul.f32 %v385, %v385
  %v788 = vmul.f32 %v387, %v387
  %v789 = vmul.f32 %v390, %v390
  %v790 = vmul.f32 %v392, %v392
  %v791 = vmul.f32 %v395, %v395
  %v792 = vmul.f32 %v397, %v397
  %v793 = vmul.f32 %v400, %v400
  %v794 = vmul.f32 %v402, %v402
  %v795 = vmul.f32 %v405, %v405
  %v796 = vmul.f32 %v407, %v407
  %v797 = vmul.f32 %v410, %v410
  %v798 = vmul.f32 %v412, %v412
  %v799 = vmul.f32 %v415, %v415
  %v800 = vmul.f32 %v417, %v417
  %v801 = vmul.f32 %v420, %v420
  %v802 = vmul.f32 %v422, %v422
  %v803 = vmul.f32 %v425, %v425
  %v804 = vmul.f32 %v427, %v427
  %v805 = vmul.f32 %v430, %v430
  %v806 = vmul.f32 %v432, %v432
  %v807 = vmul.f32 %v435, %v435
  %v808 = vmul.f32 %v437, %v437
  %v809 = vmul.f32 %v440, %v440
  %v810 = vmul.f32 %v442, %v442
  %v811 = vmul.f32 %v445, %v445
  %v812 = vmul.f32 %v447, %v447
  %v813 = vmul.f32 %v450, %v450
  %v814 = vmul.f32 %v452, %v452
  %v815 = vmul.f32 %v455, %v455
  %v816 = vmul.f32 %v457, %v457
  %v817 = vmul.f32 %v460, %v460
  %v818 = vmul.f32 %v462, %v462
  %v819 = vmul.f32 %v465, %v465
  %v820 = vmul.f32 %v467, %v467
  %v821 = vmul.f32 %v470, %v470
  %v822 = vmul.f32 %v472, %v472
  %v823 = vmul.f32 %v475, %v475
  %v824 = vmul.f32 %v477, %v477
  %v825 = vmul.f32 %v480, %v480
  %v826 = vmul.f32 %v482, %v482
  %v827 = vmul.f32 %v485, %v485
  %v828 = vmul.f32 %v487, %v487
  %v829 = vmul.f32 %v490, %v490
  %v830 = vmul.f32 %v492, %v492
  %v831 = vmul.f32 %v495, %v495
  %v832 = vmul.f32 %v497, %v497
  %v833 = vmul.f32 %v500, %v500
  %v834 = vmul.f32 %v502, %v502
  %v835 = vmul.f32 %v505, %v505
  %v836 = vmul.f32 %v507, %v507
  %v837 = vsel %vm239, %v773, 0.0
  %v838 = vsel %vm239, %v774, 0.0
  %v839 = vadd.f32 %v837, %v838
  %v840 = vsel %vm239, %v775, 0.0
  %v841 = vadd.f32 %v839, %v840
  %v842 = vsel %vm239, %v776, 0.0
  %v843 = vadd.f32 %v841, %v842
  %v844 = vsel %vm239, %v777, 0.0
  %v845 = vadd.f32 %v843, %v844
  %v846 = vsel %vm239, %v778, 0.0
  %v847 = vadd.f32 %v845, %v846
  %v848 = vsel %vm239, %v779, 0.0
  %v849 = vadd.f32 %v847, %v848
  %v850 = vsel %vm239, %v780, 0.0
  %v851 = vadd.f32 %v849, %v850
  %v852 = vsel %vm239, %v781, 0.0
  %v853 = vadd.f32 %v851, %v852
  %v854 = vsel %vm239, %v782, 0.0
  %v855 = vadd.f32 %v853, %v854
  %v856 = vsel %vm239, %v783, 0.0
  %v857 = vadd.f32 %v855, %v856
  %v858 = vsel %vm239, %v784, 0.0
  %v859 = vadd.f32 %v857, %v858
  %v860 = vsel %vm239, %v785, 0.0
  %v861 = vadd.f32 %v859, %v860
  %v862 = vsel %vm239, %v786, 0.0
  %v863 = vadd.f32 %v861, %v862
  %v864 = vsel %vm239, %v787, 0.0
  %v865 = vadd.f32 %v863, %v864
  %v866 = vsel %vm239, %v788, 0.0
  %v867 = vadd.f32 %v865, %v866
  %v868 = vsel %vm239, %v789, 0.0
  %v869 = vadd.f32 %v867, %v868
  %v870 = vsel %vm239, %v790, 0.0
  %v871 = vadd.f32 %v869, %v870
  %v872 = vsel %vm239, %v791, 0.0
  %v873 = vadd.f32 %v871, %v872
  %v874 = vsel %vm239, %v792, 0.0
  %v875 = vadd.f32 %v873, %v874
  %v876 = vsel %vm239, %v793, 0.0
  %v877 = vadd.f32 %v875, %v876
  %v878 = vsel %vm239, %v794, 0.0
  %v879 = vadd.f32 %v877, %v878
  %v880 = vsel %vm239, %v795, 0.0
  %v881 = vadd.f32 %v879, %v880
  %v882 = vsel %vm239, %v796, 0.0
  %v883 = vadd.f32 %v881, %v882
  %v884 = vsel %vm239, %v797, 0.0
  %v885 = vadd.f32 %v883, %v884
  %v886 = vsel %vm239, %v798, 0.0
  %v887 = vadd.f32 %v885, %v886
  %v888 = vsel %vm239, %v799, 0.0
  %v889 = vadd.f32 %v887, %v888
  %v890 = vsel %vm239, %v800, 0.0
  %v891 = vadd.f32 %v889, %v890
  %v892 = vsel %vm239, %v801, 0.0
  %v893 = vadd.f32 %v891, %v892
  %v894 = vsel %vm239, %v802, 0.0
  %v895 = vadd.f32 %v893, %v894
  %v896 = vsel %vm239, %v803, 0.0
  %v897 = vadd.f32 %v895, %v896
  %v898 = vsel %vm239, %v804, 0.0
  %v899 = vadd.f32 %v897, %v898
  %v900 = vsel %vm239, %v805, 0.0
  %v901 = vadd.f32 %v899, %v900
  %v902 = vsel %vm239, %v806, 0.0
  %v903 = vadd.f32 %v901, %v902
  %v904 = vsel %vm239, %v807, 0.0
  %v905 = vadd.f32 %v903, %v904
  %v906 = vsel %vm239, %v808, 0.0
  %v907 = vadd.f32 %v905, %v906
  %v908 = vsel %vm239, %v809, 0.0
  %v909 = vadd.f32 %v907, %v908
  %v910 = vsel %vm239, %v810, 0.0
  %v911 = vadd.f32 %v909, %v910
  %v912 = vsel %vm239, %v811, 0.0
  %v913 = vadd.f32 %v911, %v912
  %v914 = vsel %vm239, %v812, 0.0
  %v915 = vadd.f32 %v913, %v914
  %v916 = vsel %vm239, %v813, 0.0
  %v917 = vadd.f32 %v915, %v916
  %v918 = vsel %vm239, %v814, 0.0
  %v919 = vadd.f32 %v917, %v918
  %v920 = vsel %vm239, %v815, 0.0
  %v921 = vadd.f32 %v919, %v920
  %v922 = vsel %vm239, %v816, 0.0
  %v923 = vadd.f32 %v921, %v922
  %v924 = vsel %vm239, %v817, 0.0
  %v925 = vadd.f32 %v923, %v924
  %v926 = vsel %vm239, %v818, 0.0
  %v927 = vadd.f32 %v925, %v926
  %v928 = vsel %vm239, %v819, 0.0
  %v929 = vadd.f32 %v927, %v928
  %v930 = vsel %vm239, %v820, 0.0
  %v931 = vadd.f32 %v929, %v930
  %v932 = vsel %vm239, %v821, 0.0
  %v933 = vadd.f32 %v931, %v932
  %v934 = vsel %vm239, %v822, 0.0
  %v935 = vadd.f32 %v933, %v934
  %v936 = vsel %vm239, %v823, 0.0
  %v937 = vadd.f32 %v935, %v936
  %v938 = vsel %vm239, %v824, 0.0
  %v939 = vadd.f32 %v937, %v938
  %v940 = vsel %vm239, %v825, 0.0
  %v941 = vadd.f32 %v939, %v940
  %v942 = vsel %vm239, %v826, 0.0
  %v943 = vadd.f32 %v941, %v942
  %v944 = vsel %vm239, %v827, 0.0
  %v945 = vadd.f32 %v943, %v944
  %v946 = vsel %vm239, %v828, 0.0
  %v947 = vadd.f32 %v945, %v946
  %v948 = vsel %vm239, %v829, 0.0
  %v949 = vadd.f32 %v947, %v948
  %v950 = vsel %vm239, %v830, 0.0
  %v951 = vadd.f32 %v949, %v950
  %v952 = vsel %vm239, %v831, 0.0
  %v953 = vadd.f32 %v951, %v952
  %v954 = vsel %vm239, %v832, 0.0
  %v955 = vadd.f32 %v953, %v954
  %v956 = vsel %vm239, %v833, 0.0
  %v957 = vadd.f32 %v955, %v956
  %v958 = vsel %vm239, %v834, 0.0
  %v959 = vadd.f32 %v957, %v958
  %v960 = vsel %vm239, %v835, 0.0
  %v961 = vadd.f32 %v959, %v960
  %v962 = vsel %vm239, %v836, 0.0
  %v963 = vadd.f32 %v961, %v962
  %v964 = vrot.slane %v963, 4
  %v965 = vadd.f32 %v963, %v964
  %v966 = vrot.slane %v965, 2
  %v967 = vadd.f32 %v965, %v966
  %v968 = vrot.slane %v967, 1
  %v969 = vadd.f32 %v967, %v968
  %970 = vst.msk [vmem:[%s3 + $0x1] sm:$0x1] %vm771, %v969
  // Predicated region
  $region10: #{_lambda_.4} parent=0 // pred_check
    _
  $region11: #{_lambda_.4} parent=0 // pred_check_branch
    %972 = sbr.rel (0) target = $region13
  $region12: #{_lambda_.4} parent=0 // pred_region
    _
  $region13: #{_lambda_.4} parent=0 // pred_fallthru
    _
  // Predicated region
  $region14: #{_lambda_.4} parent=0 // pred_check
    _
  $region15: #{_lambda_.4} parent=0 // pred_check_branch
    %974 = sbr.rel (0) target = $region17
  $region16: #{_lambda_.4} parent=0 // pred_region
    _
  $region17: #{_lambda_.4} parent=0 // pred_fallthru
    _
  // Predicated region
  $region18: #{_lambda_.4} parent=0 // pred_check
    _
  $region19: #{_lambda_.4} parent=0 // pred_check_branch
    %976 = sbr.rel (0) target = $region21
  $region20: #{_lambda_.4} parent=0 // pred_region
    _
  $region21: #{_lambda_.4} parent=0 // pred_fallthru
    _
  // Predicated region
  $region22: #{_lambda_.4} parent=0 // pred_check
    _
  $region23: #{_lambda_.4} parent=0 // pred_check_branch
    %978 = sbr.rel (0) target = $region25
  $region24: #{_lambda_.4} parent=0 // pred_region
    _
  $region25: #{_lambda_.4} parent=0 // pred_fallthru
    _

// kernel: _lambda_.7
$region0: #{_lambda_.7}
  #allocation0 [shape = 'u32[]', space=smem, size = 0x4, offset = 0x4, fixed_abs, tag = 'smem constant byte address 0x4 - core index']
  #allocation1 [shape = 'u32[72,128]{1,0:T(1,128)}', space=vmem, size = 0x9000, scoped, tag = 'internal scratch']
  %s0 = inlined_call_operand.vmem [shape: bf16[512,16], index: 0, kind: input, shape index: {}]
  %s1 = inlined_call_operand.vmem [shape: f32[1,16], index: 1, kind: input, shape index: {}]
  %s2 = inlined_call_operand.vmem [shape: f32[1,16], index: 2, kind: input, shape index: {}]
  %s3 = inlined_call_operand.vmem [shape: bf16[512,16], index: 3, kind: input, shape index: {}]
  %s4 = inlined_call_operand.vmem [shape: f32[1,16], index: 4, kind: input, shape index: {}]
  %s5 = inlined_call_operand.vmem [shape: f32[1,16], index: 5, kind: input, shape index: {}]
  %s6 = inlined_call_operand.vmem [shape: bf16[512,16], index: 6, kind: output, shape index: {}]
  %s7 = sld [smem:[#allocation0]]
  $region34: #{_lambda_.7} parent=0
    _
  %s9 = ssub.s32 1, %s7
  %s10 = scalar_select 0, %s9, %s7
  // Predicated region
  $region2: #{_lambda_.7} parent=0 // pred_check
    _
  $region3: #{_lambda_.7} parent=0 // pred_check_branch
    %12 = sbr.rel (0) target = $region5
  $region4: #{_lambda_.7} parent=0 // pred_region
    _
  $region5: #{_lambda_.7} parent=0 // pred_fallthru
    _
  // Predicated region
  $region6: #{_lambda_.7} parent=0 // pred_check
    _
  $region7: #{_lambda_.7} parent=0 // pred_check_branch
    %14 = sbr.rel (0) target = $region9
  $region8: #{_lambda_.7} parent=0 // pred_region
    _
  $region9: #{_lambda_.7} parent=0 // pred_fallthru
    _
  // Predicated region
  $region10: #{_lambda_.7} parent=0 // pred_check
    _
  $region11: #{_lambda_.7} parent=0 // pred_check_branch
    %16 = sbr.rel (0) target = $region13
  $region12: #{_lambda_.7} parent=0 // pred_region
    _
  $region13: #{_lambda_.7} parent=0 // pred_fallthru
    _
  // Predicated region
  $region14: #{_lambda_.7} parent=0 // pred_check
    _
  $region15: #{_lambda_.7} parent=0 // pred_check_branch
    %18 = sbr.rel (0) target = $region17
  $region16: #{_lambda_.7} parent=0 // pred_region
    _
  $region17: #{_lambda_.7} parent=0 // pred_fallthru
    _
  // Predicated region
  $region18: #{_lambda_.7} parent=0 // pred_check
    _
  $region19: #{_lambda_.7} parent=0 // pred_check_branch
    %20 = sbr.rel (0) target = $region21
  $region20: #{_lambda_.7} parent=0 // pred_region
    _
  $region21: #{_lambda_.7} parent=0 // pred_fallthru
    _
  // Predicated region
  $region22: #{_lambda_.7} parent=0 // pred_check
    _
  $region23: #{_lambda_.7} parent=0 // pred_check_branch
    %22 = sbr.rel (0) target = $region25
  $region24: #{_lambda_.7} parent=0 // pred_region
    _
  $region25: #{_lambda_.7} parent=0 // pred_fallthru
    _
  %v23 = vld [vmem:[%s3] sm:$0xf]
  %v24 = vld [vmem:[%s3 + $0x4] sm:$0xf]
  %v25 = vld [vmem:[%s3 + $0x8] sm:$0xf]
  %v26 = vld [vmem:[%s3 + $0xc] sm:$0xf]
  %v27 = vld [vmem:[%s3 + $0x10] sm:$0xf]
  %v28 = vld [vmem:[%s3 + $0x14] sm:$0xf]
  %v29 = vld [vmem:[%s3 + $0x18] sm:$0xf]
  %v30 = vld [vmem:[%s3 + $0x1c] sm:$0xf]
  %v31 = vld [vmem:[%s3 + $0x20] sm:$0xf]
  %v32 = vld [vmem:[%s3 + $0x24] sm:$0xf]
  %v33 = vld [vmem:[%s3 + $0x28] sm:$0xf]
  %v34 = vld [vmem:[%s3 + $0x2c] sm:$0xf]
  %v35 = vld [vmem:[%s3 + $0x30] sm:$0xf]
  %v36 = vld [vmem:[%s3 + $0x34] sm:$0xf]
  %v37 = vld [vmem:[%s3 + $0x38] sm:$0xf]
  %v38 = vld [vmem:[%s3 + $0x3c] sm:$0xf]
  %v39 = vld [vmem:[%s3 + $0x40] sm:$0xf]
  %v40 = vld [vmem:[%s3 + $0x44] sm:$0xf]
  %v41 = vld [vmem:[%s3 + $0x48] sm:$0xf]
  %v42 = vld [vmem:[%s3 + $0x4c] sm:$0xf]
  %v43 = vld [vmem:[%s3 + $0x50] sm:$0xf]
  %v44 = vld [vmem:[%s3 + $0x54] sm:$0xf]
  %v45 = vld [vmem:[%s3 + $0x58] sm:$0xf]
  %v46 = vld [vmem:[%s3 + $0x5c] sm:$0xf]
  %v47 = vld [vmem:[%s3 + $0x60] sm:$0xf]
  %v48 = vld [vmem:[%s3 + $0x64] sm:$0xf]
  %v49 = vld [vmem:[%s3 + $0x68] sm:$0xf]
  %v50 = vld [vmem:[%s3 + $0x6c] sm:$0xf]
  %v51 = vld [vmem:[%s3 + $0x70] sm:$0xf]
  %v52 = vld [vmem:[%s3 + $0x74] sm:$0xf]
  %v53 = vld [vmem:[%s3 + $0x78] sm:$0xf]
  %v54 = vld [vmem:[%s3 + $0x7c] sm:$0xf]
  %v55 = vld [vmem:[%s3 + $0x80] sm:$0xf]
  %v56 = vld [vmem:[%s3 + $0x84] sm:$0xf]
  %v57 = vld [vmem:[%s3 + $0x88] sm:$0xf]
  %v58 = vld [vmem:[%s3 + $0x8c] sm:$0xf]
  %v59 = vld [vmem:[%s3 + $0x90] sm:$0xf]
  %v60 = vld [vmem:[%s3 + $0x94] sm:$0xf]
  %v61 = vld [vmem:[%s3 + $0x98] sm:$0xf]
  %v62 = vld [vmem:[%s3 + $0x9c] sm:$0xf]
  %v63 = vld [vmem:[%s3 + $0xa0] sm:$0xf]
  %v64 = vld [vmem:[%s3 + $0xa4] sm:$0xf]
  %v65 = vld [vmem:[%s3 + $0xa8] sm:$0xf]
  %v66 = vld [vmem:[%s3 + $0xac] sm:$0xf]
  %v67 = vld [vmem:[%s3 + $0xb0] sm:$0xf]
  %v68 = vld [vmem:[%s3 + $0xb4] sm:$0xf]
  %v69 = vld [vmem:[%s3 + $0xb8] sm:$0xf]
  %v70 = vld [vmem:[%s3 + $0xbc] sm:$0xf]
  %v71 = vld [vmem:[%s3 + $0xc0] sm:$0xf]
  %v72 = vld [vmem:[%s3 + $0xc4] sm:$0xf]
  %v73 = vld [vmem:[%s3 + $0xc8] sm:$0xf]
  %v74 = vld [vmem:[%s3 + $0xcc] sm:$0xf]
  %v75 = vld [vmem:[%s3 + $0xd0] sm:$0xf]
  %v76 = vld [vmem:[%s3 + $0xd4] sm:$0xf]
  %v77 = vld [vmem:[%s3 + $0xd8] sm:$0xf]
  %v78 = vld [vmem:[%s3 + $0xdc] sm:$0xf]
  %v79 = vld [vmem:[%s3 + $0xe0] sm:$0xf]
  %v80 = vld [vmem:[%s3 + $0xe4] sm:$0xf]
  %v81 = vld [vmem:[%s3 + $0xe8] sm:$0xf]
  %v82 = vld [vmem:[%s3 + $0xec] sm:$0xf]
  %v83 = vld [vmem:[%s3 + $0xf0] sm:$0xf]
  %v84 = vld [vmem:[%s3 + $0xf4] sm:$0xf]
  %v85 = vld [vmem:[%s3 + $0xf8] sm:$0xf]
  %v86 = vld [vmem:[%s3 + $0xfc] sm:$0xf]
  %v87 = vunpack.c.l.bf16 %v23
  %v88 = vunpack.c.l.bf16 %v24
  %v89 = vunpack.c.l.bf16 %v25
  %v90 = vunpack.c.l.bf16 %v26
  %v91 = vunpack.c.l.bf16 %v27
  %v92 = vunpack.c.l.bf16 %v28
  %v93 = vunpack.c.l.bf16 %v29
  %v94 = vunpack.c.l.bf16 %v30
  %v95 = vunpack.c.l.bf16 %v31
  %v96 = vunpack.c.l.bf16 %v32
  %v97 = vunpack.c.l.bf16 %v33
  %v98 = vunpack.c.l.bf16 %v34
  %v99 = vunpack.c.l.bf16 %v35
  %v100 = vunpack.c.l.bf16 %v36
  %v101 = vunpack.c.l.bf16 %v37
  %v102 = vunpack.c.l.bf16 %v38
  %v103 = vunpack.c.l.bf16 %v39
  %v104 = vunpack.c.l.bf16 %v40
  %v105 = vunpack.c.l.bf16 %v41
  %v106 = vunpack.c.l.bf16 %v42
  %v107 = vunpack.c.l.bf16 %v43
  %v108 = vunpack.c.l.bf16 %v44
  %v109 = vunpack.c.l.bf16 %v45
  %v110 = vunpack.c.l.bf16 %v46
  %v111 = vunpack.c.l.bf16 %v47
  %v112 = vunpack.c.l.bf16 %v48
  %v113 = vunpack.c.l.bf16 %v49
  %v114 = vunpack.c.l.bf16 %v50
  %v115 = vunpack.c.l.bf16 %v51
  %v116 = vunpack.c.l.bf16 %v52
  %v117 = vunpack.c.l.bf16 %v53
  %v118 = vunpack.c.l.bf16 %v54
  %v119 = vunpack.c.l.bf16 %v55
  %v120 = vunpack.c.l.bf16 %v56
  %v121 = vunpack.c.l.bf16 %v57
  %v122 = vunpack.c.l.bf16 %v58
  %v123 = vunpack.c.l.bf16 %v59
  %v124 = vunpack.c.l.bf16 %v60
  %v125 = vunpack.c.l.bf16 %v61
  %v126 = vunpack.c.l.bf16 %v62
  %v127 = vunpack.c.l.bf16 %v63
  %v128 = vunpack.c.l.bf16 %v64
  %v129 = vunpack.c.l.bf16 %v65
  %v130 = vunpack.c.l.bf16 %v66
  %v131 = vunpack.c.l.bf16 %v67
  %v132 = vunpack.c.l.bf16 %v68
  %v133 = vunpack.c.l.bf16 %v69
  %v134 = vunpack.c.l.bf16 %v70
  %v135 = vunpack.c.l.bf16 %v71
  %v136 = vunpack.c.l.bf16 %v72
  %v137 = vunpack.c.l.bf16 %v73
  %v138 = vunpack.c.l.bf16 %v74
  %v139 = vunpack.c.l.bf16 %v75
  %v140 = vunpack.c.l.bf16 %v76
  %v141 = vunpack.c.l.bf16 %v77
  %v142 = vunpack.c.l.bf16 %v78
  %v143 = vunpack.c.l.bf16 %v79
  %v144 = vunpack.c.l.bf16 %v80
  %v145 = vunpack.c.l.bf16 %v81
  %v146 = vunpack.c.l.bf16 %v82
  %v147 = vunpack.c.l.bf16 %v83
  %v148 = vunpack.c.l.bf16 %v84
  %v149 = vunpack.c.l.bf16 %v85
  %v150 = vunpack.c.l.bf16 %v86
  %v151 = vld [vmem:[%s4] sm:$0x1]
  %v153 = vperm.slane %v151, 0
  %v155 = vmul.f32 %v87, %v153
  %v156 = vmul.f32 %v88, %v153
  %v157 = vmul.f32 %v89, %v153
  %v158 = vmul.f32 %v90, %v153
  %v159 = vmul.f32 %v91, %v153
  %v160 = vmul.f32 %v92, %v153
  %v161 = vmul.f32 %v93, %v153
  %v162 = vmul.f32 %v94, %v153
  %v163 = vmul.f32 %v95, %v153
  %v164 = vmul.f32 %v96, %v153
  %v165 = vmul.f32 %v97, %v153
  %v166 = vmul.f32 %v98, %v153
  %v167 = vmul.f32 %v99, %v153
  %v168 = vmul.f32 %v100, %v153
  %v169 = vmul.f32 %v101, %v153
  %v170 = vmul.f32 %v102, %v153
  %v171 = vmul.f32 %v103, %v153
  %v172 = vmul.f32 %v104, %v153
  %v173 = vmul.f32 %v105, %v153
  %v174 = vmul.f32 %v106, %v153
  %v175 = vmul.f32 %v107, %v153
  %v176 = vmul.f32 %v108, %v153
  %v177 = vmul.f32 %v109, %v153
  %v178 = vmul.f32 %v110, %v153
  %v179 = vmul.f32 %v111, %v153
  %v180 = vmul.f32 %v112, %v153
  %v181 = vmul.f32 %v113, %v153
  %v182 = vmul.f32 %v114, %v153
  %v183 = vmul.f32 %v115, %v153
  %v184 = vmul.f32 %v116, %v153
  %v185 = vmul.f32 %v117, %v153
  %v186 = vmul.f32 %v118, %v153
  %v187 = vmul.f32 %v119, %v153
  %v188 = vmul.f32 %v120, %v153
  %v189 = vmul.f32 %v121, %v153
  %v190 = vmul.f32 %v122, %v153
  %v191 = vmul.f32 %v123, %v153
  %v192 = vmul.f32 %v124, %v153
  %v193 = vmul.f32 %v125, %v153
  %v194 = vmul.f32 %v126, %v153
  %v195 = vmul.f32 %v127, %v153
  %v196 = vmul.f32 %v128, %v153
  %v197 = vmul.f32 %v129, %v153
  %v198 = vmul.f32 %v130, %v153
  %v199 = vmul.f32 %v131, %v153
  %v200 = vmul.f32 %v132, %v153
  %v201 = vmul.f32 %v133, %v153
  %v202 = vmul.f32 %v134, %v153
  %v203 = vmul.f32 %v135, %v153
  %v204 = vmul.f32 %v136, %v153
  %v205 = vmul.f32 %v137, %v153
  %v206 = vmul.f32 %v138, %v153
  %v207 = vmul.f32 %v139, %v153
  %v208 = vmul.f32 %v140, %v153
  %v209 = vmul.f32 %v141, %v153
  %v210 = vmul.f32 %v142, %v153
  %v211 = vmul.f32 %v143, %v153
  %v212 = vmul.f32 %v144, %v153
  %v213 = vmul.f32 %v145, %v153
  %v214 = vmul.f32 %v146, %v153
  %v215 = vmul.f32 %v147, %v153
  %v216 = vmul.f32 %v148, %v153
  %v217 = vmul.f32 %v149, %v153
  %v218 = vmul.f32 %v150, %v153
  %v219 = vld [vmem:[%s5] sm:$0x1]
  %v221 = vperm.slane %v219, 0
  %v223 = vadd.f32 %v155, %v221
  %v224 = vadd.f32 %v156, %v221
  %v225 = vadd.f32 %v157, %v221
  %v226 = vadd.f32 %v158, %v221
  %v227 = vadd.f32 %v159, %v221
  %v228 = vadd.f32 %v160, %v221
  %v229 = vadd.f32 %v161, %v221
  %v230 = vadd.f32 %v162, %v221
  %v231 = vadd.f32 %v163, %v221
  %v232 = vadd.f32 %v164, %v221
  %v233 = vadd.f32 %v165, %v221
  %v234 = vadd.f32 %v166, %v221
  %v235 = vadd.f32 %v167, %v221
  %v236 = vadd.f32 %v168, %v221
  %v237 = vadd.f32 %v169, %v221
  %v238 = vadd.f32 %v170, %v221
  %v239 = vadd.f32 %v171, %v221
  %v240 = vadd.f32 %v172, %v221
  %v241 = vadd.f32 %v173, %v221
  %v242 = vadd.f32 %v174, %v221
  %v243 = vadd.f32 %v175, %v221
  %v244 = vadd.f32 %v176, %v221
  %v245 = vadd.f32 %v177, %v221
  %v246 = vadd.f32 %v178, %v221
  %v247 = vadd.f32 %v179, %v221
  %v248 = vadd.f32 %v180, %v221
  %v249 = vadd.f32 %v181, %v221
  %v250 = vadd.f32 %v182, %v221
  %v251 = vadd.f32 %v183, %v221
  %v252 = vadd.f32 %v184, %v221
  %v253 = vadd.f32 %v185, %v221
  %v254 = vadd.f32 %v186, %v221
  %v255 = vadd.f32 %v187, %v221
  %v256 = vadd.f32 %v188, %v221
  %v257 = vadd.f32 %v189, %v221
  %v258 = vadd.f32 %v190, %v221
  %v259 = vadd.f32 %v191, %v221
  %v260 = vadd.f32 %v192, %v221
  %v261 = vadd.f32 %v193, %v221
  %v262 = vadd.f32 %v194, %v221
  %v263 = vadd.f32 %v195, %v221
  %v264 = vadd.f32 %v196, %v221
  %v265 = vadd.f32 %v197, %v221
  %v266 = vadd.f32 %v198, %v221
  %v267 = vadd.f32 %v199, %v221
  %v268 = vadd.f32 %v200, %v221
  %v269 = vadd.f32 %v201, %v221
  %v270 = vadd.f32 %v202, %v221
  %v271 = vadd.f32 %v203, %v221
  %v272 = vadd.f32 %v204, %v221
  %v273 = vadd.f32 %v205, %v221
  %v274 = vadd.f32 %v206, %v221
  %v275 = vadd.f32 %v207, %v221
  %v276 = vadd.f32 %v208, %v221
  %v277 = vadd.f32 %v209, %v221
  %v278 = vadd.f32 %v210, %v221
  %v279 = vadd.f32 %v211, %v221
  %v280 = vadd.f32 %v212, %v221
  %v281 = vadd.f32 %v213, %v221
  %v282 = vadd.f32 %v214, %v221
  %v283 = vadd.f32 %v215, %v221
  %v284 = vadd.f32 %v216, %v221
  %v285 = vadd.f32 %v217, %v221
  %v286 = vadd.f32 %v218, %v221
  %v287 = vld [vmem:[%s0] sm:$0xf]
  %v288 = vld [vmem:[%s0 + $0x4] sm:$0xf]
  %v289 = vld [vmem:[%s0 + $0x8] sm:$0xf]
  %v290 = vld [vmem:[%s0 + $0xc] sm:$0xf]
  %v291 = vld [vmem:[%s0 + $0x10] sm:$0xf]
  %v292 = vld [vmem:[%s0 + $0x14] sm:$0xf]
  %v293 = vld [vmem:[%s0 + $0x18] sm:$0xf]
  %v294 = vld [vmem:[%s0 + $0x1c] sm:$0xf]
  %v295 = vld [vmem:[%s0 + $0x20] sm:$0xf]
  %v296 = vld [vmem:[%s0 + $0x24] sm:$0xf]
  %v297 = vld [vmem:[%s0 + $0x28] sm:$0xf]
  %v298 = vld [vmem:[%s0 + $0x2c] sm:$0xf]
  %v299 = vld [vmem:[%s0 + $0x30] sm:$0xf]
  %v300 = vld [vmem:[%s0 + $0x34] sm:$0xf]
  %v301 = vld [vmem:[%s0 + $0x38] sm:$0xf]
  %v302 = vld [vmem:[%s0 + $0x3c] sm:$0xf]
  %v303 = vld [vmem:[%s0 + $0x40] sm:$0xf]
  %v304 = vld [vmem:[%s0 + $0x44] sm:$0xf]
  %v305 = vld [vmem:[%s0 + $0x48] sm:$0xf]
  %v306 = vld [vmem:[%s0 + $0x4c] sm:$0xf]
  %v307 = vld [vmem:[%s0 + $0x50] sm:$0xf]
  %v308 = vld [vmem:[%s0 + $0x54] sm:$0xf]
  %v309 = vld [vmem:[%s0 + $0x58] sm:$0xf]
  %v310 = vld [vmem:[%s0 + $0x5c] sm:$0xf]
  %v311 = vld [vmem:[%s0 + $0x60] sm:$0xf]
  %v312 = vld [vmem:[%s0 + $0x64] sm:$0xf]
  %v313 = vld [vmem:[%s0 + $0x68] sm:$0xf]
  %v314 = vld [vmem:[%s0 + $0x6c] sm:$0xf]
  %v315 = vld [vmem:[%s0 + $0x70] sm:$0xf]
  %v316 = vld [vmem:[%s0 + $0x74] sm:$0xf]
  %v317 = vld [vmem:[%s0 + $0x78] sm:$0xf]
  %v318 = vld [vmem:[%s0 + $0x7c] sm:$0xf]
  %v319 = vld [vmem:[%s0 + $0x80] sm:$0xf]
  %v320 = vld [vmem:[%s0 + $0x84] sm:$0xf]
  %v321 = vld [vmem:[%s0 + $0x88] sm:$0xf]
  %v322 = vld [vmem:[%s0 + $0x8c] sm:$0xf]
  %v323 = vld [vmem:[%s0 + $0x90] sm:$0xf]
  %v324 = vld [vmem:[%s0 + $0x94] sm:$0xf]
  %v325 = vld [vmem:[%s0 + $0x98] sm:$0xf]
  %v326 = vld [vmem:[%s0 + $0x9c] sm:$0xf]
  %v327 = vld [vmem:[%s0 + $0xa0] sm:$0xf]
  %v328 = vld [vmem:[%s0 + $0xa4] sm:$0xf]
  %v329 = vld [vmem:[%s0 + $0xa8] sm:$0xf]
  %v330 = vld [vmem:[%s0 + $0xac] sm:$0xf]
  %v331 = vld [vmem:[%s0 + $0xb0] sm:$0xf]
  %v332 = vld [vmem:[%s0 + $0xb4] sm:$0xf]
  %v333 = vld [vmem:[%s0 + $0xb8] sm:$0xf]
  %v334 = vld [vmem:[%s0 + $0xbc] sm:$0xf]
  %v335 = vld [vmem:[%s0 + $0xc0] sm:$0xf]
  %v336 = vld [vmem:[%s0 + $0xc4] sm:$0xf]
  %v337 = vld [vmem:[%s0 + $0xc8] sm:$0xf]
  %v338 = vld [vmem:[%s0 + $0xcc] sm:$0xf]
  %v339 = vld [vmem:[%s0 + $0xd0] sm:$0xf]
  %v340 = vld [vmem:[%s0 + $0xd4] sm:$0xf]
  %v341 = vld [vmem:[%s0 + $0xd8] sm:$0xf]
  %v342 = vld [vmem:[%s0 + $0xdc] sm:$0xf]
  %v343 = vld [vmem:[%s0 + $0xe0] sm:$0xf]
  %v344 = vld [vmem:[%s0 + $0xe4] sm:$0xf]
  %v345 = vld [vmem:[%s0 + $0xe8] sm:$0xf]
  %v346 = vld [vmem:[%s0 + $0xec] sm:$0xf]
  %v347 = vld [vmem:[%s0 + $0xf0] sm:$0xf]
  %v348 = vld [vmem:[%s0 + $0xf4] sm:$0xf]
  %v349 = vld [vmem:[%s0 + $0xf8] sm:$0xf]
  %v350 = vld [vmem:[%s0 + $0xfc] sm:$0xf]
  %v351 = vunpack.c.l.bf16 %v287
  %v352 = vunpack.c.l.bf16 %v288
  %v353 = vunpack.c.l.bf16 %v289
  %v354 = vunpack.c.l.bf16 %v290
  %v355 = vunpack.c.l.bf16 %v291
  %v356 = vunpack.c.l.bf16 %v292
  %v357 = vunpack.c.l.bf16 %v293
  %v358 = vunpack.c.l.bf16 %v294
  %v359 = vunpack.c.l.bf16 %v295
  %v360 = vunpack.c.l.bf16 %v296
  %v361 = vunpack.c.l.bf16 %v297
  %v362 = vunpack.c.l.bf16 %v298
  %v363 = vunpack.c.l.bf16 %v299
  %v364 = vunpack.c.l.bf16 %v300
  %v365 = vunpack.c.l.bf16 %v301
  %v366 = vunpack.c.l.bf16 %v302
  %v367 = vunpack.c.l.bf16 %v303
  %v368 = vunpack.c.l.bf16 %v304
  %v369 = vunpack.c.l.bf16 %v305
  %v370 = vunpack.c.l.bf16 %v306
  %v371 = vunpack.c.l.bf16 %v307
  %v372 = vunpack.c.l.bf16 %v308
  %v373 = vunpack.c.l.bf16 %v309
  %v374 = vunpack.c.l.bf16 %v310
  %v375 = vunpack.c.l.bf16 %v311
  %v376 = vunpack.c.l.bf16 %v312
  %v377 = vunpack.c.l.bf16 %v313
  %v378 = vunpack.c.l.bf16 %v314
  %v379 = vunpack.c.l.bf16 %v315
  %v380 = vunpack.c.l.bf16 %v316
  %v381 = vunpack.c.l.bf16 %v317
  %v382 = vunpack.c.l.bf16 %v318
  %v383 = vunpack.c.l.bf16 %v319
  %v384 = vunpack.c.l.bf16 %v320
  %v385 = vunpack.c.l.bf16 %v321
  %v386 = vunpack.c.l.bf16 %v322
  %v387 = vunpack.c.l.bf16 %v323
  %v388 = vunpack.c.l.bf16 %v324
  %v389 = vunpack.c.l.bf16 %v325
  %v390 = vunpack.c.l.bf16 %v326
  %v391 = vunpack.c.l.bf16 %v327
  %v392 = vunpack.c.l.bf16 %v328
  %v393 = vunpack.c.l.bf16 %v329
  %v394 = vunpack.c.l.bf16 %v330
  %v395 = vunpack.c.l.bf16 %v331
  %v396 = vunpack.c.l.bf16 %v332
  %v397 = vunpack.c.l.bf16 %v333
  %v398 = vunpack.c.l.bf16 %v334
  %v399 = vunpack.c.l.bf16 %v335
  %v400 = vunpack.c.l.bf16 %v336
  %v401 = vunpack.c.l.bf16 %v337
  %v402 = vunpack.c.l.bf16 %v338
  %v403 = vunpack.c.l.bf16 %v339
  %v404 = vunpack.c.l.bf16 %v340
  %v405 = vunpack.c.l.bf16 %v341
  %v406 = vunpack.c.l.bf16 %v342
  %v407 = vunpack.c.l.bf16 %v343
  %v408 = vunpack.c.l.bf16 %v344
  %v409 = vunpack.c.l.bf16 %v345
  %v410 = vunpack.c.l.bf16 %v346
  %v411 = vunpack.c.l.bf16 %v347
  %v412 = vunpack.c.l.bf16 %v348
  %v413 = vunpack.c.l.bf16 %v349
  %v414 = vunpack.c.l.bf16 %v350
  %v415 = vld [vmem:[%s1] sm:$0x1]
  %v417 = vperm.slane %v415, 0
  %v419 = vmul.f32 %v351, %v417
  %v420 = vmul.f32 %v352, %v417
  %v421 = vmul.f32 %v353, %v417
  %v422 = vmul.f32 %v354, %v417
  %v423 = vmul.f32 %v355, %v417
  %v424 = vmul.f32 %v356, %v417
  %v425 = vmul.f32 %v357, %v417
  %v426 = vmul.f32 %v358, %v417
  %v427 = vmul.f32 %v359, %v417
  %v428 = vmul.f32 %v360, %v417
  %v429 = vmul.f32 %v361, %v417
  %v430 = vmul.f32 %v362, %v417
  %v431 = vmul.f32 %v363, %v417
  %v432 = vmul.f32 %v364, %v417
  %v433 = vmul.f32 %v365, %v417
  %v434 = vmul.f32 %v366, %v417
  %v435 = vmul.f32 %v367, %v417
  %v436 = vmul.f32 %v368, %v417
  %v437 = vmul.f32 %v369, %v417
  %v438 = vmul.f32 %v370, %v417
  %v439 = vmul.f32 %v371, %v417
  %v440 = vmul.f32 %v372, %v417
  %v441 = vmul.f32 %v373, %v417
  %v442 = vmul.f32 %v374, %v417
  %v443 = vmul.f32 %v375, %v417
  %v444 = vmul.f32 %v376, %v417
  %v445 = vmul.f32 %v377, %v417
  %v446 = vmul.f32 %v378, %v417
  %v447 = vmul.f32 %v379, %v417
  %v448 = vmul.f32 %v380, %v417
  %v449 = vmul.f32 %v381, %v417
  %v450 = vmul.f32 %v382, %v417
  %v451 = vmul.f32 %v383, %v417
  %v452 = vmul.f32 %v384, %v417
  %v453 = vmul.f32 %v385, %v417
  %v454 = vmul.f32 %v386, %v417
  %v455 = vmul.f32 %v387, %v417
  %v456 = vmul.f32 %v388, %v417
  %v457 = vmul.f32 %v389, %v417
  %v458 = vmul.f32 %v390, %v417
  %v459 = vmul.f32 %v391, %v417
  %v460 = vmul.f32 %v392, %v417
  %v461 = vmul.f32 %v393, %v417
  %v462 = vmul.f32 %v394, %v417
  %v463 = vmul.f32 %v395, %v417
  %v464 = vmul.f32 %v396, %v417
  %v465 = vmul.f32 %v397, %v417
  %v466 = vmul.f32 %v398, %v417
  %v467 = vmul.f32 %v399, %v417
  %v468 = vmul.f32 %v400, %v417
  %v469 = vmul.f32 %v401, %v417
  %v470 = vmul.f32 %v402, %v417
  %v471 = vmul.f32 %v403, %v417
  %v472 = vmul.f32 %v404, %v417
  %v473 = vmul.f32 %v405, %v417
  %v474 = vmul.f32 %v406, %v417
  %v475 = vmul.f32 %v407, %v417
  %v476 = vmul.f32 %v408, %v417
  %v477 = vmul.f32 %v409, %v417
  %v478 = vmul.f32 %v410, %v417
  %v479 = vmul.f32 %v411, %v417
  %v480 = vmul.f32 %v412, %v417
  %v481 = vmul.f32 %v413, %v417
  %v482 = vmul.f32 %v414, %v417
  %v483 = vld [vmem:[%s2] sm:$0x1]
  %v485 = vperm.slane %v483, 0
  %v487 = vadd.f32 %v419, %v485
  %v488 = vadd.f32 %v420, %v485
  %v489 = vadd.f32 %v421, %v485
  %v490 = vadd.f32 %v422, %v485
  %v491 = vadd.f32 %v423, %v485
  %v492 = vadd.f32 %v424, %v485
  %v493 = vadd.f32 %v425, %v485
  %v494 = vadd.f32 %v426, %v485
  %v495 = vadd.f32 %v427, %v485
  %v496 = vadd.f32 %v428, %v485
  %v497 = vadd.f32 %v429, %v485
  %v498 = vadd.f32 %v430, %v485
  %v499 = vadd.f32 %v431, %v485
  %v500 = vadd.f32 %v432, %v485
  %v501 = vadd.f32 %v433, %v485
  %v502 = vadd.f32 %v434, %v485
  %v503 = vadd.f32 %v435, %v485
  %v504 = vadd.f32 %v436, %v485
  %v505 = vadd.f32 %v437, %v485
  %v506 = vadd.f32 %v438, %v485
  %v507 = vadd.f32 %v439, %v485
  %v508 = vadd.f32 %v440, %v485
  %v509 = vadd.f32 %v441, %v485
  %v510 = vadd.f32 %v442, %v485
  %v511 = vadd.f32 %v443, %v485
  %v512 = vadd.f32 %v444, %v485
  %v513 = vadd.f32 %v445, %v485
  %v514 = vadd.f32 %v446, %v485
  %v515 = vadd.f32 %v447, %v485
  %v516 = vadd.f32 %v448, %v485
  %v517 = vadd.f32 %v449, %v485
  %v518 = vadd.f32 %v450, %v485
  %v519 = vadd.f32 %v451, %v485
  %v520 = vadd.f32 %v452, %v485
  %v521 = vadd.f32 %v453, %v485
  %v522 = vadd.f32 %v454, %v485
  %v523 = vadd.f32 %v455, %v485
  %v524 = vadd.f32 %v456, %v485
  %v525 = vadd.f32 %v457, %v485
  %v526 = vadd.f32 %v458, %v485
  %v527 = vadd.f32 %v459, %v485
  %v528 = vadd.f32 %v460, %v485
  %v529 = vadd.f32 %v461, %v485
  %v530 = vadd.f32 %v462, %v485
  %v531 = vadd.f32 %v463, %v485
  %v532 = vadd.f32 %v464, %v485
  %v533 = vadd.f32 %v465, %v485
  %v534 = vadd.f32 %v466, %v485
  %v535 = vadd.f32 %v467, %v485
  %v536 = vadd.f32 %v468, %v485
  %v537 = vadd.f32 %v469, %v485
  %v538 = vadd.f32 %v470, %v485
  %v539 = vadd.f32 %v471, %v485
  %v540 = vadd.f32 %v472, %v485
  %v541 = vadd.f32 %v473, %v485
  %v542 = vadd.f32 %v474, %v485
  %v543 = vadd.f32 %v475, %v485
  %v544 = vadd.f32 %v476, %v485
  %v545 = vadd.f32 %v477, %v485
  %v546 = vadd.f32 %v478, %v485
  %v547 = vadd.f32 %v479, %v485
  %v548 = vadd.f32 %v480, %v485
  %v549 = vadd.f32 %v481, %v485
  %v550 = vadd.f32 %v482, %v485
  %v551 = vadd.f32 %v487, %v223
  %v552 = vadd.f32 %v488, %v224
  %v553 = vadd.f32 %v489, %v225
  %v554 = vadd.f32 %v490, %v226
  %v555 = vadd.f32 %v491, %v227
  %v556 = vadd.f32 %v492, %v228
  %v557 = vadd.f32 %v493, %v229
  %v558 = vadd.f32 %v494, %v230
  %v559 = vadd.f32 %v495, %v231
  %v560 = vadd.f32 %v496, %v232
  %v561 = vadd.f32 %v497, %v233
  %v562 = vadd.f32 %v498, %v234
  %v563 = vadd.f32 %v499, %v235
  %v564 = vadd.f32 %v500, %v236
  %v565 = vadd.f32 %v501, %v237
  %v566 = vadd.f32 %v502, %v238
  %v567 = vadd.f32 %v503, %v239
  %v568 = vadd.f32 %v504, %v240
  %v569 = vadd.f32 %v505, %v241
  %v570 = vadd.f32 %v506, %v242
  %v571 = vadd.f32 %v507, %v243
  %v572 = vadd.f32 %v508, %v244
  %v573 = vadd.f32 %v509, %v245
  %v574 = vadd.f32 %v510, %v246
  %v575 = vadd.f32 %v511, %v247
  %v576 = vadd.f32 %v512, %v248
  %v577 = vadd.f32 %v513, %v249
  %v578 = vadd.f32 %v514, %v250
  %v579 = vadd.f32 %v515, %v251
  %v580 = vadd.f32 %v516, %v252
  %v581 = vadd.f32 %v517, %v253
  %v582 = vadd.f32 %v518, %v254
  %v583 = vadd.f32 %v519, %v255
  %v584 = vadd.f32 %v520, %v256
  %v585 = vadd.f32 %v521, %v257
  %v586 = vadd.f32 %v522, %v258
  %v587 = vadd.f32 %v523, %v259
  %v588 = vadd.f32 %v524, %v260
  %v589 = vadd.f32 %v525, %v261
  %v590 = vadd.f32 %v526, %v262
  %v591 = vadd.f32 %v527, %v263
  %v592 = vadd.f32 %v528, %v264
  %v593 = vadd.f32 %v529, %v265
  %v594 = vadd.f32 %v530, %v266
  %v595 = vadd.f32 %v531, %v267
  %v596 = vadd.f32 %v532, %v268
  %v597 = vadd.f32 %v533, %v269
  %v598 = vadd.f32 %v534, %v270
  %v599 = vadd.f32 %v535, %v271
  %v600 = vadd.f32 %v536, %v272
  %v601 = vadd.f32 %v537, %v273
  %v602 = vadd.f32 %v538, %v274
  %v603 = vadd.f32 %v539, %v275
  %v604 = vadd.f32 %v540, %v276
  %v605 = vadd.f32 %v541, %v277
  %v606 = vadd.f32 %v542, %v278
  %v607 = vadd.f32 %v543, %v279
  %v608 = vadd.f32 %v544, %v280
  %v609 = vadd.f32 %v545, %v281
  %v610 = vadd.f32 %v546, %v282
  %v611 = vadd.f32 %v547, %v283
  %v612 = vadd.f32 %v548, %v284
  %v613 = vadd.f32 %v549, %v285
  %v614 = vadd.f32 %v550, %v286
  %v615 = vmax.f32 %v551, 0.0
  %v616 = vmax.f32 %v552, 0.0
  %v617 = vmax.f32 %v553, 0.0
  %v618 = vmax.f32 %v554, 0.0
  %v619 = vmax.f32 %v555, 0.0
  %v620 = vmax.f32 %v556, 0.0
  %v621 = vmax.f32 %v557, 0.0
  %v622 = vmax.f32 %v558, 0.0
  %v623 = vmax.f32 %v559, 0.0
  %v624 = vmax.f32 %v560, 0.0
  %v625 = vmax.f32 %v561, 0.0
  %v626 = vmax.f32 %v562, 0.0
  %v627 = vmax.f32 %v563, 0.0
  %v628 = vmax.f32 %v564, 0.0
  %v629 = vmax.f32 %v565, 0.0
  %v630 = vmax.f32 %v566, 0.0
  %v631 = vmax.f32 %v567, 0.0
  %v632 = vmax.f32 %v568, 0.0
  %v633 = vmax.f32 %v569, 0.0
  %v634 = vmax.f32 %v570, 0.0
  %v635 = vmax.f32 %v571, 0.0
  %v636 = vmax.f32 %v572, 0.0
  %v637 = vmax.f32 %v573, 0.0
  %v638 = vmax.f32 %v574, 0.0
  %v639 = vmax.f32 %v575, 0.0
  %v640 = vmax.f32 %v576, 0.0
  %v641 = vmax.f32 %v577, 0.0
  %v642 = vmax.f32 %v578, 0.0
  %v643 = vmax.f32 %v579, 0.0
  %v644 = vmax.f32 %v580, 0.0
  %v645 = vmax.f32 %v581, 0.0
  %v646 = vmax.f32 %v582, 0.0
  %v647 = vmax.f32 %v583, 0.0
  %v648 = vmax.f32 %v584, 0.0
  %v649 = vmax.f32 %v585, 0.0
  %v650 = vmax.f32 %v586, 0.0
  %v651 = vmax.f32 %v587, 0.0
  %v652 = vmax.f32 %v588, 0.0
  %v653 = vmax.f32 %v589, 0.0
  %v654 = vmax.f32 %v590, 0.0
  %v655 = vmax.f32 %v591, 0.0
  %v656 = vmax.f32 %v592, 0.0
  %v657 = vmax.f32 %v593, 0.0
  %v658 = vmax.f32 %v594, 0.0
  %v659 = vmax.f32 %v595, 0.0
  %v660 = vmax.f32 %v596, 0.0
  %v661 = vmax.f32 %v597, 0.0
  %v662 = vmax.f32 %v598, 0.0
  %v663 = vmax.f32 %v599, 0.0
  %v664 = vmax.f32 %v600, 0.0
  %v665 = vmax.f32 %v601, 0.0
  %v666 = vmax.f32 %v602, 0.0
  %v667 = vmax.f32 %v603, 0.0
  %v668 = vmax.f32 %v604, 0.0
  %v669 = vmax.f32 %v605, 0.0
  %v670 = vmax.f32 %v606, 0.0
  %v671 = vmax.f32 %v607, 0.0
  %v672 = vmax.f32 %v608, 0.0
  %v673 = vmax.f32 %v609, 0.0
  %v674 = vmax.f32 %v610, 0.0
  %v675 = vmax.f32 %v611, 0.0
  %v676 = vmax.f32 %v612, 0.0
  %v677 = vmax.f32 %v613, 0.0
  %v678 = vmax.f32 %v614, 0.0
  %v679 = vpack.c.bf16 %v615, %v615
  %v680 = vpack.c.bf16 %v616, %v616
  %v681 = vpack.c.bf16 %v617, %v617
  %v682 = vpack.c.bf16 %v618, %v618
  %v683 = vpack.c.bf16 %v619, %v619
  %v684 = vpack.c.bf16 %v620, %v620
  %v685 = vpack.c.bf16 %v621, %v621
  %v686 = vpack.c.bf16 %v622, %v622
  %v687 = vpack.c.bf16 %v623, %v623
  %v688 = vpack.c.bf16 %v624, %v624
  %v689 = vpack.c.bf16 %v625, %v625
  %v690 = vpack.c.bf16 %v626, %v626
  %v691 = vpack.c.bf16 %v627, %v627
  %v692 = vpack.c.bf16 %v628, %v628
  %v693 = vpack.c.bf16 %v629, %v629
  %v694 = vpack.c.bf16 %v630, %v630
  %v695 = vpack.c.bf16 %v631, %v631
  %v696 = vpack.c.bf16 %v632, %v632
  %v697 = vpack.c.bf16 %v633, %v633
  %v698 = vpack.c.bf16 %v634, %v634
  %v699 = vpack.c.bf16 %v635, %v635
  %v700 = vpack.c.bf16 %v636, %v636
  %v701 = vpack.c.bf16 %v637, %v637
  %v702 = vpack.c.bf16 %v638, %v638
  %v703 = vpack.c.bf16 %v639, %v639
  %v704 = vpack.c.bf16 %v640, %v640
  %v705 = vpack.c.bf16 %v641, %v641
  %v706 = vpack.c.bf16 %v642, %v642
  %v707 = vpack.c.bf16 %v643, %v643
  %v708 = vpack.c.bf16 %v644, %v644
  %v709 = vpack.c.bf16 %v645, %v645
  %v710 = vpack.c.bf16 %v646, %v646
  %v711 = vpack.c.bf16 %v647, %v647
  %v712 = vpack.c.bf16 %v648, %v648
  %v713 = vpack.c.bf16 %v649, %v649
  %v714 = vpack.c.bf16 %v650, %v650
  %v715 = vpack.c.bf16 %v651, %v651
  %v716 = vpack.c.bf16 %v652, %v652
  %v717 = vpack.c.bf16 %v653, %v653
  %v718 = vpack.c.bf16 %v654, %v654
  %v719 = vpack.c.bf16 %v655, %v655
  %v720 = vpack.c.bf16 %v656, %v656
  %v721 = vpack.c.bf16 %v657, %v657
  %v722 = vpack.c.bf16 %v658, %v658
  %v723 = vpack.c.bf16 %v659, %v659
  %v724 = vpack.c.bf16 %v660, %v660
  %v725 = vpack.c.bf16 %v661, %v661
  %v726 = vpack.c.bf16 %v662, %v662
  %v727 = vpack.c.bf16 %v663, %v663
  %v728 = vpack.c.bf16 %v664, %v664
  %v729 = vpack.c.bf16 %v665, %v665
  %v730 = vpack.c.bf16 %v666, %v666
  %v731 = vpack.c.bf16 %v667, %v667
  %v732 = vpack.c.bf16 %v668, %v668
  %v733 = vpack.c.bf16 %v669, %v669
  %v734 = vpack.c.bf16 %v670, %v670
  %v735 = vpack.c.bf16 %v671, %v671
  %v736 = vpack.c.bf16 %v672, %v672
  %v737 = vpack.c.bf16 %v673, %v673
  %v738 = vpack.c.bf16 %v674, %v674
  %v739 = vpack.c.bf16 %v675, %v675
  %v740 = vpack.c.bf16 %v676, %v676
  %v741 = vpack.c.bf16 %v677, %v677
  %v742 = vpack.c.bf16 %v678, %v678
  %vm743 = vcmask 125952
  %744 = vst.msk [vmem:[%s6] sm:$0xf] %vm743, %v679
  %745 = vst.msk [vmem:[%s6 + $0x4] sm:$0xf] %vm743, %v680
  %746 = vst.msk [vmem:[%s6 + $0x8] sm:$0xf] %vm743, %v681
  %747 = vst.msk [vmem:[%s6 + $0xc] sm:$0xf] %vm743, %v682
  %748 = vst.msk [vmem:[%s6 + $0x10] sm:$0xf] %vm743, %v683
  %749 = vst.msk [vmem:[%s6 + $0x14] sm:$0xf] %vm743, %v684
  %750 = vst.msk [vmem:[%s6 + $0x18] sm:$0xf] %vm743, %v685
  %751 = vst.msk [vmem:[%s6 + $0x1c] sm:$0xf] %vm743, %v686
  %752 = vst.msk [vmem:[%s6 + $0x20] sm:$0xf] %vm743, %v687
  %753 = vst.msk [vmem:[%s6 + $0x24] sm:$0xf] %vm743, %v688
  %754 = vst.msk [vmem:[%s6 + $0x28] sm:$0xf] %vm743, %v689
  %755 = vst.msk [vmem:[%s6 + $0x2c] sm:$0xf] %vm743, %v690
  %756 = vst.msk [vmem:[%s6 + $0x30] sm:$0xf] %vm743, %v691
  %757 = vst.msk [vmem:[%s6 + $0x34] sm:$0xf] %vm743, %v692
  %758 = vst.msk [vmem:[%s6 + $0x38] sm:$0xf] %vm743, %v693
  %759 = vst.msk [vmem:[%s6 + $0x3c] sm:$0xf] %vm743, %v694
  %760 = vst.msk [vmem:[%s6 + $0x40] sm:$0xf] %vm743, %v695
  %761 = vst.msk [vmem:[%s6 + $0x44] sm:$0xf] %vm743, %v696
  %762 = vst.msk [vmem:[%s6 + $0x48] sm:$0xf] %vm743, %v697
  %763 = vst.msk [vmem:[%s6 + $0x4c] sm:$0xf] %vm743, %v698
  %764 = vst.msk [vmem:[%s6 + $0x50] sm:$0xf] %vm743, %v699
  %765 = vst.msk [vmem:[%s6 + $0x54] sm:$0xf] %vm743, %v700
  %766 = vst.msk [vmem:[%s6 + $0x58] sm:$0xf] %vm743, %v701
  %767 = vst.msk [vmem:[%s6 + $0x5c] sm:$0xf] %vm743, %v702
  %768 = vst.msk [vmem:[%s6 + $0x60] sm:$0xf] %vm743, %v703
  %769 = vst.msk [vmem:[%s6 + $0x64] sm:$0xf] %vm743, %v704
  %770 = vst.msk [vmem:[%s6 + $0x68] sm:$0xf] %vm743, %v705
  %771 = vst.msk [vmem:[%s6 + $0x6c] sm:$0xf] %vm743, %v706
  %772 = vst.msk [vmem:[%s6 + $0x70] sm:$0xf] %vm743, %v707
  %773 = vst.msk [vmem:[%s6 + $0x74] sm:$0xf] %vm743, %v708
  %774 = vst.msk [vmem:[%s6 + $0x78] sm:$0xf] %vm743, %v709
  %775 = vst.msk [vmem:[%s6 + $0x7c] sm:$0xf] %vm743, %v710
  %776 = vst.msk [vmem:[%s6 + $0x80] sm:$0xf] %vm743, %v711
  %777 = vst.msk [vmem:[%s6 + $0x84] sm:$0xf] %vm743, %v712
  %778 = vst.msk [vmem:[%s6 + $0x88] sm:$0xf] %vm743, %v713
  %779 = vst.msk [vmem:[%s6 + $0x8c] sm:$0xf] %vm743, %v714
  %780 = vst.msk [vmem:[%s6 + $0x90] sm:$0xf] %vm743, %v715
  %781 = vst.msk [vmem:[%s6 + $0x94] sm:$0xf] %vm743, %v716
  %782 = vst.msk [vmem:[%s6 + $0x98] sm:$0xf] %vm743, %v717
  %783 = vst.msk [vmem:[%s6 + $0x9c] sm:$0xf] %vm743, %v718
  %784 = vst.msk [vmem:[%s6 + $0xa0] sm:$0xf] %vm743, %v719
  %785 = vst.msk [vmem:[%s6 + $0xa4] sm:$0xf] %vm743, %v720
  %786 = vst.msk [vmem:[%s6 + $0xa8] sm:$0xf] %vm743, %v721
  %787 = vst.msk [vmem:[%s6 + $0xac] sm:$0xf] %vm743, %v722
  %788 = vst.msk [vmem:[%s6 + $0xb0] sm:$0xf] %vm743, %v723
  %789 = vst.msk [vmem:[%s6 + $0xb4] sm:$0xf] %vm743, %v724
  %790 = vst.msk [vmem:[%s6 + $0xb8] sm:$0xf] %vm743, %v725
  %791 = vst.msk [vmem:[%s6 + $0xbc] sm:$0xf] %vm743, %v726
  %792 = vst.msk [vmem:[%s6 + $0xc0] sm:$0xf] %vm743, %v727
  %793 = vst.msk [vmem:[%s6 + $0xc4] sm:$0xf] %vm743, %v728
  %794 = vst.msk [vmem:[%s6 + $0xc8] sm:$0xf] %vm743, %v729
  %795 = vst.msk [vmem:[%s6 + $0xcc] sm:$0xf] %vm743, %v730
  %796 = vst.msk [vmem:[%s6 + $0xd0] sm:$0xf] %vm743, %v731
  %797 = vst.msk [vmem:[%s6 + $0xd4] sm:$0xf] %vm743, %v732
  %798 = vst.msk [vmem:[%s6 + $0xd8] sm:$0xf] %vm743, %v733
  %799 = vst.msk [vmem:[%s6 + $0xdc] sm:$0xf] %vm743, %v734
  %800 = vst.msk [vmem:[%s6 + $0xe0] sm:$0xf] %vm743, %v735
  %801 = vst.msk [vmem:[%s6 + $0xe4] sm:$0xf] %vm743, %v736
  %802 = vst.msk [vmem:[%s6 + $0xe8] sm:$0xf] %vm743, %v737
  %803 = vst.msk [vmem:[%s6 + $0xec] sm:$0xf] %vm743, %v738
  %804 = vst.msk [vmem:[%s6 + $0xf0] sm:$0xf] %vm743, %v739
  %805 = vst.msk [vmem:[%s6 + $0xf4] sm:$0xf] %vm743, %v740
  %806 = vst.msk [vmem:[%s6 + $0xf8] sm:$0xf] %vm743, %v741
  %807 = vst.msk [vmem:[%s6 + $0xfc] sm:$0xf] %vm743, %v742
  // Predicated region
  $region26: #{_lambda_.7} parent=0 // pred_check
    _
  $region27: #{_lambda_.7} parent=0 // pred_check_branch
    %809 = sbr.rel (0) target = $region29
  $region28: #{_lambda_.7} parent=0 // pred_region
    _
  $region29: #{_lambda_.7} parent=0 // pred_fallthru
    _
  // Predicated region
  $region30: #{_lambda_.7} parent=0 // pred_check
    _
  $region31: #{_lambda_.7} parent=0 // pred_check_branch
    %811 = sbr.rel (0) target = $region33
  $region32: #{_lambda_.7} parent=0 // pred_region
    _
  $region33: #{_lambda_.7} parent=0 // pred_fallthru
    _

// kernel: _lambda_.6
$region0: #{_lambda_.6}
  #allocation0 [shape = 'u32[]', space=smem, size = 0x4, offset = 0x4, fixed_abs, tag = 'smem constant byte address 0x4 - core index']
  #allocation1 [shape = 'u32[72,128]{1,0:T(1,128)}', space=vmem, size = 0x9000, scoped, tag = 'internal scratch']
  %s0 = inlined_call_operand.vmem [shape: bf16[512,4], index: 0, kind: input, shape index: {}]
  %s1 = inlined_call_operand.vmem [shape: f32[1,4], index: 1, kind: input, shape index: {}]
  %s2 = inlined_call_operand.vmem [shape: f32[1,4], index: 2, kind: input, shape index: {}]
  %s3 = inlined_call_operand.vmem [shape: bf16[4,16], index: 3, kind: input, shape index: {}]
  %s4 = inlined_call_operand.vmem [shape: bf16[512,4], index: 4, kind: input, shape index: {}]
  %s5 = inlined_call_operand.vmem [shape: bf16[4,16], index: 5, kind: input, shape index: {}]
  %s6 = inlined_call_operand.vmem [shape: bf16[512,16], index: 6, kind: output, shape index: {0}]
  %s7 = inlined_call_operand.vmem [shape: bf16[512,16], index: 7, kind: output, shape index: {1}]
  %s8 = inlined_call_operand.vmem [shape: f32[1,2,16], index: 8, kind: output, shape index: {2}]
  %s9 = inlined_call_operand.vmem [shape: f32[1,2,16], index: 9, kind: output, shape index: {3}]
  %10 = xla_tuple %s6, %s7, %s8, %s9
  %s11 = sld [smem:[#allocation0]]
  $region58: #{_lambda_.6} parent=0
    _
  %s13 = ssub.s32 1, %s11
  %s14 = scalar_select 0, %s13, %s11
  // Predicated region
  $region2: #{_lambda_.6} parent=0 // pred_check
    _
  $region3: #{_lambda_.6} parent=0 // pred_check_branch
    %16 = sbr.rel (0) target = $region5
  $region4: #{_lambda_.6} parent=0 // pred_region
    _
  $region5: #{_lambda_.6} parent=0 // pred_fallthru
    _
  // Predicated region
  $region6: #{_lambda_.6} parent=0 // pred_check
    _
  $region7: #{_lambda_.6} parent=0 // pred_check_branch
    %18 = sbr.rel (0) target = $region9
  $region8: #{_lambda_.6} parent=0 // pred_region
    _
  $region9: #{_lambda_.6} parent=0 // pred_fallthru
    _
  // Predicated region
  $region10: #{_lambda_.6} parent=0 // pred_check
    _
  $region11: #{_lambda_.6} parent=0 // pred_check_branch
    %20 = sbr.rel (0) target = $region13
  $region12: #{_lambda_.6} parent=0 // pred_region
    _
  $region13: #{_lambda_.6} parent=0 // pred_fallthru
    _
  // Predicated region
  $region14: #{_lambda_.6} parent=0 // pred_check
    _
  $region15: #{_lambda_.6} parent=0 // pred_check_branch
    %22 = sbr.rel (0) target = $region17
  $region16: #{_lambda_.6} parent=0 // pred_region
    _
  $region17: #{_lambda_.6} parent=0 // pred_fallthru
    _
  // Predicated region
  $region18: #{_lambda_.6} parent=0 // pred_check
    _
  $region19: #{_lambda_.6} parent=0 // pred_check_branch
    %24 = sbr.rel (0) target = $region21
  $region20: #{_lambda_.6} parent=0 // pred_region
    _
  $region21: #{_lambda_.6} parent=0 // pred_fallthru
    _
  // Predicated region
  $region22: #{_lambda_.6} parent=0 // pred_check
    _
  $region23: #{_lambda_.6} parent=0 // pred_check_branch
    %26 = sbr.rel (0) target = $region25
  $region24: #{_lambda_.6} parent=0 // pred_region
    _
  $region25: #{_lambda_.6} parent=0 // pred_fallthru
    _
  %v28 = vld [vmem:[%s0] sm:$0xf]
  %v29 = vld [vmem:[%s0 + $0x4] sm:$0xf]
  %v30 = vld [vmem:[%s0 + $0x8] sm:$0xf]
  %v31 = vld [vmem:[%s0 + $0xc] sm:$0xf]
  %v32 = vld [vmem:[%s0 + $0x10] sm:$0xf]
  %v33 = vld [vmem:[%s0 + $0x14] sm:$0xf]
  %v34 = vld [vmem:[%s0 + $0x18] sm:$0xf]
  %v35 = vld [vmem:[%s0 + $0x1c] sm:$0xf]
  %v36 = vld [vmem:[%s0 + $0x20] sm:$0xf]
  %v37 = vld [vmem:[%s0 + $0x24] sm:$0xf]
  %v38 = vld [vmem:[%s0 + $0x28] sm:$0xf]
  %v39 = vld [vmem:[%s0 + $0x2c] sm:$0xf]
  %v40 = vld [vmem:[%s0 + $0x30] sm:$0xf]
  %v41 = vld [vmem:[%s0 + $0x34] sm:$0xf]
  %v42 = vld [vmem:[%s0 + $0x38] sm:$0xf]
  %v43 = vld [vmem:[%s0 + $0x3c] sm:$0xf]
  %v44 = vld [vmem:[%s0 + $0x40] sm:$0xf]
  %v45 = vld [vmem:[%s0 + $0x44] sm:$0xf]
  %v46 = vld [vmem:[%s0 + $0x48] sm:$0xf]
  %v47 = vld [vmem:[%s0 + $0x4c] sm:$0xf]
  %v48 = vld [vmem:[%s0 + $0x50] sm:$0xf]
  %v49 = vld [vmem:[%s0 + $0x54] sm:$0xf]
  %v50 = vld [vmem:[%s0 + $0x58] sm:$0xf]
  %v51 = vld [vmem:[%s0 + $0x5c] sm:$0xf]
  %v52 = vld [vmem:[%s0 + $0x60] sm:$0xf]
  %v53 = vld [vmem:[%s0 + $0x64] sm:$0xf]
  %v54 = vld [vmem:[%s0 + $0x68] sm:$0xf]
  %v55 = vld [vmem:[%s0 + $0x6c] sm:$0xf]
  %v56 = vld [vmem:[%s0 + $0x70] sm:$0xf]
  %v57 = vld [vmem:[%s0 + $0x74] sm:$0xf]
  %v58 = vld [vmem:[%s0 + $0x78] sm:$0xf]
  %v59 = vld [vmem:[%s0 + $0x7c] sm:$0xf]
  %v60 = vld [vmem:[%s0 + $0x80] sm:$0xf]
  %v61 = vld [vmem:[%s0 + $0x84] sm:$0xf]
  %v62 = vld [vmem:[%s0 + $0x88] sm:$0xf]
  %v63 = vld [vmem:[%s0 + $0x8c] sm:$0xf]
  %v64 = vld [vmem:[%s0 + $0x90] sm:$0xf]
  %v65 = vld [vmem:[%s0 + $0x94] sm:$0xf]
  %v66 = vld [vmem:[%s0 + $0x98] sm:$0xf]
  %v67 = vld [vmem:[%s0 + $0x9c] sm:$0xf]
  %v68 = vld [vmem:[%s0 + $0xa0] sm:$0xf]
  %v69 = vld [vmem:[%s0 + $0xa4] sm:$0xf]
  %v70 = vld [vmem:[%s0 + $0xa8] sm:$0xf]
  %v71 = vld [vmem:[%s0 + $0xac] sm:$0xf]
  %v72 = vld [vmem:[%s0 + $0xb0] sm:$0xf]
  %v73 = vld [vmem:[%s0 + $0xb4] sm:$0xf]
  %v74 = vld [vmem:[%s0 + $0xb8] sm:$0xf]
  %v75 = vld [vmem:[%s0 + $0xbc] sm:$0xf]
  %v76 = vld [vmem:[%s0 + $0xc0] sm:$0xf]
  %v77 = vld [vmem:[%s0 + $0xc4] sm:$0xf]
  %v78 = vld [vmem:[%s0 + $0xc8] sm:$0xf]
  %v79 = vld [vmem:[%s0 + $0xcc] sm:$0xf]
  %v80 = vld [vmem:[%s0 + $0xd0] sm:$0xf]
  %v81 = vld [vmem:[%s0 + $0xd4] sm:$0xf]
  %v82 = vld [vmem:[%s0 + $0xd8] sm:$0xf]
  %v83 = vld [vmem:[%s0 + $0xdc] sm:$0xf]
  %v84 = vld [vmem:[%s0 + $0xe0] sm:$0xf]
  %v85 = vld [vmem:[%s0 + $0xe4] sm:$0xf]
  %v86 = vld [vmem:[%s0 + $0xe8] sm:$0xf]
  %v87 = vld [vmem:[%s0 + $0xec] sm:$0xf]
  %v88 = vld [vmem:[%s0 + $0xf0] sm:$0xf]
  %v89 = vld [vmem:[%s0 + $0xf4] sm:$0xf]
  %v90 = vld [vmem:[%s0 + $0xf8] sm:$0xf]
  %v91 = vld [vmem:[%s0 + $0xfc] sm:$0xf]
  %v92 = vunpack.c.l.bf16 %v28
  %v93 = vunpack.c.l.bf16 %v29
  %v94 = vunpack.c.l.bf16 %v30
  %v95 = vunpack.c.l.bf16 %v31
  %v96 = vunpack.c.l.bf16 %v32
  %v97 = vunpack.c.l.bf16 %v33
  %v98 = vunpack.c.l.bf16 %v34
  %v99 = vunpack.c.l.bf16 %v35
  %v100 = vunpack.c.l.bf16 %v36
  %v101 = vunpack.c.l.bf16 %v37
  %v102 = vunpack.c.l.bf16 %v38
  %v103 = vunpack.c.l.bf16 %v39
  %v104 = vunpack.c.l.bf16 %v40
  %v105 = vunpack.c.l.bf16 %v41
  %v106 = vunpack.c.l.bf16 %v42
  %v107 = vunpack.c.l.bf16 %v43
  %v108 = vunpack.c.l.bf16 %v44
  %v109 = vunpack.c.l.bf16 %v45
  %v110 = vunpack.c.l.bf16 %v46
  %v111 = vunpack.c.l.bf16 %v47
  %v112 = vunpack.c.l.bf16 %v48
  %v113 = vunpack.c.l.bf16 %v49
  %v114 = vunpack.c.l.bf16 %v50
  %v115 = vunpack.c.l.bf16 %v51
  %v116 = vunpack.c.l.bf16 %v52
  %v117 = vunpack.c.l.bf16 %v53
  %v118 = vunpack.c.l.bf16 %v54
  %v119 = vunpack.c.l.bf16 %v55
  %v120 = vunpack.c.l.bf16 %v56
  %v121 = vunpack.c.l.bf16 %v57
  %v122 = vunpack.c.l.bf16 %v58
  %v123 = vunpack.c.l.bf16 %v59
  %v124 = vunpack.c.l.bf16 %v60
  %v125 = vunpack.c.l.bf16 %v61
  %v126 = vunpack.c.l.bf16 %v62
  %v127 = vunpack.c.l.bf16 %v63
  %v128 = vunpack.c.l.bf16 %v64
  %v129 = vunpack.c.l.bf16 %v65
  %v130 = vunpack.c.l.bf16 %v66
  %v131 = vunpack.c.l.bf16 %v67
  %v132 = vunpack.c.l.bf16 %v68
  %v133 = vunpack.c.l.bf16 %v69
  %v134 = vunpack.c.l.bf16 %v70
  %v135 = vunpack.c.l.bf16 %v71
  %v136 = vunpack.c.l.bf16 %v72
  %v137 = vunpack.c.l.bf16 %v73
  %v138 = vunpack.c.l.bf16 %v74
  %v139 = vunpack.c.l.bf16 %v75
  %v140 = vunpack.c.l.bf16 %v76
  %v141 = vunpack.c.l.bf16 %v77
  %v142 = vunpack.c.l.bf16 %v78
  %v143 = vunpack.c.l.bf16 %v79
  %v144 = vunpack.c.l.bf16 %v80
  %v145 = vunpack.c.l.bf16 %v81
  %v146 = vunpack.c.l.bf16 %v82
  %v147 = vunpack.c.l.bf16 %v83
  %v148 = vunpack.c.l.bf16 %v84
  %v149 = vunpack.c.l.bf16 %v85
  %v150 = vunpack.c.l.bf16 %v86
  %v151 = vunpack.c.l.bf16 %v87
  %v152 = vunpack.c.l.bf16 %v88
  %v153 = vunpack.c.l.bf16 %v89
  %v154 = vunpack.c.l.bf16 %v90
  %v155 = vunpack.c.l.bf16 %v91
  %v156 = vld [vmem:[%s1] sm:$0x1]
  %v158 = vperm.slane %v156, 0
  %v160 = vmul.f32 %v92, %v158
  %v161 = vmul.f32 %v93, %v158
  %v162 = vmul.f32 %v94, %v158
  %v163 = vmul.f32 %v95, %v158
  %v164 = vmul.f32 %v96, %v158
  %v165 = vmul.f32 %v97, %v158
  %v166 = vmul.f32 %v98, %v158
  %v167 = vmul.f32 %v99, %v158
  %v168 = vmul.f32 %v100, %v158
  %v169 = vmul.f32 %v101, %v158
  %v170 = vmul.f32 %v102, %v158
  %v171 = vmul.f32 %v103, %v158
  %v172 = vmul.f32 %v104, %v158
  %v173 = vmul.f32 %v105, %v158
  %v174 = vmul.f32 %v106, %v158
  %v175 = vmul.f32 %v107, %v158
  %v176 = vmul.f32 %v108, %v158
  %v177 = vmul.f32 %v109, %v158
  %v178 = vmul.f32 %v110, %v158
  %v179 = vmul.f32 %v111, %v158
  %v180 = vmul.f32 %v112, %v158
  %v181 = vmul.f32 %v113, %v158
  %v182 = vmul.f32 %v114, %v158
  %v183 = vmul.f32 %v115, %v158
  %v184 = vmul.f32 %v116, %v158
  %v185 = vmul.f32 %v117, %v158
  %v186 = vmul.f32 %v118, %v158
  %v187 = vmul.f32 %v119, %v158
  %v188 = vmul.f32 %v120, %v158
  %v189 = vmul.f32 %v121, %v158
  %v190 = vmul.f32 %v122, %v158
  %v191 = vmul.f32 %v123, %v158
  %v192 = vmul.f32 %v124, %v158
  %v193 = vmul.f32 %v125, %v158
  %v194 = vmul.f32 %v126, %v158
  %v195 = vmul.f32 %v127, %v158
  %v196 = vmul.f32 %v128, %v158
  %v197 = vmul.f32 %v129, %v158
  %v198 = vmul.f32 %v130, %v158
  %v199 = vmul.f32 %v131, %v158
  %v200 = vmul.f32 %v132, %v158
  %v201 = vmul.f32 %v133, %v158
  %v202 = vmul.f32 %v134, %v158
  %v203 = vmul.f32 %v135, %v158
  %v204 = vmul.f32 %v136, %v158
  %v205 = vmul.f32 %v137, %v158
  %v206 = vmul.f32 %v138, %v158
  %v207 = vmul.f32 %v139, %v158
  %v208 = vmul.f32 %v140, %v158
  %v209 = vmul.f32 %v141, %v158
  %v210 = vmul.f32 %v142, %v158
  %v211 = vmul.f32 %v143, %v158
  %v212 = vmul.f32 %v144, %v158
  %v213 = vmul.f32 %v145, %v158
  %v214 = vmul.f32 %v146, %v158
  %v215 = vmul.f32 %v147, %v158
  %v216 = vmul.f32 %v148, %v158
  %v217 = vmul.f32 %v149, %v158
  %v218 = vmul.f32 %v150, %v158
  %v219 = vmul.f32 %v151, %v158
  %v220 = vmul.f32 %v152, %v158
  %v221 = vmul.f32 %v153, %v158
  %v222 = vmul.f32 %v154, %v158
  %v223 = vmul.f32 %v155, %v158
  %v224 = vld [vmem:[%s2] sm:$0x1]
  %v226 = vperm.slane %v224, 0
  %v228 = vadd.f32 %v160, %v226
  %v229 = vadd.f32 %v161, %v226
  %v230 = vadd.f32 %v162, %v226
  %v231 = vadd.f32 %v163, %v226
  %v232 = vadd.f32 %v164, %v226
  %v233 = vadd.f32 %v165, %v226
  %v234 = vadd.f32 %v166, %v226
  %v235 = vadd.f32 %v167, %v226
  %v236 = vadd.f32 %v168, %v226
  %v237 = vadd.f32 %v169, %v226
  %v238 = vadd.f32 %v170, %v226
  %v239 = vadd.f32 %v171, %v226
  %v240 = vadd.f32 %v172, %v226
  %v241 = vadd.f32 %v173, %v226
  %v242 = vadd.f32 %v174, %v226
  %v243 = vadd.f32 %v175, %v226
  %v244 = vadd.f32 %v176, %v226
  %v245 = vadd.f32 %v177, %v226
  %v246 = vadd.f32 %v178, %v226
  %v247 = vadd.f32 %v179, %v226
  %v248 = vadd.f32 %v180, %v226
  %v249 = vadd.f32 %v181, %v226
  %v250 = vadd.f32 %v182, %v226
  %v251 = vadd.f32 %v183, %v226
  %v252 = vadd.f32 %v184, %v226
  %v253 = vadd.f32 %v185, %v226
  %v254 = vadd.f32 %v186, %v226
  %v255 = vadd.f32 %v187, %v226
  %v256 = vadd.f32 %v188, %v226
  %v257 = vadd.f32 %v189, %v226
  %v258 = vadd.f32 %v190, %v226
  %v259 = vadd.f32 %v191, %v226
  %v260 = vadd.f32 %v192, %v226
  %v261 = vadd.f32 %v193, %v226
  %v262 = vadd.f32 %v194, %v226
  %v263 = vadd.f32 %v195, %v226
  %v264 = vadd.f32 %v196, %v226
  %v265 = vadd.f32 %v197, %v226
  %v266 = vadd.f32 %v198, %v226
  %v267 = vadd.f32 %v199, %v226
  %v268 = vadd.f32 %v200, %v226
  %v269 = vadd.f32 %v201, %v226
  %v270 = vadd.f32 %v202, %v226
  %v271 = vadd.f32 %v203, %v226
  %v272 = vadd.f32 %v204, %v226
  %v273 = vadd.f32 %v205, %v226
  %v274 = vadd.f32 %v206, %v226
  %v275 = vadd.f32 %v207, %v226
  %v276 = vadd.f32 %v208, %v226
  %v277 = vadd.f32 %v209, %v226
  %v278 = vadd.f32 %v210, %v226
  %v279 = vadd.f32 %v211, %v226
  %v280 = vadd.f32 %v212, %v226
  %v281 = vadd.f32 %v213, %v226
  %v282 = vadd.f32 %v214, %v226
  %v283 = vadd.f32 %v215, %v226
  %v284 = vadd.f32 %v216, %v226
  %v285 = vadd.f32 %v217, %v226
  %v286 = vadd.f32 %v218, %v226
  %v287 = vadd.f32 %v219, %v226
  %v288 = vadd.f32 %v220, %v226
  %v289 = vadd.f32 %v221, %v226
  %v290 = vadd.f32 %v222, %v226
  %v291 = vadd.f32 %v223, %v226
  %v292 = vmax.f32 %v228, 0.0
  %v293 = vmax.f32 %v229, 0.0
  %v294 = vmax.f32 %v230, 0.0
  %v295 = vmax.f32 %v231, 0.0
  %v296 = vmax.f32 %v232, 0.0
  %v297 = vmax.f32 %v233, 0.0
  %v298 = vmax.f32 %v234, 0.0
  %v299 = vmax.f32 %v235, 0.0
  %v300 = vmax.f32 %v236, 0.0
  %v301 = vmax.f32 %v237, 0.0
  %v302 = vmax.f32 %v238, 0.0
  %v303 = vmax.f32 %v239, 0.0
  %v304 = vmax.f32 %v240, 0.0
  %v305 = vmax.f32 %v241, 0.0
  %v306 = vmax.f32 %v242, 0.0
  %v307 = vmax.f32 %v243, 0.0
  %v308 = vmax.f32 %v244, 0.0
  %v309 = vmax.f32 %v245, 0.0
  %v310 = vmax.f32 %v246, 0.0
  %v311 = vmax.f32 %v247, 0.0
  %v312 = vmax.f32 %v248, 0.0
  %v313 = vmax.f32 %v249, 0.0
  %v314 = vmax.f32 %v250, 0.0
  %v315 = vmax.f32 %v251, 0.0
  %v316 = vmax.f32 %v252, 0.0
  %v317 = vmax.f32 %v253, 0.0
  %v318 = vmax.f32 %v254, 0.0
  %v319 = vmax.f32 %v255, 0.0
  %v320 = vmax.f32 %v256, 0.0
  %v321 = vmax.f32 %v257, 0.0
  %v322 = vmax.f32 %v258, 0.0
  %v323 = vmax.f32 %v259, 0.0
  %v324 = vmax.f32 %v260, 0.0
  %v325 = vmax.f32 %v261, 0.0
  %v326 = vmax.f32 %v262, 0.0
  %v327 = vmax.f32 %v263, 0.0
  %v328 = vmax.f32 %v264, 0.0
  %v329 = vmax.f32 %v265, 0.0
  %v330 = vmax.f32 %v266, 0.0
  %v331 = vmax.f32 %v267, 0.0
  %v332 = vmax.f32 %v268, 0.0
  %v333 = vmax.f32 %v269, 0.0
  %v334 = vmax.f32 %v270, 0.0
  %v335 = vmax.f32 %v271, 0.0
  %v336 = vmax.f32 %v272, 0.0
  %v337 = vmax.f32 %v273, 0.0
  %v338 = vmax.f32 %v274, 0.0
  %v339 = vmax.f32 %v275, 0.0
  %v340 = vmax.f32 %v276, 0.0
  %v341 = vmax.f32 %v277, 0.0
  %v342 = vmax.f32 %v278, 0.0
  %v343 = vmax.f32 %v279, 0.0
  %v344 = vmax.f32 %v280, 0.0
  %v345 = vmax.f32 %v281, 0.0
  %v346 = vmax.f32 %v282, 0.0
  %v347 = vmax.f32 %v283, 0.0
  %v348 = vmax.f32 %v284, 0.0
  %v349 = vmax.f32 %v285, 0.0
  %v350 = vmax.f32 %v286, 0.0
  %v351 = vmax.f32 %v287, 0.0
  %v352 = vmax.f32 %v288, 0.0
  %v353 = vmax.f32 %v289, 0.0
  %v354 = vmax.f32 %v290, 0.0
  %v355 = vmax.f32 %v291, 0.0
  %v356 = vpack.c.bf16 %v293, %v292
  %v357 = vpack.c.bf16 %v295, %v294
  %v358 = vpack.c.bf16 %v297, %v296
  %v359 = vpack.c.bf16 %v299, %v298
  %v360 = vpack.c.bf16 %v301, %v300
  %v361 = vpack.c.bf16 %v303, %v302
  %v362 = vpack.c.bf16 %v305, %v304
  %v363 = vpack.c.bf16 %v307, %v306
  %v364 = vpack.c.bf16 %v309, %v308
  %v365 = vpack.c.bf16 %v311, %v310
  %v366 = vpack.c.bf16 %v313, %v312
  %v367 = vpack.c.bf16 %v315, %v314
  %v368 = vpack.c.bf16 %v317, %v316
  %v369 = vpack.c.bf16 %v319, %v318
  %v370 = vpack.c.bf16 %v321, %v320
  %v371 = vpack.c.bf16 %v323, %v322
  %v372 = vpack.c.bf16 %v325, %v324
  %v373 = vpack.c.bf16 %v327, %v326
  %v374 = vpack.c.bf16 %v329, %v328
  %v375 = vpack.c.bf16 %v331, %v330
  %v376 = vpack.c.bf16 %v333, %v332
  %v377 = vpack.c.bf16 %v335, %v334
  %v378 = vpack.c.bf16 %v337, %v336
  %v379 = vpack.c.bf16 %v339, %v338
  %v380 = vpack.c.bf16 %v341, %v340
  %v381 = vpack.c.bf16 %v343, %v342
  %v382 = vpack.c.bf16 %v345, %v344
  %v383 = vpack.c.bf16 %v347, %v346
  %v384 = vpack.c.bf16 %v349, %v348
  %v385 = vpack.c.bf16 %v351, %v350
  %v386 = vpack.c.bf16 %v353, %v352
  %v387 = vpack.c.bf16 %v355, %v354
  %v388 = vld [vmem:[%s3] sm:$0x3]
  %vm389 = vcmask 31744
  %v391 = vsel %vm389, %v356, 0
  %v394 = vsel %vm389, %v357, 0
  %v397 = vsel %vm389, %v358, 0
  %v400 = vsel %vm389, %v359, 0
  %v403 = vsel %vm389, %v360, 0
  %v406 = vsel %vm389, %v361, 0
  %v409 = vsel %vm389, %v362, 0
  %v412 = vsel %vm389, %v363, 0
  %v415 = vsel %vm389, %v364, 0
  %v418 = vsel %vm389, %v365, 0
  %v421 = vsel %vm389, %v366, 0
  %v424 = vsel %vm389, %v367, 0
  %v427 = vsel %vm389, %v368, 0
  %v430 = vsel %vm389, %v369, 0
  %v433 = vsel %vm389, %v370, 0
  %v436 = vsel %vm389, %v371, 0
  %v439 = vsel %vm389, %v372, 0
  %v442 = vsel %vm389, %v373, 0
  %v445 = vsel %vm389, %v374, 0
  %v448 = vsel %vm389, %v375, 0
  %v451 = vsel %vm389, %v376, 0
  %v454 = vsel %vm389, %v377, 0
  %v457 = vsel %vm389, %v378, 0
  %v460 = vsel %vm389, %v379, 0
  %v463 = vsel %vm389, %v380, 0
  %v466 = vsel %vm389, %v381, 0
  %v469 = vsel %vm389, %v382, 0
  %v472 = vsel %vm389, %v383, 0
  %v475 = vsel %vm389, %v384, 0
  %v478 = vsel %vm389, %v385, 0
  %v481 = vsel %vm389, %v386, 0
  %v484 = vsel %vm389, %v387, 0
  %vm486 = vcmask 1041408
  %v488 = vsel %vm486, %v388, 0
  %490 = vmatpush.bf16.msra.mxu0 0
  %491 = vmatpush.bf16.msra.mxu0 0
  %492 = vmatpush.bf16.msra.mxu0 0
  %493 = vmatpush.bf16.msra.mxu0 0
  %494 = vmatpush.bf16.msra.mxu0 0
  %495 = vmatpush.bf16.msra.mxu0 0
  %496 = vmatpush.bf16.msra.mxu0 0
  %497 = vmatpush.bf16.msra.mxu0 %v488
  %498 = vmatmul.bf16.gmra.mxu0 %v391
  %v499 = vpop.f32.mrf.mxu0
  %v500 = vadd.f32 0.0, %v499
  %v501 = vpop.f32.mrf.mxu0
  %v502 = vadd.f32 0.0, %v501
  %503 = vmatmul.bf16.gmra.mxu0 %v394
  %v504 = vpop.f32.mrf.mxu0
  %v505 = vadd.f32 0.0, %v504
  %v506 = vpop.f32.mrf.mxu0
  %v507 = vadd.f32 0.0, %v506
  %508 = vmatmul.bf16.gmra.mxu0 %v397
  %v509 = vpop.f32.mrf.mxu0
  %v510 = vadd.f32 0.0, %v509
  %v511 = vpop.f32.mrf.mxu0
  %v512 = vadd.f32 0.0, %v511
  %513 = vmatmul.bf16.gmra.mxu0 %v400
  %v514 = vpop.f32.mrf.mxu0
  %v515 = vadd.f32 0.0, %v514
  %v516 = vpop.f32.mrf.mxu0
  %v517 = vadd.f32 0.0, %v516
  %518 = vmatmul.bf16.gmra.mxu0 %v403
  %v519 = vpop.f32.mrf.mxu0
  %v520 = vadd.f32 0.0, %v519
  %v521 = vpop.f32.mrf.mxu0
  %v522 = vadd.f32 0.0, %v521
  %523 = vmatmul.bf16.gmra.mxu0 %v406
  %v524 = vpop.f32.mrf.mxu0
  %v525 = vadd.f32 0.0, %v524
  %v526 = vpop.f32.mrf.mxu0
  %v527 = vadd.f32 0.0, %v526
  %528 = vmatmul.bf16.gmra.mxu0 %v409
  %v529 = vpop.f32.mrf.mxu0
  %v530 = vadd.f32 0.0, %v529
  %v531 = vpop.f32.mrf.mxu0
  %v532 = vadd.f32 0.0, %v531
  %533 = vmatmul.bf16.gmra.mxu0 %v412
  %v534 = vpop.f32.mrf.mxu0
  %v535 = vadd.f32 0.0, %v534
  %v536 = vpop.f32.mrf.mxu0
  %v537 = vadd.f32 0.0, %v536
  %538 = vmatmul.bf16.gmra.mxu0 %v415
  %v539 = vpop.f32.mrf.mxu0
  %v540 = vadd.f32 0.0, %v539
  %v541 = vpop.f32.mrf.mxu0
  %v542 = vadd.f32 0.0, %v541
  %543 = vmatmul.bf16.gmra.mxu0 %v418
  %v544 = vpop.f32.mrf.mxu0
  %v545 = vadd.f32 0.0, %v544
  %v546 = vpop.f32.mrf.mxu0
  %v547 = vadd.f32 0.0, %v546
  %548 = vmatmul.bf16.gmra.mxu0 %v421
  %v549 = vpop.f32.mrf.mxu0
  %v550 = vadd.f32 0.0, %v549
  %v551 = vpop.f32.mrf.mxu0
  %v552 = vadd.f32 0.0, %v551
  %553 = vmatmul.bf16.gmra.mxu0 %v424
  %v554 = vpop.f32.mrf.mxu0
  %v555 = vadd.f32 0.0, %v554
  %v556 = vpop.f32.mrf.mxu0
  %v557 = vadd.f32 0.0, %v556
  %558 = vmatmul.bf16.gmra.mxu0 %v427
  %v559 = vpop.f32.mrf.mxu0
  %v560 = vadd.f32 0.0, %v559
  %v561 = vpop.f32.mrf.mxu0
  %v562 = vadd.f32 0.0, %v561
  %563 = vmatmul.bf16.gmra.mxu0 %v430
  %v564 = vpop.f32.mrf.mxu0
  %v565 = vadd.f32 0.0, %v564
  %v566 = vpop.f32.mrf.mxu0
  %v567 = vadd.f32 0.0, %v566
  %568 = vmatmul.bf16.gmra.mxu0 %v433
  %v569 = vpop.f32.mrf.mxu0
  %v570 = vadd.f32 0.0, %v569
  %v571 = vpop.f32.mrf.mxu0
  %v572 = vadd.f32 0.0, %v571
  %573 = vmatmul.bf16.gmra.mxu0 %v436
  %v574 = vpop.f32.mrf.mxu0
  %v575 = vadd.f32 0.0, %v574
  %v576 = vpop.f32.mrf.mxu0
  %v577 = vadd.f32 0.0, %v576
  %578 = vmatmul.bf16.gmra.mxu0 %v439
  %v579 = vpop.f32.mrf.mxu0
  %v580 = vadd.f32 0.0, %v579
  %v581 = vpop.f32.mrf.mxu0
  %v582 = vadd.f32 0.0, %v581
  %583 = vmatmul.bf16.gmra.mxu0 %v442
  %v584 = vpop.f32.mrf.mxu0
  %v585 = vadd.f32 0.0, %v584
  %v586 = vpop.f32.mrf.mxu0
  %v587 = vadd.f32 0.0, %v586
  %588 = vmatmul.bf16.gmra.mxu0 %v445
  %v589 = vpop.f32.mrf.mxu0
  %v590 = vadd.f32 0.0, %v589
  %v591 = vpop.f32.mrf.mxu0
  %v592 = vadd.f32 0.0, %v591
  %593 = vmatmul.bf16.gmra.mxu0 %v448
  %v594 = vpop.f32.mrf.mxu0
  %v595 = vadd.f32 0.0, %v594
  %v596 = vpop.f32.mrf.mxu0
  %v597 = vadd.f32 0.0, %v596
  %598 = vmatmul.bf16.gmra.mxu0 %v451
  %v599 = vpop.f32.mrf.mxu0
  %v600 = vadd.f32 0.0, %v599
  %v601 = vpop.f32.mrf.mxu0
  %v602 = vadd.f32 0.0, %v601
  %603 = vmatmul.bf16.gmra.mxu0 %v454
  %v604 = vpop.f32.mrf.mxu0
  %v605 = vadd.f32 0.0, %v604
  %v606 = vpop.f32.mrf.mxu0
  %v607 = vadd.f32 0.0, %v606
  %608 = vmatmul.bf16.gmra.mxu0 %v457
  %v609 = vpop.f32.mrf.mxu0
  %v610 = vadd.f32 0.0, %v609
  %v611 = vpop.f32.mrf.mxu0
  %v612 = vadd.f32 0.0, %v611
  %613 = vmatmul.bf16.gmra.mxu0 %v460
  %v614 = vpop.f32.mrf.mxu0
  %v615 = vadd.f32 0.0, %v614
  %v616 = vpop.f32.mrf.mxu0
  %v617 = vadd.f32 0.0, %v616
  %618 = vmatmul.bf16.gmra.mxu0 %v463
  %v619 = vpop.f32.mrf.mxu0
  %v620 = vadd.f32 0.0, %v619
  %v621 = vpop.f32.mrf.mxu0
  %v622 = vadd.f32 0.0, %v621
  %623 = vmatmul.bf16.gmra.mxu0 %v466
  %v624 = vpop.f32.mrf.mxu0
  %v625 = vadd.f32 0.0, %v624
  %v626 = vpop.f32.mrf.mxu0
  %v627 = vadd.f32 0.0, %v626
  %628 = vmatmul.bf16.gmra.mxu0 %v469
  %v629 = vpop.f32.mrf.mxu0
  %v630 = vadd.f32 0.0, %v629
  %v631 = vpop.f32.mrf.mxu0
  %v632 = vadd.f32 0.0, %v631
  %633 = vmatmul.bf16.gmra.mxu0 %v472
  %v634 = vpop.f32.mrf.mxu0
  %v635 = vadd.f32 0.0, %v634
  %v636 = vpop.f32.mrf.mxu0
  %v637 = vadd.f32 0.0, %v636
  %638 = vmatmul.bf16.gmra.mxu0 %v475
  %v639 = vpop.f32.mrf.mxu0
  %v640 = vadd.f32 0.0, %v639
  %v641 = vpop.f32.mrf.mxu0
  %v642 = vadd.f32 0.0, %v641
  %643 = vmatmul.bf16.gmra.mxu0 %v478
  %v644 = vpop.f32.mrf.mxu0
  %v645 = vadd.f32 0.0, %v644
  %v646 = vpop.f32.mrf.mxu0
  %v647 = vadd.f32 0.0, %v646
  %648 = vmatmul.bf16.gmra.mxu0 %v481
  %v649 = vpop.f32.mrf.mxu0
  %v650 = vadd.f32 0.0, %v649
  %v651 = vpop.f32.mrf.mxu0
  %v652 = vadd.f32 0.0, %v651
  %653 = vmatmul.bf16.gmra.mxu0 %v484
  %v654 = vpop.f32.mrf.mxu0
  %v655 = vadd.f32 0.0, %v654
  %v656 = vpop.f32.mrf.mxu0
  %v657 = vadd.f32 0.0, %v656
  %658 = vdwg.mxu0
  %v659 = vpack.c.bf16 %v500, %v500
  %v660 = vpack.c.bf16 %v502, %v502
  %v661 = vpack.c.bf16 %v505, %v505
  %v662 = vpack.c.bf16 %v507, %v507
  %v663 = vpack.c.bf16 %v510, %v510
  %v664 = vpack.c.bf16 %v512, %v512
  %v665 = vpack.c.bf16 %v515, %v515
  %v666 = vpack.c.bf16 %v517, %v517
  %v667 = vpack.c.bf16 %v520, %v520
  %v668 = vpack.c.bf16 %v522, %v522
  %v669 = vpack.c.bf16 %v525, %v525
  %v670 = vpack.c.bf16 %v527, %v527
  %v671 = vpack.c.bf16 %v530, %v530
  %v672 = vpack.c.bf16 %v532, %v532
  %v673 = vpack.c.bf16 %v535, %v535
  %v674 = vpack.c.bf16 %v537, %v537
  %v675 = vpack.c.bf16 %v540, %v540
  %v676 = vpack.c.bf16 %v542, %v542
  %v677 = vpack.c.bf16 %v545, %v545
  %v678 = vpack.c.bf16 %v547, %v547
  %v679 = vpack.c.bf16 %v550, %v550
  %v680 = vpack.c.bf16 %v552, %v552
  %v681 = vpack.c.bf16 %v555, %v555
  %v682 = vpack.c.bf16 %v557, %v557
  %v683 = vpack.c.bf16 %v560, %v560
  %v684 = vpack.c.bf16 %v562, %v562
  %v685 = vpack.c.bf16 %v565, %v565
  %v686 = vpack.c.bf16 %v567, %v567
  %v687 = vpack.c.bf16 %v570, %v570
  %v688 = vpack.c.bf16 %v572, %v572
  %v689 = vpack.c.bf16 %v575, %v575
  %v690 = vpack.c.bf16 %v577, %v577
  %v691 = vpack.c.bf16 %v580, %v580
  %v692 = vpack.c.bf16 %v582, %v582
  %v693 = vpack.c.bf16 %v585, %v585
  %v694 = vpack.c.bf16 %v587, %v587
  %v695 = vpack.c.bf16 %v590, %v590
  %v696 = vpack.c.bf16 %v592, %v592
  %v697 = vpack.c.bf16 %v595, %v595
  %v698 = vpack.c.bf16 %v597, %v597
  %v699 = vpack.c.bf16 %v600, %v600
  %v700 = vpack.c.bf16 %v602, %v602
  %v701 = vpack.c.bf16 %v605, %v605
  %v702 = vpack.c.bf16 %v607, %v607
  %v703 = vpack.c.bf16 %v610, %v610
  %v704 = vpack.c.bf16 %v612, %v612
  %v705 = vpack.c.bf16 %v615, %v615
  %v706 = vpack.c.bf16 %v617, %v617
  %v707 = vpack.c.bf16 %v620, %v620
  %v708 = vpack.c.bf16 %v622, %v622
  %v709 = vpack.c.bf16 %v625, %v625
  %v710 = vpack.c.bf16 %v627, %v627
  %v711 = vpack.c.bf16 %v630, %v630
  %v712 = vpack.c.bf16 %v632, %v632
  %v713 = vpack.c.bf16 %v635, %v635
  %v714 = vpack.c.bf16 %v637, %v637
  %v715 = vpack.c.bf16 %v640, %v640
  %v716 = vpack.c.bf16 %v642, %v642
  %v717 = vpack.c.bf16 %v645, %v645
  %v718 = vpack.c.bf16 %v647, %v647
  %v719 = vpack.c.bf16 %v650, %v650
  %v720 = vpack.c.bf16 %v652, %v652
  %v721 = vpack.c.bf16 %v655, %v655
  %v722 = vpack.c.bf16 %v657, %v657
  %vm723 = vcmask 125952
  %724 = vst.msk [vmem:[%s6] sm:$0xf] %vm723, %v659
  %725 = vst.msk [vmem:[%s6 + $0x4] sm:$0xf] %vm723, %v660
  %726 = vst.msk [vmem:[%s6 + $0x8] sm:$0xf] %vm723, %v661
  %727 = vst.msk [vmem:[%s6 + $0xc] sm:$0xf] %vm723, %v662
  %728 = vst.msk [vmem:[%s6 + $0x10] sm:$0xf] %vm723, %v663
  %729 = vst.msk [vmem:[%s6 + $0x14] sm:$0xf] %vm723, %v664
  %730 = vst.msk [vmem:[%s6 + $0x18] sm:$0xf] %vm723, %v665
  %731 = vst.msk [vmem:[%s6 + $0x1c] sm:$0xf] %vm723, %v666
  %732 = vst.msk [vmem:[%s6 + $0x20] sm:$0xf] %vm723, %v667
  %733 = vst.msk [vmem:[%s6 + $0x24] sm:$0xf] %vm723, %v668
  %734 = vst.msk [vmem:[%s6 + $0x28] sm:$0xf] %vm723, %v669
  %735 = vst.msk [vmem:[%s6 + $0x2c] sm:$0xf] %vm723, %v670
  %736 = vst.msk [vmem:[%s6 + $0x30] sm:$0xf] %vm723, %v671
  %737 = vst.msk [vmem:[%s6 + $0x34] sm:$0xf] %vm723, %v672
  %738 = vst.msk [vmem:[%s6 + $0x38] sm:$0xf] %vm723, %v673
  %739 = vst.msk [vmem:[%s6 + $0x3c] sm:$0xf] %vm723, %v674
  %740 = vst.msk [vmem:[%s6 + $0x40] sm:$0xf] %vm723, %v675
  %741 = vst.msk [vmem:[%s6 + $0x44] sm:$0xf] %vm723, %v676
  %742 = vst.msk [vmem:[%s6 + $0x48] sm:$0xf] %vm723, %v677
  %743 = vst.msk [vmem:[%s6 + $0x4c] sm:$0xf] %vm723, %v678
  %744 = vst.msk [vmem:[%s6 + $0x50] sm:$0xf] %vm723, %v679
  %745 = vst.msk [vmem:[%s6 + $0x54] sm:$0xf] %vm723, %v680
  %746 = vst.msk [vmem:[%s6 + $0x58] sm:$0xf] %vm723, %v681
  %747 = vst.msk [vmem:[%s6 + $0x5c] sm:$0xf] %vm723, %v682
  %748 = vst.msk [vmem:[%s6 + $0x60] sm:$0xf] %vm723, %v683
  %749 = vst.msk [vmem:[%s6 + $0x64] sm:$0xf] %vm723, %v684
  %750 = vst.msk [vmem:[%s6 + $0x68] sm:$0xf] %vm723, %v685
  %751 = vst.msk [vmem:[%s6 + $0x6c] sm:$0xf] %vm723, %v686
  %752 = vst.msk [vmem:[%s6 + $0x70] sm:$0xf] %vm723, %v687
  %753 = vst.msk [vmem:[%s6 + $0x74] sm:$0xf] %vm723, %v688
  %754 = vst.msk [vmem:[%s6 + $0x78] sm:$0xf] %vm723, %v689
  %755 = vst.msk [vmem:[%s6 + $0x7c] sm:$0xf] %vm723, %v690
  %756 = vst.msk [vmem:[%s6 + $0x80] sm:$0xf] %vm723, %v691
  %757 = vst.msk [vmem:[%s6 + $0x84] sm:$0xf] %vm723, %v692
  %758 = vst.msk [vmem:[%s6 + $0x88] sm:$0xf] %vm723, %v693
  %759 = vst.msk [vmem:[%s6 + $0x8c] sm:$0xf] %vm723, %v694
  %760 = vst.msk [vmem:[%s6 + $0x90] sm:$0xf] %vm723, %v695
  %761 = vst.msk [vmem:[%s6 + $0x94] sm:$0xf] %vm723, %v696
  %762 = vst.msk [vmem:[%s6 + $0x98] sm:$0xf] %vm723, %v697
  %763 = vst.msk [vmem:[%s6 + $0x9c] sm:$0xf] %vm723, %v698
  %764 = vst.msk [vmem:[%s6 + $0xa0] sm:$0xf] %vm723, %v699
  %765 = vst.msk [vmem:[%s6 + $0xa4] sm:$0xf] %vm723, %v700
  %766 = vst.msk [vmem:[%s6 + $0xa8] sm:$0xf] %vm723, %v701
  %767 = vst.msk [vmem:[%s6 + $0xac] sm:$0xf] %vm723, %v702
  %768 = vst.msk [vmem:[%s6 + $0xb0] sm:$0xf] %vm723, %v703
  %769 = vst.msk [vmem:[%s6 + $0xb4] sm:$0xf] %vm723, %v704
  %770 = vst.msk [vmem:[%s6 + $0xb8] sm:$0xf] %vm723, %v705
  %771 = vst.msk [vmem:[%s6 + $0xbc] sm:$0xf] %vm723, %v706
  %772 = vst.msk [vmem:[%s6 + $0xc0] sm:$0xf] %vm723, %v707
  %773 = vst.msk [vmem:[%s6 + $0xc4] sm:$0xf] %vm723, %v708
  %774 = vst.msk [vmem:[%s6 + $0xc8] sm:$0xf] %vm723, %v709
  %775 = vst.msk [vmem:[%s6 + $0xcc] sm:$0xf] %vm723, %v710
  %776 = vst.msk [vmem:[%s6 + $0xd0] sm:$0xf] %vm723, %v711
  %777 = vst.msk [vmem:[%s6 + $0xd4] sm:$0xf] %vm723, %v712
  %778 = vst.msk [vmem:[%s6 + $0xd8] sm:$0xf] %vm723, %v713
  %779 = vst.msk [vmem:[%s6 + $0xdc] sm:$0xf] %vm723, %v714
  %780 = vst.msk [vmem:[%s6 + $0xe0] sm:$0xf] %vm723, %v715
  %781 = vst.msk [vmem:[%s6 + $0xe4] sm:$0xf] %vm723, %v716
  %782 = vst.msk [vmem:[%s6 + $0xe8] sm:$0xf] %vm723, %v717
  %783 = vst.msk [vmem:[%s6 + $0xec] sm:$0xf] %vm723, %v718
  %784 = vst.msk [vmem:[%s6 + $0xf0] sm:$0xf] %vm723, %v719
  %785 = vst.msk [vmem:[%s6 + $0xf4] sm:$0xf] %vm723, %v720
  %786 = vst.msk [vmem:[%s6 + $0xf8] sm:$0xf] %vm723, %v721
  %787 = vst.msk [vmem:[%s6 + $0xfc] sm:$0xf] %vm723, %v722
  %vm788 = vcmask 130048
  %v789 = vsel %vm788, %v500, 0.0
  %v790 = vsel %vm788, %v502, 0.0
  %v791 = vadd.f32 %v789, %v790
  %v792 = vsel %vm788, %v505, 0.0
  %v793 = vadd.f32 %v791, %v792
  %v794 = vsel %vm788, %v507, 0.0
  %v795 = vadd.f32 %v793, %v794
  %v796 = vsel %vm788, %v510, 0.0
  %v797 = vadd.f32 %v795, %v796
  %v798 = vsel %vm788, %v512, 0.0
  %v799 = vadd.f32 %v797, %v798
  %v800 = vsel %vm788, %v515, 0.0
  %v801 = vadd.f32 %v799, %v800
  %v802 = vsel %vm788, %v517, 0.0
  %v803 = vadd.f32 %v801, %v802
  %v804 = vsel %vm788, %v520, 0.0
  %v805 = vadd.f32 %v803, %v804
  %v806 = vsel %vm788, %v522, 0.0
  %v807 = vadd.f32 %v805, %v806
  %v808 = vsel %vm788, %v525, 0.0
  %v809 = vadd.f32 %v807, %v808
  %v810 = vsel %vm788, %v527, 0.0
  %v811 = vadd.f32 %v809, %v810
  %v812 = vsel %vm788, %v530, 0.0
  %v813 = vadd.f32 %v811, %v812
  %v814 = vsel %vm788, %v532, 0.0
  %v815 = vadd.f32 %v813, %v814
  %v816 = vsel %vm788, %v535, 0.0
  %v817 = vadd.f32 %v815, %v816
  %v818 = vsel %vm788, %v537, 0.0
  %v819 = vadd.f32 %v817, %v818
  %v820 = vsel %vm788, %v540, 0.0
  %v821 = vadd.f32 %v819, %v820
  %v822 = vsel %vm788, %v542, 0.0
  %v823 = vadd.f32 %v821, %v822
  %v824 = vsel %vm788, %v545, 0.0
  %v825 = vadd.f32 %v823, %v824
  %v826 = vsel %vm788, %v547, 0.0
  %v827 = vadd.f32 %v825, %v826
  %v828 = vsel %vm788, %v550, 0.0
  %v829 = vadd.f32 %v827, %v828
  %v830 = vsel %vm788, %v552, 0.0
  %v831 = vadd.f32 %v829, %v830
  %v832 = vsel %vm788, %v555, 0.0
  %v833 = vadd.f32 %v831, %v832
  %v834 = vsel %vm788, %v557, 0.0
  %v835 = vadd.f32 %v833, %v834
  %v836 = vsel %vm788, %v560, 0.0
  %v837 = vadd.f32 %v835, %v836
  %v838 = vsel %vm788, %v562, 0.0
  %v839 = vadd.f32 %v837, %v838
  %v840 = vsel %vm788, %v565, 0.0
  %v841 = vadd.f32 %v839, %v840
  %v842 = vsel %vm788, %v567, 0.0
  %v843 = vadd.f32 %v841, %v842
  %v844 = vsel %vm788, %v570, 0.0
  %v845 = vadd.f32 %v843, %v844
  %v846 = vsel %vm788, %v572, 0.0
  %v847 = vadd.f32 %v845, %v846
  %v848 = vsel %vm788, %v575, 0.0
  %v849 = vadd.f32 %v847, %v848
  %v850 = vsel %vm788, %v577, 0.0
  %v851 = vadd.f32 %v849, %v850
  %v852 = vsel %vm788, %v580, 0.0
  %v853 = vadd.f32 %v851, %v852
  %v854 = vsel %vm788, %v582, 0.0
  %v855 = vadd.f32 %v853, %v854
  %v856 = vsel %vm788, %v585, 0.0
  %v857 = vadd.f32 %v855, %v856
  %v858 = vsel %vm788, %v587, 0.0
  %v859 = vadd.f32 %v857, %v858
  %v860 = vsel %vm788, %v590, 0.0
  %v861 = vadd.f32 %v859, %v860
  %v862 = vsel %vm788, %v592, 0.0
  %v863 = vadd.f32 %v861, %v862
  %v864 = vsel %vm788, %v595, 0.0
  %v865 = vadd.f32 %v863, %v864
  %v866 = vsel %vm788, %v597, 0.0
  %v867 = vadd.f32 %v865, %v866
  %v868 = vsel %vm788, %v600, 0.0
  %v869 = vadd.f32 %v867, %v868
  %v870 = vsel %vm788, %v602, 0.0
  %v871 = vadd.f32 %v869, %v870
  %v872 = vsel %vm788, %v605, 0.0
  %v873 = vadd.f32 %v871, %v872
  %v874 = vsel %vm788, %v607, 0.0
  %v875 = vadd.f32 %v873, %v874
  %v876 = vsel %vm788, %v610, 0.0
  %v877 = vadd.f32 %v875, %v876
  %v878 = vsel %vm788, %v612, 0.0
  %v879 = vadd.f32 %v877, %v878
  %v880 = vsel %vm788, %v615, 0.0
  %v881 = vadd.f32 %v879, %v880
  %v882 = vsel %vm788, %v617, 0.0
  %v883 = vadd.f32 %v881, %v882
  %v884 = vsel %vm788, %v620, 0.0
  %v885 = vadd.f32 %v883, %v884
  %v886 = vsel %vm788, %v622, 0.0
  %v887 = vadd.f32 %v885, %v886
  %v888 = vsel %vm788, %v625, 0.0
  %v889 = vadd.f32 %v887, %v888
  %v890 = vsel %vm788, %v627, 0.0
  %v891 = vadd.f32 %v889, %v890
  %v892 = vsel %vm788, %v630, 0.0
  %v893 = vadd.f32 %v891, %v892
  %v894 = vsel %vm788, %v632, 0.0
  %v895 = vadd.f32 %v893, %v894
  %v896 = vsel %vm788, %v635, 0.0
  %v897 = vadd.f32 %v895, %v896
  %v898 = vsel %vm788, %v637, 0.0
  %v899 = vadd.f32 %v897, %v898
  %v900 = vsel %vm788, %v640, 0.0
  %v901 = vadd.f32 %v899, %v900
  %v902 = vsel %vm788, %v642, 0.0
  %v903 = vadd.f32 %v901, %v902
  %v904 = vsel %vm788, %v645, 0.0
  %v905 = vadd.f32 %v903, %v904
  %v906 = vsel %vm788, %v647, 0.0
  %v907 = vadd.f32 %v905, %v906
  %v908 = vsel %vm788, %v650, 0.0
  %v909 = vadd.f32 %v907, %v908
  %v910 = vsel %vm788, %v652, 0.0
  %v911 = vadd.f32 %v909, %v910
  %v912 = vsel %vm788, %v655, 0.0
  %v913 = vadd.f32 %v911, %v912
  %v914 = vsel %vm788, %v657, 0.0
  %v915 = vadd.f32 %v913, %v914
  %v916 = vrot.slane %v915, 4
  %v917 = vadd.f32 %v915, %v916
  %v918 = vrot.slane %v917, 2
  %v919 = vadd.f32 %v917, %v918
  %v920 = vrot.slane %v919, 1
  %v921 = vadd.f32 %v919, %v920
  %vm922 = vcmask 122880
  %923 = vst.msk [vmem:[%s8] sm:$0x1] %vm922, %v921
  %v924 = vmul.f32 %v500, %v500
  %v925 = vmul.f32 %v502, %v502
  %v926 = vmul.f32 %v505, %v505
  %v927 = vmul.f32 %v507, %v507
  %v928 = vmul.f32 %v510, %v510
  %v929 = vmul.f32 %v512, %v512
  %v930 = vmul.f32 %v515, %v515
  %v931 = vmul.f32 %v517, %v517
  %v932 = vmul.f32 %v520, %v520
  %v933 = vmul.f32 %v522, %v522
  %v934 = vmul.f32 %v525, %v525
  %v935 = vmul.f32 %v527, %v527
  %v936 = vmul.f32 %v530, %v530
  %v937 = vmul.f32 %v532, %v532
  %v938 = vmul.f32 %v535, %v535
  %v939 = vmul.f32 %v537, %v537
  %v940 = vmul.f32 %v540, %v540
  %v941 = vmul.f32 %v542, %v542
  %v942 = vmul.f32 %v545, %v545
  %v943 = vmul.f32 %v547, %v547
  %v944 = vmul.f32 %v550, %v550
  %v945 = vmul.f32 %v552, %v552
  %v946 = vmul.f32 %v555, %v555
  %v947 = vmul.f32 %v557, %v557
  %v948 = vmul.f32 %v560, %v560
  %v949 = vmul.f32 %v562, %v562
  %v950 = vmul.f32 %v565, %v565
  %v951 = vmul.f32 %v567, %v567
  %v952 = vmul.f32 %v570, %v570
  %v953 = vmul.f32 %v572, %v572
  %v954 = vmul.f32 %v575, %v575
  %v955 = vmul.f32 %v577, %v577
  %v956 = vmul.f32 %v580, %v580
  %v957 = vmul.f32 %v582, %v582
  %v958 = vmul.f32 %v585, %v585
  %v959 = vmul.f32 %v587, %v587
  %v960 = vmul.f32 %v590, %v590
  %v961 = vmul.f32 %v592, %v592
  %v962 = vmul.f32 %v595, %v595
  %v963 = vmul.f32 %v597, %v597
  %v964 = vmul.f32 %v600, %v600
  %v965 = vmul.f32 %v602, %v602
  %v966 = vmul.f32 %v605, %v605
  %v967 = vmul.f32 %v607, %v607
  %v968 = vmul.f32 %v610, %v610
  %v969 = vmul.f32 %v612, %v612
  %v970 = vmul.f32 %v615, %v615
  %v971 = vmul.f32 %v617, %v617
  %v972 = vmul.f32 %v620, %v620
  %v973 = vmul.f32 %v622, %v622
  %v974 = vmul.f32 %v625, %v625
  %v975 = vmul.f32 %v627, %v627
  %v976 = vmul.f32 %v630, %v630
  %v977 = vmul.f32 %v632, %v632
  %v978 = vmul.f32 %v635, %v635
  %v979 = vmul.f32 %v637, %v637
  %v980 = vmul.f32 %v640, %v640
  %v981 = vmul.f32 %v642, %v642
  %v982 = vmul.f32 %v645, %v645
  %v983 = vmul.f32 %v647, %v647
  %v984 = vmul.f32 %v650, %v650
  %v985 = vmul.f32 %v652, %v652
  %v986 = vmul.f32 %v655, %v655
  %v987 = vmul.f32 %v657, %v657
  %v988 = vsel %vm788, %v924, 0.0
  %v989 = vsel %vm788, %v925, 0.0
  %v990 = vadd.f32 %v988, %v989
  %v991 = vsel %vm788, %v926, 0.0
  %v992 = vadd.f32 %v990, %v991
  %v993 = vsel %vm788, %v927, 0.0
  %v994 = vadd.f32 %v992, %v993
  %v995 = vsel %vm788, %v928, 0.0
  %v996 = vadd.f32 %v994, %v995
  %v997 = vsel %vm788, %v929, 0.0
  %v998 = vadd.f32 %v996, %v997
  %v999 = vsel %vm788, %v930, 0.0
  %v1000 = vadd.f32 %v998, %v999
  %v1001 = vsel %vm788, %v931, 0.0
  %v1002 = vadd.f32 %v1000, %v1001
  %v1003 = vsel %vm788, %v932, 0.0
  %v1004 = vadd.f32 %v1002, %v1003
  %v1005 = vsel %vm788, %v933, 0.0
  %v1006 = vadd.f32 %v1004, %v1005
  %v1007 = vsel %vm788, %v934, 0.0
  %v1008 = vadd.f32 %v1006, %v1007
  %v1009 = vsel %vm788, %v935, 0.0
  %v1010 = vadd.f32 %v1008, %v1009
  %v1011 = vsel %vm788, %v936, 0.0
  %v1012 = vadd.f32 %v1010, %v1011
  %v1013 = vsel %vm788, %v937, 0.0
  %v1014 = vadd.f32 %v1012, %v1013
  %v1015 = vsel %vm788, %v938, 0.0
  %v1016 = vadd.f32 %v1014, %v1015
  %v1017 = vsel %vm788, %v939, 0.0
  %v1018 = vadd.f32 %v1016, %v1017
  %v1019 = vsel %vm788, %v940, 0.0
  %v1020 = vadd.f32 %v1018, %v1019
  %v1021 = vsel %vm788, %v941, 0.0
  %v1022 = vadd.f32 %v1020, %v1021
  %v1023 = vsel %vm788, %v942, 0.0
  %v1024 = vadd.f32 %v1022, %v1023
  %v1025 = vsel %vm788, %v943, 0.0
  %v1026 = vadd.f32 %v1024, %v1025
  %v1027 = vsel %vm788, %v944, 0.0
  %v1028 = vadd.f32 %v1026, %v1027
  %v1029 = vsel %vm788, %v945, 0.0
  %v1030 = vadd.f32 %v1028, %v1029
  %v1031 = vsel %vm788, %v946, 0.0
  %v1032 = vadd.f32 %v1030, %v1031
  %v1033 = vsel %vm788, %v947, 0.0
  %v1034 = vadd.f32 %v1032, %v1033
  %v1035 = vsel %vm788, %v948, 0.0
  %v1036 = vadd.f32 %v1034, %v1035
  %v1037 = vsel %vm788, %v949, 0.0
  %v1038 = vadd.f32 %v1036, %v1037
  %v1039 = vsel %vm788, %v950, 0.0
  %v1040 = vadd.f32 %v1038, %v1039
  %v1041 = vsel %vm788, %v951, 0.0
  %v1042 = vadd.f32 %v1040, %v1041
  %v1043 = vsel %vm788, %v952, 0.0
  %v1044 = vadd.f32 %v1042, %v1043
  %v1045 = vsel %vm788, %v953, 0.0
  %v1046 = vadd.f32 %v1044, %v1045
  %v1047 = vsel %vm788, %v954, 0.0
  %v1048 = vadd.f32 %v1046, %v1047
  %v1049 = vsel %vm788, %v955, 0.0
  %v1050 = vadd.f32 %v1048, %v1049
  %v1051 = vsel %vm788, %v956, 0.0
  %v1052 = vadd.f32 %v1050, %v1051
  %v1053 = vsel %vm788, %v957, 0.0
  %v1054 = vadd.f32 %v1052, %v1053
  %v1055 = vsel %vm788, %v958, 0.0
  %v1056 = vadd.f32 %v1054, %v1055
  %v1057 = vsel %vm788, %v959, 0.0
  %v1058 = vadd.f32 %v1056, %v1057
  %v1059 = vsel %vm788, %v960, 0.0
  %v1060 = vadd.f32 %v1058, %v1059
  %v1061 = vsel %vm788, %v961, 0.0
  %v1062 = vadd.f32 %v1060, %v1061
  %v1063 = vsel %vm788, %v962, 0.0
  %v1064 = vadd.f32 %v1062, %v1063
  %v1065 = vsel %vm788, %v963, 0.0
  %v1066 = vadd.f32 %v1064, %v1065
  %v1067 = vsel %vm788, %v964, 0.0
  %v1068 = vadd.f32 %v1066, %v1067
  %v1069 = vsel %vm788, %v965, 0.0
  %v1070 = vadd.f32 %v1068, %v1069
  %v1071 = vsel %vm788, %v966, 0.0
  %v1072 = vadd.f32 %v1070, %v1071
  %v1073 = vsel %vm788, %v967, 0.0
  %v1074 = vadd.f32 %v1072, %v1073
  %v1075 = vsel %vm788, %v968, 0.0
  %v1076 = vadd.f32 %v1074, %v1075
  %v1077 = vsel %vm788, %v969, 0.0
  %v1078 = vadd.f32 %v1076, %v1077
  %v1079 = vsel %vm788, %v970, 0.0
  %v1080 = vadd.f32 %v1078, %v1079
  %v1081 = vsel %vm788, %v971, 0.0
  %v1082 = vadd.f32 %v1080, %v1081
  %v1083 = vsel %vm788, %v972, 0.0
  %v1084 = vadd.f32 %v1082, %v1083
  %v1085 = vsel %vm788, %v973, 0.0
  %v1086 = vadd.f32 %v1084, %v1085
  %v1087 = vsel %vm788, %v974, 0.0
  %v1088 = vadd.f32 %v1086, %v1087
  %v1089 = vsel %vm788, %v975, 0.0
  %v1090 = vadd.f32 %v1088, %v1089
  %v1091 = vsel %vm788, %v976, 0.0
  %v1092 = vadd.f32 %v1090, %v1091
  %v1093 = vsel %vm788, %v977, 0.0
  %v1094 = vadd.f32 %v1092, %v1093
  %v1095 = vsel %vm788, %v978, 0.0
  %v1096 = vadd.f32 %v1094, %v1095
  %v1097 = vsel %vm788, %v979, 0.0
  %v1098 = vadd.f32 %v1096, %v1097
  %v1099 = vsel %vm788, %v980, 0.0
  %v1100 = vadd.f32 %v1098, %v1099
  %v1101 = vsel %vm788, %v981, 0.0
  %v1102 = vadd.f32 %v1100, %v1101
  %v1103 = vsel %vm788, %v982, 0.0
  %v1104 = vadd.f32 %v1102, %v1103
  %v1105 = vsel %vm788, %v983, 0.0
  %v1106 = vadd.f32 %v1104, %v1105
  %v1107 = vsel %vm788, %v984, 0.0
  %v1108 = vadd.f32 %v1106, %v1107
  %v1109 = vsel %vm788, %v985, 0.0
  %v1110 = vadd.f32 %v1108, %v1109
  %v1111 = vsel %vm788, %v986, 0.0
  %v1112 = vadd.f32 %v1110, %v1111
  %v1113 = vsel %vm788, %v987, 0.0
  %v1114 = vadd.f32 %v1112, %v1113
  %v1115 = vrot.slane %v1114, 4
  %v1116 = vadd.f32 %v1114, %v1115
  %v1117 = vrot.slane %v1116, 2
  %v1118 = vadd.f32 %v1116, %v1117
  %v1119 = vrot.slane %v1118, 1
  %v1120 = vadd.f32 %v1118, %v1119
  %1121 = vst.msk [vmem:[%s8 + $0x1] sm:$0x1] %vm922, %v1120
  %v1122 = vld [vmem:[%s4] sm:$0xf]
  %v1123 = vld [vmem:[%s4 + $0x4] sm:$0xf]
  %v1124 = vld [vmem:[%s4 + $0x8] sm:$0xf]
  %v1125 = vld [vmem:[%s4 + $0xc] sm:$0xf]
  %v1126 = vld [vmem:[%s4 + $0x10] sm:$0xf]
  %v1127 = vld [vmem:[%s4 + $0x14] sm:$0xf]
  %v1128 = vld [vmem:[%s4 + $0x18] sm:$0xf]
  %v1129 = vld [vmem:[%s4 + $0x1c] sm:$0xf]
  %v1130 = vld [vmem:[%s4 + $0x20] sm:$0xf]
  %v1131 = vld [vmem:[%s4 + $0x24] sm:$0xf]
  %v1132 = vld [vmem:[%s4 + $0x28] sm:$0xf]
  %v1133 = vld [vmem:[%s4 + $0x2c] sm:$0xf]
  %v1134 = vld [vmem:[%s4 + $0x30] sm:$0xf]
  %v1135 = vld [vmem:[%s4 + $0x34] sm:$0xf]
  %v1136 = vld [vmem:[%s4 + $0x38] sm:$0xf]
  %v1137 = vld [vmem:[%s4 + $0x3c] sm:$0xf]
  %v1138 = vld [vmem:[%s4 + $0x40] sm:$0xf]
  %v1139 = vld [vmem:[%s4 + $0x44] sm:$0xf]
  %v1140 = vld [vmem:[%s4 + $0x48] sm:$0xf]
  %v1141 = vld [vmem:[%s4 + $0x4c] sm:$0xf]
  %v1142 = vld [vmem:[%s4 + $0x50] sm:$0xf]
  %v1143 = vld [vmem:[%s4 + $0x54] sm:$0xf]
  %v1144 = vld [vmem:[%s4 + $0x58] sm:$0xf]
  %v1145 = vld [vmem:[%s4 + $0x5c] sm:$0xf]
  %v1146 = vld [vmem:[%s4 + $0x60] sm:$0xf]
  %v1147 = vld [vmem:[%s4 + $0x64] sm:$0xf]
  %v1148 = vld [vmem:[%s4 + $0x68] sm:$0xf]
  %v1149 = vld [vmem:[%s4 + $0x6c] sm:$0xf]
  %v1150 = vld [vmem:[%s4 + $0x70] sm:$0xf]
  %v1151 = vld [vmem:[%s4 + $0x74] sm:$0xf]
  %v1152 = vld [vmem:[%s4 + $0x78] sm:$0xf]
  %v1153 = vld [vmem:[%s4 + $0x7c] sm:$0xf]
  %v1154 = vld [vmem:[%s4 + $0x80] sm:$0xf]
  %v1155 = vld [vmem:[%s4 + $0x84] sm:$0xf]
  %v1156 = vld [vmem:[%s4 + $0x88] sm:$0xf]
  %v1157 = vld [vmem:[%s4 + $0x8c] sm:$0xf]
  %v1158 = vld [vmem:[%s4 + $0x90] sm:$0xf]
  %v1159 = vld [vmem:[%s4 + $0x94] sm:$0xf]
  %v1160 = vld [vmem:[%s4 + $0x98] sm:$0xf]
  %v1161 = vld [vmem:[%s4 + $0x9c] sm:$0xf]
  %v1162 = vld [vmem:[%s4 + $0xa0] sm:$0xf]
  %v1163 = vld [vmem:[%s4 + $0xa4] sm:$0xf]
  %v1164 = vld [vmem:[%s4 + $0xa8] sm:$0xf]
  %v1165 = vld [vmem:[%s4 + $0xac] sm:$0xf]
  %v1166 = vld [vmem:[%s4 + $0xb0] sm:$0xf]
  %v1167 = vld [vmem:[%s4 + $0xb4] sm:$0xf]
  %v1168 = vld [vmem:[%s4 + $0xb8] sm:$0xf]
  %v1169 = vld [vmem:[%s4 + $0xbc] sm:$0xf]
  %v1170 = vld [vmem:[%s4 + $0xc0] sm:$0xf]
  %v1171 = vld [vmem:[%s4 + $0xc4] sm:$0xf]
  %v1172 = vld [vmem:[%s4 + $0xc8] sm:$0xf]
  %v1173 = vld [vmem:[%s4 + $0xcc] sm:$0xf]
  %v1174 = vld [vmem:[%s4 + $0xd0] sm:$0xf]
  %v1175 = vld [vmem:[%s4 + $0xd4] sm:$0xf]
  %v1176 = vld [vmem:[%s4 + $0xd8] sm:$0xf]
  %v1177 = vld [vmem:[%s4 + $0xdc] sm:$0xf]
  %v1178 = vld [vmem:[%s4 + $0xe0] sm:$0xf]
  %v1179 = vld [vmem:[%s4 + $0xe4] sm:$0xf]
  %v1180 = vld [vmem:[%s4 + $0xe8] sm:$0xf]
  %v1181 = vld [vmem:[%s4 + $0xec] sm:$0xf]
  %v1182 = vld [vmem:[%s4 + $0xf0] sm:$0xf]
  %v1183 = vld [vmem:[%s4 + $0xf4] sm:$0xf]
  %v1184 = vld [vmem:[%s4 + $0xf8] sm:$0xf]
  %v1185 = vld [vmem:[%s4 + $0xfc] sm:$0xf]
  %v1186 = vld [vmem:[%s5] sm:$0x3]
  %v1251 = vunpack.c.l.b16 %v1122
  %v1252 = vunpack.c.l.b16 %v1123
  %v1253 = vunpack.c.l.b16 %v1124
  %v1254 = vunpack.c.l.b16 %v1125
  %v1255 = vunpack.c.l.b16 %v1126
  %v1256 = vunpack.c.l.b16 %v1127
  %v1257 = vunpack.c.l.b16 %v1128
  %v1258 = vunpack.c.l.b16 %v1129
  %v1259 = vunpack.c.l.b16 %v1130
  %v1260 = vunpack.c.l.b16 %v1131
  %v1261 = vunpack.c.l.b16 %v1132
  %v1262 = vunpack.c.l.b16 %v1133
  %v1263 = vunpack.c.l.b16 %v1134
  %v1264 = vunpack.c.l.b16 %v1135
  %v1265 = vunpack.c.l.b16 %v1136
  %v1266 = vunpack.c.l.b16 %v1137
  %v1267 = vunpack.c.l.b16 %v1138
  %v1268 = vunpack.c.l.b16 %v1139
  %v1269 = vunpack.c.l.b16 %v1140
  %v1270 = vunpack.c.l.b16 %v1141
  %v1271 = vunpack.c.l.b16 %v1142
  %v1272 = vunpack.c.l.b16 %v1143
  %v1273 = vunpack.c.l.b16 %v1144
  %v1274 = vunpack.c.l.b16 %v1145
  %v1275 = vunpack.c.l.b16 %v1146
  %v1276 = vunpack.c.l.b16 %v1147
  %v1277 = vunpack.c.l.b16 %v1148
  %v1278 = vunpack.c.l.b16 %v1149
  %v1279 = vunpack.c.l.b16 %v1150
  %v1280 = vunpack.c.l.b16 %v1151
  %v1281 = vunpack.c.l.b16 %v1152
  %v1282 = vunpack.c.l.b16 %v1153
  %v1283 = vunpack.c.l.b16 %v1154
  %v1284 = vunpack.c.l.b16 %v1155
  %v1285 = vunpack.c.l.b16 %v1156
  %v1286 = vunpack.c.l.b16 %v1157
  %v1287 = vunpack.c.l.b16 %v1158
  %v1288 = vunpack.c.l.b16 %v1159
  %v1289 = vunpack.c.l.b16 %v1160
  %v1290 = vunpack.c.l.b16 %v1161
  %v1291 = vunpack.c.l.b16 %v1162
  %v1292 = vunpack.c.l.b16 %v1163
  %v1293 = vunpack.c.l.b16 %v1164
  %v1294 = vunpack.c.l.b16 %v1165
  %v1295 = vunpack.c.l.b16 %v1166
  %v1296 = vunpack.c.l.b16 %v1167
  %v1297 = vunpack.c.l.b16 %v1168
  %v1298 = vunpack.c.l.b16 %v1169
  %v1299 = vunpack.c.l.b16 %v1170
  %v1300 = vunpack.c.l.b16 %v1171
  %v1301 = vunpack.c.l.b16 %v1172
  %v1302 = vunpack.c.l.b16 %v1173
  %v1303 = vunpack.c.l.b16 %v1174
  %v1304 = vunpack.c.l.b16 %v1175
  %v1305 = vunpack.c.l.b16 %v1176
  %v1306 = vunpack.c.l.b16 %v1177
  %v1307 = vunpack.c.l.b16 %v1178
  %v1308 = vunpack.c.l.b16 %v1179
  %v1309 = vunpack.c.l.b16 %v1180
  %v1310 = vunpack.c.l.b16 %v1181
  %v1311 = vunpack.c.l.b16 %v1182
  %v1312 = vunpack.c.l.b16 %v1183
  %v1313 = vunpack.c.l.b16 %v1184
  %v1314 = vunpack.c.l.b16 %v1185
  %v1315 = vpack.c.b16 %v1252, %v1251
  %v1316 = vpack.c.b16 %v1254, %v1253
  %v1317 = vpack.c.b16 %v1256, %v1255
  %v1318 = vpack.c.b16 %v1258, %v1257
  %v1319 = vpack.c.b16 %v1260, %v1259
  %v1320 = vpack.c.b16 %v1262, %v1261
  %v1321 = vpack.c.b16 %v1264, %v1263
  %v1322 = vpack.c.b16 %v1266, %v1265
  %v1323 = vpack.c.b16 %v1268, %v1267
  %v1324 = vpack.c.b16 %v1270, %v1269
  %v1325 = vpack.c.b16 %v1272, %v1271
  %v1326 = vpack.c.b16 %v1274, %v1273
  %v1327 = vpack.c.b16 %v1276, %v1275
  %v1328 = vpack.c.b16 %v1278, %v1277
  %v1329 = vpack.c.b16 %v1280, %v1279
  %v1330 = vpack.c.b16 %v1282, %v1281
  %v1331 = vpack.c.b16 %v1284, %v1283
  %v1332 = vpack.c.b16 %v1286, %v1285
  %v1333 = vpack.c.b16 %v1288, %v1287
  %v1334 = vpack.c.b16 %v1290, %v1289
  %v1335 = vpack.c.b16 %v1292, %v1291
  %v1336 = vpack.c.b16 %v1294, %v1293
  %v1337 = vpack.c.b16 %v1296, %v1295
  %v1338 = vpack.c.b16 %v1298, %v1297
  %v1339 = vpack.c.b16 %v1300, %v1299
  %v1340 = vpack.c.b16 %v1302, %v1301
  %v1341 = vpack.c.b16 %v1304, %v1303
  %v1342 = vpack.c.b16 %v1306, %v1305
  %v1343 = vpack.c.b16 %v1308, %v1307
  %v1344 = vpack.c.b16 %v1310, %v1309
  %v1345 = vpack.c.b16 %v1312, %v1311
  %v1346 = vpack.c.b16 %v1314, %v1313
  %v1348 = vsel %vm389, %v1315, 0
  %v1351 = vsel %vm389, %v1316, 0
  %v1354 = vsel %vm389, %v1317, 0
  %v1357 = vsel %vm389, %v1318, 0
  %v1360 = vsel %vm389, %v1319, 0
  %v1363 = vsel %vm389, %v1320, 0
  %v1366 = vsel %vm389, %v1321, 0
  %v1369 = vsel %vm389, %v1322, 0
  %v1372 = vsel %vm389, %v1323, 0
  %v1375 = vsel %vm389, %v1324, 0
  %v1378 = vsel %vm389, %v1325, 0
  %v1381 = vsel %vm389, %v1326, 0
  %v1384 = vsel %vm389, %v1327, 0
  %v1387 = vsel %vm389, %v1328, 0
  %v1390 = vsel %vm389, %v1329, 0
  %v1393 = vsel %vm389, %v1330, 0
  %v1396 = vsel %vm389, %v1331, 0
  %v1399 = vsel %vm389, %v1332, 0
  %v1402 = vsel %vm389, %v1333, 0
  %v1405 = vsel %vm389, %v1334, 0
  %v1408 = vsel %vm389, %v1335, 0
  %v1411 = vsel %vm389, %v1336, 0
  %v1414 = vsel %vm389, %v1337, 0
  %v1417 = vsel %vm389, %v1338, 0
  %v1420 = vsel %vm389, %v1339, 0
  %v1423 = vsel %vm389, %v1340, 0
  %v1426 = vsel %vm389, %v1341, 0
  %v1429 = vsel %vm389, %v1342, 0
  %v1432 = vsel %vm389, %v1343, 0
  %v1435 = vsel %vm389, %v1344, 0
  %v1438 = vsel %vm389, %v1345, 0
  %v1441 = vsel %vm389, %v1346, 0
  %v1444 = vsel %vm486, %v1186, 0
  %1446 = vmatpush.bf16.msra.mxu0 0
  %1447 = vmatpush.bf16.msra.mxu0 0
  %1448 = vmatpush.bf16.msra.mxu0 0
  %1449 = vmatpush.bf16.msra.mxu0 0
  %1450 = vmatpush.bf16.msra.mxu0 0
  %1451 = vmatpush.bf16.msra.mxu0 0
  %1452 = vmatpush.bf16.msra.mxu0 0
  %1453 = vmatpush.bf16.msra.mxu0 %v1444
  %1454 = vmatmul.bf16.gmra.mxu0 %v1348
  %v1455 = vpop.f32.mrf.mxu0
  %v1456 = vadd.f32 0.0, %v1455
  %v1457 = vpop.f32.mrf.mxu0
  %v1458 = vadd.f32 0.0, %v1457
  %1459 = vmatmul.bf16.gmra.mxu0 %v1351
  %v1460 = vpop.f32.mrf.mxu0
  %v1461 = vadd.f32 0.0, %v1460
  %v1462 = vpop.f32.mrf.mxu0
  %v1463 = vadd.f32 0.0, %v1462
  %1464 = vmatmul.bf16.gmra.mxu0 %v1354
  %v1465 = vpop.f32.mrf.mxu0
  %v1466 = vadd.f32 0.0, %v1465
  %v1467 = vpop.f32.mrf.mxu0
  %v1468 = vadd.f32 0.0, %v1467
  %1469 = vmatmul.bf16.gmra.mxu0 %v1357
  %v1470 = vpop.f32.mrf.mxu0
  %v1471 = vadd.f32 0.0, %v1470
  %v1472 = vpop.f32.mrf.mxu0
  %v1473 = vadd.f32 0.0, %v1472
  %1474 = vmatmul.bf16.gmra.mxu0 %v1360
  %v1475 = vpop.f32.mrf.mxu0
  %v1476 = vadd.f32 0.0, %v1475
  %v1477 = vpop.f32.mrf.mxu0
  %v1478 = vadd.f32 0.0, %v1477
  %1479 = vmatmul.bf16.gmra.mxu0 %v1363
  %v1480 = vpop.f32.mrf.mxu0
  %v1481 = vadd.f32 0.0, %v1480
  %v1482 = vpop.f32.mrf.mxu0
  %v1483 = vadd.f32 0.0, %v1482
  %1484 = vmatmul.bf16.gmra.mxu0 %v1366
  %v1485 = vpop.f32.mrf.mxu0
  %v1486 = vadd.f32 0.0, %v1485
  %v1487 = vpop.f32.mrf.mxu0
  %v1488 = vadd.f32 0.0, %v1487
  %1489 = vmatmul.bf16.gmra.mxu0 %v1369
  %v1490 = vpop.f32.mrf.mxu0
  %v1491 = vadd.f32 0.0, %v1490
  %v1492 = vpop.f32.mrf.mxu0
  %v1493 = vadd.f32 0.0, %v1492
  %1494 = vmatmul.bf16.gmra.mxu0 %v1372
  %v1495 = vpop.f32.mrf.mxu0
  %v1496 = vadd.f32 0.0, %v1495
  %v1497 = vpop.f32.mrf.mxu0
  %v1498 = vadd.f32 0.0, %v1497
  %1499 = vmatmul.bf16.gmra.mxu0 %v1375
  %v1500 = vpop.f32.mrf.mxu0
  %v1501 = vadd.f32 0.0, %v1500
  %v1502 = vpop.f32.mrf.mxu0
  %v1503 = vadd.f32 0.0, %v1502
  %1504 = vmatmul.bf16.gmra.mxu0 %v1378
  %v1505 = vpop.f32.mrf.mxu0
  %v1506 = vadd.f32 0.0, %v1505
  %v1507 = vpop.f32.mrf.mxu0
  %v1508 = vadd.f32 0.0, %v1507
  %1509 = vmatmul.bf16.gmra.mxu0 %v1381
  %v1510 = vpop.f32.mrf.mxu0
  %v1511 = vadd.f32 0.0, %v1510
  %v1512 = vpop.f32.mrf.mxu0
  %v1513 = vadd.f32 0.0, %v1512
  %1514 = vmatmul.bf16.gmra.mxu0 %v1384
  %v1515 = vpop.f32.mrf.mxu0
  %v1516 = vadd.f32 0.0, %v1515
  %v1517 = vpop.f32.mrf.mxu0
  %v1518 = vadd.f32 0.0, %v1517
  %1519 = vmatmul.bf16.gmra.mxu0 %v1387
  %v1520 = vpop.f32.mrf.mxu0
  %v1521 = vadd.f32 0.0, %v1520
  %v1522 = vpop.f32.mrf.mxu0
  %v1523 = vadd.f32 0.0, %v1522
  %1524 = vmatmul.bf16.gmra.mxu0 %v1390
  %v1525 = vpop.f32.mrf.mxu0
  %v1526 = vadd.f32 0.0, %v1525
  %v1527 = vpop.f32.mrf.mxu0
  %v1528 = vadd.f32 0.0, %v1527
  %1529 = vmatmul.bf16.gmra.mxu0 %v1393
  %v1530 = vpop.f32.mrf.mxu0
  %v1531 = vadd.f32 0.0, %v1530
  %v1532 = vpop.f32.mrf.mxu0
  %v1533 = vadd.f32 0.0, %v1532
  %1534 = vmatmul.bf16.gmra.mxu0 %v1396
  %v1535 = vpop.f32.mrf.mxu0
  %v1536 = vadd.f32 0.0, %v1535
  %v1537 = vpop.f32.mrf.mxu0
  %v1538 = vadd.f32 0.0, %v1537
  %1539 = vmatmul.bf16.gmra.mxu0 %v1399
  %v1540 = vpop.f32.mrf.mxu0
  %v1541 = vadd.f32 0.0, %v1540
  %v1542 = vpop.f32.mrf.mxu0
  %v1543 = vadd.f32 0.0, %v1542
  %1544 = vmatmul.bf16.gmra.mxu0 %v1402
  %v1545 = vpop.f32.mrf.mxu0
  %v1546 = vadd.f32 0.0, %v1545
  %v1547 = vpop.f32.mrf.mxu0
  %v1548 = vadd.f32 0.0, %v1547
  %1549 = vmatmul.bf16.gmra.mxu0 %v1405
  %v1550 = vpop.f32.mrf.mxu0
  %v1551 = vadd.f32 0.0, %v1550
  %v1552 = vpop.f32.mrf.mxu0
  %v1553 = vadd.f32 0.0, %v1552
  %1554 = vmatmul.bf16.gmra.mxu0 %v1408
  %v1555 = vpop.f32.mrf.mxu0
  %v1556 = vadd.f32 0.0, %v1555
  %v1557 = vpop.f32.mrf.mxu0
  %v1558 = vadd.f32 0.0, %v1557
  %1559 = vmatmul.bf16.gmra.mxu0 %v1411
  %v1560 = vpop.f32.mrf.mxu0
  %v1561 = vadd.f32 0.0, %v1560
  %v1562 = vpop.f32.mrf.mxu0
  %v1563 = vadd.f32 0.0, %v1562
  %1564 = vmatmul.bf16.gmra.mxu0 %v1414
  %v1565 = vpop.f32.mrf.mxu0
  %v1566 = vadd.f32 0.0, %v1565
  %v1567 = vpop.f32.mrf.mxu0
  %v1568 = vadd.f32 0.0, %v1567
  %1569 = vmatmul.bf16.gmra.mxu0 %v1417
  %v1570 = vpop.f32.mrf.mxu0
  %v1571 = vadd.f32 0.0, %v1570
  %v1572 = vpop.f32.mrf.mxu0
  %v1573 = vadd.f32 0.0, %v1572
  %1574 = vmatmul.bf16.gmra.mxu0 %v1420
  %v1575 = vpop.f32.mrf.mxu0
  %v1576 = vadd.f32 0.0, %v1575
  %v1577 = vpop.f32.mrf.mxu0
  %v1578 = vadd.f32 0.0, %v1577
  %1579 = vmatmul.bf16.gmra.mxu0 %v1423
  %v1580 = vpop.f32.mrf.mxu0
  %v1581 = vadd.f32 0.0, %v1580
  %v1582 = vpop.f32.mrf.mxu0
  %v1583 = vadd.f32 0.0, %v1582
  %1584 = vmatmul.bf16.gmra.mxu0 %v1426
  %v1585 = vpop.f32.mrf.mxu0
  %v1586 = vadd.f32 0.0, %v1585
  %v1587 = vpop.f32.mrf.mxu0
  %v1588 = vadd.f32 0.0, %v1587
  %1589 = vmatmul.bf16.gmra.mxu0 %v1429
  %v1590 = vpop.f32.mrf.mxu0
  %v1591 = vadd.f32 0.0, %v1590
  %v1592 = vpop.f32.mrf.mxu0
  %v1593 = vadd.f32 0.0, %v1592
  %1594 = vmatmul.bf16.gmra.mxu0 %v1432
  %v1595 = vpop.f32.mrf.mxu0
  %v1596 = vadd.f32 0.0, %v1595
  %v1597 = vpop.f32.mrf.mxu0
  %v1598 = vadd.f32 0.0, %v1597
  %1599 = vmatmul.bf16.gmra.mxu0 %v1435
  %v1600 = vpop.f32.mrf.mxu0
  %v1601 = vadd.f32 0.0, %v1600
  %v1602 = vpop.f32.mrf.mxu0
  %v1603 = vadd.f32 0.0, %v1602
  %1604 = vmatmul.bf16.gmra.mxu0 %v1438
  %v1605 = vpop.f32.mrf.mxu0
  %v1606 = vadd.f32 0.0, %v1605
  %v1607 = vpop.f32.mrf.mxu0
  %v1608 = vadd.f32 0.0, %v1607
  %1609 = vmatmul.bf16.gmra.mxu0 %v1441
  %v1610 = vpop.f32.mrf.mxu0
  %v1611 = vadd.f32 0.0, %v1610
  %v1612 = vpop.f32.mrf.mxu0
  %v1613 = vadd.f32 0.0, %v1612
  %1614 = vdwg.mxu0
  %v1615 = vpack.c.bf16 %v1456, %v1456
  %v1616 = vpack.c.bf16 %v1458, %v1458
  %v1617 = vpack.c.bf16 %v1461, %v1461
  %v1618 = vpack.c.bf16 %v1463, %v1463
  %v1619 = vpack.c.bf16 %v1466, %v1466
  %v1620 = vpack.c.bf16 %v1468, %v1468
  %v1621 = vpack.c.bf16 %v1471, %v1471
  %v1622 = vpack.c.bf16 %v1473, %v1473
  %v1623 = vpack.c.bf16 %v1476, %v1476
  %v1624 = vpack.c.bf16 %v1478, %v1478
  %v1625 = vpack.c.bf16 %v1481, %v1481
  %v1626 = vpack.c.bf16 %v1483, %v1483
  %v1627 = vpack.c.bf16 %v1486, %v1486
  %v1628 = vpack.c.bf16 %v1488, %v1488
  %v1629 = vpack.c.bf16 %v1491, %v1491
  %v1630 = vpack.c.bf16 %v1493, %v1493
  %v1631 = vpack.c.bf16 %v1496, %v1496
  %v1632 = vpack.c.bf16 %v1498, %v1498
  %v1633 = vpack.c.bf16 %v1501, %v1501
  %v1634 = vpack.c.bf16 %v1503, %v1503
  %v1635 = vpack.c.bf16 %v1506, %v1506
  %v1636 = vpack.c.bf16 %v1508, %v1508
  %v1637 = vpack.c.bf16 %v1511, %v1511
  %v1638 = vpack.c.bf16 %v1513, %v1513
  %v1639 = vpack.c.bf16 %v1516, %v1516
  %v1640 = vpack.c.bf16 %v1518, %v1518
  %v1641 = vpack.c.bf16 %v1521, %v1521
  %v1642 = vpack.c.bf16 %v1523, %v1523
  %v1643 = vpack.c.bf16 %v1526, %v1526
  %v1644 = vpack.c.bf16 %v1528, %v1528
  %v1645 = vpack.c.bf16 %v1531, %v1531
  %v1646 = vpack.c.bf16 %v1533, %v1533
  %v1647 = vpack.c.bf16 %v1536, %v1536
  %v1648 = vpack.c.bf16 %v1538, %v1538
  %v1649 = vpack.c.bf16 %v1541, %v1541
  %v1650 = vpack.c.bf16 %v1543, %v1543
  %v1651 = vpack.c.bf16 %v1546, %v1546
  %v1652 = vpack.c.bf16 %v1548, %v1548
  %v1653 = vpack.c.bf16 %v1551, %v1551
  %v1654 = vpack.c.bf16 %v1553, %v1553
  %v1655 = vpack.c.bf16 %v1556, %v1556
  %v1656 = vpack.c.bf16 %v1558, %v1558
  %v1657 = vpack.c.bf16 %v1561, %v1561
  %v1658 = vpack.c.bf16 %v1563, %v1563
  %v1659 = vpack.c.bf16 %v1566, %v1566
  %v1660 = vpack.c.bf16 %v1568, %v1568
  %v1661 = vpack.c.bf16 %v1571, %v1571
  %v1662 = vpack.c.bf16 %v1573, %v1573
  %v1663 = vpack.c.bf16 %v1576, %v1576
  %v1664 = vpack.c.bf16 %v1578, %v1578
  %v1665 = vpack.c.bf16 %v1581, %v1581
  %v1666 = vpack.c.bf16 %v1583, %v1583
  %v1667 = vpack.c.bf16 %v1586, %v1586
  %v1668 = vpack.c.bf16 %v1588, %v1588
  %v1669 = vpack.c.bf16 %v1591, %v1591
  %v1670 = vpack.c.bf16 %v1593, %v1593
  %v1671 = vpack.c.bf16 %v1596, %v1596
  %v1672 = vpack.c.bf16 %v1598, %v1598
  %v1673 = vpack.c.bf16 %v1601, %v1601
  %v1674 = vpack.c.bf16 %v1603, %v1603
  %v1675 = vpack.c.bf16 %v1606, %v1606
  %v1676 = vpack.c.bf16 %v1608, %v1608
  %v1677 = vpack.c.bf16 %v1611, %v1611
  %v1678 = vpack.c.bf16 %v1613, %v1613
  %1679 = vst.msk [vmem:[%s7] sm:$0xf] %vm723, %v1615
  %1680 = vst.msk [vmem:[%s7 + $0x4] sm:$0xf] %vm723, %v1616
  %1681 = vst.msk [vmem:[%s7 + $0x8] sm:$0xf] %vm723, %v1617
  %1682 = vst.msk [vmem:[%s7 + $0xc] sm:$0xf] %vm723, %v1618
  %1683 = vst.msk [vmem:[%s7 + $0x10] sm:$0xf] %vm723, %v1619
  %1684 = vst.msk [vmem:[%s7 + $0x14] sm:$0xf] %vm723, %v1620
  %1685 = vst.msk [vmem:[%s7 + $0x18] sm:$0xf] %vm723, %v1621
  %1686 = vst.msk [vmem:[%s7 + $0x1c] sm:$0xf] %vm723, %v1622
  %1687 = vst.msk [vmem:[%s7 + $0x20] sm:$0xf] %vm723, %v1623
  %1688 = vst.msk [vmem:[%s7 + $0x24] sm:$0xf] %vm723, %v1624
  %1689 = vst.msk [vmem:[%s7 + $0x28] sm:$0xf] %vm723, %v1625
  %1690 = vst.msk [vmem:[%s7 + $0x2c] sm:$0xf] %vm723, %v1626
  %1691 = vst.msk [vmem:[%s7 + $0x30] sm:$0xf] %vm723, %v1627
  %1692 = vst.msk [vmem:[%s7 + $0x34] sm:$0xf] %vm723, %v1628
  %1693 = vst.msk [vmem:[%s7 + $0x38] sm:$0xf] %vm723, %v1629
  %1694 = vst.msk [vmem:[%s7 + $0x3c] sm:$0xf] %vm723, %v1630
  %1695 = vst.msk [vmem:[%s7 + $0x40] sm:$0xf] %vm723, %v1631
  %1696 = vst.msk [vmem:[%s7 + $0x44] sm:$0xf] %vm723, %v1632
  %1697 = vst.msk [vmem:[%s7 + $0x48] sm:$0xf] %vm723, %v1633
  %1698 = vst.msk [vmem:[%s7 + $0x4c] sm:$0xf] %vm723, %v1634
  %1699 = vst.msk [vmem:[%s7 + $0x50] sm:$0xf] %vm723, %v1635
  %1700 = vst.msk [vmem:[%s7 + $0x54] sm:$0xf] %vm723, %v1636
  %1701 = vst.msk [vmem:[%s7 + $0x58] sm:$0xf] %vm723, %v1637
  %1702 = vst.msk [vmem:[%s7 + $0x5c] sm:$0xf] %vm723, %v1638
  %1703 = vst.msk [vmem:[%s7 + $0x60] sm:$0xf] %vm723, %v1639
  %1704 = vst.msk [vmem:[%s7 + $0x64] sm:$0xf] %vm723, %v1640
  %1705 = vst.msk [vmem:[%s7 + $0x68] sm:$0xf] %vm723, %v1641
  %1706 = vst.msk [vmem:[%s7 + $0x6c] sm:$0xf] %vm723, %v1642
  %1707 = vst.msk [vmem:[%s7 + $0x70] sm:$0xf] %vm723, %v1643
  %1708 = vst.msk [vmem:[%s7 + $0x74] sm:$0xf] %vm723, %v1644
  %1709 = vst.msk [vmem:[%s7 + $0x78] sm:$0xf] %vm723, %v1645
  %1710 = vst.msk [vmem:[%s7 + $0x7c] sm:$0xf] %vm723, %v1646
  %1711 = vst.msk [vmem:[%s7 + $0x80] sm:$0xf] %vm723, %v1647
  %1712 = vst.msk [vmem:[%s7 + $0x84] sm:$0xf] %vm723, %v1648
  %1713 = vst.msk [vmem:[%s7 + $0x88] sm:$0xf] %vm723, %v1649
  %1714 = vst.msk [vmem:[%s7 + $0x8c] sm:$0xf] %vm723, %v1650
  %1715 = vst.msk [vmem:[%s7 + $0x90] sm:$0xf] %vm723, %v1651
  %1716 = vst.msk [vmem:[%s7 + $0x94] sm:$0xf] %vm723, %v1652
  %1717 = vst.msk [vmem:[%s7 + $0x98] sm:$0xf] %vm723, %v1653
  %1718 = vst.msk [vmem:[%s7 + $0x9c] sm:$0xf] %vm723, %v1654
  %1719 = vst.msk [vmem:[%s7 + $0xa0] sm:$0xf] %vm723, %v1655
  %1720 = vst.msk [vmem:[%s7 + $0xa4] sm:$0xf] %vm723, %v1656
  %1721 = vst.msk [vmem:[%s7 + $0xa8] sm:$0xf] %vm723, %v1657
  %1722 = vst.msk [vmem:[%s7 + $0xac] sm:$0xf] %vm723, %v1658
  %1723 = vst.msk [vmem:[%s7 + $0xb0] sm:$0xf] %vm723, %v1659
  %1724 = vst.msk [vmem:[%s7 + $0xb4] sm:$0xf] %vm723, %v1660
  %1725 = vst.msk [vmem:[%s7 + $0xb8] sm:$0xf] %vm723, %v1661
  %1726 = vst.msk [vmem:[%s7 + $0xbc] sm:$0xf] %vm723, %v1662
  %1727 = vst.msk [vmem:[%s7 + $0xc0] sm:$0xf] %vm723, %v1663
  %1728 = vst.msk [vmem:[%s7 + $0xc4] sm:$0xf] %vm723, %v1664
  %1729 = vst.msk [vmem:[%s7 + $0xc8] sm:$0xf] %vm723, %v1665
  %1730 = vst.msk [vmem:[%s7 + $0xcc] sm:$0xf] %vm723, %v1666
  %1731 = vst.msk [vmem:[%s7 + $0xd0] sm:$0xf] %vm723, %v1667
  %1732 = vst.msk [vmem:[%s7 + $0xd4] sm:$0xf] %vm723, %v1668
  %1733 = vst.msk [vmem:[%s7 + $0xd8] sm:$0xf] %vm723, %v1669
  %1734 = vst.msk [vmem:[%s7 + $0xdc] sm:$0xf] %vm723, %v1670
  %1735 = vst.msk [vmem:[%s7 + $0xe0] sm:$0xf] %vm723, %v1671
  %1736 = vst.msk [vmem:[%s7 + $0xe4] sm:$0xf] %vm723, %v1672
  %1737 = vst.msk [vmem:[%s7 + $0xe8] sm:$0xf] %vm723, %v1673
  %1738 = vst.msk [vmem:[%s7 + $0xec] sm:$0xf] %vm723, %v1674
  %1739 = vst.msk [vmem:[%s7 + $0xf0] sm:$0xf] %vm723, %v1675
  %1740 = vst.msk [vmem:[%s7 + $0xf4] sm:$0xf] %vm723, %v1676
  %1741 = vst.msk [vmem:[%s7 + $0xf8] sm:$0xf] %vm723, %v1677
  %1742 = vst.msk [vmem:[%s7 + $0xfc] sm:$0xf] %vm723, %v1678
  %v1743 = vsel %vm788, %v1456, 0.0
  %v1744 = vsel %vm788, %v1458, 0.0
  %v1745 = vadd.f32 %v1743, %v1744
  %v1746 = vsel %vm788, %v1461, 0.0
  %v1747 = vadd.f32 %v1745, %v1746
  %v1748 = vsel %vm788, %v1463, 0.0
  %v1749 = vadd.f32 %v1747, %v1748
  %v1750 = vsel %vm788, %v1466, 0.0
  %v1751 = vadd.f32 %v1749, %v1750
  %v1752 = vsel %vm788, %v1468, 0.0
  %v1753 = vadd.f32 %v1751, %v1752
  %v1754 = vsel %vm788, %v1471, 0.0
  %v1755 = vadd.f32 %v1753, %v1754
  %v1756 = vsel %vm788, %v1473, 0.0
  %v1757 = vadd.f32 %v1755, %v1756
  %v1758 = vsel %vm788, %v1476, 0.0
  %v1759 = vadd.f32 %v1757, %v1758
  %v1760 = vsel %vm788, %v1478, 0.0
  %v1761 = vadd.f32 %v1759, %v1760
  %v1762 = vsel %vm788, %v1481, 0.0
  %v1763 = vadd.f32 %v1761, %v1762
  %v1764 = vsel %vm788, %v1483, 0.0
  %v1765 = vadd.f32 %v1763, %v1764
  %v1766 = vsel %vm788, %v1486, 0.0
  %v1767 = vadd.f32 %v1765, %v1766
  %v1768 = vsel %vm788, %v1488, 0.0
  %v1769 = vadd.f32 %v1767, %v1768
  %v1770 = vsel %vm788, %v1491, 0.0
  %v1771 = vadd.f32 %v1769, %v1770
  %v1772 = vsel %vm788, %v1493, 0.0
  %v1773 = vadd.f32 %v1771, %v1772
  %v1774 = vsel %vm788, %v1496, 0.0
  %v1775 = vadd.f32 %v1773, %v1774
  %v1776 = vsel %vm788, %v1498, 0.0
  %v1777 = vadd.f32 %v1775, %v1776
  %v1778 = vsel %vm788, %v1501, 0.0
  %v1779 = vadd.f32 %v1777, %v1778
  %v1780 = vsel %vm788, %v1503, 0.0
  %v1781 = vadd.f32 %v1779, %v1780
  %v1782 = vsel %vm788, %v1506, 0.0
  %v1783 = vadd.f32 %v1781, %v1782
  %v1784 = vsel %vm788, %v1508, 0.0
  %v1785 = vadd.f32 %v1783, %v1784
  %v1786 = vsel %vm788, %v1511, 0.0
  %v1787 = vadd.f32 %v1785, %v1786
  %v1788 = vsel %vm788, %v1513, 0.0
  %v1789 = vadd.f32 %v1787, %v1788
  %v1790 = vsel %vm788, %v1516, 0.0
  %v1791 = vadd.f32 %v1789, %v1790
  %v1792 = vsel %vm788, %v1518, 0.0
  %v1793 = vadd.f32 %v1791, %v1792
  %v1794 = vsel %vm788, %v1521, 0.0
  %v1795 = vadd.f32 %v1793, %v1794
  %v1796 = vsel %vm788, %v1523, 0.0
  %v1797 = vadd.f32 %v1795, %v1796
  %v1798 = vsel %vm788, %v1526, 0.0
  %v1799 = vadd.f32 %v1797, %v1798
  %v1800 = vsel %vm788, %v1528, 0.0
  %v1801 = vadd.f32 %v1799, %v1800
  %v1802 = vsel %vm788, %v1531, 0.0
  %v1803 = vadd.f32 %v1801, %v1802
  %v1804 = vsel %vm788, %v1533, 0.0
  %v1805 = vadd.f32 %v1803, %v1804
  %v1806 = vsel %vm788, %v1536, 0.0
  %v1807 = vadd.f32 %v1805, %v1806
  %v1808 = vsel %vm788, %v1538, 0.0
  %v1809 = vadd.f32 %v1807, %v1808
  %v1810 = vsel %vm788, %v1541, 0.0
  %v1811 = vadd.f32 %v1809, %v1810
  %v1812 = vsel %vm788, %v1543, 0.0
  %v1813 = vadd.f32 %v1811, %v1812
  %v1814 = vsel %vm788, %v1546, 0.0
  %v1815 = vadd.f32 %v1813, %v1814
  %v1816 = vsel %vm788, %v1548, 0.0
  %v1817 = vadd.f32 %v1815, %v1816
  %v1818 = vsel %vm788, %v1551, 0.0
  %v1819 = vadd.f32 %v1817, %v1818
  %v1820 = vsel %vm788, %v1553, 0.0
  %v1821 = vadd.f32 %v1819, %v1820
  %v1822 = vsel %vm788, %v1556, 0.0
  %v1823 = vadd.f32 %v1821, %v1822
  %v1824 = vsel %vm788, %v1558, 0.0
  %v1825 = vadd.f32 %v1823, %v1824
  %v1826 = vsel %vm788, %v1561, 0.0
  %v1827 = vadd.f32 %v1825, %v1826
  %v1828 = vsel %vm788, %v1563, 0.0
  %v1829 = vadd.f32 %v1827, %v1828
  %v1830 = vsel %vm788, %v1566, 0.0
  %v1831 = vadd.f32 %v1829, %v1830
  %v1832 = vsel %vm788, %v1568, 0.0
  %v1833 = vadd.f32 %v1831, %v1832
  %v1834 = vsel %vm788, %v1571, 0.0
  %v1835 = vadd.f32 %v1833, %v1834
  %v1836 = vsel %vm788, %v1573, 0.0
  %v1837 = vadd.f32 %v1835, %v1836
  %v1838 = vsel %vm788, %v1576, 0.0
  %v1839 = vadd.f32 %v1837, %v1838
  %v1840 = vsel %vm788, %v1578, 0.0
  %v1841 = vadd.f32 %v1839, %v1840
  %v1842 = vsel %vm788, %v1581, 0.0
  %v1843 = vadd.f32 %v1841, %v1842
  %v1844 = vsel %vm788, %v1583, 0.0
  %v1845 = vadd.f32 %v1843, %v1844
  %v1846 = vsel %vm788, %v1586, 0.0
  %v1847 = vadd.f32 %v1845, %v1846
  %v1848 = vsel %vm788, %v1588, 0.0
  %v1849 = vadd.f32 %v1847, %v1848
  %v1850 = vsel %vm788, %v1591, 0.0
  %v1851 = vadd.f32 %v1849, %v1850
  %v1852 = vsel %vm788, %v1593, 0.0
  %v1853 = vadd.f32 %v1851, %v1852
  %v1854 = vsel %vm788, %v1596, 0.0
  %v1855 = vadd.f32 %v1853, %v1854
  %v1856 = vsel %vm788, %v1598, 0.0
  %v1857 = vadd.f32 %v1855, %v1856
  %v1858 = vsel %vm788, %v1601, 0.0
  %v1859 = vadd.f32 %v1857, %v1858
  %v1860 = vsel %vm788, %v1603, 0.0
  %v1861 = vadd.f32 %v1859, %v1860
  %v1862 = vsel %vm788, %v1606, 0.0
  %v1863 = vadd.f32 %v1861, %v1862
  %v1864 = vsel %vm788, %v1608, 0.0
  %v1865 = vadd.f32 %v1863, %v1864
  %v1866 = vsel %vm788, %v1611, 0.0
  %v1867 = vadd.f32 %v1865, %v1866
  %v1868 = vsel %vm788, %v1613, 0.0
  %v1869 = vadd.f32 %v1867, %v1868
  %v1870 = vrot.slane %v1869, 4
  %v1871 = vadd.f32 %v1869, %v1870
  %v1872 = vrot.slane %v1871, 2
  %v1873 = vadd.f32 %v1871, %v1872
  %v1874 = vrot.slane %v1873, 1
  %v1875 = vadd.f32 %v1873, %v1874
  %1876 = vst.msk [vmem:[%s9] sm:$0x1] %vm922, %v1875
  %v1877 = vmul.f32 %v1456, %v1456
  %v1878 = vmul.f32 %v1458, %v1458
  %v1879 = vmul.f32 %v1461, %v1461
  %v1880 = vmul.f32 %v1463, %v1463
  %v1881 = vmul.f32 %v1466, %v1466
  %v1882 = vmul.f32 %v1468, %v1468
  %v1883 = vmul.f32 %v1471, %v1471
  %v1884 = vmul.f32 %v1473, %v1473
  %v1885 = vmul.f32 %v1476, %v1476
  %v1886 = vmul.f32 %v1478, %v1478
  %v1887 = vmul.f32 %v1481, %v1481
  %v1888 = vmul.f32 %v1483, %v1483
  %v1889 = vmul.f32 %v1486, %v1486
  %v1890 = vmul.f32 %v1488, %v1488
  %v1891 = vmul.f32 %v1491, %v1491
  %v1892 = vmul.f32 %v1493, %v1493
  %v1893 = vmul.f32 %v1496, %v1496
  %v1894 = vmul.f32 %v1498, %v1498
  %v1895 = vmul.f32 %v1501, %v1501
  %v1896 = vmul.f32 %v1503, %v1503
  %v1897 = vmul.f32 %v1506, %v1506
  %v1898 = vmul.f32 %v1508, %v1508
  %v1899 = vmul.f32 %v1511, %v1511
  %v1900 = vmul.f32 %v1513, %v1513
  %v1901 = vmul.f32 %v1516, %v1516
  %v1902 = vmul.f32 %v1518, %v1518
  %v1903 = vmul.f32 %v1521, %v1521
  %v1904 = vmul.f32 %v1523, %v1523
  %v1905 = vmul.f32 %v1526, %v1526
  %v1906 = vmul.f32 %v1528, %v1528
  %v1907 = vmul.f32 %v1531, %v1531
  %v1908 = vmul.f32 %v1533, %v1533
  %v1909 = vmul.f32 %v1536, %v1536
  %v1910 = vmul.f32 %v1538, %v1538
  %v1911 = vmul.f32 %v1541, %v1541
  %v1912 = vmul.f32 %v1543, %v1543
  %v1913 = vmul.f32 %v1546, %v1546
  %v1914 = vmul.f32 %v1548, %v1548
  %v1915 = vmul.f32 %v1551, %v1551
  %v1916 = vmul.f32 %v1553, %v1553
  %v1917 = vmul.f32 %v1556, %v1556
  %v1918 = vmul.f32 %v1558, %v1558
  %v1919 = vmul.f32 %v1561, %v1561
  %v1920 = vmul.f32 %v1563, %v1563
  %v1921 = vmul.f32 %v1566, %v1566
  %v1922 = vmul.f32 %v1568, %v1568
  %v1923 = vmul.f32 %v1571, %v1571
  %v1924 = vmul.f32 %v1573, %v1573
  %v1925 = vmul.f32 %v1576, %v1576
  %v1926 = vmul.f32 %v1578, %v1578
  %v1927 = vmul.f32 %v1581, %v1581
  %v1928 = vmul.f32 %v1583, %v1583
  %v1929 = vmul.f32 %v1586, %v1586
  %v1930 = vmul.f32 %v1588, %v1588
  %v1931 = vmul.f32 %v1591, %v1591
  %v1932 = vmul.f32 %v1593, %v1593
  %v1933 = vmul.f32 %v1596, %v1596
  %v1934 = vmul.f32 %v1598, %v1598
  %v1935 = vmul.f32 %v1601, %v1601
  %v1936 = vmul.f32 %v1603, %v1603
  %v1937 = vmul.f32 %v1606, %v1606
  %v1938 = vmul.f32 %v1608, %v1608
  %v1939 = vmul.f32 %v1611, %v1611
  %v1940 = vmul.f32 %v1613, %v1613
  %v1941 = vsel %vm788, %v1877, 0.0
  %v1942 = vsel %vm788, %v1878, 0.0
  %v1943 = vadd.f32 %v1941, %v1942
  %v1944 = vsel %vm788, %v1879, 0.0
  %v1945 = vadd.f32 %v1943, %v1944
  %v1946 = vsel %vm788, %v1880, 0.0
  %v1947 = vadd.f32 %v1945, %v1946
  %v1948 = vsel %vm788, %v1881, 0.0
  %v1949 = vadd.f32 %v1947, %v1948
  %v1950 = vsel %vm788, %v1882, 0.0
  %v1951 = vadd.f32 %v1949, %v1950
  %v1952 = vsel %vm788, %v1883, 0.0
  %v1953 = vadd.f32 %v1951, %v1952
  %v1954 = vsel %vm788, %v1884, 0.0
  %v1955 = vadd.f32 %v1953, %v1954
  %v1956 = vsel %vm788, %v1885, 0.0
  %v1957 = vadd.f32 %v1955, %v1956
  %v1958 = vsel %vm788, %v1886, 0.0
  %v1959 = vadd.f32 %v1957, %v1958
  %v1960 = vsel %vm788, %v1887, 0.0
  %v1961 = vadd.f32 %v1959, %v1960
  %v1962 = vsel %vm788, %v1888, 0.0
  %v1963 = vadd.f32 %v1961, %v1962
  %v1964 = vsel %vm788, %v1889, 0.0
  %v1965 = vadd.f32 %v1963, %v1964
  %v1966 = vsel %vm788, %v1890, 0.0
  %v1967 = vadd.f32 %v1965, %v1966
  %v1968 = vsel %vm788, %v1891, 0.0
  %v1969 = vadd.f32 %v1967, %v1968
  %v1970 = vsel %vm788, %v1892, 0.0
  %v1971 = vadd.f32 %v1969, %v1970
  %v1972 = vsel %vm788, %v1893, 0.0
  %v1973 = vadd.f32 %v1971, %v1972
  %v1974 = vsel %vm788, %v1894, 0.0
  %v1975 = vadd.f32 %v1973, %v1974
  %v1976 = vsel %vm788, %v1895, 0.0
  %v1977 = vadd.f32 %v1975, %v1976
  %v1978 = vsel %vm788, %v1896, 0.0
  %v1979 = vadd.f32 %v1977, %v1978
  %v1980 = vsel %vm788, %v1897, 0.0
  %v1981 = vadd.f32 %v1979, %v1980
  %v1982 = vsel %vm788, %v1898, 0.0
  %v1983 = vadd.f32 %v1981, %v1982
  %v1984 = vsel %vm788, %v1899, 0.0
  %v1985 = vadd.f32 %v1983, %v1984
  %v1986 = vsel %vm788, %v1900, 0.0
  %v1987 = vadd.f32 %v1985, %v1986
  %v1988 = vsel %vm788, %v1901, 0.0
  %v1989 = vadd.f32 %v1987, %v1988
  %v1990 = vsel %vm788, %v1902, 0.0
  %v1991 = vadd.f32 %v1989, %v1990
  %v1992 = vsel %vm788, %v1903, 0.0
  %v1993 = vadd.f32 %v1991, %v1992
  %v1994 = vsel %vm788, %v1904, 0.0
  %v1995 = vadd.f32 %v1993, %v1994
  %v1996 = vsel %vm788, %v1905, 0.0
  %v1997 = vadd.f32 %v1995, %v1996
  %v1998 = vsel %vm788, %v1906, 0.0
  %v1999 = vadd.f32 %v1997, %v1998
  %v2000 = vsel %vm788, %v1907, 0.0
  %v2001 = vadd.f32 %v1999, %v2000
  %v2002 = vsel %vm788, %v1908, 0.0
  %v2003 = vadd.f32 %v2001, %v2002
  %v2004 = vsel %vm788, %v1909, 0.0
  %v2005 = vadd.f32 %v2003, %v2004
  %v2006 = vsel %vm788, %v1910, 0.0
  %v2007 = vadd.f32 %v2005, %v2006
  %v2008 = vsel %vm788, %v1911, 0.0
  %v2009 = vadd.f32 %v2007, %v2008
  %v2010 = vsel %vm788, %v1912, 0.0
  %v2011 = vadd.f32 %v2009, %v2010
  %v2012 = vsel %vm788, %v1913, 0.0
  %v2013 = vadd.f32 %v2011, %v2012
  %v2014 = vsel %vm788, %v1914, 0.0
  %v2015 = vadd.f32 %v2013, %v2014
  %v2016 = vsel %vm788, %v1915, 0.0
  %v2017 = vadd.f32 %v2015, %v2016
  %v2018 = vsel %vm788, %v1916, 0.0
  %v2019 = vadd.f32 %v2017, %v2018
  %v2020 = vsel %vm788, %v1917, 0.0
  %v2021 = vadd.f32 %v2019, %v2020
  %v2022 = vsel %vm788, %v1918, 0.0
  %v2023 = vadd.f32 %v2021, %v2022
  %v2024 = vsel %vm788, %v1919, 0.0
  %v2025 = vadd.f32 %v2023, %v2024
  %v2026 = vsel %vm788, %v1920, 0.0
  %v2027 = vadd.f32 %v2025, %v2026
  %v2028 = vsel %vm788, %v1921, 0.0
  %v2029 = vadd.f32 %v2027, %v2028
  %v2030 = vsel %vm788, %v1922, 0.0
  %v2031 = vadd.f32 %v2029, %v2030
  %v2032 = vsel %vm788, %v1923, 0.0
  %v2033 = vadd.f32 %v2031, %v2032
  %v2034 = vsel %vm788, %v1924, 0.0
  %v2035 = vadd.f32 %v2033, %v2034
  %v2036 = vsel %vm788, %v1925, 0.0
  %v2037 = vadd.f32 %v2035, %v2036
  %v2038 = vsel %vm788, %v1926, 0.0
  %v2039 = vadd.f32 %v2037, %v2038
  %v2040 = vsel %vm788, %v1927, 0.0
  %v2041 = vadd.f32 %v2039, %v2040
  %v2042 = vsel %vm788, %v1928, 0.0
  %v2043 = vadd.f32 %v2041, %v2042
  %v2044 = vsel %vm788, %v1929, 0.0
  %v2045 = vadd.f32 %v2043, %v2044
  %v2046 = vsel %vm788, %v1930, 0.0
  %v2047 = vadd.f32 %v2045, %v2046
  %v2048 = vsel %vm788, %v1931, 0.0
  %v2049 = vadd.f32 %v2047, %v2048
  %v2050 = vsel %vm788, %v1932, 0.0
  %v2051 = vadd.f32 %v2049, %v2050
  %v2052 = vsel %vm788, %v1933, 0.0
  %v2053 = vadd.f32 %v2051, %v2052
  %v2054 = vsel %vm788, %v1934, 0.0
  %v2055 = vadd.f32 %v2053, %v2054
  %v2056 = vsel %vm788, %v1935, 0.0
  %v2057 = vadd.f32 %v2055, %v2056
  %v2058 = vsel %vm788, %v1936, 0.0
  %v2059 = vadd.f32 %v2057, %v2058
  %v2060 = vsel %vm788, %v1937, 0.0
  %v2061 = vadd.f32 %v2059, %v2060
  %v2062 = vsel %vm788, %v1938, 0.0
  %v2063 = vadd.f32 %v2061, %v2062
  %v2064 = vsel %vm788, %v1939, 0.0
  %v2065 = vadd.f32 %v2063, %v2064
  %v2066 = vsel %vm788, %v1940, 0.0
  %v2067 = vadd.f32 %v2065, %v2066
  %v2068 = vrot.slane %v2067, 4
  %v2069 = vadd.f32 %v2067, %v2068
  %v2070 = vrot.slane %v2069, 2
  %v2071 = vadd.f32 %v2069, %v2070
  %v2072 = vrot.slane %v2071, 1
  %v2073 = vadd.f32 %v2071, %v2072
  %2074 = vst.msk [vmem:[%s9 + $0x1] sm:$0x1] %vm922, %v2073
  // Predicated region
  $region26: #{_lambda_.6} parent=0 // pred_check
    _
  $region27: #{_lambda_.6} parent=0 // pred_check_branch
    %2076 = sbr.rel (0) target = $region29
  $region28: #{_lambda_.6} parent=0 // pred_region
    _
  $region29: #{_lambda_.6} parent=0 // pred_fallthru
    _
  // Predicated region
  $region30: #{_lambda_.6} parent=0 // pred_check
    _
  $region31: #{_lambda_.6} parent=0 // pred_check_branch
    %2078 = sbr.rel (0) target = $region33
  $region32: #{_lambda_.6} parent=0 // pred_region
    _
  $region33: #{_lambda_.6} parent=0 // pred_fallthru
    _
  // Predicated region
  $region34: #{_lambda_.6} parent=0 // pred_check
    _
  $region35: #{_lambda_.6} parent=0 // pred_check_branch
    %2080 = sbr.rel (0) target = $region37
  $region36: #{_lambda_.6} parent=0 // pred_region
    _
  $region37: #{_lambda_.6} parent=0 // pred_fallthru
    _
  // Predicated region
  $region38: #{_lambda_.6} parent=0 // pred_check
    _
  $region39: #{_lambda_.6} parent=0 // pred_check_branch
    %2082 = sbr.rel (0) target = $region41
  $region40: #{_lambda_.6} parent=0 // pred_region
    _
  $region41: #{_lambda_.6} parent=0 // pred_fallthru
    _
  // Predicated region
  $region42: #{_lambda_.6} parent=0 // pred_check
    _
  $region43: #{_lambda_.6} parent=0 // pred_check_branch
    %2084 = sbr.rel (0) target = $region45
  $region44: #{_lambda_.6} parent=0 // pred_region
    _
  $region45: #{_lambda_.6} parent=0 // pred_fallthru
    _
  // Predicated region
  $region46: #{_lambda_.6} parent=0 // pred_check
    _
  $region47: #{_lambda_.6} parent=0 // pred_check_branch
    %2086 = sbr.rel (0) target = $region49
  $region48: #{_lambda_.6} parent=0 // pred_region
    _
  $region49: #{_lambda_.6} parent=0 // pred_fallthru
    _
  // Predicated region
  $region50: #{_lambda_.6} parent=0 // pred_check
    _
  $region51: #{_lambda_.6} parent=0 // pred_check_branch
    %2088 = sbr.rel (0) target = $region53
  $region52: #{_lambda_.6} parent=0 // pred_region
    _
  $region53: #{_lambda_.6} parent=0 // pred_fallthru
    _
  // Predicated region
  $region54: #{_lambda_.6} parent=0 // pred_check
    _
  $region55: #{_lambda_.6} parent=0 // pred_check_branch
    %2090 = sbr.rel (0) target = $region57
  $region56: #{_lambda_.6} parent=0 // pred_region
    _
  $region57: #{_lambda_.6} parent=0 // pred_fallthru
    _

// kernel: _lambda_.5
$region0: #{_lambda_.5}
  #allocation0 [shape = 'u32[]', space=smem, size = 0x4, offset = 0x4, fixed_abs, tag = 'smem constant byte address 0x4 - core index']
  #allocation1 [shape = 'u32[72,128]{1,0:T(1,128)}', space=vmem, size = 0x9000, scoped, tag = 'internal scratch']
  #allocation2 [shape = 'bf16[18,18,4]{2,1,0:T(8,128)(2,1)}', space=vmem, size = 0x1b000, scoped, tag = 'scratch operand']
  #allocation3 [shape = 'bf16[256,36]{1,0:T(8,128)(2,1)}', space=vmem, size = 0x10000, scoped, tag = 'scratch operand']
  %s0 = inlined_call_operand.vmem [shape: bf16[2,16,16,4], index: 0, kind: input, shape index: {}]
  %s1 = inlined_call_operand.vmem [shape: f32[1,4], index: 1, kind: input, shape index: {}]
  %s2 = inlined_call_operand.vmem [shape: f32[1,4], index: 2, kind: input, shape index: {}]
  %s3 = inlined_call_operand.vmem [shape: bf16[36,4], index: 3, kind: input, shape index: {}]
  %s4 = inlined_call_operand.vmem [shape: bf16[2,16,16,4], index: 4, kind: output, shape index: {0}]
  %s5 = inlined_call_operand.vmem [shape: f32[2,2,4], index: 5, kind: output, shape index: {1}]
  %6 = xla_tuple %s4, %s5
  %s7 = sld [smem:[#allocation0]]
  $region57: #{_lambda_.5} parent=0
    _
  %s9 = ssub.s32 1, %s7
  %s10 = scalar_select 0, %s9, %s7
  loop: start=0, step=1, limit=4
  $region2: #{_lambda_.5} parent=0 // loop_pre_header
    _
  $region3: #{_lambda_.5} parent=0 // loop_header
    %s12 = sphi 0, %s16
    %p13 = scmp.ge.s32.totalorder %s12, 4
    %s22 = sphi 0, %s24
    %s25 = sphi 0, %s22
    %s26 = sphi 0, %s25
    %s42 = sphi 0, %s26
    %s46 = sphi 0, %s46
    %s48 = sphi 0, %s46
    %s49 = sphi 0, %s48
    %s63 = sphi 0, %s49
    %s67 = sphi 0, %s67
    %s69 = sphi 0, %s67
    %s70 = sphi 0, %s69
    %s84 = sphi 0, %s70
    %s88 = sphi 0, %s88
    %s90 = sphi 0, %s88
    %s91 = sphi 0, %s90
    %s105 = sphi 0, %s91
    %s111 = sphi 0, %s113
    %s114 = sphi 0, %s111
    %s115 = sphi 0, %s114
    %s131 = sphi 0, %s115
    %s137 = sphi 0, %s139
    %s140 = sphi 0, %s137
    %s141 = sphi 0, %s140
    %s157 = sphi 0, %s141
  $region4: #{_lambda_.5} parent=0 // loop_header_branch
    %15 = sbr.rel (%p13) target = $region8
  $region5: #{_lambda_.5} parent=0 // loop_body
    %s17 = ssub.s32 %s12, 1
    %s18 = ssub.s32 %s12, 2
    %s19 = sadd.s32 %s12, 1
    %s20 = ssub.s32 %s12, %s19
    %p21 = scmp.eq.s32.totalorder %s20, 0
    %s23 = sadd.s32 %s22, 1
    %s24 = scalar_select %p21, %s22, %s23
    %p27 = pneg %p21
    %p28 = scmp.eq.s32.totalorder %s12, 1
    %p29 = por %p27, %p28
    %p30 = scmp.ne.s32.totalorder %s22, %s25
    %p31 = scmp.eq.s32.totalorder %s12, 0
    %p32 = por %p30, %p31
    %p33 = scmp.ne.s32.totalorder %s22, %s25
    %p34 = scmp.eq.s32.totalorder %s17, 1
    %p35 = por %p33, %p34
    %p36 = scmp.ne.s32.totalorder %s25, %s26
    %p37 = scmp.eq.s32.totalorder %s17, 0
    %p38 = por %p36, %p37
    %p39 = scmp.ne.s32.totalorder %s25, %s26
    %p40 = scmp.eq.s32.totalorder %s18, 1
    %p41 = por %p39, %p40
    %p43 = scmp.ne.s32.totalorder %s26, %s42
    %p44 = scmp.eq.s32.totalorder %s18, 0
    %p45 = por %p43, %p44
    %s47 = sadd.s32 %s46, 1
    %p50 = scmp.eq.s32.totalorder %s12, 1
    %p51 = scmp.ne.s32.totalorder %s46, %s48
    %p52 = scmp.eq.s32.totalorder %s12, 0
    %p53 = por %p51, %p52
    %p54 = scmp.ne.s32.totalorder %s46, %s48
    %p55 = scmp.eq.s32.totalorder %s17, 1
    %p56 = por %p54, %p55
    %p57 = scmp.ne.s32.totalorder %s48, %s49
    %p58 = scmp.eq.s32.totalorder %s17, 0
    %p59 = por %p57, %p58
    %p60 = scmp.ne.s32.totalorder %s48, %s49
    %p61 = scmp.eq.s32.totalorder %s18, 1
    %p62 = por %p60, %p61
    %p64 = scmp.ne.s32.totalorder %s49, %s63
    %p65 = scmp.eq.s32.totalorder %s18, 0
    %p66 = por %p64, %p65
    %s68 = sadd.s32 %s67, 1
    %p71 = scmp.eq.s32.totalorder %s12, 1
    %p72 = scmp.ne.s32.totalorder %s67, %s69
    %p73 = scmp.eq.s32.totalorder %s12, 0
    %p74 = por %p72, %p73
    %p75 = scmp.ne.s32.totalorder %s67, %s69
    %p76 = scmp.eq.s32.totalorder %s17, 1
    %p77 = por %p75, %p76
    %p78 = scmp.ne.s32.totalorder %s69, %s70
    %p79 = scmp.eq.s32.totalorder %s17, 0
    %p80 = por %p78, %p79
    %p81 = scmp.ne.s32.totalorder %s69, %s70
    %p82 = scmp.eq.s32.totalorder %s18, 1
    %p83 = por %p81, %p82
    %p85 = scmp.ne.s32.totalorder %s70, %s84
    %p86 = scmp.eq.s32.totalorder %s18, 0
    %p87 = por %p85, %p86
    %s89 = sadd.s32 %s88, 1
    %p92 = scmp.eq.s32.totalorder %s12, 1
    %p93 = scmp.ne.s32.totalorder %s88, %s90
    %p94 = scmp.eq.s32.totalorder %s12, 0
    %p95 = por %p93, %p94
    %p96 = scmp.ne.s32.totalorder %s88, %s90
    %p97 = scmp.eq.s32.totalorder %s17, 1
    %p98 = por %p96, %p97
    %p99 = scmp.ne.s32.totalorder %s90, %s91
    %p100 = scmp.eq.s32.totalorder %s17, 0
    %p101 = por %p99, %p100
    %p102 = scmp.ne.s32.totalorder %s90, %s91
    %p103 = scmp.eq.s32.totalorder %s18, 1
    %p104 = por %p102, %p103
    %p106 = scmp.ne.s32.totalorder %s91, %s105
    %p107 = scmp.eq.s32.totalorder %s18, 0
    %p108 = por %p106, %p107
    %s109 = ssub.s32 %s12, %s19
    %p110 = scmp.eq.s32.totalorder %s109, 0
    %s112 = sadd.s32 %s111, 1
    %s113 = scalar_select %p110, %s111, %s112
    %p116 = pneg %p110
    %p117 = scmp.eq.s32.totalorder %s12, 1
    %p118 = por %p116, %p117
    %p119 = scmp.ne.s32.totalorder %s111, %s114
    %p120 = scmp.eq.s32.totalorder %s12, 0
    %p121 = por %p119, %p120
    %p122 = scmp.ne.s32.totalorder %s111, %s114
    %p123 = scmp.eq.s32.totalorder %s17, 1
    %p124 = por %p122, %p123
    %p125 = scmp.ne.s32.totalorder %s114, %s115
    %p126 = scmp.eq.s32.totalorder %s17, 0
    %p127 = por %p125, %p126
    %p128 = scmp.ne.s32.totalorder %s114, %s115
    %p129 = scmp.eq.s32.totalorder %s18, 1
    %p130 = por %p128, %p129
    %p132 = scmp.ne.s32.totalorder %s115, %s131
    %p133 = scmp.eq.s32.totalorder %s18, 0
    %p134 = por %p132, %p133
    %s135 = ssub.s32 %s12, %s19
    %p136 = scmp.eq.s32.totalorder %s135, 0
    %s138 = sadd.s32 %s137, 1
    %s139 = scalar_select %p136, %s137, %s138
    %p142 = pneg %p136
    %p143 = scmp.eq.s32.totalorder %s12, 1
    %p144 = por %p142, %p143
    %p145 = scmp.ne.s32.totalorder %s137, %s140
    %p146 = scmp.eq.s32.totalorder %s12, 0
    %p147 = por %p145, %p146
    %p148 = scmp.ne.s32.totalorder %s137, %s140
    %p149 = scmp.eq.s32.totalorder %s17, 1
    %p150 = por %p148, %p149
    %p151 = scmp.ne.s32.totalorder %s140, %s141
    %p152 = scmp.eq.s32.totalorder %s17, 0
    %p153 = por %p151, %p152
    %p154 = scmp.ne.s32.totalorder %s140, %s141
    %p155 = scmp.eq.s32.totalorder %s18, 1
    %p156 = por %p154, %p155
    %p158 = scmp.ne.s32.totalorder %s141, %s157
    %p159 = scmp.eq.s32.totalorder %s18, 0
    %p160 = por %p158, %p159
    %p161 = scmp.le.s32.totalorder 1, %s12
    %p162 = scmp.lt.s32.totalorder %s12, 3
    %p163 = pnand %p161, %p162
    %p164 = pneg %p163
    // Predicated region
    $region9: #{_lambda_.5} parent=5 // pred_check
      _
    $region10: #{_lambda_.5} parent=5 // pred_check_branch
      %166 = sbr.rel (%p163) target = $region12
    $region11: #{_lambda_.5} parent=5 // pred_region
      %s167 = ssub.s32 %s12, 1
      // Predicated region
      $region13: #{_lambda_.5} parent=11 // pred_check
        %p168 = pneg %p59
      $region14: #{_lambda_.5} parent=11 // pred_check_branch
        %170 = sbr.rel (%p168) target = $region16
      $region15: #{_lambda_.5} parent=11 // pred_region
        _
      $region16: #{_lambda_.5} parent=11 // pred_fallthru
        _
      // Predicated region
      $region17: #{_lambda_.5} parent=11 // pred_check
        %p171 = pneg %p80
      $region18: #{_lambda_.5} parent=11 // pred_check_branch
        %173 = sbr.rel (%p171) target = $region20
      $region19: #{_lambda_.5} parent=11 // pred_region
        _
      $region20: #{_lambda_.5} parent=11 // pred_fallthru
        _
      // Predicated region
      $region21: #{_lambda_.5} parent=11 // pred_check
        %p174 = pneg %p101
      $region22: #{_lambda_.5} parent=11 // pred_check_branch
        %176 = sbr.rel (%p174) target = $region24
      $region23: #{_lambda_.5} parent=11 // pred_region
        _
      $region24: #{_lambda_.5} parent=11 // pred_fallthru
        _
    $region12: #{_lambda_.5} parent=5 // pred_fallthru
      _
    %p177 = scmp.lt.s32.totalorder %s12, 2
    // Predicated region
    $region25: #{_lambda_.5} parent=5 // pred_check
      %p178 = pneg %p177
    $region26: #{_lambda_.5} parent=5 // pred_check_branch
      %180 = sbr.rel (%p178) target = $region28
    $region27: #{_lambda_.5} parent=5 // pred_region
      // Predicated region
      $region29: #{_lambda_.5} parent=27 // pred_check
        %p181 = pneg %p32
      $region30: #{_lambda_.5} parent=27 // pred_check_branch
        %183 = sbr.rel (%p181) target = $region32
      $region31: #{_lambda_.5} parent=27 // pred_region
        %p184 = scmp.lt.s32.totalorder %s12, 1
        %s185 = scalar_select %p184, %s12, 1
        %s186 = smul.addr %s185, 32
        %s187 = smul.addr %s186, 4
        %s188 = scalar_lea.vmem %s0, %s187
      $region32: #{_lambda_.5} parent=27 // pred_fallthru
        _
    $region28: #{_lambda_.5} parent=5 // pred_fallthru
      _
    %p189 = scmp.le.s32.totalorder 1, %s12
    %p190 = scmp.lt.s32.totalorder %s12, 3
    %p191 = pnand %p189, %p190
    %p192 = pneg %p191
    // Predicated region
    $region33: #{_lambda_.5} parent=5 // pred_check
      _
    $region34: #{_lambda_.5} parent=5 // pred_check_branch
      %194 = sbr.rel (%p191) target = $region36
    $region35: #{_lambda_.5} parent=5 // pred_region
      %s195 = ssub.s32 %s12, 1
      %p196 = scmp.lt.s32.totalorder %s17, 1
      %s197 = scalar_select %p196, %s17, 1
      %s198 = smul.addr %s197, 32
      %s199 = smul.addr %s198, 4
      %s200 = scalar_lea.vmem %s0, %s199
      %p201 = pneg %p38
      %p202 = pneg %p35
      %p203 = pneg %p59
      %p204 = pneg %p56
      %p205 = pneg %p80
      %p206 = pneg %p77
      %p207 = pneg %p101
      %p208 = pneg %p98
      %p209 = pneg %p127
      %p210 = pneg %p124
      %p211 = scmp.lt.s32.totalorder %s17, 1
      %s212 = scalar_select %p211, %s17, 1
      %s213 = smul.addr %s212, 32
      %s214 = smul.addr %s213, 4
      %s215 = scalar_lea.vmem %s4, %s214
      %p216 = pneg %p153
      %p217 = pneg %p150
      %p218 = scmp.lt.s32.totalorder %s17, 1
      %s219 = scalar_select %p218, %s17, 1
      %s220 = smul.addr %s219, 2
      %s221 = scalar_lea.vmem %s5, %s220
      %p222 = scmp.lt.s32.totalorder %s17, 1
      %s223 = scalar_select %p222, %s17, 1
      %s224 = smul.addr %s223, 32
      %s225 = smul.addr %s224, 4
      %s226 = scalar_lea.vmem %s0, %s225
      %p227 = scmp.lt.s32.totalorder %s17, 1
      %s228 = scalar_select %p227, %s17, 1
      %s229 = smul.addr %s228, 32
      %s230 = smul.addr %s229, 4
      %s231 = scalar_lea.vmem %s4, %s230
      %p232 = scmp.lt.s32.totalorder %s17, 1
      %s233 = scalar_select %p232, %s17, 1
      %s234 = smul.addr %s233, 2
      %s235 = scalar_lea.vmem %s5, %s234
      %v237 = vld [vmem:[%s226] sm:$0xf]
      %v238 = vld [vmem:[%s226 + $0x4] sm:$0xf]
      %v239 = vld [vmem:[%s226 + $0x8] sm:$0xf]
      %v240 = vld [vmem:[%s226 + $0xc] sm:$0xf]
      %v241 = vld [vmem:[%s226 + $0x10] sm:$0xf]
      %v242 = vld [vmem:[%s226 + $0x14] sm:$0xf]
      %v243 = vld [vmem:[%s226 + $0x18] sm:$0xf]
      %v244 = vld [vmem:[%s226 + $0x1c] sm:$0xf]
      %v245 = vld [vmem:[%s226 + $0x20] sm:$0xf]
      %v246 = vld [vmem:[%s226 + $0x24] sm:$0xf]
      %v247 = vld [vmem:[%s226 + $0x28] sm:$0xf]
      %v248 = vld [vmem:[%s226 + $0x2c] sm:$0xf]
      %v249 = vld [vmem:[%s226 + $0x30] sm:$0xf]
      %v250 = vld [vmem:[%s226 + $0x34] sm:$0xf]
      %v251 = vld [vmem:[%s226 + $0x38] sm:$0xf]
      %v252 = vld [vmem:[%s226 + $0x3c] sm:$0xf]
      %v253 = vld [vmem:[%s226 + $0x40] sm:$0xf]
      %v254 = vld [vmem:[%s226 + $0x44] sm:$0xf]
      %v255 = vld [vmem:[%s226 + $0x48] sm:$0xf]
      %v256 = vld [vmem:[%s226 + $0x4c] sm:$0xf]
      %v257 = vld [vmem:[%s226 + $0x50] sm:$0xf]
      %v258 = vld [vmem:[%s226 + $0x54] sm:$0xf]
      %v259 = vld [vmem:[%s226 + $0x58] sm:$0xf]
      %v260 = vld [vmem:[%s226 + $0x5c] sm:$0xf]
      %v261 = vld [vmem:[%s226 + $0x60] sm:$0xf]
      %v262 = vld [vmem:[%s226 + $0x64] sm:$0xf]
      %v263 = vld [vmem:[%s226 + $0x68] sm:$0xf]
      %v264 = vld [vmem:[%s226 + $0x6c] sm:$0xf]
      %v265 = vld [vmem:[%s226 + $0x70] sm:$0xf]
      %v266 = vld [vmem:[%s226 + $0x74] sm:$0xf]
      %v267 = vld [vmem:[%s226 + $0x78] sm:$0xf]
      %v268 = vld [vmem:[%s226 + $0x7c] sm:$0xf]
      %v269 = vunpack.c.l.bf16 %v237
      %v270 = vunpack.c.l.bf16 %v238
      %v271 = vunpack.c.l.bf16 %v239
      %v272 = vunpack.c.l.bf16 %v240
      %v273 = vunpack.c.l.bf16 %v241
      %v274 = vunpack.c.l.bf16 %v242
      %v275 = vunpack.c.l.bf16 %v243
      %v276 = vunpack.c.l.bf16 %v244
      %v277 = vunpack.c.l.bf16 %v245
      %v278 = vunpack.c.l.bf16 %v246
      %v279 = vunpack.c.l.bf16 %v247
      %v280 = vunpack.c.l.bf16 %v248
      %v281 = vunpack.c.l.bf16 %v249
      %v282 = vunpack.c.l.bf16 %v250
      %v283 = vunpack.c.l.bf16 %v251
      %v284 = vunpack.c.l.bf16 %v252
      %v285 = vunpack.c.l.bf16 %v253
      %v286 = vunpack.c.l.bf16 %v254
      %v287 = vunpack.c.l.bf16 %v255
      %v288 = vunpack.c.l.bf16 %v256
      %v289 = vunpack.c.l.bf16 %v257
      %v290 = vunpack.c.l.bf16 %v258
      %v291 = vunpack.c.l.bf16 %v259
      %v292 = vunpack.c.l.bf16 %v260
      %v293 = vunpack.c.l.bf16 %v261
      %v294 = vunpack.c.l.bf16 %v262
      %v295 = vunpack.c.l.bf16 %v263
      %v296 = vunpack.c.l.bf16 %v264
      %v297 = vunpack.c.l.bf16 %v265
      %v298 = vunpack.c.l.bf16 %v266
      %v299 = vunpack.c.l.bf16 %v267
      %v300 = vunpack.c.l.bf16 %v268
      %v301 = vld [vmem:[%s1] sm:$0x1]
      %v303 = vperm.slane %v301, 0
      %v305 = vmul.f32 %v269, %v303
      %v306 = vmul.f32 %v270, %v303
      %v307 = vmul.f32 %v271, %v303
      %v308 = vmul.f32 %v272, %v303
      %v309 = vmul.f32 %v273, %v303
      %v310 = vmul.f32 %v274, %v303
      %v311 = vmul.f32 %v275, %v303
      %v312 = vmul.f32 %v276, %v303
      %v313 = vmul.f32 %v277, %v303
      %v314 = vmul.f32 %v278, %v303
      %v315 = vmul.f32 %v279, %v303
      %v316 = vmul.f32 %v280, %v303
      %v317 = vmul.f32 %v281, %v303
      %v318 = vmul.f32 %v282, %v303
      %v319 = vmul.f32 %v283, %v303
      %v320 = vmul.f32 %v284, %v303
      %v321 = vmul.f32 %v285, %v303
      %v322 = vmul.f32 %v286, %v303
      %v323 = vmul.f32 %v287, %v303
      %v324 = vmul.f32 %v288, %v303
      %v325 = vmul.f32 %v289, %v303
      %v326 = vmul.f32 %v290, %v303
      %v327 = vmul.f32 %v291, %v303
      %v328 = vmul.f32 %v292, %v303
      %v329 = vmul.f32 %v293, %v303
      %v330 = vmul.f32 %v294, %v303
      %v331 = vmul.f32 %v295, %v303
      %v332 = vmul.f32 %v296, %v303
      %v333 = vmul.f32 %v297, %v303
      %v334 = vmul.f32 %v298, %v303
      %v335 = vmul.f32 %v299, %v303
      %v336 = vmul.f32 %v300, %v303
      %v337 = vld [vmem:[%s2] sm:$0x1]
      %v339 = vperm.slane %v337, 0
      %v341 = vadd.f32 %v305, %v339
      %v342 = vadd.f32 %v306, %v339
      %v343 = vadd.f32 %v307, %v339
      %v344 = vadd.f32 %v308, %v339
      %v345 = vadd.f32 %v309, %v339
      %v346 = vadd.f32 %v310, %v339
      %v347 = vadd.f32 %v311, %v339
      %v348 = vadd.f32 %v312, %v339
      %v349 = vadd.f32 %v313, %v339
      %v350 = vadd.f32 %v314, %v339
      %v351 = vadd.f32 %v315, %v339
      %v352 = vadd.f32 %v316, %v339
      %v353 = vadd.f32 %v317, %v339
      %v354 = vadd.f32 %v318, %v339
      %v355 = vadd.f32 %v319, %v339
      %v356 = vadd.f32 %v320, %v339
      %v357 = vadd.f32 %v321, %v339
      %v358 = vadd.f32 %v322, %v339
      %v359 = vadd.f32 %v323, %v339
      %v360 = vadd.f32 %v324, %v339
      %v361 = vadd.f32 %v325, %v339
      %v362 = vadd.f32 %v326, %v339
      %v363 = vadd.f32 %v327, %v339
      %v364 = vadd.f32 %v328, %v339
      %v365 = vadd.f32 %v329, %v339
      %v366 = vadd.f32 %v330, %v339
      %v367 = vadd.f32 %v331, %v339
      %v368 = vadd.f32 %v332, %v339
      %v369 = vadd.f32 %v333, %v339
      %v370 = vadd.f32 %v334, %v339
      %v371 = vadd.f32 %v335, %v339
      %v372 = vadd.f32 %v336, %v339
      %v373 = vmax.f32 %v341, 0.0
      %v374 = vmax.f32 %v342, 0.0
      %v375 = vmax.f32 %v343, 0.0
      %v376 = vmax.f32 %v344, 0.0
      %v377 = vmax.f32 %v345, 0.0
      %v378 = vmax.f32 %v346, 0.0
      %v379 = vmax.f32 %v347, 0.0
      %v380 = vmax.f32 %v348, 0.0
      %v381 = vmax.f32 %v349, 0.0
      %v382 = vmax.f32 %v350, 0.0
      %v383 = vmax.f32 %v351, 0.0
      %v384 = vmax.f32 %v352, 0.0
      %v385 = vmax.f32 %v353, 0.0
      %v386 = vmax.f32 %v354, 0.0
      %v387 = vmax.f32 %v355, 0.0
      %v388 = vmax.f32 %v356, 0.0
      %v389 = vmax.f32 %v357, 0.0
      %v390 = vmax.f32 %v358, 0.0
      %v391 = vmax.f32 %v359, 0.0
      %v392 = vmax.f32 %v360, 0.0
      %v393 = vmax.f32 %v361, 0.0
      %v394 = vmax.f32 %v362, 0.0
      %v395 = vmax.f32 %v363, 0.0
      %v396 = vmax.f32 %v364, 0.0
      %v397 = vmax.f32 %v365, 0.0
      %v398 = vmax.f32 %v366, 0.0
      %v399 = vmax.f32 %v367, 0.0
      %v400 = vmax.f32 %v368, 0.0
      %v401 = vmax.f32 %v369, 0.0
      %v402 = vmax.f32 %v370, 0.0
      %v403 = vmax.f32 %v371, 0.0
      %v404 = vmax.f32 %v372, 0.0
      %vm405 = vcmask 27648
      %406 = vst.msk [vmem:[#allocation2] sm:$0xf] %vm405, 0
      %407 = vst.msk [vmem:[#allocation2 + $0x4] sm:$0xf] %vm405, 0
      %vm408 = vcmask 24576
      %409 = vst.msk [vmem:[#allocation2 + $0x8] sm:$0x1] %vm408, 0
      %410 = vst.msk [vmem:[#allocation2 + $0xc] sm:$0xf] %vm405, 0
      %411 = vst.msk [vmem:[#allocation2 + $0x10] sm:$0xf] %vm405, 0
      %412 = vst.msk [vmem:[#allocation2 + $0x14] sm:$0x1] %vm408, 0
      %413 = vst.msk [vmem:[#allocation2 + $0x18] sm:$0xf] %vm405, 0
      %414 = vst.msk [vmem:[#allocation2 + $0x1c] sm:$0xf] %vm405, 0
      %415 = vst.msk [vmem:[#allocation2 + $0x20] sm:$0x1] %vm408, 0
      %416 = vst.msk [vmem:[#allocation2 + $0x24] sm:$0xf] %vm405, 0
      %417 = vst.msk [vmem:[#allocation2 + $0x28] sm:$0xf] %vm405, 0
      %418 = vst.msk [vmem:[#allocation2 + $0x2c] sm:$0x1] %vm408, 0
      %419 = vst.msk [vmem:[#allocation2 + $0x30] sm:$0xf] %vm405, 0
      %420 = vst.msk [vmem:[#allocation2 + $0x34] sm:$0xf] %vm405, 0
      %421 = vst.msk [vmem:[#allocation2 + $0x38] sm:$0x1] %vm408, 0
      %422 = vst.msk [vmem:[#allocation2 + $0x3c] sm:$0xf] %vm405, 0
      %423 = vst.msk [vmem:[#allocation2 + $0x40] sm:$0xf] %vm405, 0
      %424 = vst.msk [vmem:[#allocation2 + $0x44] sm:$0x1] %vm408, 0
      %425 = vst.msk [vmem:[#allocation2 + $0x48] sm:$0xf] %vm405, 0
      %426 = vst.msk [vmem:[#allocation2 + $0x4c] sm:$0xf] %vm405, 0
      %427 = vst.msk [vmem:[#allocation2 + $0x50] sm:$0x1] %vm408, 0
      %428 = vst.msk [vmem:[#allocation2 + $0x54] sm:$0xf] %vm405, 0
      %429 = vst.msk [vmem:[#allocation2 + $0x58] sm:$0xf] %vm405, 0
      %430 = vst.msk [vmem:[#allocation2 + $0x5c] sm:$0x1] %vm408, 0
      %431 = vst.msk [vmem:[#allocation2 + $0x60] sm:$0xf] %vm405, 0
      %432 = vst.msk [vmem:[#allocation2 + $0x64] sm:$0xf] %vm405, 0
      %433 = vst.msk [vmem:[#allocation2 + $0x68] sm:$0x1] %vm408, 0
      %434 = vst.msk [vmem:[#allocation2 + $0x6c] sm:$0xf] %vm405, 0
      %435 = vst.msk [vmem:[#allocation2 + $0x70] sm:$0xf] %vm405, 0
      %436 = vst.msk [vmem:[#allocation2 + $0x74] sm:$0x1] %vm408, 0
      %437 = vst.msk [vmem:[#allocation2 + $0x78] sm:$0xf] %vm405, 0
      %438 = vst.msk [vmem:[#allocation2 + $0x7c] sm:$0xf] %vm405, 0
      %439 = vst.msk [vmem:[#allocation2 + $0x80] sm:$0x1] %vm408, 0
      %440 = vst.msk [vmem:[#allocation2 + $0x84] sm:$0xf] %vm405, 0
      %441 = vst.msk [vmem:[#allocation2 + $0x88] sm:$0xf] %vm405, 0
      %442 = vst.msk [vmem:[#allocation2 + $0x8c] sm:$0x1] %vm408, 0
      %443 = vst.msk [vmem:[#allocation2 + $0x90] sm:$0xf] %vm405, 0
      %444 = vst.msk [vmem:[#allocation2 + $0x94] sm:$0xf] %vm405, 0
      %445 = vst.msk [vmem:[#allocation2 + $0x98] sm:$0x1] %vm408, 0
      %446 = vst.msk [vmem:[#allocation2 + $0x9c] sm:$0xf] %vm405, 0
      %447 = vst.msk [vmem:[#allocation2 + $0xa0] sm:$0xf] %vm405, 0
      %448 = vst.msk [vmem:[#allocation2 + $0xa4] sm:$0x1] %vm408, 0
      %449 = vst.msk [vmem:[#allocation2 + $0xa8] sm:$0xf] %vm405, 0
      %450 = vst.msk [vmem:[#allocation2 + $0xac] sm:$0xf] %vm405, 0
      %451 = vst.msk [vmem:[#allocation2 + $0xb0] sm:$0x1] %vm408, 0
      %452 = vst.msk [vmem:[#allocation2 + $0xb4] sm:$0xf] %vm405, 0
      %453 = vst.msk [vmem:[#allocation2 + $0xb8] sm:$0xf] %vm405, 0
      %454 = vst.msk [vmem:[#allocation2 + $0xbc] sm:$0x1] %vm408, 0
      %455 = vst.msk [vmem:[#allocation2 + $0xc0] sm:$0xf] %vm405, 0
      %456 = vst.msk [vmem:[#allocation2 + $0xc4] sm:$0xf] %vm405, 0
      %457 = vst.msk [vmem:[#allocation2 + $0xc8] sm:$0x1] %vm408, 0
      %458 = vst.msk [vmem:[#allocation2 + $0xcc] sm:$0xf] %vm405, 0
      %459 = vst.msk [vmem:[#allocation2 + $0xd0] sm:$0xf] %vm405, 0
      %460 = vst.msk [vmem:[#allocation2 + $0xd4] sm:$0x1] %vm408, 0
      %v461 = vpack.c.bf16 %v373, %v373
      %v462 = vpack.c.bf16 %v374, %v374
      %v463 = vpack.c.bf16 %v375, %v375
      %v464 = vpack.c.bf16 %v376, %v376
      %v465 = vpack.c.bf16 %v377, %v377
      %v466 = vpack.c.bf16 %v378, %v378
      %v467 = vpack.c.bf16 %v379, %v379
      %v468 = vpack.c.bf16 %v380, %v380
      %v469 = vpack.c.bf16 %v381, %v381
      %v470 = vpack.c.bf16 %v382, %v382
      %v471 = vpack.c.bf16 %v383, %v383
      %v472 = vpack.c.bf16 %v384, %v384
      %v473 = vpack.c.bf16 %v385, %v385
      %v474 = vpack.c.bf16 %v386, %v386
      %v475 = vpack.c.bf16 %v387, %v387
      %v476 = vpack.c.bf16 %v388, %v388
      %v477 = vpack.c.bf16 %v389, %v389
      %v478 = vpack.c.bf16 %v390, %v390
      %v479 = vpack.c.bf16 %v391, %v391
      %v480 = vpack.c.bf16 %v392, %v392
      %v481 = vpack.c.bf16 %v393, %v393
      %v482 = vpack.c.bf16 %v394, %v394
      %v483 = vpack.c.bf16 %v395, %v395
      %v484 = vpack.c.bf16 %v396, %v396
      %v485 = vpack.c.bf16 %v397, %v397
      %v486 = vpack.c.bf16 %v398, %v398
      %v487 = vpack.c.bf16 %v399, %v399
      %v488 = vpack.c.bf16 %v400, %v400
      %v489 = vpack.c.bf16 %v401, %v401
      %v490 = vpack.c.bf16 %v402, %v402
      %v491 = vpack.c.bf16 %v403, %v403
      %v492 = vpack.c.bf16 %v404, %v404
      %vm493 = vsmask.f32 256
      %vm494 = vsmask.f32 4368
      %vm495 = vmor %vm493, %vm494
      %v497 = vshrl.u32 %v461, 16
      %v499 = vrot.slane %v497, 7
      %v500 = vshll.u32 %v461, 16
      %v502 = vor.u32 %v499, %v500
      %v503 = vrot.slane %v499, 4
      %v505 = vshrl.u32 %v462, 16
      %v507 = vrot.slane %v505, 7
      %v508 = vshll.u32 %v462, 16
      %v510 = vor.u32 %v507, %v508
      %v511 = vsel %vm495, %v503, %v510
      %v512 = vrot.slane %v507, 4
      %v514 = vshrl.u32 %v463, 16
      %v516 = vrot.slane %v514, 7
      %v517 = vshll.u32 %v463, 16
      %v519 = vor.u32 %v516, %v517
      %v520 = vrot.slane %v516, 4
      %v522 = vshrl.u32 %v464, 16
      %v524 = vrot.slane %v522, 7
      %v525 = vshll.u32 %v464, 16
      %v527 = vor.u32 %v524, %v525
      %v528 = vsel %vm495, %v520, %v527
      %v529 = vrot.slane %v524, 4
      %v531 = vshrl.u32 %v465, 16
      %v533 = vrot.slane %v531, 7
      %v534 = vshll.u32 %v465, 16
      %v536 = vor.u32 %v533, %v534
      %v537 = vrot.slane %v533, 4
      %v539 = vshrl.u32 %v466, 16
      %v541 = vrot.slane %v539, 7
      %v542 = vshll.u32 %v466, 16
      %v544 = vor.u32 %v541, %v542
      %v545 = vsel %vm495, %v537, %v544
      %v546 = vrot.slane %v541, 4
      %v548 = vshrl.u32 %v467, 16
      %v550 = vrot.slane %v548, 7
      %v551 = vshll.u32 %v467, 16
      %v553 = vor.u32 %v550, %v551
      %v554 = vrot.slane %v550, 4
      %v556 = vshrl.u32 %v468, 16
      %v558 = vrot.slane %v556, 7
      %v559 = vshll.u32 %v468, 16
      %v561 = vor.u32 %v558, %v559
      %v562 = vsel %vm495, %v554, %v561
      %v563 = vrot.slane %v558, 4
      %v565 = vshrl.u32 %v469, 16
      %v567 = vrot.slane %v565, 7
      %v568 = vshll.u32 %v469, 16
      %v570 = vor.u32 %v567, %v568
      %v571 = vrot.slane %v567, 4
      %v573 = vshrl.u32 %v470, 16
      %v575 = vrot.slane %v573, 7
      %v576 = vshll.u32 %v470, 16
      %v578 = vor.u32 %v575, %v576
      %v579 = vsel %vm495, %v571, %v578
      %v580 = vrot.slane %v575, 4
      %v582 = vshrl.u32 %v471, 16
      %v584 = vrot.slane %v582, 7
      %v585 = vshll.u32 %v471, 16
      %v587 = vor.u32 %v584, %v585
      %v588 = vrot.slane %v584, 4
      %v590 = vshrl.u32 %v472, 16
      %v592 = vrot.slane %v590, 7
      %v593 = vshll.u32 %v472, 16
      %v595 = vor.u32 %v592, %v593
      %v596 = vsel %vm495, %v588, %v595
      %v597 = vrot.slane %v592, 4
      %v599 = vshrl.u32 %v473, 16
      %v601 = vrot.slane %v599, 7
      %v602 = vshll.u32 %v473, 16
      %v604 = vor.u32 %v601, %v602
      %v605 = vrot.slane %v601, 4
      %v607 = vshrl.u32 %v474, 16
      %v609 = vrot.slane %v607, 7
      %v610 = vshll.u32 %v474, 16
      %v612 = vor.u32 %v609, %v610
      %v613 = vsel %vm495, %v605, %v612
      %v614 = vrot.slane %v609, 4
      %v616 = vshrl.u32 %v475, 16
      %v618 = vrot.slane %v616, 7
      %v619 = vshll.u32 %v475, 16
      %v621 = vor.u32 %v618, %v619
      %v622 = vrot.slane %v618, 4
      %v624 = vshrl.u32 %v476, 16
      %v626 = vrot.slane %v624, 7
      %v627 = vshll.u32 %v476, 16
      %v629 = vor.u32 %v626, %v627
      %v630 = vsel %vm495, %v622, %v629
      %v631 = vrot.slane %v626, 4
      %v633 = vshrl.u32 %v477, 16
      %v635 = vrot.slane %v633, 7
      %v636 = vshll.u32 %v477, 16
      %v638 = vor.u32 %v635, %v636
      %v639 = vrot.slane %v635, 4
      %v641 = vshrl.u32 %v478, 16
      %v643 = vrot.slane %v641, 7
      %v644 = vshll.u32 %v478, 16
      %v646 = vor.u32 %v643, %v644
      %v647 = vsel %vm495, %v639, %v646
      %v648 = vrot.slane %v643, 4
      %v650 = vshrl.u32 %v479, 16
      %v652 = vrot.slane %v650, 7
      %v653 = vshll.u32 %v479, 16
      %v655 = vor.u32 %v652, %v653
      %v656 = vrot.slane %v652, 4
      %v658 = vshrl.u32 %v480, 16
      %v660 = vrot.slane %v658, 7
      %v661 = vshll.u32 %v480, 16
      %v663 = vor.u32 %v660, %v661
      %v664 = vsel %vm495, %v656, %v663
      %v665 = vrot.slane %v660, 4
      %v667 = vshrl.u32 %v481, 16
      %v669 = vrot.slane %v667, 7
      %v670 = vshll.u32 %v481, 16
      %v672 = vor.u32 %v669, %v670
      %v673 = vrot.slane %v669, 4
      %v675 = vshrl.u32 %v482, 16
      %v677 = vrot.slane %v675, 7
      %v678 = vshll.u32 %v482, 16
      %v680 = vor.u32 %v677, %v678
      %v681 = vsel %vm495, %v673, %v680
      %v682 = vrot.slane %v677, 4
      %v684 = vshrl.u32 %v483, 16
      %v686 = vrot.slane %v684, 7
      %v687 = vshll.u32 %v483, 16
      %v689 = vor.u32 %v686, %v687
      %v690 = vrot.slane %v686, 4
      %v692 = vshrl.u32 %v484, 16
      %v694 = vrot.slane %v692, 7
      %v695 = vshll.u32 %v484, 16
      %v697 = vor.u32 %v694, %v695
      %v698 = vsel %vm495, %v690, %v697
      %v699 = vrot.slane %v694, 4
      %v701 = vshrl.u32 %v485, 16
      %v703 = vrot.slane %v701, 7
      %v704 = vshll.u32 %v485, 16
      %v706 = vor.u32 %v703, %v704
      %v707 = vrot.slane %v703, 4
      %v709 = vshrl.u32 %v486, 16
      %v711 = vrot.slane %v709, 7
      %v712 = vshll.u32 %v486, 16
      %v714 = vor.u32 %v711, %v712
      %v715 = vsel %vm495, %v707, %v714
      %v716 = vrot.slane %v711, 4
      %v718 = vshrl.u32 %v487, 16
      %v720 = vrot.slane %v718, 7
      %v721 = vshll.u32 %v487, 16
      %v723 = vor.u32 %v720, %v721
      %v724 = vrot.slane %v720, 4
      %v726 = vshrl.u32 %v488, 16
      %v728 = vrot.slane %v726, 7
      %v729 = vshll.u32 %v488, 16
      %v731 = vor.u32 %v728, %v729
      %v732 = vsel %vm495, %v724, %v731
      %v733 = vrot.slane %v728, 4
      %v735 = vshrl.u32 %v489, 16
      %v737 = vrot.slane %v735, 7
      %v738 = vshll.u32 %v489, 16
      %v740 = vor.u32 %v737, %v738
      %v741 = vrot.slane %v737, 4
      %v743 = vshrl.u32 %v490, 16
      %v745 = vrot.slane %v743, 7
      %v746 = vshll.u32 %v490, 16
      %v748 = vor.u32 %v745, %v746
      %v749 = vsel %vm495, %v741, %v748
      %v750 = vrot.slane %v745, 4
      %v752 = vshrl.u32 %v491, 16
      %v754 = vrot.slane %v752, 7
      %v755 = vshll.u32 %v491, 16
      %v757 = vor.u32 %v754, %v755
      %v758 = vrot.slane %v754, 4
      %v760 = vshrl.u32 %v492, 16
      %v762 = vrot.slane %v760, 7
      %v763 = vshll.u32 %v492, 16
      %v765 = vor.u32 %v762, %v763
      %v766 = vsel %vm495, %v758, %v765
      %v767 = vrot.slane %v762, 4
      %s816 = scalar_lea.vmem [#allocation2], 12
      %vm817 = vcmask 27648
      %vm818 = vsmask.f32 7938
      %vm819 = vmand %vm817, %vm818
      %v820 = vld [vmem:[%s816] sm:$0xf]
      %v821 = vsel %vm819, %v502, %v820
      %822 = vst [vmem:[%s816] sm:$0xf] %v821
      %823 = vst.msk [vmem:[%s816 + $0x4] sm:$0xf] %vm405, %v511
      %vm824 = vcmask 24576
      %vm825 = vmand %vm824, %vm493
      %v826 = vld [vmem:[%s816 + $0x8] sm:$0x1]
      %v827 = vsel %vm825, %v512, %v826
      %828 = vst [vmem:[%s816 + $0x8] sm:$0x1] %v827
      %v829 = vld [vmem:[%s816 + $0xc] sm:$0xf]
      %v830 = vsel %vm819, %v519, %v829
      %831 = vst [vmem:[%s816 + $0xc] sm:$0xf] %v830
      %832 = vst.msk [vmem:[%s816 + $0x10] sm:$0xf] %vm405, %v528
      %v833 = vld [vmem:[%s816 + $0x14] sm:$0x1]
      %v834 = vsel %vm825, %v529, %v833
      %835 = vst [vmem:[%s816 + $0x14] sm:$0x1] %v834
      %v836 = vld [vmem:[%s816 + $0x18] sm:$0xf]
      %v837 = vsel %vm819, %v536, %v836
      %838 = vst [vmem:[%s816 + $0x18] sm:$0xf] %v837
      %839 = vst.msk [vmem:[%s816 + $0x1c] sm:$0xf] %vm405, %v545
      %v840 = vld [vmem:[%s816 + $0x20] sm:$0x1]
      %v841 = vsel %vm825, %v546, %v840
      %842 = vst [vmem:[%s816 + $0x20] sm:$0x1] %v841
      %v843 = vld [vmem:[%s816 + $0x24] sm:$0xf]
      %v844 = vsel %vm819, %v553, %v843
      %845 = vst [vmem:[%s816 + $0x24] sm:$0xf] %v844
      %846 = vst.msk [vmem:[%s816 + $0x28] sm:$0xf] %vm405, %v562
      %v847 = vld [vmem:[%s816 + $0x2c] sm:$0x1]
      %v848 = vsel %vm825, %v563, %v847
      %849 = vst [vmem:[%s816 + $0x2c] sm:$0x1] %v848
      %v850 = vld [vmem:[%s816 + $0x30] sm:$0xf]
      %v851 = vsel %vm819, %v570, %v850
      %852 = vst [vmem:[%s816 + $0x30] sm:$0xf] %v851
      %853 = vst.msk [vmem:[%s816 + $0x34] sm:$0xf] %vm405, %v579
      %v854 = vld [vmem:[%s816 + $0x38] sm:$0x1]
      %v855 = vsel %vm825, %v580, %v854
      %856 = vst [vmem:[%s816 + $0x38] sm:$0x1] %v855
      %v857 = vld [vmem:[%s816 + $0x3c] sm:$0xf]
      %v858 = vsel %vm819, %v587, %v857
      %859 = vst [vmem:[%s816 + $0x3c] sm:$0xf] %v858
      %860 = vst.msk [vmem:[%s816 + $0x40] sm:$0xf] %vm405, %v596
      %v861 = vld [vmem:[%s816 + $0x44] sm:$0x1]
      %v862 = vsel %vm825, %v597, %v861
      %863 = vst [vmem:[%s816 + $0x44] sm:$0x1] %v862
      %v864 = vld [vmem:[%s816 + $0x48] sm:$0xf]
      %v865 = vsel %vm819, %v604, %v864
      %866 = vst [vmem:[%s816 + $0x48] sm:$0xf] %v865
      %867 = vst.msk [vmem:[%s816 + $0x4c] sm:$0xf] %vm405, %v613
      %v868 = vld [vmem:[%s816 + $0x50] sm:$0x1]
      %v869 = vsel %vm825, %v614, %v868
      %870 = vst [vmem:[%s816 + $0x50] sm:$0x1] %v869
      %v871 = vld [vmem:[%s816 + $0x54] sm:$0xf]
      %v872 = vsel %vm819, %v621, %v871
      %873 = vst [vmem:[%s816 + $0x54] sm:$0xf] %v872
      %874 = vst.msk [vmem:[%s816 + $0x58] sm:$0xf] %vm405, %v630
      %v875 = vld [vmem:[%s816 + $0x5c] sm:$0x1]
      %v876 = vsel %vm825, %v631, %v875
      %877 = vst [vmem:[%s816 + $0x5c] sm:$0x1] %v876
      %v878 = vld [vmem:[%s816 + $0x60] sm:$0xf]
      %v879 = vsel %vm819, %v638, %v878
      %880 = vst [vmem:[%s816 + $0x60] sm:$0xf] %v879
      %881 = vst.msk [vmem:[%s816 + $0x64] sm:$0xf] %vm405, %v647
      %v882 = vld [vmem:[%s816 + $0x68] sm:$0x1]
      %v883 = vsel %vm825, %v648, %v882
      %884 = vst [vmem:[%s816 + $0x68] sm:$0x1] %v883
      %v885 = vld [vmem:[%s816 + $0x6c] sm:$0xf]
      %v886 = vsel %vm819, %v655, %v885
      %887 = vst [vmem:[%s816 + $0x6c] sm:$0xf] %v886
      %888 = vst.msk [vmem:[%s816 + $0x70] sm:$0xf] %vm405, %v664
      %v889 = vld [vmem:[%s816 + $0x74] sm:$0x1]
      %v890 = vsel %vm825, %v665, %v889
      %891 = vst [vmem:[%s816 + $0x74] sm:$0x1] %v890
      %v892 = vld [vmem:[%s816 + $0x78] sm:$0xf]
      %v893 = vsel %vm819, %v672, %v892
      %894 = vst [vmem:[%s816 + $0x78] sm:$0xf] %v893
      %895 = vst.msk [vmem:[%s816 + $0x7c] sm:$0xf] %vm405, %v681
      %v896 = vld [vmem:[%s816 + $0x80] sm:$0x1]
      %v897 = vsel %vm825, %v682, %v896
      %898 = vst [vmem:[%s816 + $0x80] sm:$0x1] %v897
      %v899 = vld [vmem:[%s816 + $0x84] sm:$0xf]
      %v900 = vsel %vm819, %v689, %v899
      %901 = vst [vmem:[%s816 + $0x84] sm:$0xf] %v900
      %902 = vst.msk [vmem:[%s816 + $0x88] sm:$0xf] %vm405, %v698
      %v903 = vld [vmem:[%s816 + $0x8c] sm:$0x1]
      %v904 = vsel %vm825, %v699, %v903
      %905 = vst [vmem:[%s816 + $0x8c] sm:$0x1] %v904
      %v906 = vld [vmem:[%s816 + $0x90] sm:$0xf]
      %v907 = vsel %vm819, %v706, %v906
      %908 = vst [vmem:[%s816 + $0x90] sm:$0xf] %v907
      %909 = vst.msk [vmem:[%s816 + $0x94] sm:$0xf] %vm405, %v715
      %v910 = vld [vmem:[%s816 + $0x98] sm:$0x1]
      %v911 = vsel %vm825, %v716, %v910
      %912 = vst [vmem:[%s816 + $0x98] sm:$0x1] %v911
      %v913 = vld [vmem:[%s816 + $0x9c] sm:$0xf]
      %v914 = vsel %vm819, %v723, %v913
      %915 = vst [vmem:[%s816 + $0x9c] sm:$0xf] %v914
      %916 = vst.msk [vmem:[%s816 + $0xa0] sm:$0xf] %vm405, %v732
      %v917 = vld [vmem:[%s816 + $0xa4] sm:$0x1]
      %v918 = vsel %vm825, %v733, %v917
      %919 = vst [vmem:[%s816 + $0xa4] sm:$0x1] %v918
      %v920 = vld [vmem:[%s816 + $0xa8] sm:$0xf]
      %v921 = vsel %vm819, %v740, %v920
      %922 = vst [vmem:[%s816 + $0xa8] sm:$0xf] %v921
      %923 = vst.msk [vmem:[%s816 + $0xac] sm:$0xf] %vm405, %v749
      %v924 = vld [vmem:[%s816 + $0xb0] sm:$0x1]
      %v925 = vsel %vm825, %v750, %v924
      %926 = vst [vmem:[%s816 + $0xb0] sm:$0x1] %v925
      %v927 = vld [vmem:[%s816 + $0xb4] sm:$0xf]
      %v928 = vsel %vm819, %v757, %v927
      %929 = vst [vmem:[%s816 + $0xb4] sm:$0xf] %v928
      %930 = vst.msk [vmem:[%s816 + $0xb8] sm:$0xf] %vm405, %v766
      %v931 = vld [vmem:[%s816 + $0xbc] sm:$0x1]
      %v932 = vsel %vm825, %v767, %v931
      %933 = vst [vmem:[%s816 + $0xbc] sm:$0x1] %v932
      %v934 = vld [vmem:[#allocation2] sm:$0xf]
      %v935 = vld [vmem:[#allocation2 + $0x4] sm:$0xf]
      %v936 = vld [vmem:[#allocation2 + $0x8] sm:$0x1]
      %v937 = vld [vmem:[#allocation2 + $0xc] sm:$0xf]
      %v938 = vld [vmem:[#allocation2 + $0x10] sm:$0xf]
      %v939 = vld [vmem:[#allocation2 + $0x14] sm:$0x1]
      %v940 = vld [vmem:[#allocation2 + $0x18] sm:$0xf]
      %v941 = vld [vmem:[#allocation2 + $0x1c] sm:$0xf]
      %v942 = vld [vmem:[#allocation2 + $0x20] sm:$0x1]
      %v943 = vld [vmem:[#allocation2 + $0x24] sm:$0xf]
      %v944 = vld [vmem:[#allocation2 + $0x28] sm:$0xf]
      %v945 = vld [vmem:[#allocation2 + $0x2c] sm:$0x1]
      %v946 = vld [vmem:[#allocation2 + $0x30] sm:$0xf]
      %v947 = vld [vmem:[#allocation2 + $0x34] sm:$0xf]
      %v948 = vld [vmem:[#allocation2 + $0x38] sm:$0x1]
      %v949 = vld [vmem:[#allocation2 + $0x3c] sm:$0xf]
      %v950 = vld [vmem:[#allocation2 + $0x40] sm:$0xf]
      %v951 = vld [vmem:[#allocation2 + $0x44] sm:$0x1]
      %v952 = vld [vmem:[#allocation2 + $0x48] sm:$0xf]
      %v953 = vld [vmem:[#allocation2 + $0x4c] sm:$0xf]
      %v954 = vld [vmem:[#allocation2 + $0x50] sm:$0x1]
      %v955 = vld [vmem:[#allocation2 + $0x54] sm:$0xf]
      %v956 = vld [vmem:[#allocation2 + $0x58] sm:$0xf]
      %v957 = vld [vmem:[#allocation2 + $0x5c] sm:$0x1]
      %v958 = vld [vmem:[#allocation2 + $0x60] sm:$0xf]
      %v959 = vld [vmem:[#allocation2 + $0x64] sm:$0xf]
      %v960 = vld [vmem:[#allocation2 + $0x68] sm:$0x1]
      %v961 = vld [vmem:[#allocation2 + $0x6c] sm:$0xf]
      %v962 = vld [vmem:[#allocation2 + $0x70] sm:$0xf]
      %v963 = vld [vmem:[#allocation2 + $0x74] sm:$0x1]
      %v964 = vld [vmem:[#allocation2 + $0x78] sm:$0xf]
      %v965 = vld [vmem:[#allocation2 + $0x7c] sm:$0xf]
      %v966 = vld [vmem:[#allocation2 + $0x80] sm:$0x1]
      %v967 = vld [vmem:[#allocation2 + $0x84] sm:$0xf]
      %v968 = vld [vmem:[#allocation2 + $0x88] sm:$0xf]
      %v969 = vld [vmem:[#allocation2 + $0x8c] sm:$0x1]
      %v970 = vld [vmem:[#allocation2 + $0x90] sm:$0xf]
      %v971 = vld [vmem:[#allocation2 + $0x94] sm:$0xf]
      %v972 = vld [vmem:[#allocation2 + $0x98] sm:$0x1]
      %v973 = vld [vmem:[#allocation2 + $0x9c] sm:$0xf]
      %v974 = vld [vmem:[#allocation2 + $0xa0] sm:$0xf]
      %v975 = vld [vmem:[#allocation2 + $0xa4] sm:$0x1]
      %v976 = vld [vmem:[#allocation2 + $0xa8] sm:$0xf]
      %v977 = vld [vmem:[#allocation2 + $0xac] sm:$0xf]
      %v978 = vld [vmem:[#allocation2 + $0xb0] sm:$0x1]
      %v979 = vld [vmem:[#allocation2 + $0xb4] sm:$0xf]
      %v980 = vld [vmem:[#allocation2 + $0xb8] sm:$0xf]
      %v981 = vld [vmem:[#allocation2 + $0xbc] sm:$0x1]
      %v982 = vld [vmem:[#allocation2 + $0xc0] sm:$0xf]
      %v983 = vld [vmem:[#allocation2 + $0xc4] sm:$0xf]
      %v984 = vld [vmem:[#allocation2 + $0xc8] sm:$0x1]
      %v985 = vld [vmem:[#allocation2 + $0xcc] sm:$0xf]
      %v986 = vld [vmem:[#allocation2 + $0xd0] sm:$0xf]
      %v987 = vld [vmem:[#allocation2 + $0xd4] sm:$0x1]
      %988 = vst.msk [vmem:[#allocation3] sm:$0xf] %vm405, %v934
      %989 = vst.msk [vmem:[#allocation3 + $0x4] sm:$0xf] %vm405, %v935
      %990 = vst.msk [vmem:[#allocation3 + $0x8] sm:$0xf] %vm405, %v937
      %991 = vst.msk [vmem:[#allocation3 + $0xc] sm:$0xf] %vm405, %v938
      %992 = vst.msk [vmem:[#allocation3 + $0x10] sm:$0xf] %vm405, %v940
      %993 = vst.msk [vmem:[#allocation3 + $0x14] sm:$0xf] %vm405, %v941
      %994 = vst.msk [vmem:[#allocation3 + $0x18] sm:$0xf] %vm405, %v943
      %995 = vst.msk [vmem:[#allocation3 + $0x1c] sm:$0xf] %vm405, %v944
      %996 = vst.msk [vmem:[#allocation3 + $0x20] sm:$0xf] %vm405, %v946
      %997 = vst.msk [vmem:[#allocation3 + $0x24] sm:$0xf] %vm405, %v947
      %998 = vst.msk [vmem:[#allocation3 + $0x28] sm:$0xf] %vm405, %v949
      %999 = vst.msk [vmem:[#allocation3 + $0x2c] sm:$0xf] %vm405, %v950
      %1000 = vst.msk [vmem:[#allocation3 + $0x30] sm:$0xf] %vm405, %v952
      %1001 = vst.msk [vmem:[#allocation3 + $0x34] sm:$0xf] %vm405, %v953
      %1002 = vst.msk [vmem:[#allocation3 + $0x38] sm:$0xf] %vm405, %v955
      %1003 = vst.msk [vmem:[#allocation3 + $0x3c] sm:$0xf] %vm405, %v956
      %1004 = vst.msk [vmem:[#allocation3 + $0x40] sm:$0xf] %vm405, %v958
      %1005 = vst.msk [vmem:[#allocation3 + $0x44] sm:$0xf] %vm405, %v959
      %1006 = vst.msk [vmem:[#allocation3 + $0x48] sm:$0xf] %vm405, %v961
      %1007 = vst.msk [vmem:[#allocation3 + $0x4c] sm:$0xf] %vm405, %v962
      %1008 = vst.msk [vmem:[#allocation3 + $0x50] sm:$0xf] %vm405, %v964
      %1009 = vst.msk [vmem:[#allocation3 + $0x54] sm:$0xf] %vm405, %v965
      %1010 = vst.msk [vmem:[#allocation3 + $0x58] sm:$0xf] %vm405, %v967
      %1011 = vst.msk [vmem:[#allocation3 + $0x5c] sm:$0xf] %vm405, %v968
      %1012 = vst.msk [vmem:[#allocation3 + $0x60] sm:$0xf] %vm405, %v970
      %1013 = vst.msk [vmem:[#allocation3 + $0x64] sm:$0xf] %vm405, %v971
      %1014 = vst.msk [vmem:[#allocation3 + $0x68] sm:$0xf] %vm405, %v973
      %1015 = vst.msk [vmem:[#allocation3 + $0x6c] sm:$0xf] %vm405, %v974
      %1016 = vst.msk [vmem:[#allocation3 + $0x70] sm:$0xf] %vm405, %v976
      %1017 = vst.msk [vmem:[#allocation3 + $0x74] sm:$0xf] %vm405, %v977
      %1018 = vst.msk [vmem:[#allocation3 + $0x78] sm:$0xf] %vm405, %v979
      %1019 = vst.msk [vmem:[#allocation3 + $0x7c] sm:$0xf] %vm405, %v980
      %vm1020 = vsmask.f32 3328
      %vm1021 = vsmask.f32 7440
      %vm1022 = vmor %vm1020, %vm1021
      %v1024 = vshrl.u32 %v934, 16
      %v1026 = vrot.slane %v1024, 4
      %v1027 = vshll.u32 %v934, 16
      %v1029 = vrot.slane %v1027, 5
      %v1030 = vor.u32 %v1026, %v1029
      %v1031 = vrot.slane %v1030, 4
      %v1033 = vshll.u32 %v935, 16
      %v1035 = vrot.slane %v1033, 5
      %v1036 = vsel %vm1022, %v1031, %v1035
      %v1037 = vshrl.u32 %v935, 16
      %v1039 = vrot.slane %v1037, 4
      %v1040 = vor.u32 %v1039, %v1035
      %v1041 = vrot.slane %v1040, 4
      %v1043 = vshll.u32 %v936, 16
      %v1045 = vrot.slane %v1043, 5
      %v1046 = vsel %vm1022, %v1041, %v1045
      %v1048 = vshrl.u32 %v937, 16
      %v1050 = vrot.slane %v1048, 4
      %v1051 = vshll.u32 %v937, 16
      %v1053 = vrot.slane %v1051, 5
      %v1054 = vor.u32 %v1050, %v1053
      %v1055 = vrot.slane %v1054, 4
      %v1057 = vshll.u32 %v938, 16
      %v1059 = vrot.slane %v1057, 5
      %v1060 = vsel %vm1022, %v1055, %v1059
      %v1061 = vshrl.u32 %v938, 16
      %v1063 = vrot.slane %v1061, 4
      %v1064 = vor.u32 %v1063, %v1059
      %v1065 = vrot.slane %v1064, 4
      %v1067 = vshll.u32 %v939, 16
      %v1069 = vrot.slane %v1067, 5
      %v1070 = vsel %vm1022, %v1065, %v1069
      %v1072 = vshrl.u32 %v940, 16
      %v1074 = vrot.slane %v1072, 4
      %v1075 = vshll.u32 %v940, 16
      %v1077 = vrot.slane %v1075, 5
      %v1078 = vor.u32 %v1074, %v1077
      %v1079 = vrot.slane %v1078, 4
      %v1081 = vshll.u32 %v941, 16
      %v1083 = vrot.slane %v1081, 5
      %v1084 = vsel %vm1022, %v1079, %v1083
      %v1085 = vshrl.u32 %v941, 16
      %v1087 = vrot.slane %v1085, 4
      %v1088 = vor.u32 %v1087, %v1083
      %v1089 = vrot.slane %v1088, 4
      %v1091 = vshll.u32 %v942, 16
      %v1093 = vrot.slane %v1091, 5
      %v1094 = vsel %vm1022, %v1089, %v1093
      %v1096 = vshrl.u32 %v943, 16
      %v1098 = vrot.slane %v1096, 4
      %v1099 = vshll.u32 %v943, 16
      %v1101 = vrot.slane %v1099, 5
      %v1102 = vor.u32 %v1098, %v1101
      %v1103 = vrot.slane %v1102, 4
      %v1105 = vshll.u32 %v944, 16
      %v1107 = vrot.slane %v1105, 5
      %v1108 = vsel %vm1022, %v1103, %v1107
      %v1109 = vshrl.u32 %v944, 16
      %v1111 = vrot.slane %v1109, 4
      %v1112 = vor.u32 %v1111, %v1107
      %v1113 = vrot.slane %v1112, 4
      %v1115 = vshll.u32 %v945, 16
      %v1117 = vrot.slane %v1115, 5
      %v1118 = vsel %vm1022, %v1113, %v1117
      %v1120 = vshrl.u32 %v946, 16
      %v1122 = vrot.slane %v1120, 4
      %v1123 = vshll.u32 %v946, 16
      %v1125 = vrot.slane %v1123, 5
      %v1126 = vor.u32 %v1122, %v1125
      %v1127 = vrot.slane %v1126, 4
      %v1129 = vshll.u32 %v947, 16
      %v1131 = vrot.slane %v1129, 5
      %v1132 = vsel %vm1022, %v1127, %v1131
      %v1133 = vshrl.u32 %v947, 16
      %v1135 = vrot.slane %v1133, 4
      %v1136 = vor.u32 %v1135, %v1131
      %v1137 = vrot.slane %v1136, 4
      %v1139 = vshll.u32 %v948, 16
      %v1141 = vrot.slane %v1139, 5
      %v1142 = vsel %vm1022, %v1137, %v1141
      %v1144 = vshrl.u32 %v949, 16
      %v1146 = vrot.slane %v1144, 4
      %v1147 = vshll.u32 %v949, 16
      %v1149 = vrot.slane %v1147, 5
      %v1150 = vor.u32 %v1146, %v1149
      %v1151 = vrot.slane %v1150, 4
      %v1153 = vshll.u32 %v950, 16
      %v1155 = vrot.slane %v1153, 5
      %v1156 = vsel %vm1022, %v1151, %v1155
      %v1157 = vshrl.u32 %v950, 16
      %v1159 = vrot.slane %v1157, 4
      %v1160 = vor.u32 %v1159, %v1155
      %v1161 = vrot.slane %v1160, 4
      %v1163 = vshll.u32 %v951, 16
      %v1165 = vrot.slane %v1163, 5
      %v1166 = vsel %vm1022, %v1161, %v1165
      %v1168 = vshrl.u32 %v952, 16
      %v1170 = vrot.slane %v1168, 4
      %v1171 = vshll.u32 %v952, 16
      %v1173 = vrot.slane %v1171, 5
      %v1174 = vor.u32 %v1170, %v1173
      %v1175 = vrot.slane %v1174, 4
      %v1177 = vshll.u32 %v953, 16
      %v1179 = vrot.slane %v1177, 5
      %v1180 = vsel %vm1022, %v1175, %v1179
      %v1181 = vshrl.u32 %v953, 16
      %v1183 = vrot.slane %v1181, 4
      %v1184 = vor.u32 %v1183, %v1179
      %v1185 = vrot.slane %v1184, 4
      %v1187 = vshll.u32 %v954, 16
      %v1189 = vrot.slane %v1187, 5
      %v1190 = vsel %vm1022, %v1185, %v1189
      %v1192 = vshrl.u32 %v955, 16
      %v1194 = vrot.slane %v1192, 4
      %v1195 = vshll.u32 %v955, 16
      %v1197 = vrot.slane %v1195, 5
      %v1198 = vor.u32 %v1194, %v1197
      %v1199 = vrot.slane %v1198, 4
      %v1201 = vshll.u32 %v956, 16
      %v1203 = vrot.slane %v1201, 5
      %v1204 = vsel %vm1022, %v1199, %v1203
      %v1205 = vshrl.u32 %v956, 16
      %v1207 = vrot.slane %v1205, 4
      %v1208 = vor.u32 %v1207, %v1203
      %v1209 = vrot.slane %v1208, 4
      %v1211 = vshll.u32 %v957, 16
      %v1213 = vrot.slane %v1211, 5
      %v1214 = vsel %vm1022, %v1209, %v1213
      %v1216 = vshrl.u32 %v958, 16
      %v1218 = vrot.slane %v1216, 4
      %v1219 = vshll.u32 %v958, 16
      %v1221 = vrot.slane %v1219, 5
      %v1222 = vor.u32 %v1218, %v1221
      %v1223 = vrot.slane %v1222, 4
      %v1225 = vshll.u32 %v959, 16
      %v1227 = vrot.slane %v1225, 5
      %v1228 = vsel %vm1022, %v1223, %v1227
      %v1229 = vshrl.u32 %v959, 16
      %v1231 = vrot.slane %v1229, 4
      %v1232 = vor.u32 %v1231, %v1227
      %v1233 = vrot.slane %v1232, 4
      %v1235 = vshll.u32 %v960, 16
      %v1237 = vrot.slane %v1235, 5
      %v1238 = vsel %vm1022, %v1233, %v1237
      %v1240 = vshrl.u32 %v961, 16
      %v1242 = vrot.slane %v1240, 4
      %v1243 = vshll.u32 %v961, 16
      %v1245 = vrot.slane %v1243, 5
      %v1246 = vor.u32 %v1242, %v1245
      %v1247 = vrot.slane %v1246, 4
      %v1249 = vshll.u32 %v962, 16
      %v1251 = vrot.slane %v1249, 5
      %v1252 = vsel %vm1022, %v1247, %v1251
      %v1253 = vshrl.u32 %v962, 16
      %v1255 = vrot.slane %v1253, 4
      %v1256 = vor.u32 %v1255, %v1251
      %v1257 = vrot.slane %v1256, 4
      %v1259 = vshll.u32 %v963, 16
      %v1261 = vrot.slane %v1259, 5
      %v1262 = vsel %vm1022, %v1257, %v1261
      %v1264 = vshrl.u32 %v964, 16
      %v1266 = vrot.slane %v1264, 4
      %v1267 = vshll.u32 %v964, 16
      %v1269 = vrot.slane %v1267, 5
      %v1270 = vor.u32 %v1266, %v1269
      %v1271 = vrot.slane %v1270, 4
      %v1273 = vshll.u32 %v965, 16
      %v1275 = vrot.slane %v1273, 5
      %v1276 = vsel %vm1022, %v1271, %v1275
      %v1277 = vshrl.u32 %v965, 16
      %v1279 = vrot.slane %v1277, 4
      %v1280 = vor.u32 %v1279, %v1275
      %v1281 = vrot.slane %v1280, 4
      %v1283 = vshll.u32 %v966, 16
      %v1285 = vrot.slane %v1283, 5
      %v1286 = vsel %vm1022, %v1281, %v1285
      %v1288 = vshrl.u32 %v967, 16
      %v1290 = vrot.slane %v1288, 4
      %v1291 = vshll.u32 %v967, 16
      %v1293 = vrot.slane %v1291, 5
      %v1294 = vor.u32 %v1290, %v1293
      %v1295 = vrot.slane %v1294, 4
      %v1297 = vshll.u32 %v968, 16
      %v1299 = vrot.slane %v1297, 5
      %v1300 = vsel %vm1022, %v1295, %v1299
      %v1301 = vshrl.u32 %v968, 16
      %v1303 = vrot.slane %v1301, 4
      %v1304 = vor.u32 %v1303, %v1299
      %v1305 = vrot.slane %v1304, 4
      %v1307 = vshll.u32 %v969, 16
      %v1309 = vrot.slane %v1307, 5
      %v1310 = vsel %vm1022, %v1305, %v1309
      %v1312 = vshrl.u32 %v970, 16
      %v1314 = vrot.slane %v1312, 4
      %v1315 = vshll.u32 %v970, 16
      %v1317 = vrot.slane %v1315, 5
      %v1318 = vor.u32 %v1314, %v1317
      %v1319 = vrot.slane %v1318, 4
      %v1321 = vshll.u32 %v971, 16
      %v1323 = vrot.slane %v1321, 5
      %v1324 = vsel %vm1022, %v1319, %v1323
      %v1325 = vshrl.u32 %v971, 16
      %v1327 = vrot.slane %v1325, 4
      %v1328 = vor.u32 %v1327, %v1323
      %v1329 = vrot.slane %v1328, 4
      %v1331 = vshll.u32 %v972, 16
      %v1333 = vrot.slane %v1331, 5
      %v1334 = vsel %vm1022, %v1329, %v1333
      %v1336 = vshrl.u32 %v973, 16
      %v1338 = vrot.slane %v1336, 4
      %v1339 = vshll.u32 %v973, 16
      %v1341 = vrot.slane %v1339, 5
      %v1342 = vor.u32 %v1338, %v1341
      %v1343 = vrot.slane %v1342, 4
      %v1345 = vshll.u32 %v974, 16
      %v1347 = vrot.slane %v1345, 5
      %v1348 = vsel %vm1022, %v1343, %v1347
      %v1349 = vshrl.u32 %v974, 16
      %v1351 = vrot.slane %v1349, 4
      %v1352 = vor.u32 %v1351, %v1347
      %v1353 = vrot.slane %v1352, 4
      %v1355 = vshll.u32 %v975, 16
      %v1357 = vrot.slane %v1355, 5
      %v1358 = vsel %vm1022, %v1353, %v1357
      %v1360 = vshrl.u32 %v976, 16
      %v1362 = vrot.slane %v1360, 4
      %v1363 = vshll.u32 %v976, 16
      %v1365 = vrot.slane %v1363, 5
      %v1366 = vor.u32 %v1362, %v1365
      %v1367 = vrot.slane %v1366, 4
      %v1369 = vshll.u32 %v977, 16
      %v1371 = vrot.slane %v1369, 5
      %v1372 = vsel %vm1022, %v1367, %v1371
      %v1373 = vshrl.u32 %v977, 16
      %v1375 = vrot.slane %v1373, 4
      %v1376 = vor.u32 %v1375, %v1371
      %v1377 = vrot.slane %v1376, 4
      %v1379 = vshll.u32 %v978, 16
      %v1381 = vrot.slane %v1379, 5
      %v1382 = vsel %vm1022, %v1377, %v1381
      %v1384 = vshrl.u32 %v979, 16
      %v1386 = vrot.slane %v1384, 4
      %v1387 = vshll.u32 %v979, 16
      %v1389 = vrot.slane %v1387, 5
      %v1390 = vor.u32 %v1386, %v1389
      %v1391 = vrot.slane %v1390, 4
      %v1393 = vshll.u32 %v980, 16
      %v1395 = vrot.slane %v1393, 5
      %v1396 = vsel %vm1022, %v1391, %v1395
      %v1397 = vshrl.u32 %v980, 16
      %v1399 = vrot.slane %v1397, 4
      %v1400 = vor.u32 %v1399, %v1395
      %v1401 = vrot.slane %v1400, 4
      %v1403 = vshll.u32 %v981, 16
      %v1405 = vrot.slane %v1403, 5
      %v1406 = vsel %vm1022, %v1401, %v1405
      %1407 = vrot.lane.b32.xlu0 %v1036, 4
      %v1408 = vpop.permute.xlu0 %1407
      %1409 = vrot.lane.b32.xlu0 %v1046, 4
      %v1410 = vpop.permute.xlu0 %1409
      %1411 = vrot.lane.b32.xlu0 %v1060, 4
      %v1412 = vpop.permute.xlu0 %1411
      %1413 = vrot.lane.b32.xlu0 %v1070, 4
      %v1414 = vpop.permute.xlu0 %1413
      %1415 = vrot.lane.b32.xlu0 %v1084, 4
      %v1416 = vpop.permute.xlu0 %1415
      %1417 = vrot.lane.b32.xlu0 %v1094, 4
      %v1418 = vpop.permute.xlu0 %1417
      %1419 = vrot.lane.b32.xlu0 %v1108, 4
      %v1420 = vpop.permute.xlu0 %1419
      %1421 = vrot.lane.b32.xlu0 %v1118, 4
      %v1422 = vpop.permute.xlu0 %1421
      %1423 = vrot.lane.b32.xlu0 %v1132, 4
      %v1424 = vpop.permute.xlu0 %1423
      %1425 = vrot.lane.b32.xlu0 %v1142, 4
      %v1426 = vpop.permute.xlu0 %1425
      %1427 = vrot.lane.b32.xlu0 %v1156, 4
      %v1428 = vpop.permute.xlu0 %1427
      %1429 = vrot.lane.b32.xlu0 %v1166, 4
      %v1430 = vpop.permute.xlu0 %1429
      %1431 = vrot.lane.b32.xlu0 %v1180, 4
      %v1432 = vpop.permute.xlu0 %1431
      %1433 = vrot.lane.b32.xlu0 %v1190, 4
      %v1434 = vpop.permute.xlu0 %1433
      %1435 = vrot.lane.b32.xlu0 %v1204, 4
      %v1436 = vpop.permute.xlu0 %1435
      %1437 = vrot.lane.b32.xlu0 %v1214, 4
      %v1438 = vpop.permute.xlu0 %1437
      %1439 = vrot.lane.b32.xlu0 %v1228, 4
      %v1440 = vpop.permute.xlu0 %1439
      %1441 = vrot.lane.b32.xlu0 %v1238, 4
      %v1442 = vpop.permute.xlu0 %1441
      %1443 = vrot.lane.b32.xlu0 %v1252, 4
      %v1444 = vpop.permute.xlu0 %1443
      %1445 = vrot.lane.b32.xlu0 %v1262, 4
      %v1446 = vpop.permute.xlu0 %1445
      %1447 = vrot.lane.b32.xlu0 %v1276, 4
      %v1448 = vpop.permute.xlu0 %1447
      %1449 = vrot.lane.b32.xlu0 %v1286, 4
      %v1450 = vpop.permute.xlu0 %1449
      %1451 = vrot.lane.b32.xlu0 %v1300, 4
      %v1452 = vpop.permute.xlu0 %1451
      %1453 = vrot.lane.b32.xlu0 %v1310, 4
      %v1454 = vpop.permute.xlu0 %1453
      %1455 = vrot.lane.b32.xlu0 %v1324, 4
      %v1456 = vpop.permute.xlu0 %1455
      %1457 = vrot.lane.b32.xlu0 %v1334, 4
      %v1458 = vpop.permute.xlu0 %1457
      %1459 = vrot.lane.b32.xlu0 %v1348, 4
      %v1460 = vpop.permute.xlu0 %1459
      %1461 = vrot.lane.b32.xlu0 %v1358, 4
      %v1462 = vpop.permute.xlu0 %1461
      %1463 = vrot.lane.b32.xlu0 %v1372, 4
      %v1464 = vpop.permute.xlu0 %1463
      %1465 = vrot.lane.b32.xlu0 %v1382, 4
      %v1466 = vpop.permute.xlu0 %1465
      %1467 = vrot.lane.b32.xlu0 %v1396, 4
      %v1468 = vpop.permute.xlu0 %1467
      %1469 = vrot.lane.b32.xlu0 %v1406, 4
      %v1470 = vpop.permute.xlu0 %1469
      %vm1503 = vcmask 60448
      %1504 = vst.msk [vmem:[#allocation3] sm:$0xf] %vm1503, %v1408
      %1505 = vst.msk [vmem:[#allocation3 + $0x4] sm:$0xf] %vm1503, %v1410
      %1506 = vst.msk [vmem:[#allocation3 + $0x8] sm:$0xf] %vm1503, %v1412
      %1507 = vst.msk [vmem:[#allocation3 + $0xc] sm:$0xf] %vm1503, %v1414
      %1508 = vst.msk [vmem:[#allocation3 + $0x10] sm:$0xf] %vm1503, %v1416
      %1509 = vst.msk [vmem:[#allocation3 + $0x14] sm:$0xf] %vm1503, %v1418
      %1510 = vst.msk [vmem:[#allocation3 + $0x18] sm:$0xf] %vm1503, %v1420
      %1511 = vst.msk [vmem:[#allocation3 + $0x1c] sm:$0xf] %vm1503, %v1422
      %1512 = vst.msk [vmem:[#allocation3 + $0x20] sm:$0xf] %vm1503, %v1424
      %1513 = vst.msk [vmem:[#allocation3 + $0x24] sm:$0xf] %vm1503, %v1426
      %1514 = vst.msk [vmem:[#allocation3 + $0x28] sm:$0xf] %vm1503, %v1428
      %1515 = vst.msk [vmem:[#allocation3 + $0x2c] sm:$0xf] %vm1503, %v1430
      %1516 = vst.msk [vmem:[#allocation3 + $0x30] sm:$0xf] %vm1503, %v1432
      %1517 = vst.msk [vmem:[#allocation3 + $0x34] sm:$0xf] %vm1503, %v1434
      %1518 = vst.msk [vmem:[#allocation3 + $0x38] sm:$0xf] %vm1503, %v1436
      %1519 = vst.msk [vmem:[#allocation3 + $0x3c] sm:$0xf] %vm1503, %v1438
      %1520 = vst.msk [vmem:[#allocation3 + $0x40] sm:$0xf] %vm1503, %v1440
      %1521 = vst.msk [vmem:[#allocation3 + $0x44] sm:$0xf] %vm1503, %v1442
      %1522 = vst.msk [vmem:[#allocation3 + $0x48] sm:$0xf] %vm1503, %v1444
      %1523 = vst.msk [vmem:[#allocation3 + $0x4c] sm:$0xf] %vm1503, %v1446
      %1524 = vst.msk [vmem:[#allocation3 + $0x50] sm:$0xf] %vm1503, %v1448
      %1525 = vst.msk [vmem:[#allocation3 + $0x54] sm:$0xf] %vm1503, %v1450
      %1526 = vst.msk [vmem:[#allocation3 + $0x58] sm:$0xf] %vm1503, %v1452
      %1527 = vst.msk [vmem:[#allocation3 + $0x5c] sm:$0xf] %vm1503, %v1454
      %1528 = vst.msk [vmem:[#allocation3 + $0x60] sm:$0xf] %vm1503, %v1456
      %1529 = vst.msk [vmem:[#allocation3 + $0x64] sm:$0xf] %vm1503, %v1458
      %1530 = vst.msk [vmem:[#allocation3 + $0x68] sm:$0xf] %vm1503, %v1460
      %1531 = vst.msk [vmem:[#allocation3 + $0x6c] sm:$0xf] %vm1503, %v1462
      %1532 = vst.msk [vmem:[#allocation3 + $0x70] sm:$0xf] %vm1503, %v1464
      %1533 = vst.msk [vmem:[#allocation3 + $0x74] sm:$0xf] %vm1503, %v1466
      %1534 = vst.msk [vmem:[#allocation3 + $0x78] sm:$0xf] %vm1503, %v1468
      %1535 = vst.msk [vmem:[#allocation3 + $0x7c] sm:$0xf] %vm1503, %v1470
      %vm1584 = vcmask 1042432
      %vm1585 = vcmask 1046532
      %vm1586 = vmor %vm1584, %vm1585
      %v1587 = vrot.slane %v934, 5
      %v1588 = vrot.slane %v1587, 4
      %v1589 = vrot.slane %v935, 5
      %v1590 = vsel %vm1586, %v1588, %v1589
      %v1591 = vrot.slane %v1589, 4
      %v1592 = vrot.slane %v936, 5
      %v1593 = vsel %vm1586, %v1591, %v1592
      %v1594 = vrot.slane %v937, 5
      %v1595 = vrot.slane %v1594, 4
      %v1596 = vrot.slane %v938, 5
      %v1597 = vsel %vm1586, %v1595, %v1596
      %v1598 = vrot.slane %v1596, 4
      %v1599 = vrot.slane %v939, 5
      %v1600 = vsel %vm1586, %v1598, %v1599
      %v1601 = vrot.slane %v940, 5
      %v1602 = vrot.slane %v1601, 4
      %v1603 = vrot.slane %v941, 5
      %v1604 = vsel %vm1586, %v1602, %v1603
      %v1605 = vrot.slane %v1603, 4
      %v1606 = vrot.slane %v942, 5
      %v1607 = vsel %vm1586, %v1605, %v1606
      %v1608 = vrot.slane %v943, 5
      %v1609 = vrot.slane %v1608, 4
      %v1610 = vrot.slane %v944, 5
      %v1611 = vsel %vm1586, %v1609, %v1610
      %v1612 = vrot.slane %v1610, 4
      %v1613 = vrot.slane %v945, 5
      %v1614 = vsel %vm1586, %v1612, %v1613
      %v1615 = vrot.slane %v946, 5
      %v1616 = vrot.slane %v1615, 4
      %v1617 = vrot.slane %v947, 5
      %v1618 = vsel %vm1586, %v1616, %v1617
      %v1619 = vrot.slane %v1617, 4
      %v1620 = vrot.slane %v948, 5
      %v1621 = vsel %vm1586, %v1619, %v1620
      %v1622 = vrot.slane %v949, 5
      %v1623 = vrot.slane %v1622, 4
      %v1624 = vrot.slane %v950, 5
      %v1625 = vsel %vm1586, %v1623, %v1624
      %v1626 = vrot.slane %v1624, 4
      %v1627 = vrot.slane %v951, 5
      %v1628 = vsel %vm1586, %v1626, %v1627
      %v1629 = vrot.slane %v952, 5
      %v1630 = vrot.slane %v1629, 4
      %v1631 = vrot.slane %v953, 5
      %v1632 = vsel %vm1586, %v1630, %v1631
      %v1633 = vrot.slane %v1631, 4
      %v1634 = vrot.slane %v954, 5
      %v1635 = vsel %vm1586, %v1633, %v1634
      %v1636 = vrot.slane %v955, 5
      %v1637 = vrot.slane %v1636, 4
      %v1638 = vrot.slane %v956, 5
      %v1639 = vsel %vm1586, %v1637, %v1638
      %v1640 = vrot.slane %v1638, 4
      %v1641 = vrot.slane %v957, 5
      %v1642 = vsel %vm1586, %v1640, %v1641
      %v1643 = vrot.slane %v958, 5
      %v1644 = vrot.slane %v1643, 4
      %v1645 = vrot.slane %v959, 5
      %v1646 = vsel %vm1586, %v1644, %v1645
      %v1647 = vrot.slane %v1645, 4
      %v1648 = vrot.slane %v960, 5
      %v1649 = vsel %vm1586, %v1647, %v1648
      %v1650 = vrot.slane %v961, 5
      %v1651 = vrot.slane %v1650, 4
      %v1652 = vrot.slane %v962, 5
      %v1653 = vsel %vm1586, %v1651, %v1652
      %v1654 = vrot.slane %v1652, 4
      %v1655 = vrot.slane %v963, 5
      %v1656 = vsel %vm1586, %v1654, %v1655
      %v1657 = vrot.slane %v964, 5
      %v1658 = vrot.slane %v1657, 4
      %v1659 = vrot.slane %v965, 5
      %v1660 = vsel %vm1586, %v1658, %v1659
      %v1661 = vrot.slane %v1659, 4
      %v1662 = vrot.slane %v966, 5
      %v1663 = vsel %vm1586, %v1661, %v1662
      %v1664 = vrot.slane %v967, 5
      %v1665 = vrot.slane %v1664, 4
      %v1666 = vrot.slane %v968, 5
      %v1667 = vsel %vm1586, %v1665, %v1666
      %v1668 = vrot.slane %v1666, 4
      %v1669 = vrot.slane %v969, 5
      %v1670 = vsel %vm1586, %v1668, %v1669
      %v1671 = vrot.slane %v970, 5
      %v1672 = vrot.slane %v1671, 4
      %v1673 = vrot.slane %v971, 5
      %v1674 = vsel %vm1586, %v1672, %v1673
      %v1675 = vrot.slane %v1673, 4
      %v1676 = vrot.slane %v972, 5
      %v1677 = vsel %vm1586, %v1675, %v1676
      %v1678 = vrot.slane %v973, 5
      %v1679 = vrot.slane %v1678, 4
      %v1680 = vrot.slane %v974, 5
      %v1681 = vsel %vm1586, %v1679, %v1680
      %v1682 = vrot.slane %v1680, 4
      %v1683 = vrot.slane %v975, 5
      %v1684 = vsel %vm1586, %v1682, %v1683
      %v1685 = vrot.slane %v976, 5
      %v1686 = vrot.slane %v1685, 4
      %v1687 = vrot.slane %v977, 5
      %v1688 = vsel %vm1586, %v1686, %v1687
      %v1689 = vrot.slane %v1687, 4
      %v1690 = vrot.slane %v978, 5
      %v1691 = vsel %vm1586, %v1689, %v1690
      %v1692 = vrot.slane %v979, 5
      %v1693 = vrot.slane %v1692, 4
      %v1694 = vrot.slane %v980, 5
      %v1695 = vsel %vm1586, %v1693, %v1694
      %v1696 = vrot.slane %v1694, 4
      %v1697 = vrot.slane %v981, 5
      %v1698 = vsel %vm1586, %v1696, %v1697
      %1699 = vrot.lane.b32.xlu0 %v1590, 8
      %v1700 = vpop.permute.xlu0 %1699
      %1701 = vrot.lane.b32.xlu0 %v1593, 8
      %v1702 = vpop.permute.xlu0 %1701
      %1703 = vrot.lane.b32.xlu0 %v1597, 8
      %v1704 = vpop.permute.xlu0 %1703
      %1705 = vrot.lane.b32.xlu0 %v1600, 8
      %v1706 = vpop.permute.xlu0 %1705
      %1707 = vrot.lane.b32.xlu0 %v1604, 8
      %v1708 = vpop.permute.xlu0 %1707
      %1709 = vrot.lane.b32.xlu0 %v1607, 8
      %v1710 = vpop.permute.xlu0 %1709
      %1711 = vrot.lane.b32.xlu0 %v1611, 8
      %v1712 = vpop.permute.xlu0 %1711
      %1713 = vrot.lane.b32.xlu0 %v1614, 8
      %v1714 = vpop.permute.xlu0 %1713
      %1715 = vrot.lane.b32.xlu0 %v1618, 8
      %v1716 = vpop.permute.xlu0 %1715
      %1717 = vrot.lane.b32.xlu0 %v1621, 8
      %v1718 = vpop.permute.xlu0 %1717
      %1719 = vrot.lane.b32.xlu0 %v1625, 8
      %v1720 = vpop.permute.xlu0 %1719
      %1721 = vrot.lane.b32.xlu0 %v1628, 8
      %v1722 = vpop.permute.xlu0 %1721
      %1723 = vrot.lane.b32.xlu0 %v1632, 8
      %v1724 = vpop.permute.xlu0 %1723
      %1725 = vrot.lane.b32.xlu0 %v1635, 8
      %v1726 = vpop.permute.xlu0 %1725
      %1727 = vrot.lane.b32.xlu0 %v1639, 8
      %v1728 = vpop.permute.xlu0 %1727
      %1729 = vrot.lane.b32.xlu0 %v1642, 8
      %v1730 = vpop.permute.xlu0 %1729
      %1731 = vrot.lane.b32.xlu0 %v1646, 8
      %v1732 = vpop.permute.xlu0 %1731
      %1733 = vrot.lane.b32.xlu0 %v1649, 8
      %v1734 = vpop.permute.xlu0 %1733
      %1735 = vrot.lane.b32.xlu0 %v1653, 8
      %v1736 = vpop.permute.xlu0 %1735
      %1737 = vrot.lane.b32.xlu0 %v1656, 8
      %v1738 = vpop.permute.xlu0 %1737
      %1739 = vrot.lane.b32.xlu0 %v1660, 8
      %v1740 = vpop.permute.xlu0 %1739
      %1741 = vrot.lane.b32.xlu0 %v1663, 8
      %v1742 = vpop.permute.xlu0 %1741
      %1743 = vrot.lane.b32.xlu0 %v1667, 8
      %v1744 = vpop.permute.xlu0 %1743
      %1745 = vrot.lane.b32.xlu0 %v1670, 8
      %v1746 = vpop.permute.xlu0 %1745
      %1747 = vrot.lane.b32.xlu0 %v1674, 8
      %v1748 = vpop.permute.xlu0 %1747
      %1749 = vrot.lane.b32.xlu0 %v1677, 8
      %v1750 = vpop.permute.xlu0 %1749
      %1751 = vrot.lane.b32.xlu0 %v1681, 8
      %v1752 = vpop.permute.xlu0 %1751
      %1753 = vrot.lane.b32.xlu0 %v1684, 8
      %v1754 = vpop.permute.xlu0 %1753
      %1755 = vrot.lane.b32.xlu0 %v1688, 8
      %v1756 = vpop.permute.xlu0 %1755
      %1757 = vrot.lane.b32.xlu0 %v1691, 8
      %v1758 = vpop.permute.xlu0 %1757
      %1759 = vrot.lane.b32.xlu0 %v1695, 8
      %v1760 = vpop.permute.xlu0 %1759
      %1761 = vrot.lane.b32.xlu0 %v1698, 8
      %v1762 = vpop.permute.xlu0 %1761
      %vm1795 = vcmask 93248
      %1796 = vst.msk [vmem:[#allocation3] sm:$0xf] %vm1795, %v1700
      %1797 = vst.msk [vmem:[#allocation3 + $0x4] sm:$0xf] %vm1795, %v1702
      %1798 = vst.msk [vmem:[#allocation3 + $0x8] sm:$0xf] %vm1795, %v1704
      %1799 = vst.msk [vmem:[#allocation3 + $0xc] sm:$0xf] %vm1795, %v1706
      %1800 = vst.msk [vmem:[#allocation3 + $0x10] sm:$0xf] %vm1795, %v1708
      %1801 = vst.msk [vmem:[#allocation3 + $0x14] sm:$0xf] %vm1795, %v1710
      %1802 = vst.msk [vmem:[#allocation3 + $0x18] sm:$0xf] %vm1795, %v1712
      %1803 = vst.msk [vmem:[#allocation3 + $0x1c] sm:$0xf] %vm1795, %v1714
      %1804 = vst.msk [vmem:[#allocation3 + $0x20] sm:$0xf] %vm1795, %v1716
      %1805 = vst.msk [vmem:[#allocation3 + $0x24] sm:$0xf] %vm1795, %v1718
      %1806 = vst.msk [vmem:[#allocation3 + $0x28] sm:$0xf] %vm1795, %v1720
      %1807 = vst.msk [vmem:[#allocation3 + $0x2c] sm:$0xf] %vm1795, %v1722
      %1808 = vst.msk [vmem:[#allocation3 + $0x30] sm:$0xf] %vm1795, %v1724
      %1809 = vst.msk [vmem:[#allocation3 + $0x34] sm:$0xf] %vm1795, %v1726
      %1810 = vst.msk [vmem:[#allocation3 + $0x38] sm:$0xf] %vm1795, %v1728
      %1811 = vst.msk [vmem:[#allocation3 + $0x3c] sm:$0xf] %vm1795, %v1730
      %1812 = vst.msk [vmem:[#allocation3 + $0x40] sm:$0xf] %vm1795, %v1732
      %1813 = vst.msk [vmem:[#allocation3 + $0x44] sm:$0xf] %vm1795, %v1734
      %1814 = vst.msk [vmem:[#allocation3 + $0x48] sm:$0xf] %vm1795, %v1736
      %1815 = vst.msk [vmem:[#allocation3 + $0x4c] sm:$0xf] %vm1795, %v1738
      %1816 = vst.msk [vmem:[#allocation3 + $0x50] sm:$0xf] %vm1795, %v1740
      %1817 = vst.msk [vmem:[#allocation3 + $0x54] sm:$0xf] %vm1795, %v1742
      %1818 = vst.msk [vmem:[#allocation3 + $0x58] sm:$0xf] %vm1795, %v1744
      %1819 = vst.msk [vmem:[#allocation3 + $0x5c] sm:$0xf] %vm1795, %v1746
      %1820 = vst.msk [vmem:[#allocation3 + $0x60] sm:$0xf] %vm1795, %v1748
      %1821 = vst.msk [vmem:[#allocation3 + $0x64] sm:$0xf] %vm1795, %v1750
      %1822 = vst.msk [vmem:[#allocation3 + $0x68] sm:$0xf] %vm1795, %v1752
      %1823 = vst.msk [vmem:[#allocation3 + $0x6c] sm:$0xf] %vm1795, %v1754
      %1824 = vst.msk [vmem:[#allocation3 + $0x70] sm:$0xf] %vm1795, %v1756
      %1825 = vst.msk [vmem:[#allocation3 + $0x74] sm:$0xf] %vm1795, %v1758
      %1826 = vst.msk [vmem:[#allocation3 + $0x78] sm:$0xf] %vm1795, %v1760
      %1827 = vst.msk [vmem:[#allocation3 + $0x7c] sm:$0xf] %vm1795, %v1762
      %1830 = vrot.lane.b32.xlu0 %v937, 12
      %v1831 = vpop.permute.xlu0 %1830
      %1832 = vrot.lane.b32.xlu0 %v938, 12
      %v1833 = vpop.permute.xlu0 %1832
      %1834 = vrot.lane.b32.xlu0 %v940, 12
      %v1835 = vpop.permute.xlu0 %1834
      %1836 = vrot.lane.b32.xlu0 %v941, 12
      %v1837 = vpop.permute.xlu0 %1836
      %1838 = vrot.lane.b32.xlu0 %v943, 12
      %v1839 = vpop.permute.xlu0 %1838
      %1840 = vrot.lane.b32.xlu0 %v944, 12
      %v1841 = vpop.permute.xlu0 %1840
      %1842 = vrot.lane.b32.xlu0 %v946, 12
      %v1843 = vpop.permute.xlu0 %1842
      %1844 = vrot.lane.b32.xlu0 %v947, 12
      %v1845 = vpop.permute.xlu0 %1844
      %1846 = vrot.lane.b32.xlu0 %v949, 12
      %v1847 = vpop.permute.xlu0 %1846
      %1848 = vrot.lane.b32.xlu0 %v950, 12
      %v1849 = vpop.permute.xlu0 %1848
      %1850 = vrot.lane.b32.xlu0 %v952, 12
      %v1851 = vpop.permute.xlu0 %1850
      %1852 = vrot.lane.b32.xlu0 %v953, 12
      %v1853 = vpop.permute.xlu0 %1852
      %1854 = vrot.lane.b32.xlu0 %v955, 12
      %v1855 = vpop.permute.xlu0 %1854
      %1856 = vrot.lane.b32.xlu0 %v956, 12
      %v1857 = vpop.permute.xlu0 %1856
      %1858 = vrot.lane.b32.xlu0 %v958, 12
      %v1859 = vpop.permute.xlu0 %1858
      %1860 = vrot.lane.b32.xlu0 %v959, 12
      %v1861 = vpop.permute.xlu0 %1860
      %1862 = vrot.lane.b32.xlu0 %v961, 12
      %v1863 = vpop.permute.xlu0 %1862
      %1864 = vrot.lane.b32.xlu0 %v962, 12
      %v1865 = vpop.permute.xlu0 %1864
      %1866 = vrot.lane.b32.xlu0 %v964, 12
      %v1867 = vpop.permute.xlu0 %1866
      %1868 = vrot.lane.b32.xlu0 %v965, 12
      %v1869 = vpop.permute.xlu0 %1868
      %1870 = vrot.lane.b32.xlu0 %v967, 12
      %v1871 = vpop.permute.xlu0 %1870
      %1872 = vrot.lane.b32.xlu0 %v968, 12
      %v1873 = vpop.permute.xlu0 %1872
      %1874 = vrot.lane.b32.xlu0 %v970, 12
      %v1875 = vpop.permute.xlu0 %1874
      %1876 = vrot.lane.b32.xlu0 %v971, 12
      %v1877 = vpop.permute.xlu0 %1876
      %1878 = vrot.lane.b32.xlu0 %v973, 12
      %v1879 = vpop.permute.xlu0 %1878
      %1880 = vrot.lane.b32.xlu0 %v974, 12
      %v1881 = vpop.permute.xlu0 %1880
      %1882 = vrot.lane.b32.xlu0 %v976, 12
      %v1883 = vpop.permute.xlu0 %1882
      %1884 = vrot.lane.b32.xlu0 %v977, 12
      %v1885 = vpop.permute.xlu0 %1884
      %1886 = vrot.lane.b32.xlu0 %v979, 12
      %v1887 = vpop.permute.xlu0 %1886
      %1888 = vrot.lane.b32.xlu0 %v980, 12
      %v1889 = vpop.permute.xlu0 %1888
      %1890 = vrot.lane.b32.xlu0 %v982, 12
      %v1891 = vpop.permute.xlu0 %1890
      %1892 = vrot.lane.b32.xlu0 %v983, 12
      %v1893 = vpop.permute.xlu0 %1892
      %vm1926 = vcmask 126048
      %1927 = vst.msk [vmem:[#allocation3] sm:$0xf] %vm1926, %v1831
      %1928 = vst.msk [vmem:[#allocation3 + $0x4] sm:$0xf] %vm1926, %v1833
      %1929 = vst.msk [vmem:[#allocation3 + $0x8] sm:$0xf] %vm1926, %v1835
      %1930 = vst.msk [vmem:[#allocation3 + $0xc] sm:$0xf] %vm1926, %v1837
      %1931 = vst.msk [vmem:[#allocation3 + $0x10] sm:$0xf] %vm1926, %v1839
      %1932 = vst.msk [vmem:[#allocation3 + $0x14] sm:$0xf] %vm1926, %v1841
      %1933 = vst.msk [vmem:[#allocation3 + $0x18] sm:$0xf] %vm1926, %v1843
      %1934 = vst.msk [vmem:[#allocation3 + $0x1c] sm:$0xf] %vm1926, %v1845
      %1935 = vst.msk [vmem:[#allocation3 + $0x20] sm:$0xf] %vm1926, %v1847
      %1936 = vst.msk [vmem:[#allocation3 + $0x24] sm:$0xf] %vm1926, %v1849
      %1937 = vst.msk [vmem:[#allocation3 + $0x28] sm:$0xf] %vm1926, %v1851
      %1938 = vst.msk [vmem:[#allocation3 + $0x2c] sm:$0xf] %vm1926, %v1853
      %1939 = vst.msk [vmem:[#allocation3 + $0x30] sm:$0xf] %vm1926, %v1855
      %1940 = vst.msk [vmem:[#allocation3 + $0x34] sm:$0xf] %vm1926, %v1857
      %1941 = vst.msk [vmem:[#allocation3 + $0x38] sm:$0xf] %vm1926, %v1859
      %1942 = vst.msk [vmem:[#allocation3 + $0x3c] sm:$0xf] %vm1926, %v1861
      %1943 = vst.msk [vmem:[#allocation3 + $0x40] sm:$0xf] %vm1926, %v1863
      %1944 = vst.msk [vmem:[#allocation3 + $0x44] sm:$0xf] %vm1926, %v1865
      %1945 = vst.msk [vmem:[#allocation3 + $0x48] sm:$0xf] %vm1926, %v1867
      %1946 = vst.msk [vmem:[#allocation3 + $0x4c] sm:$0xf] %vm1926, %v1869
      %1947 = vst.msk [vmem:[#allocation3 + $0x50] sm:$0xf] %vm1926, %v1871
      %1948 = vst.msk [vmem:[#allocation3 + $0x54] sm:$0xf] %vm1926, %v1873
      %1949 = vst.msk [vmem:[#allocation3 + $0x58] sm:$0xf] %vm1926, %v1875
      %1950 = vst.msk [vmem:[#allocation3 + $0x5c] sm:$0xf] %vm1926, %v1877
      %1951 = vst.msk [vmem:[#allocation3 + $0x60] sm:$0xf] %vm1926, %v1879
      %1952 = vst.msk [vmem:[#allocation3 + $0x64] sm:$0xf] %vm1926, %v1881
      %1953 = vst.msk [vmem:[#allocation3 + $0x68] sm:$0xf] %vm1926, %v1883
      %1954 = vst.msk [vmem:[#allocation3 + $0x6c] sm:$0xf] %vm1926, %v1885
      %1955 = vst.msk [vmem:[#allocation3 + $0x70] sm:$0xf] %vm1926, %v1887
      %1956 = vst.msk [vmem:[#allocation3 + $0x74] sm:$0xf] %vm1926, %v1889
      %1957 = vst.msk [vmem:[#allocation3 + $0x78] sm:$0xf] %vm1926, %v1891
      %1958 = vst.msk [vmem:[#allocation3 + $0x7c] sm:$0xf] %vm1926, %v1893
      %v1960 = vshrl.u32 %v982, 16
      %v1962 = vrot.slane %v1960, 4
      %v1963 = vshll.u32 %v982, 16
      %v1965 = vrot.slane %v1963, 5
      %v1966 = vor.u32 %v1962, %v1965
      %v1967 = vrot.slane %v1966, 4
      %v1969 = vshll.u32 %v983, 16
      %v1971 = vrot.slane %v1969, 5
      %v1972 = vsel %vm1022, %v1967, %v1971
      %v1973 = vshrl.u32 %v983, 16
      %v1975 = vrot.slane %v1973, 4
      %v1976 = vor.u32 %v1975, %v1971
      %v1977 = vrot.slane %v1976, 4
      %v1979 = vshll.u32 %v984, 16
      %v1981 = vrot.slane %v1979, 5
      %v1982 = vsel %vm1022, %v1977, %v1981
      %1983 = vrot.lane.b32.xlu0 %v1060, 16
      %v1984 = vpop.permute.xlu0 %1983
      %1985 = vrot.lane.b32.xlu0 %v1070, 16
      %v1986 = vpop.permute.xlu0 %1985
      %1987 = vrot.lane.b32.xlu0 %v1084, 16
      %v1988 = vpop.permute.xlu0 %1987
      %1989 = vrot.lane.b32.xlu0 %v1094, 16
      %v1990 = vpop.permute.xlu0 %1989
      %1991 = vrot.lane.b32.xlu0 %v1108, 16
      %v1992 = vpop.permute.xlu0 %1991
      %1993 = vrot.lane.b32.xlu0 %v1118, 16
      %v1994 = vpop.permute.xlu0 %1993
      %1995 = vrot.lane.b32.xlu0 %v1132, 16
      %v1996 = vpop.permute.xlu0 %1995
      %1997 = vrot.lane.b32.xlu0 %v1142, 16
      %v1998 = vpop.permute.xlu0 %1997
      %1999 = vrot.lane.b32.xlu0 %v1156, 16
      %v2000 = vpop.permute.xlu0 %1999
      %2001 = vrot.lane.b32.xlu0 %v1166, 16
      %v2002 = vpop.permute.xlu0 %2001
      %2003 = vrot.lane.b32.xlu0 %v1180, 16
      %v2004 = vpop.permute.xlu0 %2003
      %2005 = vrot.lane.b32.xlu0 %v1190, 16
      %v2006 = vpop.permute.xlu0 %2005
      %2007 = vrot.lane.b32.xlu0 %v1204, 16
      %v2008 = vpop.permute.xlu0 %2007
      %2009 = vrot.lane.b32.xlu0 %v1214, 16
      %v2010 = vpop.permute.xlu0 %2009
      %2011 = vrot.lane.b32.xlu0 %v1228, 16
      %v2012 = vpop.permute.xlu0 %2011
      %2013 = vrot.lane.b32.xlu0 %v1238, 16
      %v2014 = vpop.permute.xlu0 %2013
      %2015 = vrot.lane.b32.xlu0 %v1252, 16
      %v2016 = vpop.permute.xlu0 %2015
      %2017 = vrot.lane.b32.xlu0 %v1262, 16
      %v2018 = vpop.permute.xlu0 %2017
      %2019 = vrot.lane.b32.xlu0 %v1276, 16
      %v2020 = vpop.permute.xlu0 %2019
      %2021 = vrot.lane.b32.xlu0 %v1286, 16
      %v2022 = vpop.permute.xlu0 %2021
      %2023 = vrot.lane.b32.xlu0 %v1300, 16
      %v2024 = vpop.permute.xlu0 %2023
      %2025 = vrot.lane.b32.xlu0 %v1310, 16
      %v2026 = vpop.permute.xlu0 %2025
      %2027 = vrot.lane.b32.xlu0 %v1324, 16
      %v2028 = vpop.permute.xlu0 %2027
      %2029 = vrot.lane.b32.xlu0 %v1334, 16
      %v2030 = vpop.permute.xlu0 %2029
      %2031 = vrot.lane.b32.xlu0 %v1348, 16
      %v2032 = vpop.permute.xlu0 %2031
      %2033 = vrot.lane.b32.xlu0 %v1358, 16
      %v2034 = vpop.permute.xlu0 %2033
      %2035 = vrot.lane.b32.xlu0 %v1372, 16
      %v2036 = vpop.permute.xlu0 %2035
      %2037 = vrot.lane.b32.xlu0 %v1382, 16
      %v2038 = vpop.permute.xlu0 %2037
      %2039 = vrot.lane.b32.xlu0 %v1396, 16
      %v2040 = vpop.permute.xlu0 %2039
      %2041 = vrot.lane.b32.xlu0 %v1406, 16
      %v2042 = vpop.permute.xlu0 %2041
      %2043 = vrot.lane.b32.xlu0 %v1972, 16
      %v2044 = vpop.permute.xlu0 %2043
      %2045 = vrot.lane.b32.xlu0 %v1982, 16
      %v2046 = vpop.permute.xlu0 %2045
      %vm2079 = vcmask 158848
      %2080 = vst.msk [vmem:[#allocation3] sm:$0xf] %vm2079, %v1984
      %2081 = vst.msk [vmem:[#allocation3 + $0x4] sm:$0xf] %vm2079, %v1986
      %2082 = vst.msk [vmem:[#allocation3 + $0x8] sm:$0xf] %vm2079, %v1988
      %2083 = vst.msk [vmem:[#allocation3 + $0xc] sm:$0xf] %vm2079, %v1990
      %2084 = vst.msk [vmem:[#allocation3 + $0x10] sm:$0xf] %vm2079, %v1992
      %2085 = vst.msk [vmem:[#allocation3 + $0x14] sm:$0xf] %vm2079, %v1994
      %2086 = vst.msk [vmem:[#allocation3 + $0x18] sm:$0xf] %vm2079, %v1996
      %2087 = vst.msk [vmem:[#allocation3 + $0x1c] sm:$0xf] %vm2079, %v1998
      %2088 = vst.msk [vmem:[#allocation3 + $0x20] sm:$0xf] %vm2079, %v2000
      %2089 = vst.msk [vmem:[#allocation3 + $0x24] sm:$0xf] %vm2079, %v2002
      %2090 = vst.msk [vmem:[#allocation3 + $0x28] sm:$0xf] %vm2079, %v2004
      %2091 = vst.msk [vmem:[#allocation3 + $0x2c] sm:$0xf] %vm2079, %v2006
      %2092 = vst.msk [vmem:[#allocation3 + $0x30] sm:$0xf] %vm2079, %v2008
      %2093 = vst.msk [vmem:[#allocation3 + $0x34] sm:$0xf] %vm2079, %v2010
      %2094 = vst.msk [vmem:[#allocation3 + $0x38] sm:$0xf] %vm2079, %v2012
      %2095 = vst.msk [vmem:[#allocation3 + $0x3c] sm:$0xf] %vm2079, %v2014
      %2096 = vst.msk [vmem:[#allocation3 + $0x40] sm:$0xf] %vm2079, %v2016
      %2097 = vst.msk [vmem:[#allocation3 + $0x44] sm:$0xf] %vm2079, %v2018
      %2098 = vst.msk [vmem:[#allocation3 + $0x48] sm:$0xf] %vm2079, %v2020
      %2099 = vst.msk [vmem:[#allocation3 + $0x4c] sm:$0xf] %vm2079, %v2022
      %2100 = vst.msk [vmem:[#allocation3 + $0x50] sm:$0xf] %vm2079, %v2024
      %2101 = vst.msk [vmem:[#allocation3 + $0x54] sm:$0xf] %vm2079, %v2026
      %2102 = vst.msk [vmem:[#allocation3 + $0x58] sm:$0xf] %vm2079, %v2028
      %2103 = vst.msk [vmem:[#allocation3 + $0x5c] sm:$0xf] %vm2079, %v2030
      %2104 = vst.msk [vmem:[#allocation3 + $0x60] sm:$0xf] %vm2079, %v2032
      %2105 = vst.msk [vmem:[#allocation3 + $0x64] sm:$0xf] %vm2079, %v2034
      %2106 = vst.msk [vmem:[#allocation3 + $0x68] sm:$0xf] %vm2079, %v2036
      %2107 = vst.msk [vmem:[#allocation3 + $0x6c] sm:$0xf] %vm2079, %v2038
      %2108 = vst.msk [vmem:[#allocation3 + $0x70] sm:$0xf] %vm2079, %v2040
      %2109 = vst.msk [vmem:[#allocation3 + $0x74] sm:$0xf] %vm2079, %v2042
      %2110 = vst.msk [vmem:[#allocation3 + $0x78] sm:$0xf] %vm2079, %v2044
      %2111 = vst.msk [vmem:[#allocation3 + $0x7c] sm:$0xf] %vm2079, %v2046
      %v2113 = vrot.slane %v982, 5
      %v2114 = vrot.slane %v2113, 4
      %v2115 = vrot.slane %v983, 5
      %v2116 = vsel %vm1586, %v2114, %v2115
      %v2117 = vrot.slane %v2115, 4
      %v2118 = vrot.slane %v984, 5
      %v2119 = vsel %vm1586, %v2117, %v2118
      %2120 = vrot.lane.b32.xlu0 %v1597, 20
      %v2121 = vpop.permute.xlu0 %2120
      %2122 = vrot.lane.b32.xlu0 %v1600, 20
      %v2123 = vpop.permute.xlu0 %2122
      %2124 = vrot.lane.b32.xlu0 %v1604, 20
      %v2125 = vpop.permute.xlu0 %2124
      %2126 = vrot.lane.b32.xlu0 %v1607, 20
      %v2127 = vpop.permute.xlu0 %2126
      %2128 = vrot.lane.b32.xlu0 %v1611, 20
      %v2129 = vpop.permute.xlu0 %2128
      %2130 = vrot.lane.b32.xlu0 %v1614, 20
      %v2131 = vpop.permute.xlu0 %2130
      %2132 = vrot.lane.b32.xlu0 %v1618, 20
      %v2133 = vpop.permute.xlu0 %2132
      %2134 = vrot.lane.b32.xlu0 %v1621, 20
      %v2135 = vpop.permute.xlu0 %2134
      %2136 = vrot.lane.b32.xlu0 %v1625, 20
      %v2137 = vpop.permute.xlu0 %2136
      %2138 = vrot.lane.b32.xlu0 %v1628, 20
      %v2139 = vpop.permute.xlu0 %2138
      %2140 = vrot.lane.b32.xlu0 %v1632, 20
      %v2141 = vpop.permute.xlu0 %2140
      %2142 = vrot.lane.b32.xlu0 %v1635, 20
      %v2143 = vpop.permute.xlu0 %2142
      %2144 = vrot.lane.b32.xlu0 %v1639, 20
      %v2145 = vpop.permute.xlu0 %2144
      %2146 = vrot.lane.b32.xlu0 %v1642, 20
      %v2147 = vpop.permute.xlu0 %2146
      %2148 = vrot.lane.b32.xlu0 %v1646, 20
      %v2149 = vpop.permute.xlu0 %2148
      %2150 = vrot.lane.b32.xlu0 %v1649, 20
      %v2151 = vpop.permute.xlu0 %2150
      %2152 = vrot.lane.b32.xlu0 %v1653, 20
      %v2153 = vpop.permute.xlu0 %2152
      %2154 = vrot.lane.b32.xlu0 %v1656, 20
      %v2155 = vpop.permute.xlu0 %2154
      %2156 = vrot.lane.b32.xlu0 %v1660, 20
      %v2157 = vpop.permute.xlu0 %2156
      %2158 = vrot.lane.b32.xlu0 %v1663, 20
      %v2159 = vpop.permute.xlu0 %2158
      %2160 = vrot.lane.b32.xlu0 %v1667, 20
      %v2161 = vpop.permute.xlu0 %2160
      %2162 = vrot.lane.b32.xlu0 %v1670, 20
      %v2163 = vpop.permute.xlu0 %2162
      %2164 = vrot.lane.b32.xlu0 %v1674, 20
      %v2165 = vpop.permute.xlu0 %2164
      %2166 = vrot.lane.b32.xlu0 %v1677, 20
      %v2167 = vpop.permute.xlu0 %2166
      %2168 = vrot.lane.b32.xlu0 %v1681, 20
      %v2169 = vpop.permute.xlu0 %2168
      %2170 = vrot.lane.b32.xlu0 %v1684, 20
      %v2171 = vpop.permute.xlu0 %2170
      %2172 = vrot.lane.b32.xlu0 %v1688, 20
      %v2173 = vpop.permute.xlu0 %2172
      %2174 = vrot.lane.b32.xlu0 %v1691, 20
      %v2175 = vpop.permute.xlu0 %2174
      %2176 = vrot.lane.b32.xlu0 %v1695, 20
      %v2177 = vpop.permute.xlu0 %2176
      %2178 = vrot.lane.b32.xlu0 %v1698, 20
      %v2179 = vpop.permute.xlu0 %2178
      %2180 = vrot.lane.b32.xlu0 %v2116, 20
      %v2181 = vpop.permute.xlu0 %2180
      %2182 = vrot.lane.b32.xlu0 %v2119, 20
      %v2183 = vpop.permute.xlu0 %2182
      %vm2216 = vcmask 191648
      %2217 = vst.msk [vmem:[#allocation3] sm:$0xf] %vm2216, %v2121
      %2218 = vst.msk [vmem:[#allocation3 + $0x4] sm:$0xf] %vm2216, %v2123
      %2219 = vst.msk [vmem:[#allocation3 + $0x8] sm:$0xf] %vm2216, %v2125
      %2220 = vst.msk [vmem:[#allocation3 + $0xc] sm:$0xf] %vm2216, %v2127
      %2221 = vst.msk [vmem:[#allocation3 + $0x10] sm:$0xf] %vm2216, %v2129
      %2222 = vst.msk [vmem:[#allocation3 + $0x14] sm:$0xf] %vm2216, %v2131
      %2223 = vst.msk [vmem:[#allocation3 + $0x18] sm:$0xf] %vm2216, %v2133
      %2224 = vst.msk [vmem:[#allocation3 + $0x1c] sm:$0xf] %vm2216, %v2135
      %2225 = vst.msk [vmem:[#allocation3 + $0x20] sm:$0xf] %vm2216, %v2137
      %2226 = vst.msk [vmem:[#allocation3 + $0x24] sm:$0xf] %vm2216, %v2139
      %2227 = vst.msk [vmem:[#allocation3 + $0x28] sm:$0xf] %vm2216, %v2141
      %2228 = vst.msk [vmem:[#allocation3 + $0x2c] sm:$0xf] %vm2216, %v2143
      %2229 = vst.msk [vmem:[#allocation3 + $0x30] sm:$0xf] %vm2216, %v2145
      %2230 = vst.msk [vmem:[#allocation3 + $0x34] sm:$0xf] %vm2216, %v2147
      %2231 = vst.msk [vmem:[#allocation3 + $0x38] sm:$0xf] %vm2216, %v2149
      %2232 = vst.msk [vmem:[#allocation3 + $0x3c] sm:$0xf] %vm2216, %v2151
      %2233 = vst.msk [vmem:[#allocation3 + $0x40] sm:$0xf] %vm2216, %v2153
      %2234 = vst.msk [vmem:[#allocation3 + $0x44] sm:$0xf] %vm2216, %v2155
      %2235 = vst.msk [vmem:[#allocation3 + $0x48] sm:$0xf] %vm2216, %v2157
      %2236 = vst.msk [vmem:[#allocation3 + $0x4c] sm:$0xf] %vm2216, %v2159
      %2237 = vst.msk [vmem:[#allocation3 + $0x50] sm:$0xf] %vm2216, %v2161
      %2238 = vst.msk [vmem:[#allocation3 + $0x54] sm:$0xf] %vm2216, %v2163
      %2239 = vst.msk [vmem:[#allocation3 + $0x58] sm:$0xf] %vm2216, %v2165
      %2240 = vst.msk [vmem:[#allocation3 + $0x5c] sm:$0xf] %vm2216, %v2167
      %2241 = vst.msk [vmem:[#allocation3 + $0x60] sm:$0xf] %vm2216, %v2169
      %2242 = vst.msk [vmem:[#allocation3 + $0x64] sm:$0xf] %vm2216, %v2171
      %2243 = vst.msk [vmem:[#allocation3 + $0x68] sm:$0xf] %vm2216, %v2173
      %2244 = vst.msk [vmem:[#allocation3 + $0x6c] sm:$0xf] %vm2216, %v2175
      %2245 = vst.msk [vmem:[#allocation3 + $0x70] sm:$0xf] %vm2216, %v2177
      %2246 = vst.msk [vmem:[#allocation3 + $0x74] sm:$0xf] %vm2216, %v2179
      %2247 = vst.msk [vmem:[#allocation3 + $0x78] sm:$0xf] %vm2216, %v2181
      %2248 = vst.msk [vmem:[#allocation3 + $0x7c] sm:$0xf] %vm2216, %v2183
      %2251 = vrot.lane.b32.xlu0 %v940, 24
      %v2252 = vpop.permute.xlu0 %2251
      %2253 = vrot.lane.b32.xlu0 %v941, 24
      %v2254 = vpop.permute.xlu0 %2253
      %2255 = vrot.lane.b32.xlu0 %v943, 24
      %v2256 = vpop.permute.xlu0 %2255
      %2257 = vrot.lane.b32.xlu0 %v944, 24
      %v2258 = vpop.permute.xlu0 %2257
      %2259 = vrot.lane.b32.xlu0 %v946, 24
      %v2260 = vpop.permute.xlu0 %2259
      %2261 = vrot.lane.b32.xlu0 %v947, 24
      %v2262 = vpop.permute.xlu0 %2261
      %2263 = vrot.lane.b32.xlu0 %v949, 24
      %v2264 = vpop.permute.xlu0 %2263
      %2265 = vrot.lane.b32.xlu0 %v950, 24
      %v2266 = vpop.permute.xlu0 %2265
      %2267 = vrot.lane.b32.xlu0 %v952, 24
      %v2268 = vpop.permute.xlu0 %2267
      %2269 = vrot.lane.b32.xlu0 %v953, 24
      %v2270 = vpop.permute.xlu0 %2269
      %2271 = vrot.lane.b32.xlu0 %v955, 24
      %v2272 = vpop.permute.xlu0 %2271
      %2273 = vrot.lane.b32.xlu0 %v956, 24
      %v2274 = vpop.permute.xlu0 %2273
      %2275 = vrot.lane.b32.xlu0 %v958, 24
      %v2276 = vpop.permute.xlu0 %2275
      %2277 = vrot.lane.b32.xlu0 %v959, 24
      %v2278 = vpop.permute.xlu0 %2277
      %2279 = vrot.lane.b32.xlu0 %v961, 24
      %v2280 = vpop.permute.xlu0 %2279
      %2281 = vrot.lane.b32.xlu0 %v962, 24
      %v2282 = vpop.permute.xlu0 %2281
      %2283 = vrot.lane.b32.xlu0 %v964, 24
      %v2284 = vpop.permute.xlu0 %2283
      %2285 = vrot.lane.b32.xlu0 %v965, 24
      %v2286 = vpop.permute.xlu0 %2285
      %2287 = vrot.lane.b32.xlu0 %v967, 24
      %v2288 = vpop.permute.xlu0 %2287
      %2289 = vrot.lane.b32.xlu0 %v968, 24
      %v2290 = vpop.permute.xlu0 %2289
      %2291 = vrot.lane.b32.xlu0 %v970, 24
      %v2292 = vpop.permute.xlu0 %2291
      %2293 = vrot.lane.b32.xlu0 %v971, 24
      %v2294 = vpop.permute.xlu0 %2293
      %2295 = vrot.lane.b32.xlu0 %v973, 24
      %v2296 = vpop.permute.xlu0 %2295
      %2297 = vrot.lane.b32.xlu0 %v974, 24
      %v2298 = vpop.permute.xlu0 %2297
      %2299 = vrot.lane.b32.xlu0 %v976, 24
      %v2300 = vpop.permute.xlu0 %2299
      %2301 = vrot.lane.b32.xlu0 %v977, 24
      %v2302 = vpop.permute.xlu0 %2301
      %2303 = vrot.lane.b32.xlu0 %v979, 24
      %v2304 = vpop.permute.xlu0 %2303
      %2305 = vrot.lane.b32.xlu0 %v980, 24
      %v2306 = vpop.permute.xlu0 %2305
      %2307 = vrot.lane.b32.xlu0 %v982, 24
      %v2308 = vpop.permute.xlu0 %2307
      %2309 = vrot.lane.b32.xlu0 %v983, 24
      %v2310 = vpop.permute.xlu0 %2309
      %2311 = vrot.lane.b32.xlu0 %v985, 24
      %v2312 = vpop.permute.xlu0 %2311
      %2313 = vrot.lane.b32.xlu0 %v986, 24
      %v2314 = vpop.permute.xlu0 %2313
      %vm2347 = vcmask 224448
      %2348 = vst.msk [vmem:[#allocation3] sm:$0xf] %vm2347, %v2252
      %2349 = vst.msk [vmem:[#allocation3 + $0x4] sm:$0xf] %vm2347, %v2254
      %2350 = vst.msk [vmem:[#allocation3 + $0x8] sm:$0xf] %vm2347, %v2256
      %2351 = vst.msk [vmem:[#allocation3 + $0xc] sm:$0xf] %vm2347, %v2258
      %2352 = vst.msk [vmem:[#allocation3 + $0x10] sm:$0xf] %vm2347, %v2260
      %2353 = vst.msk [vmem:[#allocation3 + $0x14] sm:$0xf] %vm2347, %v2262
      %2354 = vst.msk [vmem:[#allocation3 + $0x18] sm:$0xf] %vm2347, %v2264
      %2355 = vst.msk [vmem:[#allocation3 + $0x1c] sm:$0xf] %vm2347, %v2266
      %2356 = vst.msk [vmem:[#allocation3 + $0x20] sm:$0xf] %vm2347, %v2268
      %2357 = vst.msk [vmem:[#allocation3 + $0x24] sm:$0xf] %vm2347, %v2270
      %2358 = vst.msk [vmem:[#allocation3 + $0x28] sm:$0xf] %vm2347, %v2272
      %2359 = vst.msk [vmem:[#allocation3 + $0x2c] sm:$0xf] %vm2347, %v2274
      %2360 = vst.msk [vmem:[#allocation3 + $0x30] sm:$0xf] %vm2347, %v2276
      %2361 = vst.msk [vmem:[#allocation3 + $0x34] sm:$0xf] %vm2347, %v2278
      %2362 = vst.msk [vmem:[#allocation3 + $0x38] sm:$0xf] %vm2347, %v2280
      %2363 = vst.msk [vmem:[#allocation3 + $0x3c] sm:$0xf] %vm2347, %v2282
      %2364 = vst.msk [vmem:[#allocation3 + $0x40] sm:$0xf] %vm2347, %v2284
      %2365 = vst.msk [vmem:[#allocation3 + $0x44] sm:$0xf] %vm2347, %v2286
      %2366 = vst.msk [vmem:[#allocation3 + $0x48] sm:$0xf] %vm2347, %v2288
      %2367 = vst.msk [vmem:[#allocation3 + $0x4c] sm:$0xf] %vm2347, %v2290
      %2368 = vst.msk [vmem:[#allocation3 + $0x50] sm:$0xf] %vm2347, %v2292
      %2369 = vst.msk [vmem:[#allocation3 + $0x54] sm:$0xf] %vm2347, %v2294
      %2370 = vst.msk [vmem:[#allocation3 + $0x58] sm:$0xf] %vm2347, %v2296
      %2371 = vst.msk [vmem:[#allocation3 + $0x5c] sm:$0xf] %vm2347, %v2298
      %2372 = vst.msk [vmem:[#allocation3 + $0x60] sm:$0xf] %vm2347, %v2300
      %2373 = vst.msk [vmem:[#allocation3 + $0x64] sm:$0xf] %vm2347, %v2302
      %2374 = vst.msk [vmem:[#allocation3 + $0x68] sm:$0xf] %vm2347, %v2304
      %2375 = vst.msk [vmem:[#allocation3 + $0x6c] sm:$0xf] %vm2347, %v2306
      %2376 = vst.msk [vmem:[#allocation3 + $0x70] sm:$0xf] %vm2347, %v2308
      %2377 = vst.msk [vmem:[#allocation3 + $0x74] sm:$0xf] %vm2347, %v2310
      %2378 = vst.msk [vmem:[#allocation3 + $0x78] sm:$0xf] %vm2347, %v2312
      %2379 = vst.msk [vmem:[#allocation3 + $0x7c] sm:$0xf] %vm2347, %v2314
      %v2381 = vshrl.u32 %v985, 16
      %v2383 = vrot.slane %v2381, 4
      %v2384 = vshll.u32 %v985, 16
      %v2386 = vrot.slane %v2384, 5
      %v2387 = vor.u32 %v2383, %v2386
      %v2388 = vrot.slane %v2387, 4
      %v2390 = vshll.u32 %v986, 16
      %v2392 = vrot.slane %v2390, 5
      %v2393 = vsel %vm1022, %v2388, %v2392
      %v2394 = vshrl.u32 %v986, 16
      %v2396 = vrot.slane %v2394, 4
      %v2397 = vor.u32 %v2396, %v2392
      %v2398 = vrot.slane %v2397, 4
      %v2400 = vshll.u32 %v987, 16
      %v2402 = vrot.slane %v2400, 5
      %v2403 = vsel %vm1022, %v2398, %v2402
      %2404 = vrot.lane.b32.xlu0 %v1084, 28
      %v2405 = vpop.permute.xlu0 %2404
      %2406 = vrot.lane.b32.xlu0 %v1094, 28
      %v2407 = vpop.permute.xlu0 %2406
      %2408 = vrot.lane.b32.xlu0 %v1108, 28
      %v2409 = vpop.permute.xlu0 %2408
      %2410 = vrot.lane.b32.xlu0 %v1118, 28
      %v2411 = vpop.permute.xlu0 %2410
      %2412 = vrot.lane.b32.xlu0 %v1132, 28
      %v2413 = vpop.permute.xlu0 %2412
      %2414 = vrot.lane.b32.xlu0 %v1142, 28
      %v2415 = vpop.permute.xlu0 %2414
      %2416 = vrot.lane.b32.xlu0 %v1156, 28
      %v2417 = vpop.permute.xlu0 %2416
      %2418 = vrot.lane.b32.xlu0 %v1166, 28
      %v2419 = vpop.permute.xlu0 %2418
      %2420 = vrot.lane.b32.xlu0 %v1180, 28
      %v2421 = vpop.permute.xlu0 %2420
      %2422 = vrot.lane.b32.xlu0 %v1190, 28
      %v2423 = vpop.permute.xlu0 %2422
      %2424 = vrot.lane.b32.xlu0 %v1204, 28
      %v2425 = vpop.permute.xlu0 %2424
      %2426 = vrot.lane.b32.xlu0 %v1214, 28
      %v2427 = vpop.permute.xlu0 %2426
      %2428 = vrot.lane.b32.xlu0 %v1228, 28
      %v2429 = vpop.permute.xlu0 %2428
      %2430 = vrot.lane.b32.xlu0 %v1238, 28
      %v2431 = vpop.permute.xlu0 %2430
      %2432 = vrot.lane.b32.xlu0 %v1252, 28
      %v2433 = vpop.permute.xlu0 %2432
      %2434 = vrot.lane.b32.xlu0 %v1262, 28
      %v2435 = vpop.permute.xlu0 %2434
      %2436 = vrot.lane.b32.xlu0 %v1276, 28
      %v2437 = vpop.permute.xlu0 %2436
      %2438 = vrot.lane.b32.xlu0 %v1286, 28
      %v2439 = vpop.permute.xlu0 %2438
      %2440 = vrot.lane.b32.xlu0 %v1300, 28
      %v2441 = vpop.permute.xlu0 %2440
      %2442 = vrot.lane.b32.xlu0 %v1310, 28
      %v2443 = vpop.permute.xlu0 %2442
      %2444 = vrot.lane.b32.xlu0 %v1324, 28
      %v2445 = vpop.permute.xlu0 %2444
      %2446 = vrot.lane.b32.xlu0 %v1334, 28
      %v2447 = vpop.permute.xlu0 %2446
      %2448 = vrot.lane.b32.xlu0 %v1348, 28
      %v2449 = vpop.permute.xlu0 %2448
      %2450 = vrot.lane.b32.xlu0 %v1358, 28
      %v2451 = vpop.permute.xlu0 %2450
      %2452 = vrot.lane.b32.xlu0 %v1372, 28
      %v2453 = vpop.permute.xlu0 %2452
      %2454 = vrot.lane.b32.xlu0 %v1382, 28
      %v2455 = vpop.permute.xlu0 %2454
      %2456 = vrot.lane.b32.xlu0 %v1396, 28
      %v2457 = vpop.permute.xlu0 %2456
      %2458 = vrot.lane.b32.xlu0 %v1406, 28
      %v2459 = vpop.permute.xlu0 %2458
      %2460 = vrot.lane.b32.xlu0 %v1972, 28
      %v2461 = vpop.permute.xlu0 %2460
      %2462 = vrot.lane.b32.xlu0 %v1982, 28
      %v2463 = vpop.permute.xlu0 %2462
      %2464 = vrot.lane.b32.xlu0 %v2393, 28
      %v2465 = vpop.permute.xlu0 %2464
      %2466 = vrot.lane.b32.xlu0 %v2403, 28
      %v2467 = vpop.permute.xlu0 %2466
      %vm2500 = vcmask 257248
      %2501 = vst.msk [vmem:[#allocation3] sm:$0xf] %vm2500, %v2405
      %2502 = vst.msk [vmem:[#allocation3 + $0x4] sm:$0xf] %vm2500, %v2407
      %2503 = vst.msk [vmem:[#allocation3 + $0x8] sm:$0xf] %vm2500, %v2409
      %2504 = vst.msk [vmem:[#allocation3 + $0xc] sm:$0xf] %vm2500, %v2411
      %2505 = vst.msk [vmem:[#allocation3 + $0x10] sm:$0xf] %vm2500, %v2413
      %2506 = vst.msk [vmem:[#allocation3 + $0x14] sm:$0xf] %vm2500, %v2415
      %2507 = vst.msk [vmem:[#allocation3 + $0x18] sm:$0xf] %vm2500, %v2417
      %2508 = vst.msk [vmem:[#allocation3 + $0x1c] sm:$0xf] %vm2500, %v2419
      %2509 = vst.msk [vmem:[#allocation3 + $0x20] sm:$0xf] %vm2500, %v2421
      %2510 = vst.msk [vmem:[#allocation3 + $0x24] sm:$0xf] %vm2500, %v2423
      %2511 = vst.msk [vmem:[#allocation3 + $0x28] sm:$0xf] %vm2500, %v2425
      %2512 = vst.msk [vmem:[#allocation3 + $0x2c] sm:$0xf] %vm2500, %v2427
      %2513 = vst.msk [vmem:[#allocation3 + $0x30] sm:$0xf] %vm2500, %v2429
      %2514 = vst.msk [vmem:[#allocation3 + $0x34] sm:$0xf] %vm2500, %v2431
      %2515 = vst.msk [vmem:[#allocation3 + $0x38] sm:$0xf] %vm2500, %v2433
      %2516 = vst.msk [vmem:[#allocation3 + $0x3c] sm:$0xf] %vm2500, %v2435
      %2517 = vst.msk [vmem:[#allocation3 + $0x40] sm:$0xf] %vm2500, %v2437
      %2518 = vst.msk [vmem:[#allocation3 + $0x44] sm:$0xf] %vm2500, %v2439
      %2519 = vst.msk [vmem:[#allocation3 + $0x48] sm:$0xf] %vm2500, %v2441
      %2520 = vst.msk [vmem:[#allocation3 + $0x4c] sm:$0xf] %vm2500, %v2443
      %2521 = vst.msk [vmem:[#allocation3 + $0x50] sm:$0xf] %vm2500, %v2445
      %2522 = vst.msk [vmem:[#allocation3 + $0x54] sm:$0xf] %vm2500, %v2447
      %2523 = vst.msk [vmem:[#allocation3 + $0x58] sm:$0xf] %vm2500, %v2449
      %2524 = vst.msk [vmem:[#allocation3 + $0x5c] sm:$0xf] %vm2500, %v2451
      %2525 = vst.msk [vmem:[#allocation3 + $0x60] sm:$0xf] %vm2500, %v2453
      %2526 = vst.msk [vmem:[#allocation3 + $0x64] sm:$0xf] %vm2500, %v2455
      %2527 = vst.msk [vmem:[#allocation3 + $0x68] sm:$0xf] %vm2500, %v2457
      %2528 = vst.msk [vmem:[#allocation3 + $0x6c] sm:$0xf] %vm2500, %v2459
      %2529 = vst.msk [vmem:[#allocation3 + $0x70] sm:$0xf] %vm2500, %v2461
      %2530 = vst.msk [vmem:[#allocation3 + $0x74] sm:$0xf] %vm2500, %v2463
      %2531 = vst.msk [vmem:[#allocation3 + $0x78] sm:$0xf] %vm2500, %v2465
      %2532 = vst.msk [vmem:[#allocation3 + $0x7c] sm:$0xf] %vm2500, %v2467
      %v2534 = vrot.slane %v985, 5
      %v2535 = vrot.slane %v2534, 4
      %v2536 = vrot.slane %v986, 5
      %v2537 = vsel %vm1586, %v2535, %v2536
      %v2538 = vrot.slane %v2536, 4
      %v2539 = vrot.slane %v987, 5
      %v2540 = vsel %vm1586, %v2538, %v2539
      %2541 = vrot.lane.b32.xlu0 %v1604, 32
      %v2542 = vpop.permute.xlu0 %2541
      %2543 = vrot.lane.b32.xlu0 %v1607, 32
      %v2544 = vpop.permute.xlu0 %2543
      %2545 = vrot.lane.b32.xlu0 %v1611, 32
      %v2546 = vpop.permute.xlu0 %2545
      %2547 = vrot.lane.b32.xlu0 %v1614, 32
      %v2548 = vpop.permute.xlu0 %2547
      %2549 = vrot.lane.b32.xlu0 %v1618, 32
      %v2550 = vpop.permute.xlu0 %2549
      %2551 = vrot.lane.b32.xlu0 %v1621, 32
      %v2552 = vpop.permute.xlu0 %2551
      %2553 = vrot.lane.b32.xlu0 %v1625, 32
      %v2554 = vpop.permute.xlu0 %2553
      %2555 = vrot.lane.b32.xlu0 %v1628, 32
      %v2556 = vpop.permute.xlu0 %2555
      %2557 = vrot.lane.b32.xlu0 %v1632, 32
      %v2558 = vpop.permute.xlu0 %2557
      %2559 = vrot.lane.b32.xlu0 %v1635, 32
      %v2560 = vpop.permute.xlu0 %2559
      %2561 = vrot.lane.b32.xlu0 %v1639, 32
      %v2562 = vpop.permute.xlu0 %2561
      %2563 = vrot.lane.b32.xlu0 %v1642, 32
      %v2564 = vpop.permute.xlu0 %2563
      %2565 = vrot.lane.b32.xlu0 %v1646, 32
      %v2566 = vpop.permute.xlu0 %2565
      %2567 = vrot.lane.b32.xlu0 %v1649, 32
      %v2568 = vpop.permute.xlu0 %2567
      %2569 = vrot.lane.b32.xlu0 %v1653, 32
      %v2570 = vpop.permute.xlu0 %2569
      %2571 = vrot.lane.b32.xlu0 %v1656, 32
      %v2572 = vpop.permute.xlu0 %2571
      %2573 = vrot.lane.b32.xlu0 %v1660, 32
      %v2574 = vpop.permute.xlu0 %2573
      %2575 = vrot.lane.b32.xlu0 %v1663, 32
      %v2576 = vpop.permute.xlu0 %2575
      %2577 = vrot.lane.b32.xlu0 %v1667, 32
      %v2578 = vpop.permute.xlu0 %2577
      %2579 = vrot.lane.b32.xlu0 %v1670, 32
      %v2580 = vpop.permute.xlu0 %2579
      %2581 = vrot.lane.b32.xlu0 %v1674, 32
      %v2582 = vpop.permute.xlu0 %2581
      %2583 = vrot.lane.b32.xlu0 %v1677, 32
      %v2584 = vpop.permute.xlu0 %2583
      %2585 = vrot.lane.b32.xlu0 %v1681, 32
      %v2586 = vpop.permute.xlu0 %2585
      %2587 = vrot.lane.b32.xlu0 %v1684, 32
      %v2588 = vpop.permute.xlu0 %2587
      %2589 = vrot.lane.b32.xlu0 %v1688, 32
      %v2590 = vpop.permute.xlu0 %2589
      %2591 = vrot.lane.b32.xlu0 %v1691, 32
      %v2592 = vpop.permute.xlu0 %2591
      %2593 = vrot.lane.b32.xlu0 %v1695, 32
      %v2594 = vpop.permute.xlu0 %2593
      %2595 = vrot.lane.b32.xlu0 %v1698, 32
      %v2596 = vpop.permute.xlu0 %2595
      %2597 = vrot.lane.b32.xlu0 %v2116, 32
      %v2598 = vpop.permute.xlu0 %2597
      %2599 = vrot.lane.b32.xlu0 %v2119, 32
      %v2600 = vpop.permute.xlu0 %2599
      %2601 = vrot.lane.b32.xlu0 %v2537, 32
      %v2602 = vpop.permute.xlu0 %2601
      %2603 = vrot.lane.b32.xlu0 %v2540, 32
      %v2604 = vpop.permute.xlu0 %2603
      %vm2637 = vcmask 290048
      %2638 = vst.msk [vmem:[#allocation3] sm:$0xf] %vm2637, %v2542
      %2639 = vst.msk [vmem:[#allocation3 + $0x4] sm:$0xf] %vm2637, %v2544
      %2640 = vst.msk [vmem:[#allocation3 + $0x8] sm:$0xf] %vm2637, %v2546
      %2641 = vst.msk [vmem:[#allocation3 + $0xc] sm:$0xf] %vm2637, %v2548
      %2642 = vst.msk [vmem:[#allocation3 + $0x10] sm:$0xf] %vm2637, %v2550
      %2643 = vst.msk [vmem:[#allocation3 + $0x14] sm:$0xf] %vm2637, %v2552
      %2644 = vst.msk [vmem:[#allocation3 + $0x18] sm:$0xf] %vm2637, %v2554
      %2645 = vst.msk [vmem:[#allocation3 + $0x1c] sm:$0xf] %vm2637, %v2556
      %2646 = vst.msk [vmem:[#allocation3 + $0x20] sm:$0xf] %vm2637, %v2558
      %2647 = vst.msk [vmem:[#allocation3 + $0x24] sm:$0xf] %vm2637, %v2560
      %2648 = vst.msk [vmem:[#allocation3 + $0x28] sm:$0xf] %vm2637, %v2562
      %2649 = vst.msk [vmem:[#allocation3 + $0x2c] sm:$0xf] %vm2637, %v2564
      %2650 = vst.msk [vmem:[#allocation3 + $0x30] sm:$0xf] %vm2637, %v2566
      %2651 = vst.msk [vmem:[#allocation3 + $0x34] sm:$0xf] %vm2637, %v2568
      %2652 = vst.msk [vmem:[#allocation3 + $0x38] sm:$0xf] %vm2637, %v2570
      %2653 = vst.msk [vmem:[#allocation3 + $0x3c] sm:$0xf] %vm2637, %v2572
      %2654 = vst.msk [vmem:[#allocation3 + $0x40] sm:$0xf] %vm2637, %v2574
      %2655 = vst.msk [vmem:[#allocation3 + $0x44] sm:$0xf] %vm2637, %v2576
      %2656 = vst.msk [vmem:[#allocation3 + $0x48] sm:$0xf] %vm2637, %v2578
      %2657 = vst.msk [vmem:[#allocation3 + $0x4c] sm:$0xf] %vm2637, %v2580
      %2658 = vst.msk [vmem:[#allocation3 + $0x50] sm:$0xf] %vm2637, %v2582
      %2659 = vst.msk [vmem:[#allocation3 + $0x54] sm:$0xf] %vm2637, %v2584
      %2660 = vst.msk [vmem:[#allocation3 + $0x58] sm:$0xf] %vm2637, %v2586
      %2661 = vst.msk [vmem:[#allocation3 + $0x5c] sm:$0xf] %vm2637, %v2588
      %2662 = vst.msk [vmem:[#allocation3 + $0x60] sm:$0xf] %vm2637, %v2590
      %2663 = vst.msk [vmem:[#allocation3 + $0x64] sm:$0xf] %vm2637, %v2592
      %2664 = vst.msk [vmem:[#allocation3 + $0x68] sm:$0xf] %vm2637, %v2594
      %2665 = vst.msk [vmem:[#allocation3 + $0x6c] sm:$0xf] %vm2637, %v2596
      %2666 = vst.msk [vmem:[#allocation3 + $0x70] sm:$0xf] %vm2637, %v2598
      %2667 = vst.msk [vmem:[#allocation3 + $0x74] sm:$0xf] %vm2637, %v2600
      %2668 = vst.msk [vmem:[#allocation3 + $0x78] sm:$0xf] %vm2637, %v2602
      %2669 = vst.msk [vmem:[#allocation3 + $0x7c] sm:$0xf] %vm2637, %v2604
      %v2670 = vld [vmem:[#allocation3] sm:$0xf]
      %v2671 = vld [vmem:[#allocation3 + $0x4] sm:$0xf]
      %v2672 = vld [vmem:[#allocation3 + $0x8] sm:$0xf]
      %v2673 = vld [vmem:[#allocation3 + $0xc] sm:$0xf]
      %v2674 = vld [vmem:[#allocation3 + $0x10] sm:$0xf]
      %v2675 = vld [vmem:[#allocation3 + $0x14] sm:$0xf]
      %v2676 = vld [vmem:[#allocation3 + $0x18] sm:$0xf]
      %v2677 = vld [vmem:[#allocation3 + $0x1c] sm:$0xf]
      %v2678 = vld [vmem:[#allocation3 + $0x20] sm:$0xf]
      %v2679 = vld [vmem:[#allocation3 + $0x24] sm:$0xf]
      %v2680 = vld [vmem:[#allocation3 + $0x28] sm:$0xf]
      %v2681 = vld [vmem:[#allocation3 + $0x2c] sm:$0xf]
      %v2682 = vld [vmem:[#allocation3 + $0x30] sm:$0xf]
      %v2683 = vld [vmem:[#allocation3 + $0x34] sm:$0xf]
      %v2684 = vld [vmem:[#allocation3 + $0x38] sm:$0xf]
      %v2685 = vld [vmem:[#allocation3 + $0x3c] sm:$0xf]
      %v2686 = vld [vmem:[#allocation3 + $0x40] sm:$0xf]
      %v2687 = vld [vmem:[#allocation3 + $0x44] sm:$0xf]
      %v2688 = vld [vmem:[#allocation3 + $0x48] sm:$0xf]
      %v2689 = vld [vmem:[#allocation3 + $0x4c] sm:$0xf]
      %v2690 = vld [vmem:[#allocation3 + $0x50] sm:$0xf]
      %v2691 = vld [vmem:[#allocation3 + $0x54] sm:$0xf]
      %v2692 = vld [vmem:[#allocation3 + $0x58] sm:$0xf]
      %v2693 = vld [vmem:[#allocation3 + $0x5c] sm:$0xf]
      %v2694 = vld [vmem:[#allocation3 + $0x60] sm:$0xf]
      %v2695 = vld [vmem:[#allocation3 + $0x64] sm:$0xf]
      %v2696 = vld [vmem:[#allocation3 + $0x68] sm:$0xf]
      %v2697 = vld [vmem:[#allocation3 + $0x6c] sm:$0xf]
      %v2698 = vld [vmem:[#allocation3 + $0x70] sm:$0xf]
      %v2699 = vld [vmem:[#allocation3 + $0x74] sm:$0xf]
      %v2700 = vld [vmem:[#allocation3 + $0x78] sm:$0xf]
      %v2701 = vld [vmem:[#allocation3 + $0x7c] sm:$0xf]
      %v2702 = vld [vmem:[%s3] sm:$0xf]
      %v2703 = vld [vmem:[%s3 + $0x4] sm:$0xf]
      %v2704 = vld [vmem:[%s3 + $0x8] sm:$0xf]
      %v2705 = vld [vmem:[%s3 + $0xc] sm:$0xf]
      %v2706 = vld [vmem:[%s3 + $0x10] sm:$0x3]
      %v2739 = vunpack.c.l.b16 %v2670
      %v2740 = vunpack.c.l.b16 %v2671
      %v2741 = vunpack.c.l.b16 %v2672
      %v2742 = vunpack.c.l.b16 %v2673
      %v2743 = vunpack.c.l.b16 %v2674
      %v2744 = vunpack.c.l.b16 %v2675
      %v2745 = vunpack.c.l.b16 %v2676
      %v2746 = vunpack.c.l.b16 %v2677
      %v2747 = vunpack.c.l.b16 %v2678
      %v2748 = vunpack.c.l.b16 %v2679
      %v2749 = vunpack.c.l.b16 %v2680
      %v2750 = vunpack.c.l.b16 %v2681
      %v2751 = vunpack.c.l.b16 %v2682
      %v2752 = vunpack.c.l.b16 %v2683
      %v2753 = vunpack.c.l.b16 %v2684
      %v2754 = vunpack.c.l.b16 %v2685
      %v2755 = vunpack.c.l.b16 %v2686
      %v2756 = vunpack.c.l.b16 %v2687
      %v2757 = vunpack.c.l.b16 %v2688
      %v2758 = vunpack.c.l.b16 %v2689
      %v2759 = vunpack.c.l.b16 %v2690
      %v2760 = vunpack.c.l.b16 %v2691
      %v2761 = vunpack.c.l.b16 %v2692
      %v2762 = vunpack.c.l.b16 %v2693
      %v2763 = vunpack.c.l.b16 %v2694
      %v2764 = vunpack.c.l.b16 %v2695
      %v2765 = vunpack.c.l.b16 %v2696
      %v2766 = vunpack.c.l.b16 %v2697
      %v2767 = vunpack.c.l.b16 %v2698
      %v2768 = vunpack.c.l.b16 %v2699
      %v2769 = vunpack.c.l.b16 %v2700
      %v2770 = vunpack.c.l.b16 %v2701
      %v2771 = vpack.c.b16 %v2740, %v2739
      %v2772 = vpack.c.b16 %v2742, %v2741
      %v2773 = vpack.c.b16 %v2744, %v2743
      %v2774 = vpack.c.b16 %v2746, %v2745
      %v2775 = vpack.c.b16 %v2748, %v2747
      %v2776 = vpack.c.b16 %v2750, %v2749
      %v2777 = vpack.c.b16 %v2752, %v2751
      %v2778 = vpack.c.b16 %v2754, %v2753
      %v2779 = vpack.c.b16 %v2756, %v2755
      %v2780 = vpack.c.b16 %v2758, %v2757
      %v2781 = vpack.c.b16 %v2760, %v2759
      %v2782 = vpack.c.b16 %v2762, %v2761
      %v2783 = vpack.c.b16 %v2764, %v2763
      %v2784 = vpack.c.b16 %v2766, %v2765
      %v2785 = vpack.c.b16 %v2768, %v2767
      %v2786 = vpack.c.b16 %v2770, %v2769
      %v2792 = vunpack.c.l.b16 %v2702
      %v2793 = vunpack.c.l.b16 %v2703
      %v2794 = vunpack.c.l.b16 %v2704
      %v2795 = vunpack.c.l.b16 %v2705
      %v2796 = vunpack.c.l.b16 %v2706
      %v2797 = vpack.c.b16 %v2793, %v2792
      %v2798 = vpack.c.b16 %v2795, %v2794
      %v2799 = vpack.c.b16 %v2796, %v2796
      %vm2802 = vcmask 293888
      %v2804 = vsel %vm2802, %v2771, 0
      %v2807 = vsel %vm2802, %v2772, 0
      %v2810 = vsel %vm2802, %v2773, 0
      %v2813 = vsel %vm2802, %v2774, 0
      %v2816 = vsel %vm2802, %v2775, 0
      %v2819 = vsel %vm2802, %v2776, 0
      %v2822 = vsel %vm2802, %v2777, 0
      %v2825 = vsel %vm2802, %v2778, 0
      %v2828 = vsel %vm2802, %v2779, 0
      %v2831 = vsel %vm2802, %v2780, 0
      %v2834 = vsel %vm2802, %v2781, 0
      %v2837 = vsel %vm2802, %v2782, 0
      %v2840 = vsel %vm2802, %v2783, 0
      %v2843 = vsel %vm2802, %v2784, 0
      %v2846 = vsel %vm2802, %v2785, 0
      %v2849 = vsel %vm2802, %v2786, 0
      %vm2851 = vcmask 1041408
      %v2853 = vsel %vm2851, %v2799, 0
      %2855 = vmatpush.bf16.msra.mxu0 0
      %2856 = vmatpush.bf16.msra.mxu0 0
      %2857 = vmatpush.bf16.msra.mxu0 0
      %2858 = vmatpush.bf16.msra.mxu0 0
      %2859 = vmatpush.bf16.msra.mxu0 0
      %2860 = vmatpush.bf16.msra.mxu0 %v2853
      %2861 = vmatpush.bf16.msra.mxu0 %v2798
      %2862 = vmatpush.bf16.msra.mxu0 %v2797
      %2863 = vmatmul.bf16.gmra.mxu0 %v2804
      %v2864 = vpop.f32.mrf.mxu0
      %v2865 = vadd.f32 0.0, %v2864
      %v2866 = vpop.f32.mrf.mxu0
      %v2867 = vadd.f32 0.0, %v2866
      %2868 = vmatmul.bf16.gmra.mxu0 %v2807
      %v2869 = vpop.f32.mrf.mxu0
      %v2870 = vadd.f32 0.0, %v2869
      %v2871 = vpop.f32.mrf.mxu0
      %v2872 = vadd.f32 0.0, %v2871
      %2873 = vmatmul.bf16.gmra.mxu0 %v2810
      %v2874 = vpop.f32.mrf.mxu0
      %v2875 = vadd.f32 0.0, %v2874
      %v2876 = vpop.f32.mrf.mxu0
      %v2877 = vadd.f32 0.0, %v2876
      %2878 = vmatmul.bf16.gmra.mxu0 %v2813
      %v2879 = vpop.f32.mrf.mxu0
      %v2880 = vadd.f32 0.0, %v2879
      %v2881 = vpop.f32.mrf.mxu0
      %v2882 = vadd.f32 0.0, %v2881
      %2883 = vmatmul.bf16.gmra.mxu0 %v2816
      %v2884 = vpop.f32.mrf.mxu0
      %v2885 = vadd.f32 0.0, %v2884
      %v2886 = vpop.f32.mrf.mxu0
      %v2887 = vadd.f32 0.0, %v2886
      %2888 = vmatmul.bf16.gmra.mxu0 %v2819
      %v2889 = vpop.f32.mrf.mxu0
      %v2890 = vadd.f32 0.0, %v2889
      %v2891 = vpop.f32.mrf.mxu0
      %v2892 = vadd.f32 0.0, %v2891
      %2893 = vmatmul.bf16.gmra.mxu0 %v2822
      %v2894 = vpop.f32.mrf.mxu0
      %v2895 = vadd.f32 0.0, %v2894
      %v2896 = vpop.f32.mrf.mxu0
      %v2897 = vadd.f32 0.0, %v2896
      %2898 = vmatmul.bf16.gmra.mxu0 %v2825
      %v2899 = vpop.f32.mrf.mxu0
      %v2900 = vadd.f32 0.0, %v2899
      %v2901 = vpop.f32.mrf.mxu0
      %v2902 = vadd.f32 0.0, %v2901
      %2903 = vmatmul.bf16.gmra.mxu0 %v2828
      %v2904 = vpop.f32.mrf.mxu0
      %v2905 = vadd.f32 0.0, %v2904
      %v2906 = vpop.f32.mrf.mxu0
      %v2907 = vadd.f32 0.0, %v2906
      %2908 = vmatmul.bf16.gmra.mxu0 %v2831
      %v2909 = vpop.f32.mrf.mxu0
      %v2910 = vadd.f32 0.0, %v2909
      %v2911 = vpop.f32.mrf.mxu0
      %v2912 = vadd.f32 0.0, %v2911
      %2913 = vmatmul.bf16.gmra.mxu0 %v2834
      %v2914 = vpop.f32.mrf.mxu0
      %v2915 = vadd.f32 0.0, %v2914
      %v2916 = vpop.f32.mrf.mxu0
      %v2917 = vadd.f32 0.0, %v2916
      %2918 = vmatmul.bf16.gmra.mxu0 %v2837
      %v2919 = vpop.f32.mrf.mxu0
      %v2920 = vadd.f32 0.0, %v2919
      %v2921 = vpop.f32.mrf.mxu0
      %v2922 = vadd.f32 0.0, %v2921
      %2923 = vmatmul.bf16.gmra.mxu0 %v2840
      %v2924 = vpop.f32.mrf.mxu0
      %v2925 = vadd.f32 0.0, %v2924
      %v2926 = vpop.f32.mrf.mxu0
      %v2927 = vadd.f32 0.0, %v2926
      %2928 = vmatmul.bf16.gmra.mxu0 %v2843
      %v2929 = vpop.f32.mrf.mxu0
      %v2930 = vadd.f32 0.0, %v2929
      %v2931 = vpop.f32.mrf.mxu0
      %v2932 = vadd.f32 0.0, %v2931
      %2933 = vmatmul.bf16.gmra.mxu0 %v2846
      %v2934 = vpop.f32.mrf.mxu0
      %v2935 = vadd.f32 0.0, %v2934
      %v2936 = vpop.f32.mrf.mxu0
      %v2937 = vadd.f32 0.0, %v2936
      %2938 = vmatmul.bf16.gmra.mxu0 %v2849
      %v2939 = vpop.f32.mrf.mxu0
      %v2940 = vadd.f32 0.0, %v2939
      %v2941 = vpop.f32.mrf.mxu0
      %v2942 = vadd.f32 0.0, %v2941
      %2943 = vdwg.mxu0
      %v2944 = vpack.c.bf16 %v2865, %v2865
      %v2945 = vpack.c.bf16 %v2867, %v2867
      %v2946 = vpack.c.bf16 %v2870, %v2870
      %v2947 = vpack.c.bf16 %v2872, %v2872
      %v2948 = vpack.c.bf16 %v2875, %v2875
      %v2949 = vpack.c.bf16 %v2877, %v2877
      %v2950 = vpack.c.bf16 %v2880, %v2880
      %v2951 = vpack.c.bf16 %v2882, %v2882
      %v2952 = vpack.c.bf16 %v2885, %v2885
      %v2953 = vpack.c.bf16 %v2887, %v2887
      %v2954 = vpack.c.bf16 %v2890, %v2890
      %v2955 = vpack.c.bf16 %v2892, %v2892
      %v2956 = vpack.c.bf16 %v2895, %v2895
      %v2957 = vpack.c.bf16 %v2897, %v2897
      %v2958 = vpack.c.bf16 %v2900, %v2900
      %v2959 = vpack.c.bf16 %v2902, %v2902
      %v2960 = vpack.c.bf16 %v2905, %v2905
      %v2961 = vpack.c.bf16 %v2907, %v2907
      %v2962 = vpack.c.bf16 %v2910, %v2910
      %v2963 = vpack.c.bf16 %v2912, %v2912
      %v2964 = vpack.c.bf16 %v2915, %v2915
      %v2965 = vpack.c.bf16 %v2917, %v2917
      %v2966 = vpack.c.bf16 %v2920, %v2920
      %v2967 = vpack.c.bf16 %v2922, %v2922
      %v2968 = vpack.c.bf16 %v2925, %v2925
      %v2969 = vpack.c.bf16 %v2927, %v2927
      %v2970 = vpack.c.bf16 %v2930, %v2930
      %v2971 = vpack.c.bf16 %v2932, %v2932
      %v2972 = vpack.c.bf16 %v2935, %v2935
      %v2973 = vpack.c.bf16 %v2937, %v2937
      %v2974 = vpack.c.bf16 %v2940, %v2940
      %v2975 = vpack.c.bf16 %v2942, %v2942
      %2976 = vst.msk [vmem:[%s231] sm:$0xf] %vm405, %v2944
      %2977 = vst.msk [vmem:[%s231 + $0x4] sm:$0xf] %vm405, %v2945
      %2978 = vst.msk [vmem:[%s231 + $0x8] sm:$0xf] %vm405, %v2946
      %2979 = vst.msk [vmem:[%s231 + $0xc] sm:$0xf] %vm405, %v2947
      %2980 = vst.msk [vmem:[%s231 + $0x10] sm:$0xf] %vm405, %v2948
      %2981 = vst.msk [vmem:[%s231 + $0x14] sm:$0xf] %vm405, %v2949
      %2982 = vst.msk [vmem:[%s231 + $0x18] sm:$0xf] %vm405, %v2950
      %2983 = vst.msk [vmem:[%s231 + $0x1c] sm:$0xf] %vm405, %v2951
      %2984 = vst.msk [vmem:[%s231 + $0x20] sm:$0xf] %vm405, %v2952
      %2985 = vst.msk [vmem:[%s231 + $0x24] sm:$0xf] %vm405, %v2953
      %2986 = vst.msk [vmem:[%s231 + $0x28] sm:$0xf] %vm405, %v2954
      %2987 = vst.msk [vmem:[%s231 + $0x2c] sm:$0xf] %vm405, %v2955
      %2988 = vst.msk [vmem:[%s231 + $0x30] sm:$0xf] %vm405, %v2956
      %2989 = vst.msk [vmem:[%s231 + $0x34] sm:$0xf] %vm405, %v2957
      %2990 = vst.msk [vmem:[%s231 + $0x38] sm:$0xf] %vm405, %v2958
      %2991 = vst.msk [vmem:[%s231 + $0x3c] sm:$0xf] %vm405, %v2959
      %2992 = vst.msk [vmem:[%s231 + $0x40] sm:$0xf] %vm405, %v2960
      %2993 = vst.msk [vmem:[%s231 + $0x44] sm:$0xf] %vm405, %v2961
      %2994 = vst.msk [vmem:[%s231 + $0x48] sm:$0xf] %vm405, %v2962
      %2995 = vst.msk [vmem:[%s231 + $0x4c] sm:$0xf] %vm405, %v2963
      %2996 = vst.msk [vmem:[%s231 + $0x50] sm:$0xf] %vm405, %v2964
      %2997 = vst.msk [vmem:[%s231 + $0x54] sm:$0xf] %vm405, %v2965
      %2998 = vst.msk [vmem:[%s231 + $0x58] sm:$0xf] %vm405, %v2966
      %2999 = vst.msk [vmem:[%s231 + $0x5c] sm:$0xf] %vm405, %v2967
      %3000 = vst.msk [vmem:[%s231 + $0x60] sm:$0xf] %vm405, %v2968
      %3001 = vst.msk [vmem:[%s231 + $0x64] sm:$0xf] %vm405, %v2969
      %3002 = vst.msk [vmem:[%s231 + $0x68] sm:$0xf] %vm405, %v2970
      %3003 = vst.msk [vmem:[%s231 + $0x6c] sm:$0xf] %vm405, %v2971
      %3004 = vst.msk [vmem:[%s231 + $0x70] sm:$0xf] %vm405, %v2972
      %3005 = vst.msk [vmem:[%s231 + $0x74] sm:$0xf] %vm405, %v2973
      %3006 = vst.msk [vmem:[%s231 + $0x78] sm:$0xf] %vm405, %v2974
      %3007 = vst.msk [vmem:[%s231 + $0x7c] sm:$0xf] %vm405, %v2975
      %vm3008 = vcmask 31744
      %v3009 = vsel %vm3008, %v2865, 0.0
      %v3010 = vsel %vm3008, %v2867, 0.0
      %v3011 = vadd.f32 %v3009, %v3010
      %v3012 = vsel %vm3008, %v2870, 0.0
      %v3013 = vadd.f32 %v3011, %v3012
      %v3014 = vsel %vm3008, %v2872, 0.0
      %v3015 = vadd.f32 %v3013, %v3014
      %v3016 = vsel %vm3008, %v2875, 0.0
      %v3017 = vadd.f32 %v3015, %v3016
      %v3018 = vsel %vm3008, %v2877, 0.0
      %v3019 = vadd.f32 %v3017, %v3018
      %v3020 = vsel %vm3008, %v2880, 0.0
      %v3021 = vadd.f32 %v3019, %v3020
      %v3022 = vsel %vm3008, %v2882, 0.0
      %v3023 = vadd.f32 %v3021, %v3022
      %v3024 = vsel %vm3008, %v2885, 0.0
      %v3025 = vadd.f32 %v3023, %v3024
      %v3026 = vsel %vm3008, %v2887, 0.0
      %v3027 = vadd.f32 %v3025, %v3026
      %v3028 = vsel %vm3008, %v2890, 0.0
      %v3029 = vadd.f32 %v3027, %v3028
      %v3030 = vsel %vm3008, %v2892, 0.0
      %v3031 = vadd.f32 %v3029, %v3030
      %v3032 = vsel %vm3008, %v2895, 0.0
      %v3033 = vadd.f32 %v3031, %v3032
      %v3034 = vsel %vm3008, %v2897, 0.0
      %v3035 = vadd.f32 %v3033, %v3034
      %v3036 = vsel %vm3008, %v2900, 0.0
      %v3037 = vadd.f32 %v3035, %v3036
      %v3038 = vsel %vm3008, %v2902, 0.0
      %v3039 = vadd.f32 %v3037, %v3038
      %v3040 = vsel %vm3008, %v2905, 0.0
      %v3041 = vadd.f32 %v3039, %v3040
      %v3042 = vsel %vm3008, %v2907, 0.0
      %v3043 = vadd.f32 %v3041, %v3042
      %v3044 = vsel %vm3008, %v2910, 0.0
      %v3045 = vadd.f32 %v3043, %v3044
      %v3046 = vsel %vm3008, %v2912, 0.0
      %v3047 = vadd.f32 %v3045, %v3046
      %v3048 = vsel %vm3008, %v2915, 0.0
      %v3049 = vadd.f32 %v3047, %v3048
      %v3050 = vsel %vm3008, %v2917, 0.0
      %v3051 = vadd.f32 %v3049, %v3050
      %v3052 = vsel %vm3008, %v2920, 0.0
      %v3053 = vadd.f32 %v3051, %v3052
      %v3054 = vsel %vm3008, %v2922, 0.0
      %v3055 = vadd.f32 %v3053, %v3054
      %v3056 = vsel %vm3008, %v2925, 0.0
      %v3057 = vadd.f32 %v3055, %v3056
      %v3058 = vsel %vm3008, %v2927, 0.0
      %v3059 = vadd.f32 %v3057, %v3058
      %v3060 = vsel %vm3008, %v2930, 0.0
      %v3061 = vadd.f32 %v3059, %v3060
      %v3062 = vsel %vm3008, %v2932, 0.0
      %v3063 = vadd.f32 %v3061, %v3062
      %v3064 = vsel %vm3008, %v2935, 0.0
      %v3065 = vadd.f32 %v3063, %v3064
      %v3066 = vsel %vm3008, %v2937, 0.0
      %v3067 = vadd.f32 %v3065, %v3066
      %v3068 = vsel %vm3008, %v2940, 0.0
      %v3069 = vadd.f32 %v3067, %v3068
      %v3070 = vsel %vm3008, %v2942, 0.0
      %v3071 = vadd.f32 %v3069, %v3070
      %v3072 = vrot.slane %v3071, 4
      %v3073 = vadd.f32 %v3071, %v3072
      %v3074 = vrot.slane %v3073, 2
      %v3075 = vadd.f32 %v3073, %v3074
      %v3076 = vrot.slane %v3075, 1
      %v3077 = vadd.f32 %v3075, %v3076
      %3078 = vst.msk [vmem:[%s235] sm:$0x1] %vm408, %v3077
      %v3079 = vmul.f32 %v2865, %v2865
      %v3080 = vmul.f32 %v2867, %v2867
      %v3081 = vmul.f32 %v2870, %v2870
      %v3082 = vmul.f32 %v2872, %v2872
      %v3083 = vmul.f32 %v2875, %v2875
      %v3084 = vmul.f32 %v2877, %v2877
      %v3085 = vmul.f32 %v2880, %v2880
      %v3086 = vmul.f32 %v2882, %v2882
      %v3087 = vmul.f32 %v2885, %v2885
      %v3088 = vmul.f32 %v2887, %v2887
      %v3089 = vmul.f32 %v2890, %v2890
      %v3090 = vmul.f32 %v2892, %v2892
      %v3091 = vmul.f32 %v2895, %v2895
      %v3092 = vmul.f32 %v2897, %v2897
      %v3093 = vmul.f32 %v2900, %v2900
      %v3094 = vmul.f32 %v2902, %v2902
      %v3095 = vmul.f32 %v2905, %v2905
      %v3096 = vmul.f32 %v2907, %v2907
      %v3097 = vmul.f32 %v2910, %v2910
      %v3098 = vmul.f32 %v2912, %v2912
      %v3099 = vmul.f32 %v2915, %v2915
      %v3100 = vmul.f32 %v2917, %v2917
      %v3101 = vmul.f32 %v2920, %v2920
      %v3102 = vmul.f32 %v2922, %v2922
      %v3103 = vmul.f32 %v2925, %v2925
      %v3104 = vmul.f32 %v2927, %v2927
      %v3105 = vmul.f32 %v2930, %v2930
      %v3106 = vmul.f32 %v2932, %v2932
      %v3107 = vmul.f32 %v2935, %v2935
      %v3108 = vmul.f32 %v2937, %v2937
      %v3109 = vmul.f32 %v2940, %v2940
      %v3110 = vmul.f32 %v2942, %v2942
      %v3111 = vsel %vm3008, %v3079, 0.0
      %v3112 = vsel %vm3008, %v3080, 0.0
      %v3113 = vadd.f32 %v3111, %v3112
      %v3114 = vsel %vm3008, %v3081, 0.0
      %v3115 = vadd.f32 %v3113, %v3114
      %v3116 = vsel %vm3008, %v3082, 0.0
      %v3117 = vadd.f32 %v3115, %v3116
      %v3118 = vsel %vm3008, %v3083, 0.0
      %v3119 = vadd.f32 %v3117, %v3118
      %v3120 = vsel %vm3008, %v3084, 0.0
      %v3121 = vadd.f32 %v3119, %v3120
      %v3122 = vsel %vm3008, %v3085, 0.0
      %v3123 = vadd.f32 %v3121, %v3122
      %v3124 = vsel %vm3008, %v3086, 0.0
      %v3125 = vadd.f32 %v3123, %v3124
      %v3126 = vsel %vm3008, %v3087, 0.0
      %v3127 = vadd.f32 %v3125, %v3126
      %v3128 = vsel %vm3008, %v3088, 0.0
      %v3129 = vadd.f32 %v3127, %v3128
      %v3130 = vsel %vm3008, %v3089, 0.0
      %v3131 = vadd.f32 %v3129, %v3130
      %v3132 = vsel %vm3008, %v3090, 0.0
      %v3133 = vadd.f32 %v3131, %v3132
      %v3134 = vsel %vm3008, %v3091, 0.0
      %v3135 = vadd.f32 %v3133, %v3134
      %v3136 = vsel %vm3008, %v3092, 0.0
      %v3137 = vadd.f32 %v3135, %v3136
      %v3138 = vsel %vm3008, %v3093, 0.0
      %v3139 = vadd.f32 %v3137, %v3138
      %v3140 = vsel %vm3008, %v3094, 0.0
      %v3141 = vadd.f32 %v3139, %v3140
      %v3142 = vsel %vm3008, %v3095, 0.0
      %v3143 = vadd.f32 %v3141, %v3142
      %v3144 = vsel %vm3008, %v3096, 0.0
      %v3145 = vadd.f32 %v3143, %v3144
      %v3146 = vsel %vm3008, %v3097, 0.0
      %v3147 = vadd.f32 %v3145, %v3146
      %v3148 = vsel %vm3008, %v3098, 0.0
      %v3149 = vadd.f32 %v3147, %v3148
      %v3150 = vsel %vm3008, %v3099, 0.0
      %v3151 = vadd.f32 %v3149, %v3150
      %v3152 = vsel %vm3008, %v3100, 0.0
      %v3153 = vadd.f32 %v3151, %v3152
      %v3154 = vsel %vm3008, %v3101, 0.0
      %v3155 = vadd.f32 %v3153, %v3154
      %v3156 = vsel %vm3008, %v3102, 0.0
      %v3157 = vadd.f32 %v3155, %v3156
      %v3158 = vsel %vm3008, %v3103, 0.0
      %v3159 = vadd.f32 %v3157, %v3158
      %v3160 = vsel %vm3008, %v3104, 0.0
      %v3161 = vadd.f32 %v3159, %v3160
      %v3162 = vsel %vm3008, %v3105, 0.0
      %v3163 = vadd.f32 %v3161, %v3162
      %v3164 = vsel %vm3008, %v3106, 0.0
      %v3165 = vadd.f32 %v3163, %v3164
      %v3166 = vsel %vm3008, %v3107, 0.0
      %v3167 = vadd.f32 %v3165, %v3166
      %v3168 = vsel %vm3008, %v3108, 0.0
      %v3169 = vadd.f32 %v3167, %v3168
      %v3170 = vsel %vm3008, %v3109, 0.0
      %v3171 = vadd.f32 %v3169, %v3170
      %v3172 = vsel %vm3008, %v3110, 0.0
      %v3173 = vadd.f32 %v3171, %v3172
      %v3174 = vrot.slane %v3173, 4
      %v3175 = vadd.f32 %v3173, %v3174
      %v3176 = vrot.slane %v3175, 2
      %v3177 = vadd.f32 %v3175, %v3176
      %v3178 = vrot.slane %v3177, 1
      %v3179 = vadd.f32 %v3177, %v3178
      %3180 = vst.msk [vmem:[%s235 + $0x1] sm:$0x1] %vm408, %v3179
      %p3181 = scmp.lt.s32.totalorder %s17, 1
      %s3182 = scalar_select %p3181, %s17, 1
      %s3183 = smul.addr %s3182, 32
      %s3184 = smul.addr %s3183, 4
      %s3185 = scalar_lea.vmem %s4, %s3184
      %p3186 = scmp.lt.s32.totalorder %s17, 1
      %s3187 = scalar_select %p3186, %s17, 1
      %s3188 = smul.addr %s3187, 2
      %s3189 = scalar_lea.vmem %s5, %s3188
      // Predicated region
      $region37: #{_lambda_.5} parent=35 // pred_check
        %p3190 = pneg %p124
      $region38: #{_lambda_.5} parent=35 // pred_check_branch
        %3192 = sbr.rel (%p3190) target = $region40
      $region39: #{_lambda_.5} parent=35 // pred_region
        _
      $region40: #{_lambda_.5} parent=35 // pred_fallthru
        _
      // Predicated region
      $region41: #{_lambda_.5} parent=35 // pred_check
        %p3193 = pneg %p150
      $region42: #{_lambda_.5} parent=35 // pred_check_branch
        %3195 = sbr.rel (%p3193) target = $region44
      $region43: #{_lambda_.5} parent=35 // pred_region
        _
      $region44: #{_lambda_.5} parent=35 // pred_fallthru
        _
    $region36: #{_lambda_.5} parent=5 // pred_fallthru
      _
    %p3196 = scmp.le.s32.totalorder 2, %s12
    // Predicated region
    $region45: #{_lambda_.5} parent=5 // pred_check
      %p3197 = pneg %p3196
    $region46: #{_lambda_.5} parent=5 // pred_check_branch
      %3199 = sbr.rel (%p3197) target = $region48
    $region47: #{_lambda_.5} parent=5 // pred_region
      %s3200 = ssub.s32 %s12, 2
      // Predicated region
      $region49: #{_lambda_.5} parent=47 // pred_check
        %p3201 = pneg %p130
      $region50: #{_lambda_.5} parent=47 // pred_check_branch
        %3203 = sbr.rel (%p3201) target = $region52
      $region51: #{_lambda_.5} parent=47 // pred_region
        %p3204 = scmp.lt.s32.totalorder %s18, 1
        %s3205 = scalar_select %p3204, %s18, 1
        %s3206 = smul.addr %s3205, 32
        %s3207 = smul.addr %s3206, 4
        %s3208 = scalar_lea.vmem %s4, %s3207
      $region52: #{_lambda_.5} parent=47 // pred_fallthru
        _
      // Predicated region
      $region53: #{_lambda_.5} parent=47 // pred_check
        %p3209 = pneg %p156
      $region54: #{_lambda_.5} parent=47 // pred_check_branch
        %3211 = sbr.rel (%p3209) target = $region56
      $region55: #{_lambda_.5} parent=47 // pred_region
        %p3212 = scmp.lt.s32.totalorder %s18, 1
        %s3213 = scalar_select %p3212, %s18, 1
        %s3214 = smul.addr %s3213, 2
        %s3215 = scalar_lea.vmem %s5, %s3214
      $region56: #{_lambda_.5} parent=47 // pred_fallthru
        _
    $region48: #{_lambda_.5} parent=5 // pred_fallthru
      _
  $region6: #{_lambda_.5} parent=0 // loop_footer
    %s16 = sadd.s32 1, %s12
  $region7: #{_lambda_.5} parent=0 // loop_footer_branch
    %11 = sbr.rel target = $region3
  $region8: #{_lambda_.5} parent=0 // loop_exit
    _

</llo_original>
